<compile_context>
chip_gen: v5e
topology: v5e:2x2
jax: 0.10.0
libtpu: 0.0.40
codegen_flags: <defaults>
</compile_context>

<pallas_src>
import functools
import math

import numpy as np
import jax
import jax.numpy as jnp
from jax import lax
from jax.experimental import pallas as pl
from jax.experimental.pallas import tpu as pltpu


# ----------------------------------------------------------------------------
# sincos positional embedding (identical to the reference numpy code)
# ----------------------------------------------------------------------------
def get_1d_sincos_pos_embed_from_grid(embed_dim, pos):
    assert embed_dim % 2 == 0
    omega = np.arange(embed_dim // 2, dtype=np.float64)
    omega /= embed_dim / 2.0
    omega = 1.0 / 10000 ** omega
    pos = pos.reshape(-1)
    out = np.einsum("m,d->md", pos, omega)
    return np.concatenate([np.sin(out), np.cos(out)], axis=1)


def get_2d_sincos_pos_embed_from_grid(embed_dim, grid):
    assert embed_dim % 2 == 0
    emb_h = get_1d_sincos_pos_embed_from_grid(embed_dim // 2, grid[0])
    emb_w = get_1d_sincos_pos_embed_from_grid(embed_dim // 2, grid[1])
    return np.concatenate([emb_h, emb_w], axis=1)


def get_2d_sincos_pos_embed(embed_dim, grid_size):
    grid_h = np.arange(grid_size, dtype=np.float32)
    grid_w = np.arange(grid_size, dtype=np.float32)
    grid = np.meshgrid(grid_w, grid_h)
    grid = np.stack(grid, axis=0).reshape([2, 1, grid_size, grid_size])
    return get_2d_sincos_pos_embed_from_grid(embed_dim, grid)


# ----------------------------------------------------------------------------
# in-kernel helpers
# ----------------------------------------------------------------------------
def _layernorm(x, eps=1e-6):
    mu = jnp.mean(x, axis=-1, keepdims=True)
    xc = x - mu
    var = jnp.mean(xc * xc, axis=-1, keepdims=True)
    return xc * lax.rsqrt(var + eps)


def _silu(x):
    return x * jax.nn.sigmoid(x)


def _gelu_tanh(x):
    c = 0.7978845608028654  # sqrt(2/pi)
    return 0.5 * x * (1.0 + jnp.tanh(c * (x + 0.044715 * x * x * x)))


# ----------------------------------------------------------------------------
# Pallas kernels
# ----------------------------------------------------------------------------
def patch_embed_kernel(p_ref, w_ref, b_ref, pos_ref, o_ref):
    # p_ref: (B*T, C*p*p) f32, w_ref: (C*p*p, H) bf16, b_ref: (1, H) f32,
    # pos_ref: (T, H) f32, o_ref: (B, T, H) f32
    B, T, H = o_ref.shape
    out = jnp.dot(p_ref[...].astype(jnp.bfloat16), w_ref[...],
                  preferred_element_type=jnp.float32) + b_ref[...]
    out = out.reshape(B, T, H) + pos_ref[...][None, :, :]
    o_ref[...] = out.astype(o_ref.dtype)


def t_embed_kernel(tf_ref, w1_ref, b1_ref, w2_ref, b2_ref, y_ref, o_ref):
    # tf_ref: (B, F); y_ref: (B, H) (label embedding already gathered)
    h = _silu(jnp.dot(tf_ref[...], w1_ref[...],
                      preferred_element_type=jnp.float32) + b1_ref[...])
    t_emb = jnp.dot(h, w2_ref[...], preferred_element_type=jnp.float32) + b2_ref[...]
    o_ref[...] = (t_emb + y_ref[...]).astype(o_ref.dtype)


def dit_stack_kernel(x_ref, c_ref,
                     wada_ref, bada_ref, wqkv_ref, bqkv_ref,
                     wproj_ref, bproj_ref, wfc1_ref, bfc1_ref,
                     wfc2_ref, bfc2_ref,
                     wfada_ref, bfada_ref, wflin_ref, bflin_ref,
                     o_ref, x_sc, *, num_heads):
    """One grid step == one DiT block (weights streamed per layer).

    x_ref  : (B, T, H) f32     (token state input, only consumed at step 0)
    c_ref  : (B, H)    f32     (conditioning)
    per-layer weights (bf16) / biases (f32), final-layer weights (full)
    o_ref  : (B, T, O_pad) f32 (written on the last grid step only)
    x_sc   : (B, T, H) f32 VMEM scratch — token state, resident across layers
    """
    B, T, H = x_ref.shape
    hd = H // num_heads
    bf16 = jnp.bfloat16
    f32 = jnp.float32
    l = pl.program_id(0)

    @pl.when(l == 0)
    def _():
        x_sc[...] = x_ref[...]

    x = x_sc[...]                                          # (B, T, H) f32
    c_silu = _silu(c_ref[...])                             # (B, H)    f32
    c_bf = c_silu.astype(bf16)

    # ---- adaLN modulation: one (B,H) @ (H,6H) matmul, sliced 6 ways --------
    mods = jnp.dot(c_bf, wada_ref[...],
                   preferred_element_type=f32) + bada_ref[...]       # (B, 6H)
    shift_msa = mods[:, 0 * H:1 * H][:, None, :]
    scale_msa = mods[:, 1 * H:2 * H][:, None, :]
    gate_msa  = mods[:, 2 * H:3 * H][:, None, :]
    shift_mlp = mods[:, 3 * H:4 * H][:, None, :]
    scale_mlp = mods[:, 4 * H:5 * H][:, None, :]
    gate_mlp  = mods[:, 5 * H:6 * H][:, None, :]

    # ---- attention branch ---------------------------------------------------
    xm = _layernorm(x) * (1.0 + scale_msa) + shift_msa     # (B, T, H) f32
    xm2d = xm.reshape(B * T, H).astype(bf16)               # batch folded into M
    qkv = jnp.dot(xm2d, wqkv_ref[...],
                  preferred_element_type=f32) + bqkv_ref[...]        # (B*T, 3H)
    qkv = qkv.reshape(B, T, 3 * H)

    att_scale = hd ** -0.5
    head_outs = []
    for h in range(num_heads):
        q = qkv[:, :, h * hd:(h + 1) * hd].astype(bf16)
        k = qkv[:, :, H + h * hd:H + (h + 1) * hd].astype(bf16)
        v = qkv[:, :, 2 * H + h * hd:2 * H + (h + 1) * hd].astype(bf16)
        s = jnp.einsum("bqd,bkd->bqk", q, k,
                       preferred_element_type=f32) * att_scale       # (B,T,T)
        s = s - jnp.max(s, axis=-1, keepdims=True)
        p = jnp.exp(s)
        p = p * pl.reciprocal(jnp.sum(p, axis=-1, keepdims=True), approx=True)
        head_outs.append(jnp.einsum("bqk,bkd->bqd", p.astype(bf16), v,
                                    preferred_element_type=f32))     # (B,T,hd)
    attn = jnp.concatenate(head_outs, axis=-1)             # (B, T, H)
    attn2d = attn.reshape(B * T, H).astype(bf16)
    proj = jnp.dot(attn2d, wproj_ref[...],
                   preferred_element_type=f32) + bproj_ref[...]      # (B*T, H)
    x = x + gate_msa * proj.reshape(B, T, H)

    # ---- MLP branch ---------------------------------------------------------
    xm2 = _layernorm(x) * (1.0 + scale_mlp) + shift_mlp
    xm2_2d = xm2.reshape(B * T, H).astype(bf16)
    h1 = _gelu_tanh(jnp.dot(xm2_2d, wfc1_ref[...],
                            preferred_element_type=f32) + bfc1_ref[...])
    h2 = jnp.dot(h1.astype(bf16), wfc2_ref[...],
                 preferred_element_type=f32) + bfc2_ref[...]
    x = x + gate_mlp * h2.reshape(B, T, H)

    x_sc[...] = x

    # ---- final adaLN + linear, fused into the last grid step ----------------
    @pl.when(l == pl.num_programs(0) - 1)
    def _():
        fm = jnp.dot(c_bf, wfada_ref[...],
                     preferred_element_type=f32) + bfada_ref[...]    # (B, 2H)
        shift_f = fm[:, 0:H][:, None, :]
        scale_f = fm[:, H:2 * H][:, None, :]
        xf = _layernorm(x) * (1.0 + scale_f) + shift_f
        xf2d = xf.reshape(B * T, H).astype(bf16)
        out = jnp.dot(xf2d, wflin_ref[...],
                      preferred_element_type=f32) + bflin_ref[...]   # (B*T, Opad)
        o_ref[...] = out.reshape(B, T, -1).astype(o_ref.dtype)


# ----------------------------------------------------------------------------
# pallas_call wrappers
# ----------------------------------------------------------------------------
def patch_embed_call(patches2d, w, b, pos, B, T):
    H = w.shape[1]
    return pl.pallas_call(
        patch_embed_kernel,
        out_shape=jax.ShapeDtypeStruct((B, T, H), jnp.float32),
    )(patches2d, w.astype(jnp.bfloat16), b, pos)


def t_embed_call(tf, w1, b1, w2, b2, y_emb):
    B = tf.shape[0]
    H = w1.shape[1]
    return pl.pallas_call(
        t_embed_kernel,
        out_shape=jax.ShapeDtypeStruct((B, H), jnp.float32),
    )(tf, w1, b1, w2, b2, y_emb)


def dit_stack_call(x_tok, c, blocks, final, cfg):
    B, T, H = x_tok.shape
    L = blocks["w_ada"].shape[0]
    nh = cfg["num_heads"]
    bf = jnp.bfloat16

    # pad final linear to a lane-dense (H, 128k) output
    O = final["w_lin"].shape[1]
    O_pad = max(128, ((O + 127) // 128) * 128)
    w_lin_pad = jnp.zeros((H, O_pad), jnp.float32).at[:, :O].set(final["w_lin"])
    b_lin_pad = jnp.zeros((1, O_pad), jnp.float32).at[:, :O].set(final["b_lin"])

    args = (
        x_tok, c,
        blocks["w_ada"].astype(bf), blocks["b_ada"],
        blocks["w_qkv"].astype(bf), blocks["b_qkv"],
        blocks["w_proj"].astype(bf), blocks["b_proj"],
        blocks["w_fc1"].astype(bf), blocks["b_fc1"],
        blocks["w_fc2"].astype(bf), blocks["b_fc2"],
        final["w_ada"].astype(bf), final["b_ada"],
        w_lin_pad.astype(bf), b_lin_pad,
    )

    def full_spec(shape):
        nd = len(shape)
        return pl.BlockSpec(tuple(shape), lambda l, _n=nd: (0,) * _n)

    def layer_spec(shape):
        nd = len(shape) - 1
        return pl.BlockSpec((None,) + tuple(shape[1:]),
                            lambda l, _n=nd: (l,) + (0,) * _n)

    in_specs = ([full_spec(x_tok.shape), full_spec(c.shape)]
                + [layer_spec(a.shape) for a in args[2:12]]
                + [full_spec(a.shape) for a in args[12:]])

    kernel = functools.partial(dit_stack_kernel, num_heads=nh)

    out_pad = pl.pallas_call(
        kernel,
        out_shape=jax.ShapeDtypeStruct((B, T, O_pad), jnp.float32),
        grid=(L,),
        in_specs=in_specs,
        out_specs=pl.BlockSpec((B, T, O_pad), lambda l: (0, 0, 0)),
        scratch_shapes=[pltpu.VMEM((B, T, H), jnp.float32)],
        compiler_params=pltpu.CompilerParams(
            dimension_semantics=("arbitrary",)),
    )(*args)
    return out_pad[:, :, :O]


# ----------------------------------------------------------------------------
# glue: full DiT forward
# ----------------------------------------------------------------------------
def timestep_embedding(t, dim, max_period=10000):
    half = dim // 2
    freqs = jnp.exp(-math.log(max_period) *
                    jnp.arange(half, dtype=jnp.float32) / half)
    args = t[:, None].astype(jnp.float32) * freqs[None]
    return jnp.concatenate([jnp.cos(args), jnp.sin(args)], axis=-1)


def dit_forward(params, x, t, y, cfg):
    B = x.shape[0]
    ps = cfg["patch_size"]
    C = cfg["in_channels"]
    gh = cfg["input_size"] // ps
    T = gh * gh

    # patchify (equivalent to the stride-p Conv2d in PatchEmbed)
    patches = x.reshape(B, C, gh, ps, gh, ps).transpose(0, 2, 4, 1, 3, 5)
    patches = patches.reshape(B * T, C * ps * ps)
    x_tok = patch_embed_call(patches, params["patch_w"], params["patch_b"],
                             params["pos"], B, T)

    # conditioning:  c = TimestepEmbedder(t) + LabelEmbedder(y)
    # TODO(synk): training-mode label dropout uses torch RNG; eval path only.
    tf = timestep_embedding(t, cfg["freq_dim"])
    y_emb = params["label_emb"][y]                      # gather in glue
    c = t_embed_call(tf, params["t_w1"], params["t_b1"],
                     params["t_w2"], params["t_b2"], y_emb)

    # all DiT blocks + final layer in one pallas_call (weights streamed/layer)
    out = dit_stack_call(x_tok, c, params["blocks"], params["final"], cfg)

    # unpatchify
    oc = cfg["out_channels"]
    imgs = out.reshape(B, gh, gh, ps, ps, oc).transpose(0, 5, 1, 3, 2, 4)
    return imgs.reshape(B, oc, gh * ps, gh * ps)


# ----------------------------------------------------------------------------
# pure-JAX reference (f32, for correctness check)
# ----------------------------------------------------------------------------
def ref_forward(params, x, t, y, cfg):
    B = x.shape[0]
    ps = cfg["patch_size"]
    C = cfg["in_channels"]
    gh = cfg["input_size"] // ps
    T = gh * gh
    H = cfg["hidden"]
    nh = cfg["num_heads"]
    hd = H // nh

    def ln(z):
        mu = z.mean(-1, keepdims=True)
        v = ((z - mu) ** 2).mean(-1, keepdims=True)
        return (z - mu) / jnp.sqrt(v + 1e-6)

    patches = x.reshape(B, C, gh, ps, gh, ps).transpose(0, 2, 4, 1, 3, 5)
    patches = patches.reshape(B, T, C * ps * ps)
    xt = patches @ params["patch_w"] + params["patch_b"] + params["pos"][None]

    tf = timestep_embedding(t, cfg["freq_dim"])
    h = jax.nn.silu(tf @ params["t_w1"] + params["t_b1"])
    c = h @ params["t_w2"] + params["t_b2"] + params["label_emb"][y]

    blocks = params["blocks"]
    for l in range(cfg["depth"]):
        sc = jax.nn.silu(c)
        mods = sc @ blocks["w_ada"][l] + blocks["b_ada"][l]
        sh_m, sc_m, g_m, sh_f, sc_f, g_f = jnp.split(mods, 6, axis=-1)
        xm = ln(xt) * (1.0 + sc_m[:, None]) + sh_m[:, None]
        qkv = xm @ blocks["w_qkv"][l] + blocks["b_qkv"][l]
        q, k, v = jnp.split(qkv, 3, axis=-1)
        q = q.reshape(B, T, nh, hd).transpose(0, 2, 1, 3)
        k = k.reshape(B, T, nh, hd).transpose(0, 2, 1, 3)
        v = v.reshape(B, T, nh, hd).transpose(0, 2, 1, 3)
        s = jnp.einsum("bhqd,bhkd->bhqk", q, k) * (hd ** -0.5)
        pr = jax.nn.softmax(s, axis=-1)
        o = jnp.einsum("bhqk,bhkd->bhqd", pr, v).transpose(0, 2, 1, 3)
        attn = o.reshape(B, T, H) @ blocks["w_proj"][l] + blocks["b_proj"][l]
        xt = xt + g_m[:, None] * attn
        xm2 = ln(xt) * (1.0 + sc_f[:, None]) + sh_f[:, None]
        h1 = jax.nn.gelu(xm2 @ blocks["w_fc1"][l] + blocks["b_fc1"][l],
                         approximate=True)
        xt = xt + g_f[:, None] * (h1 @ blocks["w_fc2"][l] + blocks["b_fc2"][l])

    fl = params["final"]
    sc = jax.nn.silu(c)
    fm = sc @ fl["w_ada"] + fl["b_ada"]
    shift, scale = jnp.split(fm, 2, axis=-1)
    out = (ln(xt) * (1.0 + scale[:, None]) + shift[:, None]) @ fl["w_lin"] + fl["b_lin"]
    oc = cfg["out_channels"]
    return out.reshape(B, gh, gh, ps, ps, oc).transpose(0, 5, 1, 3, 2, 4).reshape(
        B, oc, gh * ps, gh * ps)


# ----------------------------------------------------------------------------
# deterministic synthetic parameter init (fused weight layouts)
# ----------------------------------------------------------------------------
def init_params(key, cfg):
    H = cfg["hidden"]
    MH = cfg["mlp_hidden"]
    P = cfg["in_channels"] * cfg["patch_size"] ** 2
    F = cfg["freq_dim"]
    gh = cfg["input_size"] // cfg["patch_size"]
    keys = iter(jax.random.split(key, 512))

    def dense(fi, fo):
        std = (2.0 / (fi + fo)) ** 0.5
        return jax.random.normal(next(keys), (fi, fo), jnp.float32) * std

    def bias(*shape):
        return 0.02 * jax.random.normal(next(keys), shape, jnp.float32)

    params = {
        "patch_w": dense(P, H),
        "patch_b": bias(1, H),
        "pos": jnp.asarray(get_2d_sincos_pos_embed(H, gh), jnp.float32),
        "t_w1": dense(F, H), "t_b1": bias(1, H),
        "t_w2": dense(H, H), "t_b2": bias(1, H),
        "label_emb": 0.02 * jax.random.normal(
            next(keys), (cfg["num_classes"] + 1, H), jnp.float32),
    }
    blk_list = []
    for _ in range(cfg["depth"]):
        blk_list.append(dict(
            w_ada=dense(H, 6 * H), b_ada=bias(1, 6 * H),
            w_qkv=dense(H, 3 * H), b_qkv=bias(1, 3 * H),
            w_proj=dense(H, H), b_proj=bias(1, H),
            w_fc1=dense(H, MH), b_fc1=bias(1, MH),
            w_fc2=dense(MH, H), b_fc2=bias(1, H),
        ))
    # stack per-layer weights along a leading layer axis for the fused kernel
    params["blocks"] = {k: jnp.stack([blk[k] for blk in blk_list])
                        for k in blk_list[0]}
    O = cfg["patch_size"] ** 2 * cfg["out_channels"]
    params["final"] = dict(
        w_ada=dense(H, 2 * H), b_ada=bias(1, 2 * H),
        w_lin=dense(H, O), b_lin=bias(1, O),
    )
    return params


# ----------------------------------------------------------------------------
if __name__ == "__main__":
    cfg = dict(input_size=16, patch_size=2, in_channels=1, out_channels=1,
               hidden=128, depth=2, num_heads=4, mlp_hidden=512,
               num_classes=10, freq_dim=256)

    key = jax.random.PRNGKey(0)
    kp, kx, kt, ky = jax.random.split(key, 4)
    params = init_params(kp, cfg)

    B = 2
    x = jax.random.normal(kx, (B, cfg["in_channels"],
                               cfg["input_size"], cfg["input_size"]), jnp.float32)
    t = jax.random.uniform(kt, (B,), jnp.float32, 0.0, 1000.0)
    y = jax.random.randint(ky, (B,), 0, cfg["num_classes"])

    fwd = jax.jit(lambda p_, x_, t_, y_: dit_forward(p_, x_, t_, y_, cfg))
    out = jax.block_until_ready(fwd(params, x, t, y))

    ref = jax.block_until_ready(ref_forward(params, x, t, y, cfg))
    assert out.shape == (B, cfg["out_channels"],
                         cfg["input_size"], cfg["input_size"])
    num = jnp.sqrt(jnp.sum((out - ref) ** 2))
    den = jnp.sqrt(jnp.sum(ref ** 2)) + 1e-12
    rel = float(num / den)
    assert rel < 3e-2, f"relative error {rel}"
    print("KERNEL_OK")
</pallas_src>

<mosaic_0001>
module attributes {stable_mosaic.version = 11 : i64} {
  func.func @t_embed_kernel(%arg0: memref<2x256xf32, #tpu.memory_space<vmem>>, %arg1: memref<256x128xf32, #tpu.memory_space<vmem>>, %arg2: memref<1x128xf32, #tpu.memory_space<vmem>>, %arg3: memref<128x128xf32, #tpu.memory_space<vmem>>, %arg4: memref<1x128xf32, #tpu.memory_space<vmem>>, %arg5: memref<2x128xf32, #tpu.memory_space<vmem>>, %arg6: memref<2x128xf32, #tpu.memory_space<vmem>>) attributes {dimension_semantics = [], scalar_prefetch = 0 : i64, scratch_operands = 0 : i64, tpu.core_type = #tpu.core_type<tc>} {
    %c0 = arith.constant 0 : index
    %c0_0 = arith.constant 0 : index
    %0 = vector.load %arg0[%c0, %c0_0] : memref<2x256xf32, #tpu.memory_space<vmem>>, vector<2x256xf32>
    %c0_1 = arith.constant 0 : index
    %c0_2 = arith.constant 0 : index
    %1 = vector.load %arg1[%c0_1, %c0_2] : memref<256x128xf32, #tpu.memory_space<vmem>>, vector<256x128xf32>
    %cst = arith.constant dense<0.000000e+00> : vector<2x128xf32>
    %2 = tpu.matmul %0, %1, %cst {dimension_numbers = #tpu.dot_dimension_numbers<[1], [0], [0], [1], [0, 0, 1, 1], [], []>} : vector<2x256xf32>, vector<256x128xf32>, vector<2x128xf32> -> vector<2x128xf32>
    %c0_3 = arith.constant 0 : index
    %c0_4 = arith.constant 0 : index
    %3 = vector.load %arg2[%c0_3, %c0_4] : memref<1x128xf32, #tpu.memory_space<vmem>>, vector<1x128xf32>
    %4 = vector.broadcast %3 : vector<1x128xf32> to vector<2x128xf32>
    %5 = arith.addf %2, %4 : vector<2x128xf32>
    %6 = arith.negf %5 : vector<2x128xf32>
    %7 = math.exp %6 : vector<2x128xf32>
    %cst_5 = arith.constant 1.000000e+00 : f32
    %8 = vector.broadcast %cst_5 : f32 to vector<2x128xf32>
    %9 = arith.addf %8, %7 : vector<2x128xf32>
    %10 = arith.divf %8, %9 : vector<2x128xf32>
    %11 = arith.mulf %5, %10 : vector<2x128xf32>
    %c0_6 = arith.constant 0 : index
    %c0_7 = arith.constant 0 : index
    %12 = vector.load %arg3[%c0_6, %c0_7] : memref<128x128xf32, #tpu.memory_space<vmem>>, vector<128x128xf32>
    %cst_8 = arith.constant dense<0.000000e+00> : vector<2x128xf32>
    %13 = tpu.matmul %11, %12, %cst_8 {dimension_numbers = #tpu.dot_dimension_numbers<[1], [0], [0], [1], [0, 0, 1, 1], [], []>} : vector<2x128xf32>, vector<128x128xf32>, vector<2x128xf32> -> vector<2x128xf32>
    %c0_9 = arith.constant 0 : index
    %c0_10 = arith.constant 0 : index
    %14 = vector.load %arg4[%c0_9, %c0_10] : memref<1x128xf32, #tpu.memory_space<vmem>>, vector<1x128xf32>
    %15 = vector.broadcast %14 : vector<1x128xf32> to vector<2x128xf32>
    %16 = arith.addf %13, %15 : vector<2x128xf32>
    %c0_11 = arith.constant 0 : index
    %c0_12 = arith.constant 0 : index
    %17 = vector.load %arg5[%c0_11, %c0_12] : memref<2x128xf32, #tpu.memory_space<vmem>>, vector<2x128xf32>
    %18 = arith.addf %16, %17 : vector<2x128xf32>
    %c0_13 = arith.constant 0 : index
    %c0_14 = arith.constant 0 : index
    %19 = vector.load %arg6[%c0_13, %c0_14] : memref<2x128xf32, #tpu.memory_space<vmem>>, vector<2x128xf32>
    tpu.vector_store %arg6[%c0_13, %c0_14], %18 {strides = array<i32>} : memref<2x128xf32, #tpu.memory_space<vmem>>, vector<2x128xf32>,
    return
  }
}

module attributes {stable_mosaic.version = 11 : i64} {
  func.func @patch_embed_kernel(%arg0: memref<128x4xf32, #tpu.memory_space<vmem>>, %arg1: memref<4x128xbf16, #tpu.memory_space<vmem>>, %arg2: memref<1x128xf32, #tpu.memory_space<vmem>>, %arg3: memref<64x128xf32, #tpu.memory_space<vmem>>, %arg4: memref<2x64x128xf32, #tpu.memory_space<vmem>>) attributes {dimension_semantics = [], scalar_prefetch = 0 : i64, scratch_operands = 0 : i64, tpu.core_type = #tpu.core_type<tc>} {
    %c0 = arith.constant 0 : index
    %c0_0 = arith.constant 0 : index
    %0 = vector.load %arg0[%c0, %c0_0] : memref<128x4xf32, #tpu.memory_space<vmem>>, vector<128x4xf32>
    %1 = arith.truncf %0 : vector<128x4xf32> to vector<128x4xbf16>
    %c0_1 = arith.constant 0 : index
    %c0_2 = arith.constant 0 : index
    %2 = vector.load %arg1[%c0_1, %c0_2] : memref<4x128xbf16, #tpu.memory_space<vmem>>, vector<4x128xbf16>
    %cst = arith.constant dense<0.000000e+00> : vector<128x128xf32>
    %3 = tpu.matmul %1, %2, %cst {dimension_numbers = #tpu.dot_dimension_numbers<[1], [0], [0], [1], [0, 0, 1, 1], [], []>} : vector<128x4xbf16>, vector<4x128xbf16>, vector<128x128xf32> -> vector<128x128xf32>
    %c0_3 = arith.constant 0 : index
    %c0_4 = arith.constant 0 : index
    %4 = vector.load %arg2[%c0_3, %c0_4] : memref<1x128xf32, #tpu.memory_space<vmem>>, vector<1x128xf32>
    %5 = vector.broadcast %4 : vector<1x128xf32> to vector<128x128xf32>
    %6 = arith.addf %3, %5 : vector<128x128xf32>
    %7 = vector.shape_cast %6 : vector<128x128xf32> to vector<2x64x128xf32>
    %c0_5 = arith.constant 0 : index
    %c0_6 = arith.constant 0 : index
    %8 = vector.load %arg3[%c0_5, %c0_6] : memref<64x128xf32, #tpu.memory_space<vmem>>, vector<64x128xf32>
    %9 = vector.shape_cast %8 : vector<64x128xf32> to vector<1x64x128xf32>
    %10 = vector.broadcast %9 : vector<1x64x128xf32> to vector<2x64x128xf32>
    %11 = arith.addf %7, %10 : vector<2x64x128xf32>
    %c0_7 = arith.constant 0 : index
    %c0_8 = arith.constant 0 : index
    %c0_9 = arith.constant 0 : index
    %12 = vector.load %arg4[%c0_7, %c0_8, %c0_9] : memref<2x64x128xf32, #tpu.memory_space<vmem>>, vector<2x64x128xf32>
    tpu.vector_store %arg4[%c0_7, %c0_8, %c0_9], %11 {strides = array<i32>} : memref<2x64x128xf32, #tpu.memory_space<vmem>>, vector<2x64x128xf32>,
    return
  }
}

module attributes {stable_mosaic.version = 11 : i64} {
  func.func @dit_stack_kernel(%arg0: i32, %arg1: memref<2x64x128xf32, #tpu.memory_space<vmem>>, %arg2: memref<2x128xf32, #tpu.memory_space<vmem>>, %arg3: memref<1x128x768xbf16, #tpu.memory_space<vmem>>, %arg4: memref<1x1x768xf32, #tpu.memory_space<vmem>>, %arg5: memref<1x128x384xbf16, #tpu.memory_space<vmem>>, %arg6: memref<1x1x384xf32, #tpu.memory_space<vmem>>, %arg7: memref<1x128x128xbf16, #tpu.memory_space<vmem>>, %arg8: memref<1x1x128xf32, #tpu.memory_space<vmem>>, %arg9: memref<1x128x512xbf16, #tpu.memory_space<vmem>>, %arg10: memref<1x1x512xf32, #tpu.memory_space<vmem>>, %arg11: memref<1x512x128xbf16, #tpu.memory_space<vmem>>, %arg12: memref<1x1x128xf32, #tpu.memory_space<vmem>>, %arg13: memref<128x256xbf16, #tpu.memory_space<vmem>>, %arg14: memref<1x256xf32, #tpu.memory_space<vmem>>, %arg15: memref<128x128xbf16, #tpu.memory_space<vmem>>, %arg16: memref<1x128xf32, #tpu.memory_space<vmem>>, %arg17: memref<2x64x128xf32, #tpu.memory_space<vmem>>, %arg18: memref<2x64x128xf32, #tpu.memory_space<vmem>>) attributes {dimension_semantics = [#tpu.dimension_semantics<arbitrary>], iteration_bounds = array<i64: 2>, scalar_prefetch = 0 : i64, scratch_operands = 1 : i64, tpu.core_type = #tpu.core_type<tc>, window_params = [{pipeline_mode = #tpu.pipeline_mode<synchronous>, transform_indices = @transform_0, window_bounds = array<i64: 2, 64, 128>}, {pipeline_mode = #tpu.pipeline_mode<synchronous>, transform_indices = @transform_1, window_bounds = array<i64: 2, 128>}, {transform_indices = @transform_2, window_bounds = array<i64: 1, 128, 768>}, {transform_indices = @transform_3, window_bounds = array<i64: 1, 1, 768>}, {transform_indices = @transform_4, window_bounds = array<i64: 1, 128, 384>}, {transform_indices = @transform_5, window_bounds = array<i64: 1, 1, 384>}, {transform_indices = @transform_6, window_bounds = array<i64: 1, 128, 128>}, {transform_indices = @transform_7, window_bounds = array<i64: 1, 1, 128>}, {transform_indices = @transform_8, window_bounds = array<i64: 1, 128, 512>}, {transform_indices = @transform_9, window_bounds = array<i64: 1, 1, 512>}, {transform_indices = @transform_10, window_bounds = array<i64: 1, 512, 128>}, {transform_indices = @transform_11, window_bounds = array<i64: 1, 1, 128>}, {pipeline_mode = #tpu.pipeline_mode<synchronous>, transform_indices = @transform_12, window_bounds = array<i64: 128, 256>}, {pipeline_mode = #tpu.pipeline_mode<synchronous>, transform_indices = @transform_13, window_bounds = array<i64: 1, 256>}, {pipeline_mode = #tpu.pipeline_mode<synchronous>, transform_indices = @transform_14, window_bounds = array<i64: 128, 128>}, {pipeline_mode = #tpu.pipeline_mode<synchronous>, transform_indices = @transform_15, window_bounds = array<i64: 1, 128>}, {pipeline_mode = #tpu.pipeline_mode<synchronous>, transform_indices = @transform_16, window_bounds = array<i64: 2, 64, 128>}]} {
    %c0_i32 = arith.constant 0 : i32
    %0 = arith.cmpi eq, %arg0, %c0_i32 : i32
    %1 = arith.extui %0 : i1 to i32
    %c0_i32_0 = arith.constant 0 : i32
    %2 = arith.cmpi ne, %1, %c0_i32_0 : i32
    scf.if %2 {
      %c0_80 = arith.constant 0 : index
      %c0_81 = arith.constant 0 : index
      %c0_82 = arith.constant 0 : index
      %221 = vector.load %arg1[%c0_80, %c0_81, %c0_82] : memref<2x64x128xf32, #tpu.memory_space<vmem>>, vector<2x64x128xf32>
      %c0_83 = arith.constant 0 : index
      %c0_84 = arith.constant 0 : index
      %c0_85 = arith.constant 0 : index
      %222 = vector.load %arg18[%c0_83, %c0_84, %c0_85] : memref<2x64x128xf32, #tpu.memory_space<vmem>>, vector<2x64x128xf32>
      tpu.vector_store %arg18[%c0_83, %c0_84, %c0_85], %221 {strides = array<i32>} : memref<2x64x128xf32, #tpu.memory_space<vmem>>, vector<2x64x128xf32>,
    } else {
    }
    %c0 = arith.constant 0 : index
    %c0_1 = arith.constant 0 : index
    %c0_2 = arith.constant 0 : index
    %3 = vector.load %arg18[%c0, %c0_1, %c0_2] : memref<2x64x128xf32, #tpu.memory_space<vmem>>, vector<2x64x128xf32>
    %c0_3 = arith.constant 0 : index
    %c0_4 = arith.constant 0 : index
    %4 = vector.load %arg2[%c0_3, %c0_4] : memref<2x128xf32, #tpu.memory_space<vmem>>, vector<2x128xf32>
    %5 = arith.negf %4 : vector<2x128xf32>
    %6 = math.exp %5 : vector<2x128xf32>
    %cst = arith.constant 1.000000e+00 : f32
    %7 = vector.broadcast %cst : f32 to vector<2x128xf32>
    %8 = arith.addf %7, %6 : vector<2x128xf32>
    %9 = arith.divf %7, %8 : vector<2x128xf32>
    %10 = arith.mulf %4, %9 : vector<2x128xf32>
    %11 = arith.truncf %10 : vector<2x128xf32> to vector<2x128xbf16>
    %c0_5 = arith.constant 0 : index
    %c0_6 = arith.constant 0 : index
    %c0_7 = arith.constant 0 : index
    %12 = vector.load %arg3[%c0_5, %c0_6, %c0_7] : memref<1x128x768xbf16, #tpu.memory_space<vmem>>, vector<1x128x768xbf16>
    %13 = vector.shape_cast %12 : vector<1x128x768xbf16> to vector<128x768xbf16>
    %cst_8 = arith.constant dense<0.000000e+00> : vector<2x768xf32>
    %14 = tpu.matmul %11, %13, %cst_8 {dimension_numbers = #tpu.dot_dimension_numbers<[1], [0], [0], [1], [0, 0, 1, 1], [], []>} : vector<2x128xbf16>, vector<128x768xbf16>, vector<2x768xf32> -> vector<2x768xf32>
    %c0_9 = arith.constant 0 : index
    %c0_10 = arith.constant 0 : index
    %c0_11 = arith.constant 0 : index
    %15 = vector.load %arg4[%c0_9, %c0_10, %c0_11] : memref<1x1x768xf32, #tpu.memory_space<vmem>>, vector<1x1x768xf32>
    %16 = vector.shape_cast %15 : vector<1x1x768xf32> to vector<1x768xf32>
    %17 = vector.broadcast %16 : vector<1x768xf32> to vector<2x768xf32>
    %18 = arith.addf %14, %17 : vector<2x768xf32>
    %19 = vector.extract_strided_slice %18 {offsets = [0, 0], sizes = [2, 128], strides = [1, 1]} : vector<2x768xf32> to vector<2x128xf32>
    %20 = vector.shape_cast %19 : vector<2x128xf32> to vector<2x1x128xf32>
    %21 = vector.extract_strided_slice %18 {offsets = [0, 128], sizes = [2, 128], strides = [1, 1]} : vector<2x768xf32> to vector<2x128xf32>
    %22 = vector.shape_cast %21 : vector<2x128xf32> to vector<2x1x128xf32>
    %23 = vector.extract_strided_slice %18 {offsets = [0, 256], sizes = [2, 128], strides = [1, 1]} : vector<2x768xf32> to vector<2x128xf32>
    %24 = vector.shape_cast %23 : vector<2x128xf32> to vector<2x1x128xf32>
    %25 = vector.extract_strided_slice %18 {offsets = [0, 384], sizes = [2, 128], strides = [1, 1]} : vector<2x768xf32> to vector<2x128xf32>
    %26 = vector.shape_cast %25 : vector<2x128xf32> to vector<2x1x128xf32>
    %27 = vector.extract_strided_slice %18 {offsets = [0, 512], sizes = [2, 128], strides = [1, 1]} : vector<2x768xf32> to vector<2x128xf32>
    %28 = vector.shape_cast %27 : vector<2x128xf32> to vector<2x1x128xf32>
    %29 = vector.extract_strided_slice %18 {offsets = [0, 640], sizes = [2, 128], strides = [1, 1]} : vector<2x768xf32> to vector<2x128xf32>
    %30 = vector.shape_cast %29 : vector<2x128xf32> to vector<2x1x128xf32>
    %cst_12 = arith.constant dense<0.000000e+00> : vector<2x64xf32>
    %31 = vector.multi_reduction <add>, %3, %cst_12 [2] : vector<2x64x128xf32> to vector<2x64xf32>
    %32 = vector.shape_cast %31 : vector<2x64xf32> to vector<2x64x1xf32>
    %cst_13 = arith.constant 1.280000e+02 : f32
    %33 = vector.broadcast %cst_13 : f32 to vector<2x64x1xf32>
    %34 = arith.divf %32, %33 : vector<2x64x1xf32>
    %35 = vector.broadcast %34 : vector<2x64x1xf32> to vector<2x64x128xf32>
    %36 = arith.subf %3, %35 : vector<2x64x128xf32>
    %37 = arith.mulf %36, %36 : vector<2x64x128xf32>
    %cst_14 = arith.constant dense<0.000000e+00> : vector<2x64xf32>
    %38 = vector.multi_reduction <add>, %37, %cst_14 [2] : vector<2x64x128xf32> to vector<2x64xf32>
    %39 = vector.shape_cast %38 : vector<2x64xf32> to vector<2x64x1xf32>
    %cst_15 = arith.constant 1.280000e+02 : f32
    %40 = vector.broadcast %cst_15 : f32 to vector<2x64x1xf32>
    %41 = arith.divf %39, %40 : vector<2x64x1xf32>
    %cst_16 = arith.constant 9.99999997E-7 : f32
    %42 = vector.broadcast %cst_16 : f32 to vector<2x64x1xf32>
    %43 = arith.addf %41, %42 : vector<2x64x1xf32>
    %44 = math.rsqrt %43 : vector<2x64x1xf32>
    %45 = vector.broadcast %44 : vector<2x64x1xf32> to vector<2x64x128xf32>
    %46 = arith.mulf %36, %45 : vector<2x64x128xf32>
    %cst_17 = arith.constant 1.000000e+00 : f32
    %47 = vector.broadcast %cst_17 : f32 to vector<2x1x128xf32>
    %48 = arith.addf %47, %22 : vector<2x1x128xf32>
    %49 = vector.broadcast %48 : vector<2x1x128xf32> to vector<2x64x128xf32>
    %50 = arith.mulf %46, %49 : vector<2x64x128xf32>
    %51 = vector.broadcast %20 : vector<2x1x128xf32> to vector<2x64x128xf32>
    %52 = arith.addf %50, %51 : vector<2x64x128xf32>
    %53 = vector.shape_cast %52 : vector<2x64x128xf32> to vector<128x128xf32>
    %54 = arith.truncf %53 : vector<128x128xf32> to vector<128x128xbf16>
    %c0_18 = arith.constant 0 : index
    %c0_19 = arith.constant 0 : index
    %c0_20 = arith.constant 0 : index
    %55 = vector.load %arg5[%c0_18, %c0_19, %c0_20] : memref<1x128x384xbf16, #tpu.memory_space<vmem>>, vector<1x128x384xbf16>
    %56 = vector.shape_cast %55 : vector<1x128x384xbf16> to vector<128x384xbf16>
    %cst_21 = arith.constant dense<0.000000e+00> : vector<128x384xf32>
    %57 = tpu.matmul %54, %56, %cst_21 {dimension_numbers = #tpu.dot_dimension_numbers<[1], [0], [0], [1], [0, 0, 1, 1], [], []>} : vector<128x128xbf16>, vector<128x384xbf16>, vector<128x384xf32> -> vector<128x384xf32>
    %c0_22 = arith.constant 0 : index
    %c0_23 = arith.constant 0 : index
    %c0_24 = arith.constant 0 : index
    %58 = vector.load %arg6[%c0_22, %c0_23, %c0_24] : memref<1x1x384xf32, #tpu.memory_space<vmem>>, vector<1x1x384xf32>
    %59 = vector.shape_cast %58 : vector<1x1x384xf32> to vector<1x384xf32>
    %60 = vector.broadcast %59 : vector<1x384xf32> to vector<128x384xf32>
    %61 = arith.addf %57, %60 : vector<128x384xf32>
    %62 = vector.shape_cast %61 : vector<128x384xf32> to vector<2x64x384xf32>
    %63 = vector.extract_strided_slice %62 {offsets = [0, 0, 0], sizes = [2, 64, 32], strides = [1, 1, 1]} : vector<2x64x384xf32> to vector<2x64x32xf32>
    %64 = arith.truncf %63 : vector<2x64x32xf32> to vector<2x64x32xbf16>
    %65 = vector.extract_strided_slice %62 {offsets = [0, 0, 128], sizes = [2, 64, 32], strides = [1, 1, 1]} : vector<2x64x384xf32> to vector<2x64x32xf32>
    %66 = arith.truncf %65 : vector<2x64x32xf32> to vector<2x64x32xbf16>
    %67 = vector.extract_strided_slice %62 {offsets = [0, 0, 256], sizes = [2, 64, 32], strides = [1, 1, 1]} : vector<2x64x384xf32> to vector<2x64x32xf32>
    %68 = arith.truncf %67 : vector<2x64x32xf32> to vector<2x64x32xbf16>
    "tpu.trace_start"() <{level = 10 : i32, message = "bqd,bkd->bqk"}> : () -> ()
    %cst_25 = arith.constant dense<0.000000e+00> : vector<2x64x64xf32>
    %69 = tpu.matmul %64, %66, %cst_25 {dimension_numbers = #tpu.dot_dimension_numbers<[2], [2], [1], [1], [0, 0, 0, 1, 1, 1], [0], [0]>} : vector<2x64x32xbf16>, vector<2x64x32xbf16>, vector<2x64x64xf32> -> vector<2x64x64xf32>
    "tpu.trace_stop"() : () -> ()
    %cst_26 = arith.constant 0.176776692 : f32
    %70 = vector.broadcast %cst_26 : f32 to vector<2x64x64xf32>
    %71 = arith.mulf %69, %70 : vector<2x64x64xf32>
    %cst_27 = arith.constant dense<0xFF800000> : vector<2x64xf32>
    %72 = vector.multi_reduction <maximumf>, %71, %cst_27 [2] : vector<2x64x64xf32> to vector<2x64xf32>
    %73 = vector.shape_cast %72 : vector<2x64xf32> to vector<2x64x1xf32>
    %74 = vector.broadcast %73 : vector<2x64x1xf32> to vector<2x64x64xf32>
    %75 = arith.subf %71, %74 : vector<2x64x64xf32>
    %76 = math.exp %75 : vector<2x64x64xf32>
    %cst_28 = arith.constant dense<0.000000e+00> : vector<2x64xf32>
    %77 = vector.multi_reduction <add>, %76, %cst_28 [2] : vector<2x64x64xf32> to vector<2x64xf32>
    %78 = vector.shape_cast %77 : vector<2x64xf32> to vector<2x64x1xf32>
    %79 = tpu.reciprocal %78 {approx = true} : vector<2x64x1xf32> -> vector<2x64x1xf32>
    %80 = vector.broadcast %79 : vector<2x64x1xf32> to vector<2x64x64xf32>
    %81 = arith.mulf %76, %80 : vector<2x64x64xf32>
    %82 = arith.truncf %81 : vector<2x64x64xf32> to vector<2x64x64xbf16>
    "tpu.trace_start"() <{level = 10 : i32, message = "bqk,bkd->bqd"}> : () -> ()
    %cst_29 = arith.constant dense<0.000000e+00> : vector<2x64x32xf32>
    %83 = tpu.matmul %82, %68, %cst_29 {dimension_numbers = #tpu.dot_dimension_numbers<[2], [1], [1], [2], [0, 0, 0, 1, 1, 2], [0], [0]>} : vector<2x64x64xbf16>, vector<2x64x32xbf16>, vector<2x64x32xf32> -> vector<2x64x32xf32>
    "tpu.trace_stop"() : () -> ()
    %84 = vector.extract_strided_slice %62 {offsets = [0, 0, 32], sizes = [2, 64, 32], strides = [1, 1, 1]} : vector<2x64x384xf32> to vector<2x64x32xf32>
    %85 = arith.truncf %84 : vector<2x64x32xf32> to vector<2x64x32xbf16>
    %86 = vector.extract_strided_slice %62 {offsets = [0, 0, 160], sizes = [2, 64, 32], strides = [1, 1, 1]} : vector<2x64x384xf32> to vector<2x64x32xf32>
    %87 = arith.truncf %86 : vector<2x64x32xf32> to vector<2x64x32xbf16>
    %88 = vector.extract_strided_slice %62 {offsets = [0, 0, 288], sizes = [2, 64, 32], strides = [1, 1, 1]} : vector<2x64x384xf32> to vector<2x64x32xf32>
    %89 = arith.truncf %88 : vector<2x64x32xf32> to vector<2x64x32xbf16>
    "tpu.trace_start"() <{level = 10 : i32, message = "bqd,bkd->bqk"}> : () -> ()
    %cst_30 = arith.constant dense<0.000000e+00> : vector<2x64x64xf32>
    %90 = tpu.matmul %85, %87, %cst_30 {dimension_numbers = #tpu.dot_dimension_numbers<[2], [2], [1], [1], [0, 0, 0, 1, 1, 1], [0], [0]>} : vector<2x64x32xbf16>, vector<2x64x32xbf16>, vector<2x64x64xf32> -> vector<2x64x64xf32>
    "tpu.trace_stop"() : () -> ()
    %cst_31 = arith.constant 0.176776692 : f32
    %91 = vector.broadcast %cst_31 : f32 to vector<2x64x64xf32>
    %92 = arith.mulf %90, %91 : vector<2x64x64xf32>
    %cst_32 = arith.constant dense<0xFF800000> : vector<2x64xf32>
    %93 = vector.multi_reduction <maximumf>, %92, %cst_32 [2] : vector<2x64x64xf32> to vector<2x64xf32>
    %94 = vector.shape_cast %93 : vector<2x64xf32> to vector<2x64x1xf32>
    %95 = vector.broadcast %94 : vector<2x64x1xf32> to vector<2x64x64xf32>
    %96 = arith.subf %92, %95 : vector<2x64x64xf32>
    %97 = math.exp %96 : vector<2x64x64xf32>
    %cst_33 = arith.constant dense<0.000000e+00> : vector<2x64xf32>
    %98 = vector.multi_reduction <add>, %97, %cst_33 [2] : vector<2x64x64xf32> to vector<2x64xf32>
    %99 = vector.shape_cast %98 : vector<2x64xf32> to vector<2x64x1xf32>
    %100 = tpu.reciprocal %99 {approx = true} : vector<2x64x1xf32> -> vector<2x64x1xf32>
    %101 = vector.broadcast %100 : vector<2x64x1xf32> to vector<2x64x64xf32>
    %102 = arith.mulf %97, %101 : vector<2x64x64xf32>
    %103 = arith.truncf %102 : vector<2x64x64xf32> to vector<2x64x64xbf16>
    "tpu.trace_start"() <{level = 10 : i32, message = "bqk,bkd->bqd"}> : () -> ()
    %cst_34 = arith.constant dense<0.000000e+00> : vector<2x64x32xf32>
    %104 = tpu.matmul %103, %89, %cst_34 {dimension_numbers = #tpu.dot_dimension_numbers<[2], [1], [1], [2], [0, 0, 0, 1, 1, 2], [0], [0]>} : vector<2x64x64xbf16>, vector<2x64x32xbf16>, vector<2x64x32xf32> -> vector<2x64x32xf32>
    "tpu.trace_stop"() : () -> ()
    %105 = vector.extract_strided_slice %62 {offsets = [0, 0, 64], sizes = [2, 64, 32], strides = [1, 1, 1]} : vector<2x64x384xf32> to vector<2x64x32xf32>
    %106 = arith.truncf %105 : vector<2x64x32xf32> to vector<2x64x32xbf16>
    %107 = vector.extract_strided_slice %62 {offsets = [0, 0, 192], sizes = [2, 64, 32], strides = [1, 1, 1]} : vector<2x64x384xf32> to vector<2x64x32xf32>
    %108 = arith.truncf %107 : vector<2x64x32xf32> to vector<2x64x32xbf16>
    %109 = vector.extract_strided_slice %62 {offsets = [0, 0, 320], sizes = [2, 64, 32], strides = [1, 1, 1]} : vector<2x64x384xf32> to vector<2x64x32xf32>
    %110 = arith.truncf %109 : vector<2x64x32xf32> to vector<2x64x32xbf16>
    "tpu.trace_start"() <{level = 10 : i32, message = "bqd,bkd->bqk"}> : () -> ()
    %cst_35 = arith.constant dense<0.000000e+00> : vector<2x64x64xf32>
    %111 = tpu.matmul %106, %108, %cst_35 {dimension_numbers = #tpu.dot_dimension_numbers<[2], [2], [1], [1], [0, 0, 0, 1, 1, 1], [0], [0]>} : vector<2x64x32xbf16>, vector<2x64x32xbf16>, vector<2x64x64xf32> -> vector<2x64x64xf32>
    "tpu.trace_stop"() : () -> ()
    %cst_36 = arith.constant 0.176776692 : f32
    %112 = vector.broadcast %cst_36 : f32 to vector<2x64x64xf32>
    %113 = arith.mulf %111, %112 : vector<2x64x64xf32>
    %cst_37 = arith.constant dense<0xFF800000> : vector<2x64xf32>
    %114 = vector.multi_reduction <maximumf>, %113, %cst_37 [2] : vector<2x64x64xf32> to vector<2x64xf32>
    %115 = vector.shape_cast %114 : vector<2x64xf32> to vector<2x64x1xf32>
    %116 = vector.broadcast %115 : vector<2x64x1xf32> to vector<2x64x64xf32>
    %117 = arith.subf %113, %116 : vector<2x64x64xf32>
    %118 = math.exp %117 : vector<2x64x64xf32>
    %cst_38 = arith.constant dense<0.000000e+00> : vector<2x64xf32>
    %119 = vector.multi_reduction <add>, %118, %cst_38 [2] : vector<2x64x64xf32> to vector<2x64xf32>
    %120 = vector.shape_cast %119 : vector<2x64xf32> to vector<2x64x1xf32>
    %121 = tpu.reciprocal %120 {approx = true} : vector<2x64x1xf32> -> vector<2x64x1xf32>
    %122 = vector.broadcast %121 : vector<2x64x1xf32> to vector<2x64x64xf32>
    %123 = arith.mulf %118, %122 : vector<2x64x64xf32>
    %124 = arith.truncf %123 : vector<2x64x64xf32> to vector<2x64x64xbf16>
    "tpu.trace_start"() <{level = 10 : i32, message = "bqk,bkd->bqd"}> : () -> ()
    %cst_39 = arith.constant dense<0.000000e+00> : vector<2x64x32xf32>
    %125 = tpu.matmul %124, %110, %cst_39 {dimension_numbers = #tpu.dot_dimension_numbers<[2], [1], [1], [2], [0, 0, 0, 1, 1, 2], [0], [0]>} : vector<2x64x64xbf16>, vector<2x64x32xbf16>, vector<2x64x32xf32> -> vector<2x64x32xf32>
    "tpu.trace_stop"() : () -> ()
    %126 = vector.extract_strided_slice %62 {offsets = [0, 0, 96], sizes = [2, 64, 32], strides = [1, 1, 1]} : vector<2x64x384xf32> to vector<2x64x32xf32>
    %127 = arith.truncf %126 : vector<2x64x32xf32> to vector<2x64x32xbf16>
    %128 = vector.extract_strided_slice %62 {offsets = [0, 0, 224], sizes = [2, 64, 32], strides = [1, 1, 1]} : vector<2x64x384xf32> to vector<2x64x32xf32>
    %129 = arith.truncf %128 : vector<2x64x32xf32> to vector<2x64x32xbf16>
    %130 = vector.extract_strided_slice %62 {offsets = [0, 0, 352], sizes = [2, 64, 32], strides = [1, 1, 1]} : vector<2x64x384xf32> to vector<2x64x32xf32>
    %131 = arith.truncf %130 : vector<2x64x32xf32> to vector<2x64x32xbf16>
    "tpu.trace_start"() <{level = 10 : i32, message = "bqd,bkd->bqk"}> : () -> ()
    %cst_40 = arith.constant dense<0.000000e+00> : vector<2x64x64xf32>
    %132 = tpu.matmul %127, %129, %cst_40 {dimension_numbers = #tpu.dot_dimension_numbers<[2], [2], [1], [1], [0, 0, 0, 1, 1, 1], [0], [0]>} : vector<2x64x32xbf16>, vector<2x64x32xbf16>, vector<2x64x64xf32> -> vector<2x64x64xf32>
    "tpu.trace_stop"() : () -> ()
    %cst_41 = arith.constant 0.176776692 : f32
    %133 = vector.broadcast %cst_41 : f32 to vector<2x64x64xf32>
    %134 = arith.mulf %132, %133 : vector<2x64x64xf32>
    %cst_42 = arith.constant dense<0xFF800000> : vector<2x64xf32>
    %135 = vector.multi_reduction <maximumf>, %134, %cst_42 [2] : vector<2x64x64xf32> to vector<2x64xf32>
    %136 = vector.shape_cast %135 : vector<2x64xf32> to vector<2x64x1xf32>
    %137 = vector.broadcast %136 : vector<2x64x1xf32> to vector<2x64x64xf32>
    %138 = arith.subf %134, %137 : vector<2x64x64xf32>
    %139 = math.exp %138 : vector<2x64x64xf32>
    %cst_43 = arith.constant dense<0.000000e+00> : vector<2x64xf32>
    %140 = vector.multi_reduction <add>, %139, %cst_43 [2] : vector<2x64x64xf32> to vector<2x64xf32>
    %141 = vector.shape_cast %140 : vector<2x64xf32> to vector<2x64x1xf32>
    %142 = tpu.reciprocal %141 {approx = true} : vector<2x64x1xf32> -> vector<2x64x1xf32>
    %143 = vector.broadcast %142 : vector<2x64x1xf32> to vector<2x64x64xf32>
    %144 = arith.mulf %139, %143 : vector<2x64x64xf32>
    %145 = arith.truncf %144 : vector<2x64x64xf32> to vector<2x64x64xbf16>
    "tpu.trace_start"() <{level = 10 : i32, message = "bqk,bkd->bqd"}> : () -> ()
    %cst_44 = arith.constant dense<0.000000e+00> : vector<2x64x32xf32>
    %146 = tpu.matmul %145, %131, %cst_44 {dimension_numbers = #tpu.dot_dimension_numbers<[2], [1], [1], [2], [0, 0, 0, 1, 1, 2], [0], [0]>} : vector<2x64x64xbf16>, vector<2x64x32xbf16>, vector<2x64x32xf32> -> vector<2x64x32xf32>
    "tpu.trace_stop"() : () -> ()
    %147 = tpu.concatenate %83, %104, %125, %146 in 2 : vector<2x64x32xf32>, vector<2x64x32xf32>, vector<2x64x32xf32>, vector<2x64x32xf32> -> vector<2x64x128xf32>
    %148 = vector.shape_cast %147 : vector<2x64x128xf32> to vector<128x128xf32>
    %149 = arith.truncf %148 : vector<128x128xf32> to vector<128x128xbf16>
    %c0_45 = arith.constant 0 : index
    %c0_46 = arith.constant 0 : index
    %c0_47 = arith.constant 0 : index
    %150 = vector.load %arg7[%c0_45, %c0_46, %c0_47] : memref<1x128x128xbf16, #tpu.memory_space<vmem>>, vector<1x128x128xbf16>
    %151 = vector.shape_cast %150 : vector<1x128x128xbf16> to vector<128x128xbf16>
    %cst_48 = arith.constant dense<0.000000e+00> : vector<128x128xf32>
    %152 = tpu.matmul %149, %151, %cst_48 {dimension_numbers = #tpu.dot_dimension_numbers<[1], [0], [0], [1], [0, 0, 1, 1], [], []>} : vector<128x128xbf16>, vector<128x128xbf16>, vector<128x128xf32> -> vector<128x128xf32>
    %c0_49 = arith.constant 0 : index
    %c0_50 = arith.constant 0 : index
    %c0_51 = arith.constant 0 : index
    %153 = vector.load %arg8[%c0_49, %c0_50, %c0_51] : memref<1x1x128xf32, #tpu.memory_space<vmem>>, vector<1x1x128xf32>
    %154 = vector.shape_cast %153 : vector<1x1x128xf32> to vector<1x128xf32>
    %155 = vector.broadcast %154 : vector<1x128xf32> to vector<128x128xf32>
    %156 = arith.addf %152, %155 : vector<128x128xf32>
    %157 = vector.shape_cast %156 : vector<128x128xf32> to vector<2x64x128xf32>
    %158 = vector.broadcast %24 : vector<2x1x128xf32> to vector<2x64x128xf32>
    %159 = arith.mulf %158, %157 : vector<2x64x128xf32>
    %160 = arith.addf %3, %159 : vector<2x64x128xf32>
    %cst_52 = arith.constant dense<0.000000e+00> : vector<2x64xf32>
    %161 = vector.multi_reduction <add>, %160, %cst_52 [2] : vector<2x64x128xf32> to vector<2x64xf32>
    %162 = vector.shape_cast %161 : vector<2x64xf32> to vector<2x64x1xf32>
    %cst_53 = arith.constant 1.280000e+02 : f32
    %163 = vector.broadcast %cst_53 : f32 to vector<2x64x1xf32>
    %164 = arith.divf %162, %163 : vector<2x64x1xf32>
    %165 = vector.broadcast %164 : vector<2x64x1xf32> to vector<2x64x128xf32>
    %166 = arith.subf %160, %165 : vector<2x64x128xf32>
    %167 = arith.mulf %166, %166 : vector<2x64x128xf32>
    %cst_54 = arith.constant dense<0.000000e+00> : vector<2x64xf32>
    %168 = vector.multi_reduction <add>, %167, %cst_54 [2] : vector<2x64x128xf32> to vector<2x64xf32>
    %169 = vector.shape_cast %168 : vector<2x64xf32> to vector<2x64x1xf32>
    %cst_55 = arith.constant 1.280000e+02 : f32
    %170 = vector.broadcast %cst_55 : f32 to vector<2x64x1xf32>
    %171 = arith.divf %169, %170 : vector<2x64x1xf32>
    %cst_56 = arith.constant 9.99999997E-7 : f32
    %172 = vector.broadcast %cst_56 : f32 to vector<2x64x1xf32>
    %173 = arith.addf %171, %172 : vector<2x64x1xf32>
    %174 = math.rsqrt %173 : vector<2x64x1xf32>
    %175 = vector.broadcast %174 : vector<2x64x1xf32> to vector<2x64x128xf32>
    %176 = arith.mulf %166, %175 : vector<2x64x128xf32>
    %cst_57 = arith.constant 1.000000e+00 : f32
    %177 = vector.broadcast %cst_57 : f32 to vector<2x1x128xf32>
    %178 = arith.addf %177, %28 : vector<2x1x128xf32>
    %179 = vector.broadcast %178 : vector<2x1x128xf32> to vector<2x64x128xf32>
    %180 = arith.mulf %176, %179 : vector<2x64x128xf32>
    %181 = vector.broadcast %26 : vector<2x1x128xf32> to vector<2x64x128xf32>
    %182 = arith.addf %180, %181 : vector<2x64x128xf32>
    %183 = vector.shape_cast %182 : vector<2x64x128xf32> to vector<128x128xf32>
    %184 = arith.truncf %183 : vector<128x128xf32> to vector<128x128xbf16>
    %c0_58 = arith.constant 0 : index
    %c0_59 = arith.constant 0 : index
    %c0_60 = arith.constant 0 : index
    %185 = vector.load %arg9[%c0_58, %c0_59, %c0_60] : memref<1x128x512xbf16, #tpu.memory_space<vmem>>, vector<1x128x512xbf16>
    %186 = vector.shape_cast %185 : vector<1x128x512xbf16> to vector<128x512xbf16>
    %cst_61 = arith.constant dense<0.000000e+00> : vector<128x512xf32>
    %187 = tpu.matmul %184, %186, %cst_61 {dimension_numbers = #tpu.dot_dimension_numbers<[1], [0], [0], [1], [0, 0, 1, 1], [], []>} : vector<128x128xbf16>, vector<128x512xbf16>, vector<128x512xf32> -> vector<128x512xf32>
    %c0_62 = arith.constant 0 : index
    %c0_63 = arith.constant 0 : index
    %c0_64 = arith.constant 0 : index
    %188 = vector.load %arg10[%c0_62, %c0_63, %c0_64] : memref<1x1x512xf32, #tpu.memory_space<vmem>>, vector<1x1x512xf32>
    %189 = vector.shape_cast %188 : vector<1x1x512xf32> to vector<1x512xf32>
    %190 = vector.broadcast %189 : vector<1x512xf32> to vector<128x512xf32>
    %191 = arith.addf %187, %190 : vector<128x512xf32>
    %cst_65 = arith.constant 5.000000e-01 : f32
    %192 = vector.broadcast %cst_65 : f32 to vector<128x512xf32>
    %193 = arith.mulf %192, %191 : vector<128x512xf32>
    %cst_66 = arith.constant 4.471500e-02 : f32
    %194 = vector.broadcast %cst_66 : f32 to vector<128x512xf32>
    %195 = arith.mulf %194, %191 : vector<128x512xf32>
    %196 = arith.mulf %195, %191 : vector<128x512xf32>
    %197 = arith.mulf %196, %191 : vector<128x512xf32>
    %198 = arith.addf %191, %197 : vector<128x512xf32>
    %cst_67 = arith.constant 0.797884583 : f32
    %199 = vector.broadcast %cst_67 : f32 to vector<128x512xf32>
    %200 = arith.mulf %199, %198 : vector<128x512xf32>
    %201 = math.tanh %200 : vector<128x512xf32>
    %cst_68 = arith.constant 1.000000e+00 : f32
    %202 = vector.broadcast %cst_68 : f32 to vector<128x512xf32>
    %203 = arith.addf %202, %201 : vector<128x512xf32>
    %204 = arith.mulf %193, %203 : vector<128x512xf32>
    %205 = arith.truncf %204 : vector<128x512xf32> to vector<128x512xbf16>
    %c0_69 = arith.constant 0 : index
    %c0_70 = arith.constant 0 : index
    %c0_71 = arith.constant 0 : index
    %206 = vector.load %arg11[%c0_69, %c0_70, %c0_71] : memref<1x512x128xbf16, #tpu.memory_space<vmem>>, vector<1x512x128xbf16>
    %207 = vector.shape_cast %206 : vector<1x512x128xbf16> to vector<512x128xbf16>
    %cst_72 = arith.constant dense<0.000000e+00> : vector<128x128xf32>
    %208 = tpu.matmul %205, %207, %cst_72 {dimension_numbers = #tpu.dot_dimension_numbers<[1], [0], [0], [1], [0, 0, 1, 1], [], []>} : vector<128x512xbf16>, vector<512x128xbf16>, vector<128x128xf32> -> vector<128x128xf32>
    %c0_73 = arith.constant 0 : index
    %c0_74 = arith.constant 0 : index
    %c0_75 = arith.constant 0 : index
    %209 = vector.load %arg12[%c0_73, %c0_74, %c0_75] : memref<1x1x128xf32, #tpu.memory_space<vmem>>, vector<1x1x128xf32>
    %210 = vector.shape_cast %209 : vector<1x1x128xf32> to vector<1x128xf32>
    %211 = vector.broadcast %210 : vector<1x128xf32> to vector<128x128xf32>
    %212 = arith.addf %208, %211 : vector<128x128xf32>
    %213 = vector.shape_cast %212 : vector<128x128xf32> to vector<2x64x128xf32>
    %214 = vector.broadcast %30 : vector<2x1x128xf32> to vector<2x64x128xf32>
    %215 = arith.mulf %214, %213 : vector<2x64x128xf32>
    %216 = arith.addf %160, %215 : vector<2x64x128xf32>
    %c0_76 = arith.constant 0 : index
    %c0_77 = arith.constant 0 : index
    %c0_78 = arith.constant 0 : index
    %217 = vector.load %arg18[%c0_76, %c0_77, %c0_78] : memref<2x64x128xf32, #tpu.memory_space<vmem>>, vector<2x64x128xf32>
    tpu.vector_store %arg18[%c0_76, %c0_77, %c0_78], %216 {strides = array<i32>} : memref<2x64x128xf32, #tpu.memory_space<vmem>>, vector<2x64x128xf32>,
    %c1_i32 = arith.constant 1 : i32
    %218 = arith.cmpi eq, %arg0, %c1_i32 : i32
    %219 = arith.extui %218 : i1 to i32
    %c0_i32_79 = arith.constant 0 : i32
    %220 = arith.cmpi ne, %219, %c0_i32_79 : i32
    scf.if %220 {
      %c0_80 = arith.constant 0 : index
      %c0_81 = arith.constant 0 : index
      %221 = vector.load %arg13[%c0_80, %c0_81] : memref<128x256xbf16, #tpu.memory_space<vmem>>, vector<128x256xbf16>
      %cst_82 = arith.constant dense<0.000000e+00> : vector<2x256xf32>
      %222 = tpu.matmul %11, %221, %cst_82 {dimension_numbers = #tpu.dot_dimension_numbers<[1], [0], [0], [1], [0, 0, 1, 1], [], []>} : vector<2x128xbf16>, vector<128x256xbf16>, vector<2x256xf32> -> vector<2x256xf32>
      %c0_83 = arith.constant 0 : index
      %c0_84 = arith.constant 0 : index
      %223 = vector.load %arg14[%c0_83, %c0_84] : memref<1x256xf32, #tpu.memory_space<vmem>>, vector<1x256xf32>
      %224 = vector.broadcast %223 : vector<1x256xf32> to vector<2x256xf32>
      %225 = arith.addf %222, %224 : vector<2x256xf32>
      %226 = vector.extract_strided_slice %225 {offsets = [0, 0], sizes = [2, 128], strides = [1, 1]} : vector<2x256xf32> to vector<2x128xf32>
      %227 = vector.shape_cast %226 : vector<2x128xf32> to vector<2x1x128xf32>
      %228 = vector.extract_strided_slice %225 {offsets = [0, 128], sizes = [2, 128], strides = [1, 1]} : vector<2x256xf32> to vector<2x128xf32>
      %229 = vector.shape_cast %228 : vector<2x128xf32> to vector<2x1x128xf32>
      %cst_85 = arith.constant dense<0.000000e+00> : vector<2x64xf32>
      %230 = vector.multi_reduction <add>, %216, %cst_85 [2] : vector<2x64x128xf32> to vector<2x64xf32>
      %231 = vector.shape_cast %230 : vector<2x64xf32> to vector<2x64x1xf32>
      %cst_86 = arith.constant 1.280000e+02 : f32
      %232 = vector.broadcast %cst_86 : f32 to vector<2x64x1xf32>
      %233 = arith.divf %231, %232 : vector<2x64x1xf32>
      %234 = vector.broadcast %233 : vector<2x64x1xf32> to vector<2x64x128xf32>
      %235 = arith.subf %216, %234 : vector<2x64x128xf32>
      %236 = arith.mulf %235, %235 : vector<2x64x128xf32>
      %cst_87 = arith.constant dense<0.000000e+00> : vector<2x64xf32>
      %237 = vector.multi_reduction <add>, %236, %cst_87 [2] : vector<2x64x128xf32> to vector<2x64xf32>
      %238 = vector.shape_cast %237 : vector<2x64xf32> to vector<2x64x1xf32>
      %cst_88 = arith.constant 1.280000e+02 : f32
      %239 = vector.broadcast %cst_88 : f32 to vector<2x64x1xf32>
      %240 = arith.divf %238, %239 : vector<2x64x1xf32>
      %cst_89 = arith.constant 9.99999997E-7 : f32
      %241 = vector.broadcast %cst_89 : f32 to vector<2x64x1xf32>
      %242 = arith.addf %240, %241 : vector<2x64x1xf32>
      %243 = math.rsqrt %242 : vector<2x64x1xf32>
      %244 = vector.broadcast %243 : vector<2x64x1xf32> to vector<2x64x128xf32>
      %245 = arith.mulf %235, %244 : vector<2x64x128xf32>
      %cst_90 = arith.constant 1.000000e+00 : f32
      %246 = vector.broadcast %cst_90 : f32 to vector<2x1x128xf32>
      %247 = arith.addf %246, %229 : vector<2x1x128xf32>
      %248 = vector.broadcast %247 : vector<2x1x128xf32> to vector<2x64x128xf32>
      %249 = arith.mulf %245, %248 : vector<2x64x128xf32>
      %250 = vector.broadcast %227 : vector<2x1x128xf32> to vector<2x64x128xf32>
      %251 = arith.addf %249, %250 : vector<2x64x128xf32>
      %252 = vector.shape_cast %251 : vector<2x64x128xf32> to vector<128x128xf32>
      %253 = arith.truncf %252 : vector<128x128xf32> to vector<128x128xbf16>
      %c0_91 = arith.constant 0 : index
      %c0_92 = arith.constant 0 : index
      %254 = vector.load %arg15[%c0_91, %c0_92] : memref<128x128xbf16, #tpu.memory_space<vmem>>, vector<128x128xbf16>
      %cst_93 = arith.constant dense<0.000000e+00> : vector<128x128xf32>
      %255 = tpu.matmul %253, %254, %cst_93 {dimension_numbers = #tpu.dot_dimension_numbers<[1], [0], [0], [1], [0, 0, 1, 1], [], []>} : vector<128x128xbf16>, vector<128x128xbf16>, vector<128x128xf32> -> vector<128x128xf32>
      %c0_94 = arith.constant 0 : index
      %c0_95 = arith.constant 0 : index
      %256 = vector.load %arg16[%c0_94, %c0_95] : memref<1x128xf32, #tpu.memory_space<vmem>>, vector<1x128xf32>
      %257 = vector.broadcast %256 : vector<1x128xf32> to vector<128x128xf32>
      %258 = arith.addf %255, %257 : vector<128x128xf32>
      %259 = vector.shape_cast %258 : vector<128x128xf32> to vector<2x64x128xf32>
      %c0_96 = arith.constant 0 : index
      %c0_97 = arith.constant 0 : index
      %c0_98 = arith.constant 0 : index
      %260 = vector.load %arg17[%c0_96, %c0_97, %c0_98] : memref<2x64x128xf32, #tpu.memory_space<vmem>>, vector<2x64x128xf32>
      tpu.vector_store %arg17[%c0_96, %c0_97, %c0_98], %259 {strides = array<i32>} : memref<2x64x128xf32, #tpu.memory_space<vmem>>, vector<2x64x128xf32>,
    } else {
    }
    return
  }
  func.func @transform_0(%arg0: i32) -> (i32, i32, i32) {
    %c0_i32 = arith.constant 0 : i32
    %c0_i32_0 = arith.constant 0 : i32
    %c0_i32_1 = arith.constant 0 : i32
    %c0_i32_2 = arith.constant 0 : i32
    return %c0_i32, %c0_i32_0, %c0_i32_1 : i32, i32, i32
  }
  func.func @transform_1(%arg0: i32) -> (i32, i32) {
    %c0_i32 = arith.constant 0 : i32
    %c0_i32_0 = arith.constant 0 : i32
    %c0_i32_1 = arith.constant 0 : i32
    return %c0_i32, %c0_i32_0 : i32, i32
  }
  func.func @transform_2(%arg0: i32) -> (i32, i32, i32) {
    %c0_i32 = arith.constant 0 : i32
    %c0_i32_0 = arith.constant 0 : i32
    %c0_i32_1 = arith.constant 0 : i32
    return %arg0, %c0_i32, %c0_i32_0 : i32, i32, i32
  }
  func.func @transform_3(%arg0: i32) -> (i32, i32, i32) {
    %c0_i32 = arith.constant 0 : i32
    %c0_i32_0 = arith.constant 0 : i32
    %c0_i32_1 = arith.constant 0 : i32
    return %arg0, %c0_i32, %c0_i32_0 : i32, i32, i32
  }
  func.func @transform_4(%arg0: i32) -> (i32, i32, i32) {
    %c0_i32 = arith.constant 0 : i32
    %c0_i32_0 = arith.constant 0 : i32
    %c0_i32_1 = arith.constant 0 : i32
    return %arg0, %c0_i32, %c0_i32_0 : i32, i32, i32
  }
  func.func @transform_5(%arg0: i32) -> (i32, i32, i32) {
    %c0_i32 = arith.constant 0 : i32
    %c0_i32_0 = arith.constant 0 : i32
    %c0_i32_1 = arith.constant 0 : i32
    return %arg0, %c0_i32, %c0_i32_0 : i32, i32, i32
  }
  func.func @transform_6(%arg0: i32) -> (i32, i32, i32) {
    %c0_i32 = arith.constant 0 : i32
    %c0_i32_0 = arith.constant 0 : i32
    %c0_i32_1 = arith.constant 0 : i32
    return %arg0, %c0_i32, %c0_i32_0 : i32, i32, i32
  }
  func.func @transform_7(%arg0: i32) -> (i32, i32, i32) {
    %c0_i32 = arith.constant 0 : i32
    %c0_i32_0 = arith.constant 0 : i32
    %c0_i32_1 = arith.constant 0 : i32
    return %arg0, %c0_i32, %c0_i32_0 : i32, i32, i32
  }
  func.func @transform_8(%arg0: i32) -> (i32, i32, i32) {
    %c0_i32 = arith.constant 0 : i32
    %c0_i32_0 = arith.constant 0 : i32
    %c0_i32_1 = arith.constant 0 : i32
    return %arg0, %c0_i32, %c0_i32_0 : i32, i32, i32
  }
  func.func @transform_9(%arg0: i32) -> (i32, i32, i32) {
    %c0_i32 = arith.constant 0 : i32
    %c0_i32_0 = arith.constant 0 : i32
    %c0_i32_1 = arith.constant 0 : i32
    return %arg0, %c0_i32, %c0_i32_0 : i32, i32, i32
  }
  func.func @transform_10(%arg0: i32) -> (i32, i32, i32) {
    %c0_i32 = arith.constant 0 : i32
    %c0_i32_0 = arith.constant 0 : i32
    %c0_i32_1 = arith.constant 0 : i32
    return %arg0, %c0_i32, %c0_i32_0 : i32, i32, i32
  }
  func.func @transform_11(%arg0: i32) -> (i32, i32, i32) {
    %c0_i32 = arith.constant 0 : i32
    %c0_i32_0 = arith.constant 0 : i32
    %c0_i32_1 = arith.constant 0 : i32
    return %arg0, %c0_i32, %c0_i32_0 : i32, i32, i32
  }
  func.func @transform_12(%arg0: i32) -> (i32, i32) {
    %c0_i32 = arith.constant 0 : i32
    %c0_i32_0 = arith.constant 0 : i32
    %c0_i32_1 = arith.constant 0 : i32
    return %c0_i32, %c0_i32_0 : i32, i32
  }
  func.func @transform_13(%arg0: i32) -> (i32, i32) {
    %c0_i32 = arith.constant 0 : i32
    %c0_i32_0 = arith.constant 0 : i32
    %c0_i32_1 = arith.constant 0 : i32
    return %c0_i32, %c0_i32_0 : i32, i32
  }
  func.func @transform_14(%arg0: i32) -> (i32, i32) {
    %c0_i32 = arith.constant 0 : i32
    %c0_i32_0 = arith.constant 0 : i32
    %c0_i32_1 = arith.constant 0 : i32
    return %c0_i32, %c0_i32_0 : i32, i32
  }
  func.func @transform_15(%arg0: i32) -> (i32, i32) {
    %c0_i32 = arith.constant 0 : i32
    %c0_i32_0 = arith.constant 0 : i32
    %c0_i32_1 = arith.constant 0 : i32
    return %c0_i32, %c0_i32_0 : i32, i32
  }
  func.func @transform_16(%arg0: i32) -> (i32, i32, i32) {
    %c0_i32 = arith.constant 0 : i32
    %c0_i32_0 = arith.constant 0 : i32
    %c0_i32_1 = arith.constant 0 : i32
    %c0_i32_2 = arith.constant 0 : i32
    return %c0_i32, %c0_i32_0, %c0_i32_1 : i32, i32, i32
  }
}

</mosaic_0001>

<llo_original>
// kernel: _lambda_.4
$region0: #{_lambda_.4}
  #allocation0 [shape = 'u32[]', space=smem, size = 0x4, offset = 0x4, fixed_abs, tag = 'smem constant byte address 0x4 - core index']
  #allocation1 [shape = 'u32[72,128]{1,0:T(1,128)}', space=vmem, size = 0x9000, scoped, tag = 'internal scratch']
  %s0 = inlined_call_operand.vmem [shape: f32[2,256], index: 0, kind: input, shape index: {}]
  %s1 = inlined_call_operand.hbm [shape: f32[256,128], index: 1, kind: input, shape index: {}]
  %s2 = inlined_call_operand.vmem [shape: f32[1,128], index: 2, kind: input, shape index: {}]
  %s3 = inlined_call_operand.hbm [shape: f32[128,128], index: 3, kind: input, shape index: {}]
  %s4 = inlined_call_operand.vmem [shape: f32[1,128], index: 4, kind: input, shape index: {}]
  %s5 = inlined_call_operand.vmem [shape: f32[2,128], index: 5, kind: input, shape index: {}]
  %s6 = inlined_call_operand.vmem [shape: f32[2,128], index: 6, kind: output, shape index: {}]
  %s7 = sld [smem:[#allocation0]]
  $region42: #{_lambda_.4} parent=0
    _
  %s9 = ssub.s32 1, %s7
  %s10 = scalar_select 0, %s9, %s7
  $region1: #{_lambda_.4} parent=0
    #allocation2 [shape = 'u8[131072]{0}', space=vmem, size = 0x20000, scoped, tag = 'input window, operand 1, single buffered']
    #allocation3 [shape = 's32[1]{0}', space=sflag, size = 0x4, scoped, tag = 'scoped memory for _lambda_.4']
    #allocation4 [shape = 'u8[65536]{0}', space=vmem, size = 0x10000, scoped, tag = 'input window, operand 3, single buffered']
    #allocation5 [shape = 's32[1]{0}', space=sflag, size = 0x4, scoped, tag = 'scoped memory for _lambda_.4']
    %11 = vsyncpa [#allocation3], 0
    %12 = vsyncpa [#allocation5], 0
    // Predicated region
    $region2: #{_lambda_.4} parent=1 // pred_check
      _
    $region3: #{_lambda_.4} parent=1 // pred_check_branch
      %14 = sbr.rel (0) target = $region5
    $region4: #{_lambda_.4} parent=1 // pred_region
      _
    $region5: #{_lambda_.4} parent=1 // pred_fallthru
      _
    // Predicated region
    $region6: #{_lambda_.4} parent=1 // pred_check
      _
    $region7: #{_lambda_.4} parent=1 // pred_check_branch
      %16 = sbr.rel (0) target = $region9
    $region8: #{_lambda_.4} parent=1 // pred_region
      %18 = vsyncadd [#allocation3], 0
      %s19 = sshll.u32 %s1, 4
      %s20 = int_to_ptr.hbm [resolvable:$true] %s19
      %s21 = sshll.u32 [#allocation2], 4
      %s22 = int_to_ptr.vmem [resolvable:$true] %s21
      %27 = dma.hbm_to_vmem [thread:$0]  %s20, 4096, %s22, [#allocation3], 128, 128, 8
    $region9: #{_lambda_.4} parent=1 // pred_fallthru
      _
    // Predicated region
    $region10: #{_lambda_.4} parent=1 // pred_check
      _
    $region11: #{_lambda_.4} parent=1 // pred_check_branch
      %29 = sbr.rel (0) target = $region13
    $region12: #{_lambda_.4} parent=1 // pred_region
      _
    $region13: #{_lambda_.4} parent=1 // pred_fallthru
      _
    // Predicated region
    $region14: #{_lambda_.4} parent=1 // pred_check
      _
    $region15: #{_lambda_.4} parent=1 // pred_check_branch
      %31 = sbr.rel (0) target = $region17
    $region16: #{_lambda_.4} parent=1 // pred_region
      %33 = vsyncadd [#allocation5], 0
      %s34 = sshll.u32 %s3, 4
      %s35 = int_to_ptr.hbm [resolvable:$true] %s34
      %s36 = sshll.u32 [#allocation4], 4
      %s37 = int_to_ptr.vmem [resolvable:$true] %s36
      %42 = dma.hbm_to_vmem [thread:$0]  %s35, 2048, %s37, [#allocation5], 128, 128, 8
    $region17: #{_lambda_.4} parent=1 // pred_fallthru
      _
    // Predicated region
    $region18: #{_lambda_.4} parent=1 // pred_check
      _
    $region19: #{_lambda_.4} parent=1 // pred_check_branch
      %44 = sbr.rel (0) target = $region21
    $region20: #{_lambda_.4} parent=1 // pred_region
      _
    $region21: #{_lambda_.4} parent=1 // pred_fallthru
      _
    // Predicated region
    $region22: #{_lambda_.4} parent=1 // pred_check
      _
    $region23: #{_lambda_.4} parent=1 // pred_check_branch
      %46 = sbr.rel (0) target = $region25
    $region24: #{_lambda_.4} parent=1 // pred_region
      _
    $region25: #{_lambda_.4} parent=1 // pred_fallthru
      _
    // Predicated region
    $region26: #{_lambda_.4} parent=1 // pred_check
      _
    $region27: #{_lambda_.4} parent=1 // pred_check_branch
      %48 = sbr.rel (0) target = $region29
    $region28: #{_lambda_.4} parent=1 // pred_region
      %50 = dma.done [#allocation3], 4096
    $region29: #{_lambda_.4} parent=1 // pred_fallthru
      _
    // Predicated region
    $region30: #{_lambda_.4} parent=1 // pred_check
      _
    $region31: #{_lambda_.4} parent=1 // pred_check_branch
      %52 = sbr.rel (0) target = $region33
    $region32: #{_lambda_.4} parent=1 // pred_region
      %54 = dma.done [#allocation5], 2048
    $region33: #{_lambda_.4} parent=1 // pred_fallthru
      _
    %v55 = vld [vmem:[%s0] sm:$0xf]
    %v56 = vld [vmem:[#allocation2] sm:$0xff]
    %v57 = vld [vmem:[#allocation2 + $0x8] sm:$0xff]
    %v58 = vld [vmem:[#allocation2 + $0x10] sm:$0xff]
    %v59 = vld [vmem:[#allocation2 + $0x18] sm:$0xff]
    %v60 = vld [vmem:[#allocation2 + $0x20] sm:$0xff]
    %v61 = vld [vmem:[#allocation2 + $0x28] sm:$0xff]
    %v62 = vld [vmem:[#allocation2 + $0x30] sm:$0xff]
    %v63 = vld [vmem:[#allocation2 + $0x38] sm:$0xff]
    %v64 = vld [vmem:[#allocation2 + $0x40] sm:$0xff]
    %v65 = vld [vmem:[#allocation2 + $0x48] sm:$0xff]
    %v66 = vld [vmem:[#allocation2 + $0x50] sm:$0xff]
    %v67 = vld [vmem:[#allocation2 + $0x58] sm:$0xff]
    %v68 = vld [vmem:[#allocation2 + $0x60] sm:$0xff]
    %v69 = vld [vmem:[#allocation2 + $0x68] sm:$0xff]
    %v70 = vld [vmem:[#allocation2 + $0x70] sm:$0xff]
    %v71 = vld [vmem:[#allocation2 + $0x78] sm:$0xff]
    %v72 = vld [vmem:[#allocation2 + $0x80] sm:$0xff]
    %v73 = vld [vmem:[#allocation2 + $0x88] sm:$0xff]
    %v74 = vld [vmem:[#allocation2 + $0x90] sm:$0xff]
    %v75 = vld [vmem:[#allocation2 + $0x98] sm:$0xff]
    %v76 = vld [vmem:[#allocation2 + $0xa0] sm:$0xff]
    %v77 = vld [vmem:[#allocation2 + $0xa8] sm:$0xff]
    %v78 = vld [vmem:[#allocation2 + $0xb0] sm:$0xff]
    %v79 = vld [vmem:[#allocation2 + $0xb8] sm:$0xff]
    %v80 = vld [vmem:[#allocation2 + $0xc0] sm:$0xff]
    %v81 = vld [vmem:[#allocation2 + $0xc8] sm:$0xff]
    %v82 = vld [vmem:[#allocation2 + $0xd0] sm:$0xff]
    %v83 = vld [vmem:[#allocation2 + $0xd8] sm:$0xff]
    %v84 = vld [vmem:[#allocation2 + $0xe0] sm:$0xff]
    %v85 = vld [vmem:[#allocation2 + $0xe8] sm:$0xff]
    %v86 = vld [vmem:[#allocation2 + $0xf0] sm:$0xff]
    %v87 = vld [vmem:[#allocation2 + $0xf8] sm:$0xff]
    %v88 = vld [vmem:[%s2] sm:$0x1]
    %v90 = vperm.slane %v88, 0
    %93 = vst [vmem:[#allocation1] ss:$4 sm:$0xff] %v55
    %v94 = vld.sshfl [vmem:[#allocation1] sm:$0xff pattern:$0x73625140]
    %v95 = vld.sshfl [vmem:[#allocation1 + $0x8] sm:$0xff pattern:$0x73625140]
    %98 = vmatpush.msra.mxu0 %v71
    %99 = vmatpush.msra.mxu0 %v70
    %100 = vmatpush.msra.mxu0 %v69
    %101 = vmatpush.msra.mxu0 %v68
    %102 = vmatpush.msra.mxu0 %v67
    %103 = vmatpush.msra.mxu0 %v66
    %104 = vmatpush.msra.mxu0 %v65
    %105 = vmatpush.msra.mxu0 %v64
    %106 = vmatpush.msra.mxu0 %v63
    %107 = vmatpush.msra.mxu0 %v62
    %108 = vmatpush.msra.mxu0 %v61
    %109 = vmatpush.msra.mxu0 %v60
    %110 = vmatpush.msra.mxu0 %v59
    %111 = vmatpush.msra.mxu0 %v58
    %112 = vmatpush.msra.mxu0 %v57
    %113 = vmatpush.msra.mxu0 %v56
    %114 = vmatmul.f32.gmra.mxu0 %v94
    %v115 = vpop.f32.mrf.mxu0
    %v116 = vadd.f32 %v90, %v115
    %117 = vdwg.mxu0
    %118 = vmatpush.msra.mxu0 %v87
    %119 = vmatpush.msra.mxu0 %v86
    %120 = vmatpush.msra.mxu0 %v85
    %121 = vmatpush.msra.mxu0 %v84
    %122 = vmatpush.msra.mxu0 %v83
    %123 = vmatpush.msra.mxu0 %v82
    %124 = vmatpush.msra.mxu0 %v81
    %125 = vmatpush.msra.mxu0 %v80
    %126 = vmatpush.msra.mxu0 %v79
    %127 = vmatpush.msra.mxu0 %v78
    %128 = vmatpush.msra.mxu0 %v77
    %129 = vmatpush.msra.mxu0 %v76
    %130 = vmatpush.msra.mxu0 %v75
    %131 = vmatpush.msra.mxu0 %v74
    %132 = vmatpush.msra.mxu0 %v73
    %133 = vmatpush.msra.mxu0 %v72
    %134 = vmatmul.f32.gmra.mxu0 %v95
    %v135 = vpop.f32.mrf.mxu0
    %v136 = vadd.f32 %v116, %v135
    %137 = vdwg.mxu0
    %v138 = vxor.u32 %v136, 2147483648
    %v139 = vmul.f32 %v138, 1.442695
    %v140 = vpow.pop %v139
    %v141 = vadd.f32 %v140, 1.0
    %v142 = vrcp.pop %v141
    %v143 = vmul.f32 %v141, %v142
    %v144 = vsub.f32 1.0, %v143
    %v145 = vmul.f32 %v142, %v144
    %v146 = vadd.f32 %v142, %v145
    %vm147 = vweird.f32 %v141
    %vm148 = vweird.f32 %v142
    %vm149 = vmor %vm147, %vm148
    %v150 = vsel %vm149, %v142, %v146
    %v151 = vand.u32 2147483647, %v141
    %vm152 = vcmp.eq.f32.partialorder %v151, 8.507059e+37
    %v153 = vand.u32 %v141, 2147483648
    %v154 = vor.u32 1.1754944e-38, %v153
    %v155 = vsel %vm152, %v154, %v150
    %v156 = vmul.f32 1.0, %v155
    %v157 = vmul.f32 %v136, %v156
    %v158 = vld [vmem:[#allocation4] sm:$0xff]
    %v159 = vld [vmem:[#allocation4 + $0x8] sm:$0xff]
    %v160 = vld [vmem:[#allocation4 + $0x10] sm:$0xff]
    %v161 = vld [vmem:[#allocation4 + $0x18] sm:$0xff]
    %v162 = vld [vmem:[#allocation4 + $0x20] sm:$0xff]
    %v163 = vld [vmem:[#allocation4 + $0x28] sm:$0xff]
    %v164 = vld [vmem:[#allocation4 + $0x30] sm:$0xff]
    %v165 = vld [vmem:[#allocation4 + $0x38] sm:$0xff]
    %v166 = vld [vmem:[#allocation4 + $0x40] sm:$0xff]
    %v167 = vld [vmem:[#allocation4 + $0x48] sm:$0xff]
    %v168 = vld [vmem:[#allocation4 + $0x50] sm:$0xff]
    %v169 = vld [vmem:[#allocation4 + $0x58] sm:$0xff]
    %v170 = vld [vmem:[#allocation4 + $0x60] sm:$0xff]
    %v171 = vld [vmem:[#allocation4 + $0x68] sm:$0xff]
    %v172 = vld [vmem:[#allocation4 + $0x70] sm:$0xff]
    %v173 = vld [vmem:[#allocation4 + $0x78] sm:$0xff]
    %v174 = vld [vmem:[%s4] sm:$0x1]
    %v176 = vperm.slane %v174, 0
    %178 = vmatpush.msra.mxu0 %v173
    %179 = vmatpush.msra.mxu0 %v172
    %180 = vmatpush.msra.mxu0 %v171
    %181 = vmatpush.msra.mxu0 %v170
    %182 = vmatpush.msra.mxu0 %v169
    %183 = vmatpush.msra.mxu0 %v168
    %184 = vmatpush.msra.mxu0 %v167
    %185 = vmatpush.msra.mxu0 %v166
    %186 = vmatpush.msra.mxu0 %v165
    %187 = vmatpush.msra.mxu0 %v164
    %188 = vmatpush.msra.mxu0 %v163
    %189 = vmatpush.msra.mxu0 %v162
    %190 = vmatpush.msra.mxu0 %v161
    %191 = vmatpush.msra.mxu0 %v160
    %192 = vmatpush.msra.mxu0 %v159
    %193 = vmatpush.msra.mxu0 %v158
    %194 = vmatmul.f32.gmra.mxu0 %v157
    %v195 = vpop.f32.mrf.mxu0
    %v196 = vadd.f32 %v176, %v195
    %197 = vdwg.mxu0
    %v198 = vld [vmem:[%s5] sm:$0x3]
    %v199 = vadd.f32 %v196, %v198
    %200 = vst [vmem:[%s6] sm:$0x3] %v199
    // Predicated region
    $region34: #{_lambda_.4} parent=1 // pred_check
      _
    $region35: #{_lambda_.4} parent=1 // pred_check_branch
      %202 = sbr.rel (0) target = $region37
    $region36: #{_lambda_.4} parent=1 // pred_region
      _
    $region37: #{_lambda_.4} parent=1 // pred_fallthru
      _
    // Predicated region
    $region38: #{_lambda_.4} parent=1 // pred_check
      _
    $region39: #{_lambda_.4} parent=1 // pred_check_branch
      %204 = sbr.rel (0) target = $region41
    $region40: #{_lambda_.4} parent=1 // pred_region
      _
    $region41: #{_lambda_.4} parent=1 // pred_fallthru
      _
    %205 = vsyncpa [#allocation3], 1
    %206 = vsyncpa [#allocation5], 1

// kernel: _lambda_.3
$region0: #{_lambda_.3}
  #allocation0 [shape = 'u32[]', space=smem, size = 0x4, offset = 0x4, fixed_abs, tag = 'smem constant byte address 0x4 - core index']
  #allocation1 [shape = 'u32[72,128]{1,0:T(1,128)}', space=vmem, size = 0x9000, scoped, tag = 'internal scratch']
  %s0 = inlined_call_operand.vmem [shape: f32[128,4], index: 0, kind: input, shape index: {}]
  %s1 = inlined_call_operand.vmem [shape: bf16[4,128], index: 1, kind: input, shape index: {}]
  %s2 = inlined_call_operand.vmem [shape: f32[1,128], index: 2, kind: input, shape index: {}]
  %s3 = inlined_call_operand.vmem [shape: f32[64,128], index: 3, kind: input, shape index: {}]
  %s4 = inlined_call_operand.vmem [shape: f32[2,64,128], index: 4, kind: output, shape index: {}]
  %s5 = sld [smem:[#allocation0]]
  $region26: #{_lambda_.3} parent=0
    _
  %s7 = ssub.s32 1, %s5
  %s8 = scalar_select 0, %s7, %s5
  // Predicated region
  $region2: #{_lambda_.3} parent=0 // pred_check
    _
  $region3: #{_lambda_.3} parent=0 // pred_check_branch
    %10 = sbr.rel (0) target = $region5
  $region4: #{_lambda_.3} parent=0 // pred_region
    _
  $region5: #{_lambda_.3} parent=0 // pred_fallthru
    _
  // Predicated region
  $region6: #{_lambda_.3} parent=0 // pred_check
    _
  $region7: #{_lambda_.3} parent=0 // pred_check_branch
    %12 = sbr.rel (0) target = $region9
  $region8: #{_lambda_.3} parent=0 // pred_region
    _
  $region9: #{_lambda_.3} parent=0 // pred_fallthru
    _
  // Predicated region
  $region10: #{_lambda_.3} parent=0 // pred_check
    _
  $region11: #{_lambda_.3} parent=0 // pred_check_branch
    %14 = sbr.rel (0) target = $region13
  $region12: #{_lambda_.3} parent=0 // pred_region
    _
  $region13: #{_lambda_.3} parent=0 // pred_fallthru
    _
  // Predicated region
  $region14: #{_lambda_.3} parent=0 // pred_check
    _
  $region15: #{_lambda_.3} parent=0 // pred_check_branch
    %16 = sbr.rel (0) target = $region17
  $region16: #{_lambda_.3} parent=0 // pred_region
    _
  $region17: #{_lambda_.3} parent=0 // pred_fallthru
    _
  %v18 = vld [vmem:[%s0] sm:$0xff]
  %v19 = vld [vmem:[%s0 + $0x8] sm:$0xff]
  %v20 = vld [vmem:[%s0 + $0x10] sm:$0xff]
  %v21 = vld [vmem:[%s0 + $0x18] sm:$0xff]
  %v22 = vld [vmem:[%s0 + $0x20] sm:$0xff]
  %v23 = vld [vmem:[%s0 + $0x28] sm:$0xff]
  %v24 = vld [vmem:[%s0 + $0x30] sm:$0xff]
  %v25 = vld [vmem:[%s0 + $0x38] sm:$0xff]
  %v26 = vld [vmem:[%s0 + $0x40] sm:$0xff]
  %v27 = vld [vmem:[%s0 + $0x48] sm:$0xff]
  %v28 = vld [vmem:[%s0 + $0x50] sm:$0xff]
  %v29 = vld [vmem:[%s0 + $0x58] sm:$0xff]
  %v30 = vld [vmem:[%s0 + $0x60] sm:$0xff]
  %v31 = vld [vmem:[%s0 + $0x68] sm:$0xff]
  %v32 = vld [vmem:[%s0 + $0x70] sm:$0xff]
  %v33 = vld [vmem:[%s0 + $0x78] sm:$0xff]
  %v34 = vpack.c.bf16 %v19, %v18
  %v35 = vpack.c.bf16 %v21, %v20
  %v36 = vpack.c.bf16 %v23, %v22
  %v37 = vpack.c.bf16 %v25, %v24
  %v38 = vpack.c.bf16 %v27, %v26
  %v39 = vpack.c.bf16 %v29, %v28
  %v40 = vpack.c.bf16 %v31, %v30
  %v41 = vpack.c.bf16 %v33, %v32
  %v42 = vld [vmem:[%s1] sm:$0x3]
  %v43 = vld [vmem:[%s2] sm:$0x1]
  %v45 = vperm.slane %v43, 0
  %vm47 = vcmask 31744
  %v49 = vsel %vm47, %v34, 0
  %v52 = vsel %vm47, %v35, 0
  %v55 = vsel %vm47, %v36, 0
  %v58 = vsel %vm47, %v37, 0
  %v61 = vsel %vm47, %v38, 0
  %v64 = vsel %vm47, %v39, 0
  %v67 = vsel %vm47, %v40, 0
  %v70 = vsel %vm47, %v41, 0
  %vm72 = vcmask 1041408
  %v74 = vsel %vm72, %v42, 0
  %76 = vmatpush.bf16.msra.mxu0 0
  %77 = vmatpush.bf16.msra.mxu0 0
  %78 = vmatpush.bf16.msra.mxu0 0
  %79 = vmatpush.bf16.msra.mxu0 0
  %80 = vmatpush.bf16.msra.mxu0 0
  %81 = vmatpush.bf16.msra.mxu0 0
  %82 = vmatpush.bf16.msra.mxu0 0
  %83 = vmatpush.bf16.msra.mxu0 %v74
  %84 = vmatmul.bf16.gmra.mxu0 %v49
  %v85 = vpop.f32.mrf.mxu0
  %v86 = vadd.f32 %v45, %v85
  %v87 = vpop.f32.mrf.mxu0
  %v88 = vadd.f32 %v45, %v87
  %89 = vmatmul.bf16.gmra.mxu0 %v52
  %v90 = vpop.f32.mrf.mxu0
  %v91 = vadd.f32 %v45, %v90
  %v92 = vpop.f32.mrf.mxu0
  %v93 = vadd.f32 %v45, %v92
  %94 = vmatmul.bf16.gmra.mxu0 %v55
  %v95 = vpop.f32.mrf.mxu0
  %v96 = vadd.f32 %v45, %v95
  %v97 = vpop.f32.mrf.mxu0
  %v98 = vadd.f32 %v45, %v97
  %99 = vmatmul.bf16.gmra.mxu0 %v58
  %v100 = vpop.f32.mrf.mxu0
  %v101 = vadd.f32 %v45, %v100
  %v102 = vpop.f32.mrf.mxu0
  %v103 = vadd.f32 %v45, %v102
  %104 = vmatmul.bf16.gmra.mxu0 %v61
  %v105 = vpop.f32.mrf.mxu0
  %v106 = vadd.f32 %v45, %v105
  %v107 = vpop.f32.mrf.mxu0
  %v108 = vadd.f32 %v45, %v107
  %109 = vmatmul.bf16.gmra.mxu0 %v64
  %v110 = vpop.f32.mrf.mxu0
  %v111 = vadd.f32 %v45, %v110
  %v112 = vpop.f32.mrf.mxu0
  %v113 = vadd.f32 %v45, %v112
  %114 = vmatmul.bf16.gmra.mxu0 %v67
  %v115 = vpop.f32.mrf.mxu0
  %v116 = vadd.f32 %v45, %v115
  %v117 = vpop.f32.mrf.mxu0
  %v118 = vadd.f32 %v45, %v117
  %119 = vmatmul.bf16.gmra.mxu0 %v70
  %v120 = vpop.f32.mrf.mxu0
  %v121 = vadd.f32 %v45, %v120
  %v122 = vpop.f32.mrf.mxu0
  %v123 = vadd.f32 %v45, %v122
  %124 = vdwg.mxu0
  %v125 = vld [vmem:[%s3] sm:$0xff]
  %v126 = vld [vmem:[%s3 + $0x8] sm:$0xff]
  %v127 = vld [vmem:[%s3 + $0x10] sm:$0xff]
  %v128 = vld [vmem:[%s3 + $0x18] sm:$0xff]
  %v129 = vld [vmem:[%s3 + $0x20] sm:$0xff]
  %v130 = vld [vmem:[%s3 + $0x28] sm:$0xff]
  %v131 = vld [vmem:[%s3 + $0x30] sm:$0xff]
  %v132 = vld [vmem:[%s3 + $0x38] sm:$0xff]
  %v133 = vadd.f32 %v86, %v125
  %v134 = vadd.f32 %v88, %v126
  %v135 = vadd.f32 %v91, %v127
  %v136 = vadd.f32 %v93, %v128
  %v137 = vadd.f32 %v96, %v129
  %v138 = vadd.f32 %v98, %v130
  %v139 = vadd.f32 %v101, %v131
  %v140 = vadd.f32 %v103, %v132
  %v141 = vadd.f32 %v106, %v125
  %v142 = vadd.f32 %v108, %v126
  %v143 = vadd.f32 %v111, %v127
  %v144 = vadd.f32 %v113, %v128
  %v145 = vadd.f32 %v116, %v129
  %v146 = vadd.f32 %v118, %v130
  %v147 = vadd.f32 %v121, %v131
  %v148 = vadd.f32 %v123, %v132
  %149 = vst [vmem:[%s4] sm:$0xff] %v133
  %150 = vst [vmem:[%s4 + $0x8] sm:$0xff] %v134
  %151 = vst [vmem:[%s4 + $0x10] sm:$0xff] %v135
  %152 = vst [vmem:[%s4 + $0x18] sm:$0xff] %v136
  %153 = vst [vmem:[%s4 + $0x20] sm:$0xff] %v137
  %154 = vst [vmem:[%s4 + $0x28] sm:$0xff] %v138
  %155 = vst [vmem:[%s4 + $0x30] sm:$0xff] %v139
  %156 = vst [vmem:[%s4 + $0x38] sm:$0xff] %v140
  %157 = vst [vmem:[%s4 + $0x40] sm:$0xff] %v141
  %158 = vst [vmem:[%s4 + $0x48] sm:$0xff] %v142
  %159 = vst [vmem:[%s4 + $0x50] sm:$0xff] %v143
  %160 = vst [vmem:[%s4 + $0x58] sm:$0xff] %v144
  %161 = vst [vmem:[%s4 + $0x60] sm:$0xff] %v145
  %162 = vst [vmem:[%s4 + $0x68] sm:$0xff] %v146
  %163 = vst [vmem:[%s4 + $0x70] sm:$0xff] %v147
  %164 = vst [vmem:[%s4 + $0x78] sm:$0xff] %v148
  // Predicated region
  $region18: #{_lambda_.3} parent=0 // pred_check
    _
  $region19: #{_lambda_.3} parent=0 // pred_check_branch
    %166 = sbr.rel (0) target = $region21
  $region20: #{_lambda_.3} parent=0 // pred_region
    _
  $region21: #{_lambda_.3} parent=0 // pred_fallthru
    _
  // Predicated region
  $region22: #{_lambda_.3} parent=0 // pred_check
    _
  $region23: #{_lambda_.3} parent=0 // pred_check_branch
    %168 = sbr.rel (0) target = $region25
  $region24: #{_lambda_.3} parent=0 // pred_region
    _
  $region25: #{_lambda_.3} parent=0 // pred_fallthru
    _

// kernel: _lambda_.5
$region0: #{_lambda_.5}
  #allocation0 [shape = 'u32[]', space=smem, size = 0x4, offset = 0x4, fixed_abs, tag = 'smem constant byte address 0x4 - core index']
  #allocation1 [shape = 'u32[72,128]{1,0:T(1,128)}', space=vmem, size = 0x9000, scoped, tag = 'internal scratch']
  #allocation2 [shape = 'f32[2,64,128]{2,1,0:T(8,128)}', space=vmem, size = 0x10000, scoped, tag = 'scratch operand']
  %s0 = inlined_call_operand.vmem [shape: f32[2,64,128], index: 0, kind: input, shape index: {}]
  %s1 = inlined_call_operand.vmem [shape: f32[2,128], index: 1, kind: input, shape index: {}]
  %s2 = inlined_call_operand.vmem [shape: bf16[2,128,768], index: 2, kind: input, shape index: {}]
  %s3 = inlined_call_operand.vmem [shape: f32[2,1,768], index: 3, kind: input, shape index: {}]
  %s4 = inlined_call_operand.vmem [shape: bf16[2,128,384], index: 4, kind: input, shape index: {}]
  %s5 = inlined_call_operand.vmem [shape: f32[2,1,384], index: 5, kind: input, shape index: {}]
  %s6 = inlined_call_operand.vmem [shape: bf16[2,128,128], index: 6, kind: input, shape index: {}]
  %s7 = inlined_call_operand.vmem [shape: f32[2,1,128], index: 7, kind: input, shape index: {}]
  %s8 = inlined_call_operand.vmem [shape: bf16[2,128,512], index: 8, kind: input, shape index: {}]
  %s9 = inlined_call_operand.vmem [shape: f32[2,1,512], index: 9, kind: input, shape index: {}]
  %s10 = inlined_call_operand.vmem [shape: bf16[2,512,128], index: 10, kind: input, shape index: {}]
  %s11 = inlined_call_operand.vmem [shape: f32[2,1,128], index: 11, kind: input, shape index: {}]
  %s12 = inlined_call_operand.vmem [shape: bf16[128,256], index: 12, kind: input, shape index: {}]
  %s13 = inlined_call_operand.vmem [shape: f32[1,256], index: 13, kind: input, shape index: {}]
  %s14 = inlined_call_operand.vmem [shape: bf16[128,128], index: 14, kind: input, shape index: {}]
  %s15 = inlined_call_operand.vmem [shape: f32[1,128], index: 15, kind: input, shape index: {}]
  %s16 = inlined_call_operand.vmem [shape: f32[2,64,128], index: 16, kind: output, shape index: {}]
  %s17 = sld [smem:[#allocation0]]
  $region105: #{_lambda_.5} parent=0
    _
  %s19 = ssub.s32 1, %s17
  %s20 = scalar_select 0, %s19, %s17
  loop: start=0, step=1, limit=4
  $region2: #{_lambda_.5} parent=0 // loop_pre_header
    _
  $region3: #{_lambda_.5} parent=0 // loop_header
    %s22 = sphi 0, %s26
    %p23 = scmp.ge.s32.totalorder %s22, 4
    %s30 = sphi 0, %s30
    %s32 = sphi 0, %s30
    %s33 = sphi 0, %s32
    %s47 = sphi 0, %s33
    %s51 = sphi 0, %s51
    %s53 = sphi 0, %s51
    %s54 = sphi 0, %s53
    %s68 = sphi 0, %s54
    %s74 = sphi 0, %s76
    %s77 = sphi 0, %s74
    %s78 = sphi 0, %s77
    %s94 = sphi 0, %s78
    %s100 = sphi 0, %s102
    %s103 = sphi 0, %s100
    %s104 = sphi 0, %s103
    %s120 = sphi 0, %s104
    %s126 = sphi 0, %s128
    %s129 = sphi 0, %s126
    %s130 = sphi 0, %s129
    %s146 = sphi 0, %s130
    %s152 = sphi 0, %s154
    %s155 = sphi 0, %s152
    %s156 = sphi 0, %s155
    %s172 = sphi 0, %s156
    %s178 = sphi 0, %s180
    %s181 = sphi 0, %s178
    %s182 = sphi 0, %s181
    %s198 = sphi 0, %s182
    %s204 = sphi 0, %s206
    %s207 = sphi 0, %s204
    %s208 = sphi 0, %s207
    %s224 = sphi 0, %s208
    %s230 = sphi 0, %s232
    %s233 = sphi 0, %s230
    %s234 = sphi 0, %s233
    %s250 = sphi 0, %s234
    %s256 = sphi 0, %s258
    %s259 = sphi 0, %s256
    %s260 = sphi 0, %s259
    %s276 = sphi 0, %s260
    %s282 = sphi 0, %s284
    %s285 = sphi 0, %s282
    %s286 = sphi 0, %s285
    %s302 = sphi 0, %s286
    %s308 = sphi 0, %s310
    %s311 = sphi 0, %s308
    %s312 = sphi 0, %s311
    %s328 = sphi 0, %s312
    %s332 = sphi 0, %s332
    %s334 = sphi 0, %s332
    %s335 = sphi 0, %s334
    %s349 = sphi 0, %s335
    %s353 = sphi 0, %s353
    %s355 = sphi 0, %s353
    %s356 = sphi 0, %s355
    %s370 = sphi 0, %s356
    %s374 = sphi 0, %s374
    %s376 = sphi 0, %s374
    %s377 = sphi 0, %s376
    %s391 = sphi 0, %s377
    %s395 = sphi 0, %s395
    %s397 = sphi 0, %s395
    %s398 = sphi 0, %s397
    %s412 = sphi 0, %s398
    %s416 = sphi 0, %s416
    %s418 = sphi 0, %s416
    %s419 = sphi 0, %s418
    %s433 = sphi 0, %s419
  $region4: #{_lambda_.5} parent=0 // loop_header_branch
    %25 = sbr.rel (%p23) target = $region8
  $region5: #{_lambda_.5} parent=0 // loop_body
    %s27 = ssub.s32 %s22, 1
    %s28 = ssub.s32 %s22, 2
    %s29 = sadd.s32 %s22, 1
    %s31 = sadd.s32 %s30, 1
    %p34 = scmp.eq.s32.totalorder %s22, 1
    %p35 = scmp.ne.s32.totalorder %s30, %s32
    %p36 = scmp.eq.s32.totalorder %s22, 0
    %p37 = por %p35, %p36
    %p38 = scmp.ne.s32.totalorder %s30, %s32
    %p39 = scmp.eq.s32.totalorder %s27, 1
    %p40 = por %p38, %p39
    %p41 = scmp.ne.s32.totalorder %s32, %s33
    %p42 = scmp.eq.s32.totalorder %s27, 0
    %p43 = por %p41, %p42
    %p44 = scmp.ne.s32.totalorder %s32, %s33
    %p45 = scmp.eq.s32.totalorder %s28, 1
    %p46 = por %p44, %p45
    %p48 = scmp.ne.s32.totalorder %s33, %s47
    %p49 = scmp.eq.s32.totalorder %s28, 0
    %p50 = por %p48, %p49
    %s52 = sadd.s32 %s51, 1
    %p55 = scmp.eq.s32.totalorder %s22, 1
    %p56 = scmp.ne.s32.totalorder %s51, %s53
    %p57 = scmp.eq.s32.totalorder %s22, 0
    %p58 = por %p56, %p57
    %p59 = scmp.ne.s32.totalorder %s51, %s53
    %p60 = scmp.eq.s32.totalorder %s27, 1
    %p61 = por %p59, %p60
    %p62 = scmp.ne.s32.totalorder %s53, %s54
    %p63 = scmp.eq.s32.totalorder %s27, 0
    %p64 = por %p62, %p63
    %p65 = scmp.ne.s32.totalorder %s53, %s54
    %p66 = scmp.eq.s32.totalorder %s28, 1
    %p67 = por %p65, %p66
    %p69 = scmp.ne.s32.totalorder %s54, %s68
    %p70 = scmp.eq.s32.totalorder %s28, 0
    %p71 = por %p69, %p70
    %s72 = ssub.s32 %s22, %s29
    %p73 = scmp.eq.s32.totalorder %s72, 0
    %s75 = sadd.s32 %s74, 1
    %s76 = scalar_select %p73, %s74, %s75
    %p79 = pneg %p73
    %p80 = scmp.eq.s32.totalorder %s22, 1
    %p81 = por %p79, %p80
    %p82 = scmp.ne.s32.totalorder %s74, %s77
    %p83 = scmp.eq.s32.totalorder %s22, 0
    %p84 = por %p82, %p83
    %p85 = scmp.ne.s32.totalorder %s74, %s77
    %p86 = scmp.eq.s32.totalorder %s27, 1
    %p87 = por %p85, %p86
    %p88 = scmp.ne.s32.totalorder %s77, %s78
    %p89 = scmp.eq.s32.totalorder %s27, 0
    %p90 = por %p88, %p89
    %p91 = scmp.ne.s32.totalorder %s77, %s78
    %p92 = scmp.eq.s32.totalorder %s28, 1
    %p93 = por %p91, %p92
    %p95 = scmp.ne.s32.totalorder %s78, %s94
    %p96 = scmp.eq.s32.totalorder %s28, 0
    %p97 = por %p95, %p96
    %s98 = ssub.s32 %s22, %s29
    %p99 = scmp.eq.s32.totalorder %s98, 0
    %s101 = sadd.s32 %s100, 1
    %s102 = scalar_select %p99, %s100, %s101
    %p105 = pneg %p99
    %p106 = scmp.eq.s32.totalorder %s22, 1
    %p107 = por %p105, %p106
    %p108 = scmp.ne.s32.totalorder %s100, %s103
    %p109 = scmp.eq.s32.totalorder %s22, 0
    %p110 = por %p108, %p109
    %p111 = scmp.ne.s32.totalorder %s100, %s103
    %p112 = scmp.eq.s32.totalorder %s27, 1
    %p113 = por %p111, %p112
    %p114 = scmp.ne.s32.totalorder %s103, %s104
    %p115 = scmp.eq.s32.totalorder %s27, 0
    %p116 = por %p114, %p115
    %p117 = scmp.ne.s32.totalorder %s103, %s104
    %p118 = scmp.eq.s32.totalorder %s28, 1
    %p119 = por %p117, %p118
    %p121 = scmp.ne.s32.totalorder %s104, %s120
    %p122 = scmp.eq.s32.totalorder %s28, 0
    %p123 = por %p121, %p122
    %s124 = ssub.s32 %s22, %s29
    %p125 = scmp.eq.s32.totalorder %s124, 0
    %s127 = sadd.s32 %s126, 1
    %s128 = scalar_select %p125, %s126, %s127
    %p131 = pneg %p125
    %p132 = scmp.eq.s32.totalorder %s22, 1
    %p133 = por %p131, %p132
    %p134 = scmp.ne.s32.totalorder %s126, %s129
    %p135 = scmp.eq.s32.totalorder %s22, 0
    %p136 = por %p134, %p135
    %p137 = scmp.ne.s32.totalorder %s126, %s129
    %p138 = scmp.eq.s32.totalorder %s27, 1
    %p139 = por %p137, %p138
    %p140 = scmp.ne.s32.totalorder %s129, %s130
    %p141 = scmp.eq.s32.totalorder %s27, 0
    %p142 = por %p140, %p141
    %p143 = scmp.ne.s32.totalorder %s129, %s130
    %p144 = scmp.eq.s32.totalorder %s28, 1
    %p145 = por %p143, %p144
    %p147 = scmp.ne.s32.totalorder %s130, %s146
    %p148 = scmp.eq.s32.totalorder %s28, 0
    %p149 = por %p147, %p148
    %s150 = ssub.s32 %s22, %s29
    %p151 = scmp.eq.s32.totalorder %s150, 0
    %s153 = sadd.s32 %s152, 1
    %s154 = scalar_select %p151, %s152, %s153
    %p157 = pneg %p151
    %p158 = scmp.eq.s32.totalorder %s22, 1
    %p159 = por %p157, %p158
    %p160 = scmp.ne.s32.totalorder %s152, %s155
    %p161 = scmp.eq.s32.totalorder %s22, 0
    %p162 = por %p160, %p161
    %p163 = scmp.ne.s32.totalorder %s152, %s155
    %p164 = scmp.eq.s32.totalorder %s27, 1
    %p165 = por %p163, %p164
    %p166 = scmp.ne.s32.totalorder %s155, %s156
    %p167 = scmp.eq.s32.totalorder %s27, 0
    %p168 = por %p166, %p167
    %p169 = scmp.ne.s32.totalorder %s155, %s156
    %p170 = scmp.eq.s32.totalorder %s28, 1
    %p171 = por %p169, %p170
    %p173 = scmp.ne.s32.totalorder %s156, %s172
    %p174 = scmp.eq.s32.totalorder %s28, 0
    %p175 = por %p173, %p174
    %s176 = ssub.s32 %s22, %s29
    %p177 = scmp.eq.s32.totalorder %s176, 0
    %s179 = sadd.s32 %s178, 1
    %s180 = scalar_select %p177, %s178, %s179
    %p183 = pneg %p177
    %p184 = scmp.eq.s32.totalorder %s22, 1
    %p185 = por %p183, %p184
    %p186 = scmp.ne.s32.totalorder %s178, %s181
    %p187 = scmp.eq.s32.totalorder %s22, 0
    %p188 = por %p186, %p187
    %p189 = scmp.ne.s32.totalorder %s178, %s181
    %p190 = scmp.eq.s32.totalorder %s27, 1
    %p191 = por %p189, %p190
    %p192 = scmp.ne.s32.totalorder %s181, %s182
    %p193 = scmp.eq.s32.totalorder %s27, 0
    %p194 = por %p192, %p193
    %p195 = scmp.ne.s32.totalorder %s181, %s182
    %p196 = scmp.eq.s32.totalorder %s28, 1
    %p197 = por %p195, %p196
    %p199 = scmp.ne.s32.totalorder %s182, %s198
    %p200 = scmp.eq.s32.totalorder %s28, 0
    %p201 = por %p199, %p200
    %s202 = ssub.s32 %s22, %s29
    %p203 = scmp.eq.s32.totalorder %s202, 0
    %s205 = sadd.s32 %s204, 1
    %s206 = scalar_select %p203, %s204, %s205
    %p209 = pneg %p203
    %p210 = scmp.eq.s32.totalorder %s22, 1
    %p211 = por %p209, %p210
    %p212 = scmp.ne.s32.totalorder %s204, %s207
    %p213 = scmp.eq.s32.totalorder %s22, 0
    %p214 = por %p212, %p213
    %p215 = scmp.ne.s32.totalorder %s204, %s207
    %p216 = scmp.eq.s32.totalorder %s27, 1
    %p217 = por %p215, %p216
    %p218 = scmp.ne.s32.totalorder %s207, %s208
    %p219 = scmp.eq.s32.totalorder %s27, 0
    %p220 = por %p218, %p219
    %p221 = scmp.ne.s32.totalorder %s207, %s208
    %p222 = scmp.eq.s32.totalorder %s28, 1
    %p223 = por %p221, %p222
    %p225 = scmp.ne.s32.totalorder %s208, %s224
    %p226 = scmp.eq.s32.totalorder %s28, 0
    %p227 = por %p225, %p226
    %s228 = ssub.s32 %s22, %s29
    %p229 = scmp.eq.s32.totalorder %s228, 0
    %s231 = sadd.s32 %s230, 1
    %s232 = scalar_select %p229, %s230, %s231
    %p235 = pneg %p229
    %p236 = scmp.eq.s32.totalorder %s22, 1
    %p237 = por %p235, %p236
    %p238 = scmp.ne.s32.totalorder %s230, %s233
    %p239 = scmp.eq.s32.totalorder %s22, 0
    %p240 = por %p238, %p239
    %p241 = scmp.ne.s32.totalorder %s230, %s233
    %p242 = scmp.eq.s32.totalorder %s27, 1
    %p243 = por %p241, %p242
    %p244 = scmp.ne.s32.totalorder %s233, %s234
    %p245 = scmp.eq.s32.totalorder %s27, 0
    %p246 = por %p244, %p245
    %p247 = scmp.ne.s32.totalorder %s233, %s234
    %p248 = scmp.eq.s32.totalorder %s28, 1
    %p249 = por %p247, %p248
    %p251 = scmp.ne.s32.totalorder %s234, %s250
    %p252 = scmp.eq.s32.totalorder %s28, 0
    %p253 = por %p251, %p252
    %s254 = ssub.s32 %s22, %s29
    %p255 = scmp.eq.s32.totalorder %s254, 0
    %s257 = sadd.s32 %s256, 1
    %s258 = scalar_select %p255, %s256, %s257
    %p261 = pneg %p255
    %p262 = scmp.eq.s32.totalorder %s22, 1
    %p263 = por %p261, %p262
    %p264 = scmp.ne.s32.totalorder %s256, %s259
    %p265 = scmp.eq.s32.totalorder %s22, 0
    %p266 = por %p264, %p265
    %p267 = scmp.ne.s32.totalorder %s256, %s259
    %p268 = scmp.eq.s32.totalorder %s27, 1
    %p269 = por %p267, %p268
    %p270 = scmp.ne.s32.totalorder %s259, %s260
    %p271 = scmp.eq.s32.totalorder %s27, 0
    %p272 = por %p270, %p271
    %p273 = scmp.ne.s32.totalorder %s259, %s260
    %p274 = scmp.eq.s32.totalorder %s28, 1
    %p275 = por %p273, %p274
    %p277 = scmp.ne.s32.totalorder %s260, %s276
    %p278 = scmp.eq.s32.totalorder %s28, 0
    %p279 = por %p277, %p278
    %s280 = ssub.s32 %s22, %s29
    %p281 = scmp.eq.s32.totalorder %s280, 0
    %s283 = sadd.s32 %s282, 1
    %s284 = scalar_select %p281, %s282, %s283
    %p287 = pneg %p281
    %p288 = scmp.eq.s32.totalorder %s22, 1
    %p289 = por %p287, %p288
    %p290 = scmp.ne.s32.totalorder %s282, %s285
    %p291 = scmp.eq.s32.totalorder %s22, 0
    %p292 = por %p290, %p291
    %p293 = scmp.ne.s32.totalorder %s282, %s285
    %p294 = scmp.eq.s32.totalorder %s27, 1
    %p295 = por %p293, %p294
    %p296 = scmp.ne.s32.totalorder %s285, %s286
    %p297 = scmp.eq.s32.totalorder %s27, 0
    %p298 = por %p296, %p297
    %p299 = scmp.ne.s32.totalorder %s285, %s286
    %p300 = scmp.eq.s32.totalorder %s28, 1
    %p301 = por %p299, %p300
    %p303 = scmp.ne.s32.totalorder %s286, %s302
    %p304 = scmp.eq.s32.totalorder %s28, 0
    %p305 = por %p303, %p304
    %s306 = ssub.s32 %s22, %s29
    %p307 = scmp.eq.s32.totalorder %s306, 0
    %s309 = sadd.s32 %s308, 1
    %s310 = scalar_select %p307, %s308, %s309
    %p313 = pneg %p307
    %p314 = scmp.eq.s32.totalorder %s22, 1
    %p315 = por %p313, %p314
    %p316 = scmp.ne.s32.totalorder %s308, %s311
    %p317 = scmp.eq.s32.totalorder %s22, 0
    %p318 = por %p316, %p317
    %p319 = scmp.ne.s32.totalorder %s308, %s311
    %p320 = scmp.eq.s32.totalorder %s27, 1
    %p321 = por %p319, %p320
    %p322 = scmp.ne.s32.totalorder %s311, %s312
    %p323 = scmp.eq.s32.totalorder %s27, 0
    %p324 = por %p322, %p323
    %p325 = scmp.ne.s32.totalorder %s311, %s312
    %p326 = scmp.eq.s32.totalorder %s28, 1
    %p327 = por %p325, %p326
    %p329 = scmp.ne.s32.totalorder %s312, %s328
    %p330 = scmp.eq.s32.totalorder %s28, 0
    %p331 = por %p329, %p330
    %s333 = sadd.s32 %s332, 1
    %p336 = scmp.eq.s32.totalorder %s22, 1
    %p337 = scmp.ne.s32.totalorder %s332, %s334
    %p338 = scmp.eq.s32.totalorder %s22, 0
    %p339 = por %p337, %p338
    %p340 = scmp.ne.s32.totalorder %s332, %s334
    %p341 = scmp.eq.s32.totalorder %s27, 1
    %p342 = por %p340, %p341
    %p343 = scmp.ne.s32.totalorder %s334, %s335
    %p344 = scmp.eq.s32.totalorder %s27, 0
    %p345 = por %p343, %p344
    %p346 = scmp.ne.s32.totalorder %s334, %s335
    %p347 = scmp.eq.s32.totalorder %s28, 1
    %p348 = por %p346, %p347
    %p350 = scmp.ne.s32.totalorder %s335, %s349
    %p351 = scmp.eq.s32.totalorder %s28, 0
    %p352 = por %p350, %p351
    %s354 = sadd.s32 %s353, 1
    %p357 = scmp.eq.s32.totalorder %s22, 1
    %p358 = scmp.ne.s32.totalorder %s353, %s355
    %p359 = scmp.eq.s32.totalorder %s22, 0
    %p360 = por %p358, %p359
    %p361 = scmp.ne.s32.totalorder %s353, %s355
    %p362 = scmp.eq.s32.totalorder %s27, 1
    %p363 = por %p361, %p362
    %p364 = scmp.ne.s32.totalorder %s355, %s356
    %p365 = scmp.eq.s32.totalorder %s27, 0
    %p366 = por %p364, %p365
    %p367 = scmp.ne.s32.totalorder %s355, %s356
    %p368 = scmp.eq.s32.totalorder %s28, 1
    %p369 = por %p367, %p368
    %p371 = scmp.ne.s32.totalorder %s356, %s370
    %p372 = scmp.eq.s32.totalorder %s28, 0
    %p373 = por %p371, %p372
    %s375 = sadd.s32 %s374, 1
    %p378 = scmp.eq.s32.totalorder %s22, 1
    %p379 = scmp.ne.s32.totalorder %s374, %s376
    %p380 = scmp.eq.s32.totalorder %s22, 0
    %p381 = por %p379, %p380
    %p382 = scmp.ne.s32.totalorder %s374, %s376
    %p383 = scmp.eq.s32.totalorder %s27, 1
    %p384 = por %p382, %p383
    %p385 = scmp.ne.s32.totalorder %s376, %s377
    %p386 = scmp.eq.s32.totalorder %s27, 0
    %p387 = por %p385, %p386
    %p388 = scmp.ne.s32.totalorder %s376, %s377
    %p389 = scmp.eq.s32.totalorder %s28, 1
    %p390 = por %p388, %p389
    %p392 = scmp.ne.s32.totalorder %s377, %s391
    %p393 = scmp.eq.s32.totalorder %s28, 0
    %p394 = por %p392, %p393
    %s396 = sadd.s32 %s395, 1
    %p399 = scmp.eq.s32.totalorder %s22, 1
    %p400 = scmp.ne.s32.totalorder %s395, %s397
    %p401 = scmp.eq.s32.totalorder %s22, 0
    %p402 = por %p400, %p401
    %p403 = scmp.ne.s32.totalorder %s395, %s397
    %p404 = scmp.eq.s32.totalorder %s27, 1
    %p405 = por %p403, %p404
    %p406 = scmp.ne.s32.totalorder %s397, %s398
    %p407 = scmp.eq.s32.totalorder %s27, 0
    %p408 = por %p406, %p407
    %p409 = scmp.ne.s32.totalorder %s397, %s398
    %p410 = scmp.eq.s32.totalorder %s28, 1
    %p411 = por %p409, %p410
    %p413 = scmp.ne.s32.totalorder %s398, %s412
    %p414 = scmp.eq.s32.totalorder %s28, 0
    %p415 = por %p413, %p414
    %s417 = sadd.s32 %s416, 1
    %p420 = scmp.eq.s32.totalorder %s22, 1
    %p421 = scmp.ne.s32.totalorder %s416, %s418
    %p422 = scmp.eq.s32.totalorder %s22, 0
    %p423 = por %p421, %p422
    %p424 = scmp.ne.s32.totalorder %s416, %s418
    %p425 = scmp.eq.s32.totalorder %s27, 1
    %p426 = por %p424, %p425
    %p427 = scmp.ne.s32.totalorder %s418, %s419
    %p428 = scmp.eq.s32.totalorder %s27, 0
    %p429 = por %p427, %p428
    %p430 = scmp.ne.s32.totalorder %s418, %s419
    %p431 = scmp.eq.s32.totalorder %s28, 1
    %p432 = por %p430, %p431
    %p434 = scmp.ne.s32.totalorder %s419, %s433
    %p435 = scmp.eq.s32.totalorder %s28, 0
    %p436 = por %p434, %p435
    %p437 = scmp.le.s32.totalorder 1, %s22
    %p438 = scmp.lt.s32.totalorder %s22, 3
    %p439 = pnand %p437, %p438
    %p440 = pneg %p439
    // Predicated region
    $region9: #{_lambda_.5} parent=5 // pred_check
      _
    $region10: #{_lambda_.5} parent=5 // pred_check_branch
      %442 = sbr.rel (%p439) target = $region12
    $region11: #{_lambda_.5} parent=5 // pred_region
      %s443 = ssub.s32 %s22, 1
      // Predicated region
      $region13: #{_lambda_.5} parent=11 // pred_check
        %p444 = pneg %p43
      $region14: #{_lambda_.5} parent=11 // pred_check_branch
        %446 = sbr.rel (%p444) target = $region16
      $region15: #{_lambda_.5} parent=11 // pred_region
        _
      $region16: #{_lambda_.5} parent=11 // pred_fallthru
        _
      // Predicated region
      $region17: #{_lambda_.5} parent=11 // pred_check
        %p447 = pneg %p64
      $region18: #{_lambda_.5} parent=11 // pred_check_branch
        %449 = sbr.rel (%p447) target = $region20
      $region19: #{_lambda_.5} parent=11 // pred_region
        _
      $region20: #{_lambda_.5} parent=11 // pred_fallthru
        _
      // Predicated region
      $region21: #{_lambda_.5} parent=11 // pred_check
        %p450 = pneg %p345
      $region22: #{_lambda_.5} parent=11 // pred_check_branch
        %452 = sbr.rel (%p450) target = $region24
      $region23: #{_lambda_.5} parent=11 // pred_region
        _
      $region24: #{_lambda_.5} parent=11 // pred_fallthru
        _
      // Predicated region
      $region25: #{_lambda_.5} parent=11 // pred_check
        %p453 = pneg %p366
      $region26: #{_lambda_.5} parent=11 // pred_check_branch
        %455 = sbr.rel (%p453) target = $region28
      $region27: #{_lambda_.5} parent=11 // pred_region
        _
      $region28: #{_lambda_.5} parent=11 // pred_fallthru
        _
      // Predicated region
      $region29: #{_lambda_.5} parent=11 // pred_check
        %p456 = pneg %p387
      $region30: #{_lambda_.5} parent=11 // pred_check_branch
        %458 = sbr.rel (%p456) target = $region32
      $region31: #{_lambda_.5} parent=11 // pred_region
        _
      $region32: #{_lambda_.5} parent=11 // pred_fallthru
        _
      // Predicated region
      $region33: #{_lambda_.5} parent=11 // pred_check
        %p459 = pneg %p408
      $region34: #{_lambda_.5} parent=11 // pred_check_branch
        %461 = sbr.rel (%p459) target = $region36
      $region35: #{_lambda_.5} parent=11 // pred_region
        _
      $region36: #{_lambda_.5} parent=11 // pred_fallthru
        _
    $region12: #{_lambda_.5} parent=5 // pred_fallthru
      _
    %p462 = scmp.lt.s32.totalorder %s22, 2
    // Predicated region
    $region37: #{_lambda_.5} parent=5 // pred_check
      %p463 = pneg %p462
    $region38: #{_lambda_.5} parent=5 // pred_check_branch
      %465 = sbr.rel (%p463) target = $region40
    $region39: #{_lambda_.5} parent=5 // pred_region
      // Predicated region
      $region41: #{_lambda_.5} parent=39 // pred_check
        %p466 = pneg %p84
      $region42: #{_lambda_.5} parent=39 // pred_check_branch
        %468 = sbr.rel (%p466) target = $region44
      $region43: #{_lambda_.5} parent=39 // pred_region
        %p469 = scmp.lt.s32.totalorder %s22, 1
        %s470 = scalar_select %p469, %s22, 1
        %s471 = smul.addr %s470, 96
        %s472 = smul.addr %s471, 4
        %s473 = scalar_lea.vmem %s2, %s472
      $region44: #{_lambda_.5} parent=39 // pred_fallthru
        _
      // Predicated region
      $region45: #{_lambda_.5} parent=39 // pred_check
        %p474 = pneg %p110
      $region46: #{_lambda_.5} parent=39 // pred_check_branch
        %476 = sbr.rel (%p474) target = $region48
      $region47: #{_lambda_.5} parent=39 // pred_region
        %p477 = scmp.lt.s32.totalorder %s22, 1
        %s478 = scalar_select %p477, %s22, 1
        %s479 = smul.addr %s478, 6
        %s480 = scalar_lea.vmem %s3, %s479
      $region48: #{_lambda_.5} parent=39 // pred_fallthru
        _
      // Predicated region
      $region49: #{_lambda_.5} parent=39 // pred_check
        %p481 = pneg %p136
      $region50: #{_lambda_.5} parent=39 // pred_check_branch
        %483 = sbr.rel (%p481) target = $region52
      $region51: #{_lambda_.5} parent=39 // pred_region
        %p484 = scmp.lt.s32.totalorder %s22, 1
        %s485 = scalar_select %p484, %s22, 1
        %s486 = smul.addr %s485, 48
        %s487 = smul.addr %s486, 4
        %s488 = scalar_lea.vmem %s4, %s487
      $region52: #{_lambda_.5} parent=39 // pred_fallthru
        _
      // Predicated region
      $region53: #{_lambda_.5} parent=39 // pred_check
        %p489 = pneg %p162
      $region54: #{_lambda_.5} parent=39 // pred_check_branch
        %491 = sbr.rel (%p489) target = $region56
      $region55: #{_lambda_.5} parent=39 // pred_region
        %p492 = scmp.lt.s32.totalorder %s22, 1
        %s493 = scalar_select %p492, %s22, 1
        %s494 = smul.addr %s493, 3
        %s495 = scalar_lea.vmem %s5, %s494
      $region56: #{_lambda_.5} parent=39 // pred_fallthru
        _
      // Predicated region
      $region57: #{_lambda_.5} parent=39 // pred_check
        %p496 = pneg %p188
      $region58: #{_lambda_.5} parent=39 // pred_check_branch
        %498 = sbr.rel (%p496) target = $region60
      $region59: #{_lambda_.5} parent=39 // pred_region
        %p499 = scmp.lt.s32.totalorder %s22, 1
        %s500 = scalar_select %p499, %s22, 1
        %s501 = smul.addr %s500, 16
        %s502 = smul.addr %s501, 4
        %s503 = scalar_lea.vmem %s6, %s502
      $region60: #{_lambda_.5} parent=39 // pred_fallthru
        _
      // Predicated region
      $region61: #{_lambda_.5} parent=39 // pred_check
        %p504 = pneg %p214
      $region62: #{_lambda_.5} parent=39 // pred_check_branch
        %506 = sbr.rel (%p504) target = $region64
      $region63: #{_lambda_.5} parent=39 // pred_region
        %p507 = scmp.lt.s32.totalorder %s22, 1
        %s508 = scalar_select %p507, %s22, 1
        %s509 = scalar_lea.vmem %s7, %s508
      $region64: #{_lambda_.5} parent=39 // pred_fallthru
        _
      // Predicated region
      $region65: #{_lambda_.5} parent=39 // pred_check
        %p510 = pneg %p240
      $region66: #{_lambda_.5} parent=39 // pred_check_branch
        %512 = sbr.rel (%p510) target = $region68
      $region67: #{_lambda_.5} parent=39 // pred_region
        %p513 = scmp.lt.s32.totalorder %s22, 1
        %s514 = scalar_select %p513, %s22, 1
        %s515 = smul.addr %s514, 64
        %s516 = smul.addr %s515, 4
        %s517 = scalar_lea.vmem %s8, %s516
      $region68: #{_lambda_.5} parent=39 // pred_fallthru
        _
      // Predicated region
      $region69: #{_lambda_.5} parent=39 // pred_check
        %p518 = pneg %p266
      $region70: #{_lambda_.5} parent=39 // pred_check_branch
        %520 = sbr.rel (%p518) target = $region72
      $region71: #{_lambda_.5} parent=39 // pred_region
        %p521 = scmp.lt.s32.totalorder %s22, 1
        %s522 = scalar_select %p521, %s22, 1
        %s523 = smul.addr %s522, 4
        %s524 = scalar_lea.vmem %s9, %s523
      $region72: #{_lambda_.5} parent=39 // pred_fallthru
        _
      // Predicated region
      $region73: #{_lambda_.5} parent=39 // pred_check
        %p525 = pneg %p292
      $region74: #{_lambda_.5} parent=39 // pred_check_branch
        %527 = sbr.rel (%p525) target = $region76
      $region75: #{_lambda_.5} parent=39 // pred_region
        %p528 = scmp.lt.s32.totalorder %s22, 1
        %s529 = scalar_select %p528, %s22, 1
        %s530 = smul.addr %s529, 64
        %s531 = smul.addr %s530, 4
        %s532 = scalar_lea.vmem %s10, %s531
      $region76: #{_lambda_.5} parent=39 // pred_fallthru
        _
      // Predicated region
      $region77: #{_lambda_.5} parent=39 // pred_check
        %p533 = pneg %p318
      $region78: #{_lambda_.5} parent=39 // pred_check_branch
        %535 = sbr.rel (%p533) target = $region80
      $region79: #{_lambda_.5} parent=39 // pred_region
        %p536 = scmp.lt.s32.totalorder %s22, 1
        %s537 = scalar_select %p536, %s22, 1
        %s538 = scalar_lea.vmem %s11, %s537
      $region80: #{_lambda_.5} parent=39 // pred_fallthru
        _
    $region40: #{_lambda_.5} parent=5 // pred_fallthru
      _
    %p539 = scmp.le.s32.totalorder 1, %s22
    %p540 = scmp.lt.s32.totalorder %s22, 3
    %p541 = pnand %p539, %p540
    %p542 = pneg %p541
    // Predicated region
    $region81: #{_lambda_.5} parent=5 // pred_check
      _
    $region82: #{_lambda_.5} parent=5 // pred_check_branch
      %544 = sbr.rel (%p541) target = $region84
    $region83: #{_lambda_.5} parent=5 // pred_region
      %s545 = ssub.s32 %s22, 1
      %p546 = pneg %p43
      %p547 = pneg %p40
      %p548 = pneg %p64
      %p549 = pneg %p61
      %p550 = scmp.lt.s32.totalorder %s27, 1
      %s551 = scalar_select %p550, %s27, 1
      %s552 = smul.addr %s551, 96
      %s553 = smul.addr %s552, 4
      %s554 = scalar_lea.vmem %s2, %s553
      %p555 = pneg %p90
      %p556 = pneg %p87
      %p557 = scmp.lt.s32.totalorder %s27, 1
      %s558 = scalar_select %p557, %s27, 1
      %s559 = smul.addr %s558, 6
      %s560 = scalar_lea.vmem %s3, %s559
      %p561 = pneg %p116
      %p562 = pneg %p113
      %p563 = scmp.lt.s32.totalorder %s27, 1
      %s564 = scalar_select %p563, %s27, 1
      %s565 = smul.addr %s564, 48
      %s566 = smul.addr %s565, 4
      %s567 = scalar_lea.vmem %s4, %s566
      %p568 = pneg %p142
      %p569 = pneg %p139
      %p570 = scmp.lt.s32.totalorder %s27, 1
      %s571 = scalar_select %p570, %s27, 1
      %s572 = smul.addr %s571, 3
      %s573 = scalar_lea.vmem %s5, %s572
      %p574 = pneg %p168
      %p575 = pneg %p165
      %p576 = scmp.lt.s32.totalorder %s27, 1
      %s577 = scalar_select %p576, %s27, 1
      %s578 = smul.addr %s577, 16
      %s579 = smul.addr %s578, 4
      %s580 = scalar_lea.vmem %s6, %s579
      %p581 = pneg %p194
      %p582 = pneg %p191
      %p583 = scmp.lt.s32.totalorder %s27, 1
      %s584 = scalar_select %p583, %s27, 1
      %s585 = scalar_lea.vmem %s7, %s584
      %p586 = pneg %p220
      %p587 = pneg %p217
      %p588 = scmp.lt.s32.totalorder %s27, 1
      %s589 = scalar_select %p588, %s27, 1
      %s590 = smul.addr %s589, 64
      %s591 = smul.addr %s590, 4
      %s592 = scalar_lea.vmem %s8, %s591
      %p593 = pneg %p246
      %p594 = pneg %p243
      %p595 = scmp.lt.s32.totalorder %s27, 1
      %s596 = scalar_select %p595, %s27, 1
      %s597 = smul.addr %s596, 4
      %s598 = scalar_lea.vmem %s9, %s597
      %p599 = pneg %p272
      %p600 = pneg %p269
      %p601 = scmp.lt.s32.totalorder %s27, 1
      %s602 = scalar_select %p601, %s27, 1
      %s603 = smul.addr %s602, 64
      %s604 = smul.addr %s603, 4
      %s605 = scalar_lea.vmem %s10, %s604
      %p606 = pneg %p298
      %p607 = pneg %p295
      %p608 = scmp.lt.s32.totalorder %s27, 1
      %s609 = scalar_select %p608, %s27, 1
      %s610 = scalar_lea.vmem %s11, %s609
      %p611 = pneg %p324
      %p612 = pneg %p321
      %p613 = pneg %p345
      %p614 = pneg %p342
      %p615 = pneg %p366
      %p616 = pneg %p363
      %p617 = pneg %p387
      %p618 = pneg %p384
      %p619 = pneg %p408
      %p620 = pneg %p405
      %p621 = pneg %p429
      %p622 = pneg %p426
      %p623 = scmp.lt.s32.totalorder %s27, 1
      %s624 = scalar_select %p623, %s27, 1
      %s625 = smul.addr %s624, 96
      %s626 = smul.addr %s625, 4
      %s627 = scalar_lea.vmem %s2, %s626
      %p628 = scmp.lt.s32.totalorder %s27, 1
      %s629 = scalar_select %p628, %s27, 1
      %s630 = smul.addr %s629, 6
      %s631 = scalar_lea.vmem %s3, %s630
      %p632 = scmp.lt.s32.totalorder %s27, 1
      %s633 = scalar_select %p632, %s27, 1
      %s634 = smul.addr %s633, 48
      %s635 = smul.addr %s634, 4
      %s636 = scalar_lea.vmem %s4, %s635
      %p637 = scmp.lt.s32.totalorder %s27, 1
      %s638 = scalar_select %p637, %s27, 1
      %s639 = smul.addr %s638, 3
      %s640 = scalar_lea.vmem %s5, %s639
      %p641 = scmp.lt.s32.totalorder %s27, 1
      %s642 = scalar_select %p641, %s27, 1
      %s643 = smul.addr %s642, 16
      %s644 = smul.addr %s643, 4
      %s645 = scalar_lea.vmem %s6, %s644
      %p646 = scmp.lt.s32.totalorder %s27, 1
      %s647 = scalar_select %p646, %s27, 1
      %s648 = scalar_lea.vmem %s7, %s647
      %p649 = scmp.lt.s32.totalorder %s27, 1
      %s650 = scalar_select %p649, %s27, 1
      %s651 = smul.addr %s650, 64
      %s652 = smul.addr %s651, 4
      %s653 = scalar_lea.vmem %s8, %s652
      %p654 = scmp.lt.s32.totalorder %s27, 1
      %s655 = scalar_select %p654, %s27, 1
      %s656 = smul.addr %s655, 4
      %s657 = scalar_lea.vmem %s9, %s656
      %p658 = scmp.lt.s32.totalorder %s27, 1
      %s659 = scalar_select %p658, %s27, 1
      %s660 = smul.addr %s659, 64
      %s661 = smul.addr %s660, 4
      %s662 = scalar_lea.vmem %s10, %s661
      %p663 = scmp.lt.s32.totalorder %s27, 1
      %s664 = scalar_select %p663, %s27, 1
      %s665 = scalar_lea.vmem %s11, %s664
      %p667 = scmp.eq.s32.totalorder %s27, 0
      // Predicated region
      $region85: #{_lambda_.5} parent=83 // pred_check
        %p668 = pneg %p667
      $region86: #{_lambda_.5} parent=83 // pred_check_branch
        %670 = sbr.rel (%p668) target = $region88
      $region87: #{_lambda_.5} parent=83 // pred_region
        %v671 = vld [vmem:[%s0] sm:$0xff]
        %v672 = vld [vmem:[%s0 + $0x8] sm:$0xff]
        %v673 = vld [vmem:[%s0 + $0x10] sm:$0xff]
        %v674 = vld [vmem:[%s0 + $0x18] sm:$0xff]
        %v675 = vld [vmem:[%s0 + $0x20] sm:$0xff]
        %v676 = vld [vmem:[%s0 + $0x28] sm:$0xff]
        %v677 = vld [vmem:[%s0 + $0x30] sm:$0xff]
        %v678 = vld [vmem:[%s0 + $0x38] sm:$0xff]
        %v679 = vld [vmem:[%s0 + $0x40] sm:$0xff]
        %v680 = vld [vmem:[%s0 + $0x48] sm:$0xff]
        %v681 = vld [vmem:[%s0 + $0x50] sm:$0xff]
        %v682 = vld [vmem:[%s0 + $0x58] sm:$0xff]
        %v683 = vld [vmem:[%s0 + $0x60] sm:$0xff]
        %v684 = vld [vmem:[%s0 + $0x68] sm:$0xff]
        %v685 = vld [vmem:[%s0 + $0x70] sm:$0xff]
        %v686 = vld [vmem:[%s0 + $0x78] sm:$0xff]
        %687 = vst [vmem:[#allocation2] sm:$0xff] %v671
        %688 = vst [vmem:[#allocation2 + $0x8] sm:$0xff] %v672
        %689 = vst [vmem:[#allocation2 + $0x10] sm:$0xff] %v673
        %690 = vst [vmem:[#allocation2 + $0x18] sm:$0xff] %v674
        %691 = vst [vmem:[#allocation2 + $0x20] sm:$0xff] %v675
        %692 = vst [vmem:[#allocation2 + $0x28] sm:$0xff] %v676
        %693 = vst [vmem:[#allocation2 + $0x30] sm:$0xff] %v677
        %694 = vst [vmem:[#allocation2 + $0x38] sm:$0xff] %v678
        %695 = vst [vmem:[#allocation2 + $0x40] sm:$0xff] %v679
        %696 = vst [vmem:[#allocation2 + $0x48] sm:$0xff] %v680
        %697 = vst [vmem:[#allocation2 + $0x50] sm:$0xff] %v681
        %698 = vst [vmem:[#allocation2 + $0x58] sm:$0xff] %v682
        %699 = vst [vmem:[#allocation2 + $0x60] sm:$0xff] %v683
        %700 = vst [vmem:[#allocation2 + $0x68] sm:$0xff] %v684
        %701 = vst [vmem:[#allocation2 + $0x70] sm:$0xff] %v685
        %702 = vst [vmem:[#allocation2 + $0x78] sm:$0xff] %v686
      $region88: #{_lambda_.5} parent=83 // pred_fallthru
        _
      %v703 = vld [vmem:[#allocation2] sm:$0xff]
      %v704 = vld [vmem:[#allocation2 + $0x8] sm:$0xff]
      %v705 = vld [vmem:[#allocation2 + $0x10] sm:$0xff]
      %v706 = vld [vmem:[#allocation2 + $0x18] sm:$0xff]
      %v707 = vld [vmem:[#allocation2 + $0x20] sm:$0xff]
      %v708 = vld [vmem:[#allocation2 + $0x28] sm:$0xff]
      %v709 = vld [vmem:[#allocation2 + $0x30] sm:$0xff]
      %v710 = vld [vmem:[#allocation2 + $0x38] sm:$0xff]
      %v711 = vld [vmem:[#allocation2 + $0x40] sm:$0xff]
      %v712 = vld [vmem:[#allocation2 + $0x48] sm:$0xff]
      %v713 = vld [vmem:[#allocation2 + $0x50] sm:$0xff]
      %v714 = vld [vmem:[#allocation2 + $0x58] sm:$0xff]
      %v715 = vld [vmem:[#allocation2 + $0x60] sm:$0xff]
      %v716 = vld [vmem:[#allocation2 + $0x68] sm:$0xff]
      %v717 = vld [vmem:[#allocation2 + $0x70] sm:$0xff]
      %v718 = vld [vmem:[#allocation2 + $0x78] sm:$0xff]
      %v719 = vld [vmem:[%s1] sm:$0x3]
      %v720 = vxor.u32 %v719, 2147483648
      %v721 = vmul.f32 %v720, 1.442695
      %v722 = vpow.pop %v721
      %v723 = vadd.f32 %v722, 1.0
      %v724 = vrcp.pop %v723
      %v725 = vmul.f32 %v723, %v724
      %v726 = vsub.f32 1.0, %v725
      %v727 = vmul.f32 %v724, %v726
      %v728 = vadd.f32 %v724, %v727
      %vm729 = vweird.f32 %v723
      %vm730 = vweird.f32 %v724
      %vm731 = vmor %vm729, %vm730
      %v732 = vsel %vm731, %v724, %v728
      %v733 = vand.u32 2147483647, %v723
      %vm734 = vcmp.eq.f32.partialorder %v733, 8.507059e+37
      %v735 = vand.u32 %v723, 2147483648
      %v736 = vor.u32 1.1754944e-38, %v735
      %v737 = vsel %vm734, %v736, %v732
      %v738 = vmul.f32 1.0, %v737
      %v739 = vmul.f32 %v719, %v738
      %v740 = vpack.c.bf16 %v739, %v739
      %v741 = vld [vmem:[%s627] sm:$0xff]
      %v742 = vld [vmem:[%s627 + $0x8] sm:$0xff]
      %v743 = vld [vmem:[%s627 + $0x10] sm:$0xff]
      %v744 = vld [vmem:[%s627 + $0x18] sm:$0xff]
      %v745 = vld [vmem:[%s627 + $0x20] sm:$0xff]
      %v746 = vld [vmem:[%s627 + $0x28] sm:$0xff]
      %v747 = vld [vmem:[%s627 + $0x30] sm:$0xff]
      %v748 = vld [vmem:[%s627 + $0x38] sm:$0xff]
      %v749 = vld [vmem:[%s627 + $0x40] sm:$0xff]
      %v750 = vld [vmem:[%s627 + $0x48] sm:$0xff]
      %v751 = vld [vmem:[%s627 + $0x50] sm:$0xff]
      %v752 = vld [vmem:[%s627 + $0x58] sm:$0xff]
      %v753 = vld [vmem:[%s627 + $0x60] sm:$0xff]
      %v754 = vld [vmem:[%s627 + $0x68] sm:$0xff]
      %v755 = vld [vmem:[%s627 + $0x70] sm:$0xff]
      %v756 = vld [vmem:[%s627 + $0x78] sm:$0xff]
      %v757 = vld [vmem:[%s627 + $0x80] sm:$0xff]
      %v758 = vld [vmem:[%s627 + $0x88] sm:$0xff]
      %v759 = vld [vmem:[%s627 + $0x90] sm:$0xff]
      %v760 = vld [vmem:[%s627 + $0x98] sm:$0xff]
      %v761 = vld [vmem:[%s627 + $0xa0] sm:$0xff]
      %v762 = vld [vmem:[%s627 + $0xa8] sm:$0xff]
      %v763 = vld [vmem:[%s627 + $0xb0] sm:$0xff]
      %v764 = vld [vmem:[%s627 + $0xb8] sm:$0xff]
      %v765 = vld [vmem:[%s627 + $0xc0] sm:$0xff]
      %v766 = vld [vmem:[%s627 + $0xc8] sm:$0xff]
      %v767 = vld [vmem:[%s627 + $0xd0] sm:$0xff]
      %v768 = vld [vmem:[%s627 + $0xd8] sm:$0xff]
      %v769 = vld [vmem:[%s627 + $0xe0] sm:$0xff]
      %v770 = vld [vmem:[%s627 + $0xe8] sm:$0xff]
      %v771 = vld [vmem:[%s627 + $0xf0] sm:$0xff]
      %v772 = vld [vmem:[%s627 + $0xf8] sm:$0xff]
      %v773 = vld [vmem:[%s627 + $0x100] sm:$0xff]
      %v774 = vld [vmem:[%s627 + $0x108] sm:$0xff]
      %v775 = vld [vmem:[%s627 + $0x110] sm:$0xff]
      %v776 = vld [vmem:[%s627 + $0x118] sm:$0xff]
      %v777 = vld [vmem:[%s627 + $0x120] sm:$0xff]
      %v778 = vld [vmem:[%s627 + $0x128] sm:$0xff]
      %v779 = vld [vmem:[%s627 + $0x130] sm:$0xff]
      %v780 = vld [vmem:[%s627 + $0x138] sm:$0xff]
      %v781 = vld [vmem:[%s627 + $0x140] sm:$0xff]
      %v782 = vld [vmem:[%s627 + $0x148] sm:$0xff]
      %v783 = vld [vmem:[%s627 + $0x150] sm:$0xff]
      %v784 = vld [vmem:[%s627 + $0x158] sm:$0xff]
      %v785 = vld [vmem:[%s627 + $0x160] sm:$0xff]
      %v786 = vld [vmem:[%s627 + $0x168] sm:$0xff]
      %v787 = vld [vmem:[%s627 + $0x170] sm:$0xff]
      %v788 = vld [vmem:[%s627 + $0x178] sm:$0xff]
      %v789 = vld [vmem:[%s631] sm:$0x3f]
      %v791 = vperm.slane %v789, 0
      %v792 = vperm.slane %v789, 1
      %v793 = vperm.slane %v789, 2
      %v794 = vperm.slane %v789, 3
      %v795 = vperm.slane %v789, 4
      %v796 = vperm.slane %v789, 5
      %v851 = vunpack.c.l.b16 %v741
      %v852 = vunpack.c.h.b16 %v741
      %v853 = vunpack.c.l.b16 %v742
      %v854 = vunpack.c.h.b16 %v742
      %v855 = vunpack.c.l.b16 %v743
      %v856 = vunpack.c.h.b16 %v743
      %v857 = vunpack.c.l.b16 %v744
      %v858 = vunpack.c.h.b16 %v744
      %v859 = vunpack.c.l.b16 %v745
      %v860 = vunpack.c.h.b16 %v745
      %v861 = vunpack.c.l.b16 %v746
      %v862 = vunpack.c.h.b16 %v746
      %v863 = vunpack.c.l.b16 %v747
      %v864 = vunpack.c.h.b16 %v747
      %v865 = vunpack.c.l.b16 %v748
      %v866 = vunpack.c.h.b16 %v748
      %v867 = vunpack.c.l.b16 %v749
      %v868 = vunpack.c.h.b16 %v749
      %v869 = vunpack.c.l.b16 %v750
      %v870 = vunpack.c.h.b16 %v750
      %v871 = vunpack.c.l.b16 %v751
      %v872 = vunpack.c.h.b16 %v751
      %v873 = vunpack.c.l.b16 %v752
      %v874 = vunpack.c.h.b16 %v752
      %v875 = vunpack.c.l.b16 %v753
      %v876 = vunpack.c.h.b16 %v753
      %v877 = vunpack.c.l.b16 %v754
      %v878 = vunpack.c.h.b16 %v754
      %v879 = vunpack.c.l.b16 %v755
      %v880 = vunpack.c.h.b16 %v755
      %v881 = vunpack.c.l.b16 %v756
      %v882 = vunpack.c.h.b16 %v756
      %v883 = vunpack.c.l.b16 %v757
      %v884 = vunpack.c.h.b16 %v757
      %v885 = vunpack.c.l.b16 %v758
      %v886 = vunpack.c.h.b16 %v758
      %v887 = vunpack.c.l.b16 %v759
      %v888 = vunpack.c.h.b16 %v759
      %v889 = vunpack.c.l.b16 %v760
      %v890 = vunpack.c.h.b16 %v760
      %v891 = vunpack.c.l.b16 %v761
      %v892 = vunpack.c.h.b16 %v761
      %v893 = vunpack.c.l.b16 %v762
      %v894 = vunpack.c.h.b16 %v762
      %v895 = vunpack.c.l.b16 %v763
      %v896 = vunpack.c.h.b16 %v763
      %v897 = vunpack.c.l.b16 %v764
      %v898 = vunpack.c.h.b16 %v764
      %v899 = vunpack.c.l.b16 %v765
      %v900 = vunpack.c.h.b16 %v765
      %v901 = vunpack.c.l.b16 %v766
      %v902 = vunpack.c.h.b16 %v766
      %v903 = vunpack.c.l.b16 %v767
      %v904 = vunpack.c.h.b16 %v767
      %v905 = vunpack.c.l.b16 %v768
      %v906 = vunpack.c.h.b16 %v768
      %v907 = vunpack.c.l.b16 %v769
      %v908 = vunpack.c.h.b16 %v769
      %v909 = vunpack.c.l.b16 %v770
      %v910 = vunpack.c.h.b16 %v770
      %v911 = vunpack.c.l.b16 %v771
      %v912 = vunpack.c.h.b16 %v771
      %v913 = vunpack.c.l.b16 %v772
      %v914 = vunpack.c.h.b16 %v772
      %v915 = vunpack.c.l.b16 %v773
      %v916 = vunpack.c.h.b16 %v773
      %v917 = vunpack.c.l.b16 %v774
      %v918 = vunpack.c.h.b16 %v774
      %v919 = vunpack.c.l.b16 %v775
      %v920 = vunpack.c.h.b16 %v775
      %v921 = vunpack.c.l.b16 %v776
      %v922 = vunpack.c.h.b16 %v776
      %v923 = vunpack.c.l.b16 %v777
      %v924 = vunpack.c.h.b16 %v777
      %v925 = vunpack.c.l.b16 %v778
      %v926 = vunpack.c.h.b16 %v778
      %v927 = vunpack.c.l.b16 %v779
      %v928 = vunpack.c.h.b16 %v779
      %v929 = vunpack.c.l.b16 %v780
      %v930 = vunpack.c.h.b16 %v780
      %v931 = vunpack.c.l.b16 %v781
      %v932 = vunpack.c.h.b16 %v781
      %v933 = vunpack.c.l.b16 %v782
      %v934 = vunpack.c.h.b16 %v782
      %v935 = vunpack.c.l.b16 %v783
      %v936 = vunpack.c.h.b16 %v783
      %v937 = vunpack.c.l.b16 %v784
      %v938 = vunpack.c.h.b16 %v784
      %v939 = vunpack.c.l.b16 %v785
      %v940 = vunpack.c.h.b16 %v785
      %v941 = vunpack.c.l.b16 %v786
      %v942 = vunpack.c.h.b16 %v786
      %v943 = vunpack.c.l.b16 %v787
      %v944 = vunpack.c.h.b16 %v787
      %v945 = vunpack.c.l.b16 %v788
      %v946 = vunpack.c.h.b16 %v788
      %v947 = vpack.c.b16 %v857, %v851
      %v948 = vpack.c.b16 %v858, %v852
      %v949 = vpack.c.b16 %v859, %v853
      %v950 = vpack.c.b16 %v860, %v854
      %v951 = vpack.c.b16 %v861, %v855
      %v952 = vpack.c.b16 %v862, %v856
      %v953 = vpack.c.b16 %v869, %v863
      %v954 = vpack.c.b16 %v870, %v864
      %v955 = vpack.c.b16 %v871, %v865
      %v956 = vpack.c.b16 %v872, %v866
      %v957 = vpack.c.b16 %v873, %v867
      %v958 = vpack.c.b16 %v874, %v868
      %v959 = vpack.c.b16 %v881, %v875
      %v960 = vpack.c.b16 %v882, %v876
      %v961 = vpack.c.b16 %v883, %v877
      %v962 = vpack.c.b16 %v884, %v878
      %v963 = vpack.c.b16 %v885, %v879
      %v964 = vpack.c.b16 %v886, %v880
      %v965 = vpack.c.b16 %v893, %v887
      %v966 = vpack.c.b16 %v894, %v888
      %v967 = vpack.c.b16 %v895, %v889
      %v968 = vpack.c.b16 %v896, %v890
      %v969 = vpack.c.b16 %v897, %v891
      %v970 = vpack.c.b16 %v898, %v892
      %v971 = vpack.c.b16 %v905, %v899
      %v972 = vpack.c.b16 %v906, %v900
      %v973 = vpack.c.b16 %v907, %v901
      %v974 = vpack.c.b16 %v908, %v902
      %v975 = vpack.c.b16 %v909, %v903
      %v976 = vpack.c.b16 %v910, %v904
      %v977 = vpack.c.b16 %v917, %v911
      %v978 = vpack.c.b16 %v918, %v912
      %v979 = vpack.c.b16 %v919, %v913
      %v980 = vpack.c.b16 %v920, %v914
      %v981 = vpack.c.b16 %v921, %v915
      %v982 = vpack.c.b16 %v922, %v916
      %v983 = vpack.c.b16 %v929, %v923
      %v984 = vpack.c.b16 %v930, %v924
      %v985 = vpack.c.b16 %v931, %v925
      %v986 = vpack.c.b16 %v932, %v926
      %v987 = vpack.c.b16 %v933, %v927
      %v988 = vpack.c.b16 %v934, %v928
      %v989 = vpack.c.b16 %v941, %v935
      %v990 = vpack.c.b16 %v942, %v936
      %v991 = vpack.c.b16 %v943, %v937
      %v992 = vpack.c.b16 %v944, %v938
      %v993 = vpack.c.b16 %v945, %v939
      %v994 = vpack.c.b16 %v946, %v940
      %1043 = vmatpush.bf16.msra.mxu0 %v989
      %1044 = vmatpush.bf16.msra.mxu0 %v983
      %1045 = vmatpush.bf16.msra.mxu0 %v977
      %1046 = vmatpush.bf16.msra.mxu0 %v971
      %1047 = vmatpush.bf16.msra.mxu0 %v965
      %1048 = vmatpush.bf16.msra.mxu0 %v959
      %1049 = vmatpush.bf16.msra.mxu0 %v953
      %1050 = vmatpush.bf16.msra.mxu0 %v947
      %1051 = vmatmul.bf16.gmra.mxu0 %v740
      %v1052 = vpop.f32.mrf.mxu0
      %v1053 = vadd.f32 %v791, %v1052
      %v1054 = vpop.f32.mrf.mxu0
      %1055 = vdwg.mxu0
      %1056 = vmatpush.bf16.msra.mxu0 %v990
      %1057 = vmatpush.bf16.msra.mxu0 %v984
      %1058 = vmatpush.bf16.msra.mxu0 %v978
      %1059 = vmatpush.bf16.msra.mxu0 %v972
      %1060 = vmatpush.bf16.msra.mxu0 %v966
      %1061 = vmatpush.bf16.msra.mxu0 %v960
      %1062 = vmatpush.bf16.msra.mxu0 %v954
      %1063 = vmatpush.bf16.msra.mxu0 %v948
      %1064 = vmatmul.bf16.gmra.mxu0 %v740
      %v1065 = vpop.f32.mrf.mxu0
      %v1066 = vadd.f32 %v792, %v1065
      %v1067 = vpop.f32.mrf.mxu0
      %1068 = vdwg.mxu0
      %1069 = vmatpush.bf16.msra.mxu0 %v991
      %1070 = vmatpush.bf16.msra.mxu0 %v985
      %1071 = vmatpush.bf16.msra.mxu0 %v979
      %1072 = vmatpush.bf16.msra.mxu0 %v973
      %1073 = vmatpush.bf16.msra.mxu0 %v967
      %1074 = vmatpush.bf16.msra.mxu0 %v961
      %1075 = vmatpush.bf16.msra.mxu0 %v955
      %1076 = vmatpush.bf16.msra.mxu0 %v949
      %1077 = vmatmul.bf16.gmra.mxu0 %v740
      %v1078 = vpop.f32.mrf.mxu0
      %v1079 = vadd.f32 %v793, %v1078
      %v1080 = vpop.f32.mrf.mxu0
      %1081 = vdwg.mxu0
      %1082 = vmatpush.bf16.msra.mxu0 %v992
      %1083 = vmatpush.bf16.msra.mxu0 %v986
      %1084 = vmatpush.bf16.msra.mxu0 %v980
      %1085 = vmatpush.bf16.msra.mxu0 %v974
      %1086 = vmatpush.bf16.msra.mxu0 %v968
      %1087 = vmatpush.bf16.msra.mxu0 %v962
      %1088 = vmatpush.bf16.msra.mxu0 %v956
      %1089 = vmatpush.bf16.msra.mxu0 %v950
      %1090 = vmatmul.bf16.gmra.mxu0 %v740
      %v1091 = vpop.f32.mrf.mxu0
      %v1092 = vadd.f32 %v794, %v1091
      %v1093 = vpop.f32.mrf.mxu0
      %1094 = vdwg.mxu0
      %1095 = vmatpush.bf16.msra.mxu0 %v993
      %1096 = vmatpush.bf16.msra.mxu0 %v987
      %1097 = vmatpush.bf16.msra.mxu0 %v981
      %1098 = vmatpush.bf16.msra.mxu0 %v975
      %1099 = vmatpush.bf16.msra.mxu0 %v969
      %1100 = vmatpush.bf16.msra.mxu0 %v963
      %1101 = vmatpush.bf16.msra.mxu0 %v957
      %1102 = vmatpush.bf16.msra.mxu0 %v951
      %1103 = vmatmul.bf16.gmra.mxu0 %v740
      %v1104 = vpop.f32.mrf.mxu0
      %v1105 = vadd.f32 %v795, %v1104
      %v1106 = vpop.f32.mrf.mxu0
      %1107 = vdwg.mxu0
      %1108 = vmatpush.bf16.msra.mxu0 %v994
      %1109 = vmatpush.bf16.msra.mxu0 %v988
      %1110 = vmatpush.bf16.msra.mxu0 %v982
      %1111 = vmatpush.bf16.msra.mxu0 %v976
      %1112 = vmatpush.bf16.msra.mxu0 %v970
      %1113 = vmatpush.bf16.msra.mxu0 %v964
      %1114 = vmatpush.bf16.msra.mxu0 %v958
      %1115 = vmatpush.bf16.msra.mxu0 %v952
      %1116 = vmatmul.bf16.gmra.mxu0 %v740
      %v1117 = vpop.f32.mrf.mxu0
      %v1118 = vadd.f32 %v796, %v1117
      %v1119 = vpop.f32.mrf.mxu0
      %1120 = vdwg.mxu0
      %v1122 = vrot.slane %v1053, 1
      %v1124 = vrot.slane %v1066, 1
      %v1127 = vrot.slane %v1079, 1
      %v1129 = vrot.slane %v1092, 1
      %v1131 = vrot.slane %v1105, 1
      %v1134 = vrot.slane %v1118, 1
      %1135 = vadd.xlane.f32.xlu0 %v703
      %v1136 = vpop.xlane.xlu0 %1135
      %1137 = vadd.xlane.f32.xlu0 %v704
      %v1138 = vpop.xlane.xlu0 %1137
      %1139 = vadd.xlane.f32.xlu0 %v705
      %v1140 = vpop.xlane.xlu0 %1139
      %1141 = vadd.xlane.f32.xlu0 %v706
      %v1142 = vpop.xlane.xlu0 %1141
      %1143 = vadd.xlane.f32.xlu0 %v707
      %v1144 = vpop.xlane.xlu0 %1143
      %1145 = vadd.xlane.f32.xlu0 %v708
      %v1146 = vpop.xlane.xlu0 %1145
      %1147 = vadd.xlane.f32.xlu0 %v709
      %v1148 = vpop.xlane.xlu0 %1147
      %1149 = vadd.xlane.f32.xlu0 %v710
      %v1150 = vpop.xlane.xlu0 %1149
      %1151 = vadd.xlane.f32.xlu0 %v711
      %v1152 = vpop.xlane.xlu0 %1151
      %1153 = vadd.xlane.f32.xlu0 %v712
      %v1154 = vpop.xlane.xlu0 %1153
      %1155 = vadd.xlane.f32.xlu0 %v713
      %v1156 = vpop.xlane.xlu0 %1155
      %1157 = vadd.xlane.f32.xlu0 %v714
      %v1158 = vpop.xlane.xlu0 %1157
      %1159 = vadd.xlane.f32.xlu0 %v715
      %v1160 = vpop.xlane.xlu0 %1159
      %1161 = vadd.xlane.f32.xlu0 %v716
      %v1162 = vpop.xlane.xlu0 %1161
      %1163 = vadd.xlane.f32.xlu0 %v717
      %v1164 = vpop.xlane.xlu0 %1163
      %1165 = vadd.xlane.f32.xlu0 %v718
      %v1166 = vpop.xlane.xlu0 %1165
      %v1167 = vrcp.pop 128.0
      %v1168 = vmul.f32 128.0, %v1167
      %v1169 = vsub.f32 1.0, %v1168
      %v1170 = vmul.f32 %v1167, %v1169
      %v1171 = vadd.f32 %v1167, %v1170
      %vm1172 = vweird.f32 %v1167
      %v1173 = vsel %vm1172, %v1167, %v1171
      %v1174 = vmul.f32 %v1136, %v1173
      %v1175 = vmul.f32 %v1138, %v1173
      %v1176 = vmul.f32 %v1140, %v1173
      %v1177 = vmul.f32 %v1142, %v1173
      %v1178 = vmul.f32 %v1144, %v1173
      %v1179 = vmul.f32 %v1146, %v1173
      %v1180 = vmul.f32 %v1148, %v1173
      %v1181 = vmul.f32 %v1150, %v1173
      %v1182 = vmul.f32 %v1152, %v1173
      %v1183 = vmul.f32 %v1154, %v1173
      %v1184 = vmul.f32 %v1156, %v1173
      %v1185 = vmul.f32 %v1158, %v1173
      %v1186 = vmul.f32 %v1160, %v1173
      %v1187 = vmul.f32 %v1162, %v1173
      %v1188 = vmul.f32 %v1164, %v1173
      %v1189 = vmul.f32 %v1166, %v1173
      %v1190 = vsub.f32 %v703, %v1174
      %v1191 = vsub.f32 %v704, %v1175
      %v1192 = vsub.f32 %v705, %v1176
      %v1193 = vsub.f32 %v706, %v1177
      %v1194 = vsub.f32 %v707, %v1178
      %v1195 = vsub.f32 %v708, %v1179
      %v1196 = vsub.f32 %v709, %v1180
      %v1197 = vsub.f32 %v710, %v1181
      %v1198 = vsub.f32 %v711, %v1182
      %v1199 = vsub.f32 %v712, %v1183
      %v1200 = vsub.f32 %v713, %v1184
      %v1201 = vsub.f32 %v714, %v1185
      %v1202 = vsub.f32 %v715, %v1186
      %v1203 = vsub.f32 %v716, %v1187
      %v1204 = vsub.f32 %v717, %v1188
      %v1205 = vsub.f32 %v718, %v1189
      %v1206 = vmul.f32 %v1190, %v1190
      %v1207 = vmul.f32 %v1191, %v1191
      %v1208 = vmul.f32 %v1192, %v1192
      %v1209 = vmul.f32 %v1193, %v1193
      %v1210 = vmul.f32 %v1194, %v1194
      %v1211 = vmul.f32 %v1195, %v1195
      %v1212 = vmul.f32 %v1196, %v1196
      %v1213 = vmul.f32 %v1197, %v1197
      %v1214 = vmul.f32 %v1198, %v1198
      %v1215 = vmul.f32 %v1199, %v1199
      %v1216 = vmul.f32 %v1200, %v1200
      %v1217 = vmul.f32 %v1201, %v1201
      %v1218 = vmul.f32 %v1202, %v1202
      %v1219 = vmul.f32 %v1203, %v1203
      %v1220 = vmul.f32 %v1204, %v1204
      %v1221 = vmul.f32 %v1205, %v1205
      %1222 = vadd.xlane.f32.xlu0 %v1206
      %v1223 = vpop.xlane.xlu0 %1222
      %1224 = vadd.xlane.f32.xlu0 %v1207
      %v1225 = vpop.xlane.xlu0 %1224
      %1226 = vadd.xlane.f32.xlu0 %v1208
      %v1227 = vpop.xlane.xlu0 %1226
      %1228 = vadd.xlane.f32.xlu0 %v1209
      %v1229 = vpop.xlane.xlu0 %1228
      %1230 = vadd.xlane.f32.xlu0 %v1210
      %v1231 = vpop.xlane.xlu0 %1230
      %1232 = vadd.xlane.f32.xlu0 %v1211
      %v1233 = vpop.xlane.xlu0 %1232
      %1234 = vadd.xlane.f32.xlu0 %v1212
      %v1235 = vpop.xlane.xlu0 %1234
      %1236 = vadd.xlane.f32.xlu0 %v1213
      %v1237 = vpop.xlane.xlu0 %1236
      %1238 = vadd.xlane.f32.xlu0 %v1214
      %v1239 = vpop.xlane.xlu0 %1238
      %1240 = vadd.xlane.f32.xlu0 %v1215
      %v1241 = vpop.xlane.xlu0 %1240
      %1242 = vadd.xlane.f32.xlu0 %v1216
      %v1243 = vpop.xlane.xlu0 %1242
      %1244 = vadd.xlane.f32.xlu0 %v1217
      %v1245 = vpop.xlane.xlu0 %1244
      %1246 = vadd.xlane.f32.xlu0 %v1218
      %v1247 = vpop.xlane.xlu0 %1246
      %1248 = vadd.xlane.f32.xlu0 %v1219
      %v1249 = vpop.xlane.xlu0 %1248
      %1250 = vadd.xlane.f32.xlu0 %v1220
      %v1251 = vpop.xlane.xlu0 %1250
      %1252 = vadd.xlane.f32.xlu0 %v1221
      %v1253 = vpop.xlane.xlu0 %1252
      %v1254 = vmul.f32 %v1223, %v1173
      %v1255 = vmul.f32 %v1225, %v1173
      %v1256 = vmul.f32 %v1227, %v1173
      %v1257 = vmul.f32 %v1229, %v1173
      %v1258 = vmul.f32 %v1231, %v1173
      %v1259 = vmul.f32 %v1233, %v1173
      %v1260 = vmul.f32 %v1235, %v1173
      %v1261 = vmul.f32 %v1237, %v1173
      %v1262 = vmul.f32 %v1239, %v1173
      %v1263 = vmul.f32 %v1241, %v1173
      %v1264 = vmul.f32 %v1243, %v1173
      %v1265 = vmul.f32 %v1245, %v1173
      %v1266 = vmul.f32 %v1247, %v1173
      %v1267 = vmul.f32 %v1249, %v1173
      %v1268 = vmul.f32 %v1251, %v1173
      %v1269 = vmul.f32 %v1253, %v1173
      %v1270 = vadd.f32 %v1254, 1e-06
      %v1271 = vadd.f32 %v1255, 1e-06
      %v1272 = vadd.f32 %v1256, 1e-06
      %v1273 = vadd.f32 %v1257, 1e-06
      %v1274 = vadd.f32 %v1258, 1e-06
      %v1275 = vadd.f32 %v1259, 1e-06
      %v1276 = vadd.f32 %v1260, 1e-06
      %v1277 = vadd.f32 %v1261, 1e-06
      %v1278 = vadd.f32 %v1262, 1e-06
      %v1279 = vadd.f32 %v1263, 1e-06
      %v1280 = vadd.f32 %v1264, 1e-06
      %v1281 = vadd.f32 %v1265, 1e-06
      %v1282 = vadd.f32 %v1266, 1e-06
      %v1283 = vadd.f32 %v1267, 1e-06
      %v1284 = vadd.f32 %v1268, 1e-06
      %v1285 = vadd.f32 %v1269, 1e-06
      %v1286 = vrsqrt.pop %v1270
      %v1287 = vmul.f32 %v1286, %v1270
      %v1288 = vmul.f32 %v1287, %v1286
      %v1289 = vmul.f32 0.5, %v1288
      %v1290 = vsub.f32 1.5, %v1289
      %v1291 = vmul.f32 %v1286, %v1290
      %vm1292 = vweird.f32 %v1270
      %vm1293 = vweird.f32 %v1286
      %vm1294 = vmor %vm1292, %vm1293
      %v1295 = vsel %vm1294, %v1286, %v1291
      %v1296 = vrsqrt.pop %v1271
      %v1297 = vmul.f32 %v1296, %v1271
      %v1298 = vmul.f32 %v1297, %v1296
      %v1299 = vmul.f32 0.5, %v1298
      %v1300 = vsub.f32 1.5, %v1299
      %v1301 = vmul.f32 %v1296, %v1300
      %vm1302 = vweird.f32 %v1271
      %vm1303 = vweird.f32 %v1296
      %vm1304 = vmor %vm1302, %vm1303
      %v1305 = vsel %vm1304, %v1296, %v1301
      %v1306 = vrsqrt.pop %v1272
      %v1307 = vmul.f32 %v1306, %v1272
      %v1308 = vmul.f32 %v1307, %v1306
      %v1309 = vmul.f32 0.5, %v1308
      %v1310 = vsub.f32 1.5, %v1309
      %v1311 = vmul.f32 %v1306, %v1310
      %vm1312 = vweird.f32 %v1272
      %vm1313 = vweird.f32 %v1306
      %vm1314 = vmor %vm1312, %vm1313
      %v1315 = vsel %vm1314, %v1306, %v1311
      %v1316 = vrsqrt.pop %v1273
      %v1317 = vmul.f32 %v1316, %v1273
      %v1318 = vmul.f32 %v1317, %v1316
      %v1319 = vmul.f32 0.5, %v1318
      %v1320 = vsub.f32 1.5, %v1319
      %v1321 = vmul.f32 %v1316, %v1320
      %vm1322 = vweird.f32 %v1273
      %vm1323 = vweird.f32 %v1316
      %vm1324 = vmor %vm1322, %vm1323
      %v1325 = vsel %vm1324, %v1316, %v1321
      %v1326 = vrsqrt.pop %v1274
      %v1327 = vmul.f32 %v1326, %v1274
      %v1328 = vmul.f32 %v1327, %v1326
      %v1329 = vmul.f32 0.5, %v1328
      %v1330 = vsub.f32 1.5, %v1329
      %v1331 = vmul.f32 %v1326, %v1330
      %vm1332 = vweird.f32 %v1274
      %vm1333 = vweird.f32 %v1326
      %vm1334 = vmor %vm1332, %vm1333
      %v1335 = vsel %vm1334, %v1326, %v1331
      %v1336 = vrsqrt.pop %v1275
      %v1337 = vmul.f32 %v1336, %v1275
      %v1338 = vmul.f32 %v1337, %v1336
      %v1339 = vmul.f32 0.5, %v1338
      %v1340 = vsub.f32 1.5, %v1339
      %v1341 = vmul.f32 %v1336, %v1340
      %vm1342 = vweird.f32 %v1275
      %vm1343 = vweird.f32 %v1336
      %vm1344 = vmor %vm1342, %vm1343
      %v1345 = vsel %vm1344, %v1336, %v1341
      %v1346 = vrsqrt.pop %v1276
      %v1347 = vmul.f32 %v1346, %v1276
      %v1348 = vmul.f32 %v1347, %v1346
      %v1349 = vmul.f32 0.5, %v1348
      %v1350 = vsub.f32 1.5, %v1349
      %v1351 = vmul.f32 %v1346, %v1350
      %vm1352 = vweird.f32 %v1276
      %vm1353 = vweird.f32 %v1346
      %vm1354 = vmor %vm1352, %vm1353
      %v1355 = vsel %vm1354, %v1346, %v1351
      %v1356 = vrsqrt.pop %v1277
      %v1357 = vmul.f32 %v1356, %v1277
      %v1358 = vmul.f32 %v1357, %v1356
      %v1359 = vmul.f32 0.5, %v1358
      %v1360 = vsub.f32 1.5, %v1359
      %v1361 = vmul.f32 %v1356, %v1360
      %vm1362 = vweird.f32 %v1277
      %vm1363 = vweird.f32 %v1356
      %vm1364 = vmor %vm1362, %vm1363
      %v1365 = vsel %vm1364, %v1356, %v1361
      %v1366 = vrsqrt.pop %v1278
      %v1367 = vmul.f32 %v1366, %v1278
      %v1368 = vmul.f32 %v1367, %v1366
      %v1369 = vmul.f32 0.5, %v1368
      %v1370 = vsub.f32 1.5, %v1369
      %v1371 = vmul.f32 %v1366, %v1370
      %vm1372 = vweird.f32 %v1278
      %vm1373 = vweird.f32 %v1366
      %vm1374 = vmor %vm1372, %vm1373
      %v1375 = vsel %vm1374, %v1366, %v1371
      %v1376 = vrsqrt.pop %v1279
      %v1377 = vmul.f32 %v1376, %v1279
      %v1378 = vmul.f32 %v1377, %v1376
      %v1379 = vmul.f32 0.5, %v1378
      %v1380 = vsub.f32 1.5, %v1379
      %v1381 = vmul.f32 %v1376, %v1380
      %vm1382 = vweird.f32 %v1279
      %vm1383 = vweird.f32 %v1376
      %vm1384 = vmor %vm1382, %vm1383
      %v1385 = vsel %vm1384, %v1376, %v1381
      %v1386 = vrsqrt.pop %v1280
      %v1387 = vmul.f32 %v1386, %v1280
      %v1388 = vmul.f32 %v1387, %v1386
      %v1389 = vmul.f32 0.5, %v1388
      %v1390 = vsub.f32 1.5, %v1389
      %v1391 = vmul.f32 %v1386, %v1390
      %vm1392 = vweird.f32 %v1280
      %vm1393 = vweird.f32 %v1386
      %vm1394 = vmor %vm1392, %vm1393
      %v1395 = vsel %vm1394, %v1386, %v1391
      %v1396 = vrsqrt.pop %v1281
      %v1397 = vmul.f32 %v1396, %v1281
      %v1398 = vmul.f32 %v1397, %v1396
      %v1399 = vmul.f32 0.5, %v1398
      %v1400 = vsub.f32 1.5, %v1399
      %v1401 = vmul.f32 %v1396, %v1400
      %vm1402 = vweird.f32 %v1281
      %vm1403 = vweird.f32 %v1396
      %vm1404 = vmor %vm1402, %vm1403
      %v1405 = vsel %vm1404, %v1396, %v1401
      %v1406 = vrsqrt.pop %v1282
      %v1407 = vmul.f32 %v1406, %v1282
      %v1408 = vmul.f32 %v1407, %v1406
      %v1409 = vmul.f32 0.5, %v1408
      %v1410 = vsub.f32 1.5, %v1409
      %v1411 = vmul.f32 %v1406, %v1410
      %vm1412 = vweird.f32 %v1282
      %vm1413 = vweird.f32 %v1406
      %vm1414 = vmor %vm1412, %vm1413
      %v1415 = vsel %vm1414, %v1406, %v1411
      %v1416 = vrsqrt.pop %v1283
      %v1417 = vmul.f32 %v1416, %v1283
      %v1418 = vmul.f32 %v1417, %v1416
      %v1419 = vmul.f32 0.5, %v1418
      %v1420 = vsub.f32 1.5, %v1419
      %v1421 = vmul.f32 %v1416, %v1420
      %vm1422 = vweird.f32 %v1283
      %vm1423 = vweird.f32 %v1416
      %vm1424 = vmor %vm1422, %vm1423
      %v1425 = vsel %vm1424, %v1416, %v1421
      %v1426 = vrsqrt.pop %v1284
      %v1427 = vmul.f32 %v1426, %v1284
      %v1428 = vmul.f32 %v1427, %v1426
      %v1429 = vmul.f32 0.5, %v1428
      %v1430 = vsub.f32 1.5, %v1429
      %v1431 = vmul.f32 %v1426, %v1430
      %vm1432 = vweird.f32 %v1284
      %vm1433 = vweird.f32 %v1426
      %vm1434 = vmor %vm1432, %vm1433
      %v1435 = vsel %vm1434, %v1426, %v1431
      %v1436 = vrsqrt.pop %v1285
      %v1437 = vmul.f32 %v1436, %v1285
      %v1438 = vmul.f32 %v1437, %v1436
      %v1439 = vmul.f32 0.5, %v1438
      %v1440 = vsub.f32 1.5, %v1439
      %v1441 = vmul.f32 %v1436, %v1440
      %vm1442 = vweird.f32 %v1285
      %vm1443 = vweird.f32 %v1436
      %vm1444 = vmor %vm1442, %vm1443
      %v1445 = vsel %vm1444, %v1436, %v1441
      %v1446 = vmul.f32 %v1190, %v1295
      %v1447 = vmul.f32 %v1191, %v1305
      %v1448 = vmul.f32 %v1192, %v1315
      %v1449 = vmul.f32 %v1193, %v1325
      %v1450 = vmul.f32 %v1194, %v1335
      %v1451 = vmul.f32 %v1195, %v1345
      %v1452 = vmul.f32 %v1196, %v1355
      %v1453 = vmul.f32 %v1197, %v1365
      %v1454 = vmul.f32 %v1198, %v1375
      %v1455 = vmul.f32 %v1199, %v1385
      %v1456 = vmul.f32 %v1200, %v1395
      %v1457 = vmul.f32 %v1201, %v1405
      %v1458 = vmul.f32 %v1202, %v1415
      %v1459 = vmul.f32 %v1203, %v1425
      %v1460 = vmul.f32 %v1204, %v1435
      %v1461 = vmul.f32 %v1205, %v1445
      %v1462 = vadd.f32 %v1066, 1.0
      %v1463 = vadd.f32 %v1124, 1.0
      %v1466 = vperm.slane %v1462, 0
      %v1467 = vperm.slane %v1463, 0
      %v1470 = vmul.f32 %v1446, %v1466
      %v1471 = vmul.f32 %v1447, %v1466
      %v1472 = vmul.f32 %v1448, %v1466
      %v1473 = vmul.f32 %v1449, %v1466
      %v1474 = vmul.f32 %v1450, %v1466
      %v1475 = vmul.f32 %v1451, %v1466
      %v1476 = vmul.f32 %v1452, %v1466
      %v1477 = vmul.f32 %v1453, %v1466
      %v1478 = vmul.f32 %v1454, %v1467
      %v1479 = vmul.f32 %v1455, %v1467
      %v1480 = vmul.f32 %v1456, %v1467
      %v1481 = vmul.f32 %v1457, %v1467
      %v1482 = vmul.f32 %v1458, %v1467
      %v1483 = vmul.f32 %v1459, %v1467
      %v1484 = vmul.f32 %v1460, %v1467
      %v1485 = vmul.f32 %v1461, %v1467
      %v1486 = vperm.slane %v1053, 0
      %v1487 = vperm.slane %v1122, 0
      %v1490 = vadd.f32 %v1470, %v1486
      %v1491 = vadd.f32 %v1471, %v1486
      %v1492 = vadd.f32 %v1472, %v1486
      %v1493 = vadd.f32 %v1473, %v1486
      %v1494 = vadd.f32 %v1474, %v1486
      %v1495 = vadd.f32 %v1475, %v1486
      %v1496 = vadd.f32 %v1476, %v1486
      %v1497 = vadd.f32 %v1477, %v1486
      %v1498 = vadd.f32 %v1478, %v1487
      %v1499 = vadd.f32 %v1479, %v1487
      %v1500 = vadd.f32 %v1480, %v1487
      %v1501 = vadd.f32 %v1481, %v1487
      %v1502 = vadd.f32 %v1482, %v1487
      %v1503 = vadd.f32 %v1483, %v1487
      %v1504 = vadd.f32 %v1484, %v1487
      %v1505 = vadd.f32 %v1485, %v1487
      %v1506 = vpack.c.bf16 %v1491, %v1490
      %v1507 = vpack.c.bf16 %v1493, %v1492
      %v1508 = vpack.c.bf16 %v1495, %v1494
      %v1509 = vpack.c.bf16 %v1497, %v1496
      %v1510 = vpack.c.bf16 %v1499, %v1498
      %v1511 = vpack.c.bf16 %v1501, %v1500
      %v1512 = vpack.c.bf16 %v1503, %v1502
      %v1513 = vpack.c.bf16 %v1505, %v1504
      %v1514 = vld [vmem:[%s636] sm:$0xff]
      %v1515 = vld [vmem:[%s636 + $0x8] sm:$0xf]
      %v1516 = vld [vmem:[%s636 + $0xc] sm:$0xff]
      %v1517 = vld [vmem:[%s636 + $0x14] sm:$0xf]
      %v1518 = vld [vmem:[%s636 + $0x18] sm:$0xff]
      %v1519 = vld [vmem:[%s636 + $0x20] sm:$0xf]
      %v1520 = vld [vmem:[%s636 + $0x24] sm:$0xff]
      %v1521 = vld [vmem:[%s636 + $0x2c] sm:$0xf]
      %v1522 = vld [vmem:[%s636 + $0x30] sm:$0xff]
      %v1523 = vld [vmem:[%s636 + $0x38] sm:$0xf]
      %v1524 = vld [vmem:[%s636 + $0x3c] sm:$0xff]
      %v1525 = vld [vmem:[%s636 + $0x44] sm:$0xf]
      %v1526 = vld [vmem:[%s636 + $0x48] sm:$0xff]
      %v1527 = vld [vmem:[%s636 + $0x50] sm:$0xf]
      %v1528 = vld [vmem:[%s636 + $0x54] sm:$0xff]
      %v1529 = vld [vmem:[%s636 + $0x5c] sm:$0xf]
      %v1530 = vld [vmem:[%s636 + $0x60] sm:$0xff]
      %v1531 = vld [vmem:[%s636 + $0x68] sm:$0xf]
      %v1532 = vld [vmem:[%s636 + $0x6c] sm:$0xff]
      %v1533 = vld [vmem:[%s636 + $0x74] sm:$0xf]
      %v1534 = vld [vmem:[%s636 + $0x78] sm:$0xff]
      %v1535 = vld [vmem:[%s636 + $0x80] sm:$0xf]
      %v1536 = vld [vmem:[%s636 + $0x84] sm:$0xff]
      %v1537 = vld [vmem:[%s636 + $0x8c] sm:$0xf]
      %v1538 = vld [vmem:[%s636 + $0x90] sm:$0xff]
      %v1539 = vld [vmem:[%s636 + $0x98] sm:$0xf]
      %v1540 = vld [vmem:[%s636 + $0x9c] sm:$0xff]
      %v1541 = vld [vmem:[%s636 + $0xa4] sm:$0xf]
      %v1542 = vld [vmem:[%s636 + $0xa8] sm:$0xff]
      %v1543 = vld [vmem:[%s636 + $0xb0] sm:$0xf]
      %v1544 = vld [vmem:[%s636 + $0xb4] sm:$0xff]
      %v1545 = vld [vmem:[%s636 + $0xbc] sm:$0xf]
      %v1546 = vld [vmem:[%s640] sm:$0x7]
      %v1548 = vperm.slane %v1546, 0
      %v1549 = vperm.slane %v1546, 1
      %v1550 = vperm.slane %v1546, 2
      %v1586 = vunpack.c.l.b16 %v1514
      %v1587 = vunpack.c.h.b16 %v1514
      %v1588 = vunpack.c.l.b16 %v1515
      %v1589 = vunpack.c.l.b16 %v1516
      %v1590 = vunpack.c.h.b16 %v1516
      %v1591 = vunpack.c.l.b16 %v1517
      %v1592 = vunpack.c.l.b16 %v1518
      %v1593 = vunpack.c.h.b16 %v1518
      %v1594 = vunpack.c.l.b16 %v1519
      %v1595 = vunpack.c.l.b16 %v1520
      %v1596 = vunpack.c.h.b16 %v1520
      %v1597 = vunpack.c.l.b16 %v1521
      %v1598 = vunpack.c.l.b16 %v1522
      %v1599 = vunpack.c.h.b16 %v1522
      %v1600 = vunpack.c.l.b16 %v1523
      %v1601 = vunpack.c.l.b16 %v1524
      %v1602 = vunpack.c.h.b16 %v1524
      %v1603 = vunpack.c.l.b16 %v1525
      %v1604 = vunpack.c.l.b16 %v1526
      %v1605 = vunpack.c.h.b16 %v1526
      %v1606 = vunpack.c.l.b16 %v1527
      %v1607 = vunpack.c.l.b16 %v1528
      %v1608 = vunpack.c.h.b16 %v1528
      %v1609 = vunpack.c.l.b16 %v1529
      %v1610 = vunpack.c.l.b16 %v1530
      %v1611 = vunpack.c.h.b16 %v1530
      %v1612 = vunpack.c.l.b16 %v1531
      %v1613 = vunpack.c.l.b16 %v1532
      %v1614 = vunpack.c.h.b16 %v1532
      %v1615 = vunpack.c.l.b16 %v1533
      %v1616 = vunpack.c.l.b16 %v1534
      %v1617 = vunpack.c.h.b16 %v1534
      %v1618 = vunpack.c.l.b16 %v1535
      %v1619 = vunpack.c.l.b16 %v1536
      %v1620 = vunpack.c.h.b16 %v1536
      %v1621 = vunpack.c.l.b16 %v1537
      %v1622 = vunpack.c.l.b16 %v1538
      %v1623 = vunpack.c.h.b16 %v1538
      %v1624 = vunpack.c.l.b16 %v1539
      %v1625 = vunpack.c.l.b16 %v1540
      %v1626 = vunpack.c.h.b16 %v1540
      %v1627 = vunpack.c.l.b16 %v1541
      %v1628 = vunpack.c.l.b16 %v1542
      %v1629 = vunpack.c.h.b16 %v1542
      %v1630 = vunpack.c.l.b16 %v1543
      %v1631 = vunpack.c.l.b16 %v1544
      %v1632 = vunpack.c.h.b16 %v1544
      %v1633 = vunpack.c.l.b16 %v1545
      %v1634 = vpack.c.b16 %v1589, %v1586
      %v1635 = vpack.c.b16 %v1590, %v1587
      %v1636 = vpack.c.b16 %v1591, %v1588
      %v1637 = vpack.c.b16 %v1595, %v1592
      %v1638 = vpack.c.b16 %v1596, %v1593
      %v1639 = vpack.c.b16 %v1597, %v1594
      %v1640 = vpack.c.b16 %v1601, %v1598
      %v1641 = vpack.c.b16 %v1602, %v1599
      %v1642 = vpack.c.b16 %v1603, %v1600
      %v1643 = vpack.c.b16 %v1607, %v1604
      %v1644 = vpack.c.b16 %v1608, %v1605
      %v1645 = vpack.c.b16 %v1609, %v1606
      %v1646 = vpack.c.b16 %v1613, %v1610
      %v1647 = vpack.c.b16 %v1614, %v1611
      %v1648 = vpack.c.b16 %v1615, %v1612
      %v1649 = vpack.c.b16 %v1619, %v1616
      %v1650 = vpack.c.b16 %v1620, %v1617
      %v1651 = vpack.c.b16 %v1621, %v1618
      %v1652 = vpack.c.b16 %v1625, %v1622
      %v1653 = vpack.c.b16 %v1626, %v1623
      %v1654 = vpack.c.b16 %v1627, %v1624
      %v1655 = vpack.c.b16 %v1631, %v1628
      %v1656 = vpack.c.b16 %v1632, %v1629
      %v1657 = vpack.c.b16 %v1633, %v1630
      %1682 = vmatpush.bf16.msra.mxu0 %v1655
      %1683 = vmatpush.bf16.msra.mxu0 %v1652
      %1684 = vmatpush.bf16.msra.mxu0 %v1649
      %1685 = vmatpush.bf16.msra.mxu0 %v1646
      %1686 = vmatpush.bf16.msra.mxu0 %v1643
      %1687 = vmatpush.bf16.msra.mxu0 %v1640
      %1688 = vmatpush.bf16.msra.mxu0 %v1637
      %1689 = vmatpush.bf16.msra.mxu0 %v1634
      %1690 = vmatmul.bf16.gmra.mxu0 %v1506
      %v1691 = vpop.f32.mrf.mxu0
      %v1692 = vadd.f32 %v1548, %v1691
      %v1693 = vpop.f32.mrf.mxu0
      %v1694 = vadd.f32 %v1548, %v1693
      %1695 = vmatmul.bf16.gmra.mxu0 %v1507
      %v1696 = vpop.f32.mrf.mxu0
      %v1697 = vadd.f32 %v1548, %v1696
      %v1698 = vpop.f32.mrf.mxu0
      %v1699 = vadd.f32 %v1548, %v1698
      %1700 = vmatmul.bf16.gmra.mxu0 %v1508
      %v1701 = vpop.f32.mrf.mxu0
      %v1702 = vadd.f32 %v1548, %v1701
      %v1703 = vpop.f32.mrf.mxu0
      %v1704 = vadd.f32 %v1548, %v1703
      %1705 = vmatmul.bf16.gmra.mxu0 %v1509
      %v1706 = vpop.f32.mrf.mxu0
      %v1707 = vadd.f32 %v1548, %v1706
      %v1708 = vpop.f32.mrf.mxu0
      %v1709 = vadd.f32 %v1548, %v1708
      %1710 = vmatmul.bf16.gmra.mxu0 %v1510
      %v1711 = vpop.f32.mrf.mxu0
      %v1712 = vadd.f32 %v1548, %v1711
      %v1713 = vpop.f32.mrf.mxu0
      %v1714 = vadd.f32 %v1548, %v1713
      %1715 = vmatmul.bf16.gmra.mxu0 %v1511
      %v1716 = vpop.f32.mrf.mxu0
      %v1717 = vadd.f32 %v1548, %v1716
      %v1718 = vpop.f32.mrf.mxu0
      %v1719 = vadd.f32 %v1548, %v1718
      %1720 = vmatmul.bf16.gmra.mxu0 %v1512
      %v1721 = vpop.f32.mrf.mxu0
      %v1722 = vadd.f32 %v1548, %v1721
      %v1723 = vpop.f32.mrf.mxu0
      %v1724 = vadd.f32 %v1548, %v1723
      %1725 = vmatmul.bf16.gmra.mxu0 %v1513
      %v1726 = vpop.f32.mrf.mxu0
      %v1727 = vadd.f32 %v1548, %v1726
      %v1728 = vpop.f32.mrf.mxu0
      %v1729 = vadd.f32 %v1548, %v1728
      %1730 = vdwg.mxu0
      %1731 = vmatpush.bf16.msra.mxu0 %v1656
      %1732 = vmatpush.bf16.msra.mxu0 %v1653
      %1733 = vmatpush.bf16.msra.mxu0 %v1650
      %1734 = vmatpush.bf16.msra.mxu0 %v1647
      %1735 = vmatpush.bf16.msra.mxu0 %v1644
      %1736 = vmatpush.bf16.msra.mxu0 %v1641
      %1737 = vmatpush.bf16.msra.mxu0 %v1638
      %1738 = vmatpush.bf16.msra.mxu0 %v1635
      %1739 = vmatmul.bf16.gmra.mxu0 %v1506
      %v1740 = vpop.f32.mrf.mxu0
      %v1741 = vadd.f32 %v1549, %v1740
      %v1742 = vpop.f32.mrf.mxu0
      %v1743 = vadd.f32 %v1549, %v1742
      %1744 = vmatmul.bf16.gmra.mxu0 %v1507
      %v1745 = vpop.f32.mrf.mxu0
      %v1746 = vadd.f32 %v1549, %v1745
      %v1747 = vpop.f32.mrf.mxu0
      %v1748 = vadd.f32 %v1549, %v1747
      %1749 = vmatmul.bf16.gmra.mxu0 %v1508
      %v1750 = vpop.f32.mrf.mxu0
      %v1751 = vadd.f32 %v1549, %v1750
      %v1752 = vpop.f32.mrf.mxu0
      %v1753 = vadd.f32 %v1549, %v1752
      %1754 = vmatmul.bf16.gmra.mxu0 %v1509
      %v1755 = vpop.f32.mrf.mxu0
      %v1756 = vadd.f32 %v1549, %v1755
      %v1757 = vpop.f32.mrf.mxu0
      %v1758 = vadd.f32 %v1549, %v1757
      %1759 = vmatmul.bf16.gmra.mxu0 %v1510
      %v1760 = vpop.f32.mrf.mxu0
      %v1761 = vadd.f32 %v1549, %v1760
      %v1762 = vpop.f32.mrf.mxu0
      %v1763 = vadd.f32 %v1549, %v1762
      %1764 = vmatmul.bf16.gmra.mxu0 %v1511
      %v1765 = vpop.f32.mrf.mxu0
      %v1766 = vadd.f32 %v1549, %v1765
      %v1767 = vpop.f32.mrf.mxu0
      %v1768 = vadd.f32 %v1549, %v1767
      %1769 = vmatmul.bf16.gmra.mxu0 %v1512
      %v1770 = vpop.f32.mrf.mxu0
      %v1771 = vadd.f32 %v1549, %v1770
      %v1772 = vpop.f32.mrf.mxu0
      %v1773 = vadd.f32 %v1549, %v1772
      %1774 = vmatmul.bf16.gmra.mxu0 %v1513
      %v1775 = vpop.f32.mrf.mxu0
      %v1776 = vadd.f32 %v1549, %v1775
      %v1777 = vpop.f32.mrf.mxu0
      %v1778 = vadd.f32 %v1549, %v1777
      %1779 = vdwg.mxu0
      %1780 = vmatpush.bf16.msra.mxu0 %v1657
      %1781 = vmatpush.bf16.msra.mxu0 %v1654
      %1782 = vmatpush.bf16.msra.mxu0 %v1651
      %1783 = vmatpush.bf16.msra.mxu0 %v1648
      %1784 = vmatpush.bf16.msra.mxu0 %v1645
      %1785 = vmatpush.bf16.msra.mxu0 %v1642
      %1786 = vmatpush.bf16.msra.mxu0 %v1639
      %1787 = vmatpush.bf16.msra.mxu0 %v1636
      %1788 = vmatmul.bf16.gmra.mxu0 %v1506
      %v1789 = vpop.f32.mrf.mxu0
      %v1790 = vadd.f32 %v1550, %v1789
      %v1791 = vpop.f32.mrf.mxu0
      %v1792 = vadd.f32 %v1550, %v1791
      %1793 = vmatmul.bf16.gmra.mxu0 %v1507
      %v1794 = vpop.f32.mrf.mxu0
      %v1795 = vadd.f32 %v1550, %v1794
      %v1796 = vpop.f32.mrf.mxu0
      %v1797 = vadd.f32 %v1550, %v1796
      %1798 = vmatmul.bf16.gmra.mxu0 %v1508
      %v1799 = vpop.f32.mrf.mxu0
      %v1800 = vadd.f32 %v1550, %v1799
      %v1801 = vpop.f32.mrf.mxu0
      %v1802 = vadd.f32 %v1550, %v1801
      %1803 = vmatmul.bf16.gmra.mxu0 %v1509
      %v1804 = vpop.f32.mrf.mxu0
      %v1805 = vadd.f32 %v1550, %v1804
      %v1806 = vpop.f32.mrf.mxu0
      %v1807 = vadd.f32 %v1550, %v1806
      %1808 = vmatmul.bf16.gmra.mxu0 %v1510
      %v1809 = vpop.f32.mrf.mxu0
      %v1810 = vadd.f32 %v1550, %v1809
      %v1811 = vpop.f32.mrf.mxu0
      %v1812 = vadd.f32 %v1550, %v1811
      %1813 = vmatmul.bf16.gmra.mxu0 %v1511
      %v1814 = vpop.f32.mrf.mxu0
      %v1815 = vadd.f32 %v1550, %v1814
      %v1816 = vpop.f32.mrf.mxu0
      %v1817 = vadd.f32 %v1550, %v1816
      %1818 = vmatmul.bf16.gmra.mxu0 %v1512
      %v1819 = vpop.f32.mrf.mxu0
      %v1820 = vadd.f32 %v1550, %v1819
      %v1821 = vpop.f32.mrf.mxu0
      %v1822 = vadd.f32 %v1550, %v1821
      %1823 = vmatmul.bf16.gmra.mxu0 %v1513
      %v1824 = vpop.f32.mrf.mxu0
      %v1825 = vadd.f32 %v1550, %v1824
      %v1826 = vpop.f32.mrf.mxu0
      %v1827 = vadd.f32 %v1550, %v1826
      %1828 = vdwg.mxu0
      %v1829 = vpack.c.bf16 %v1692, %v1692
      %v1830 = vpack.c.bf16 %v1694, %v1694
      %v1831 = vpack.c.bf16 %v1697, %v1697
      %v1832 = vpack.c.bf16 %v1699, %v1699
      %v1833 = vpack.c.bf16 %v1702, %v1702
      %v1834 = vpack.c.bf16 %v1704, %v1704
      %v1835 = vpack.c.bf16 %v1707, %v1707
      %v1836 = vpack.c.bf16 %v1709, %v1709
      %v1837 = vpack.c.bf16 %v1712, %v1712
      %v1838 = vpack.c.bf16 %v1714, %v1714
      %v1839 = vpack.c.bf16 %v1717, %v1717
      %v1840 = vpack.c.bf16 %v1719, %v1719
      %v1841 = vpack.c.bf16 %v1722, %v1722
      %v1842 = vpack.c.bf16 %v1724, %v1724
      %v1843 = vpack.c.bf16 %v1727, %v1727
      %v1844 = vpack.c.bf16 %v1729, %v1729
      %v1845 = vpack.c.bf16 %v1741, %v1741
      %v1846 = vpack.c.bf16 %v1743, %v1743
      %v1847 = vpack.c.bf16 %v1746, %v1746
      %v1848 = vpack.c.bf16 %v1748, %v1748
      %v1849 = vpack.c.bf16 %v1751, %v1751
      %v1850 = vpack.c.bf16 %v1753, %v1753
      %v1851 = vpack.c.bf16 %v1756, %v1756
      %v1852 = vpack.c.bf16 %v1758, %v1758
      %v1853 = vpack.c.bf16 %v1761, %v1761
      %v1854 = vpack.c.bf16 %v1763, %v1763
      %v1855 = vpack.c.bf16 %v1766, %v1766
      %v1856 = vpack.c.bf16 %v1768, %v1768
      %v1857 = vpack.c.bf16 %v1771, %v1771
      %v1858 = vpack.c.bf16 %v1773, %v1773
      %v1859 = vpack.c.bf16 %v1776, %v1776
      %v1860 = vpack.c.bf16 %v1778, %v1778
      %v1861 = vpack.c.bf16 %v1790, %v1790
      %v1862 = vpack.c.bf16 %v1792, %v1792
      %v1863 = vpack.c.bf16 %v1795, %v1795
      %v1864 = vpack.c.bf16 %v1797, %v1797
      %v1865 = vpack.c.bf16 %v1800, %v1800
      %v1866 = vpack.c.bf16 %v1802, %v1802
      %v1867 = vpack.c.bf16 %v1805, %v1805
      %v1868 = vpack.c.bf16 %v1807, %v1807
      %v1869 = vpack.c.bf16 %v1810, %v1810
      %v1870 = vpack.c.bf16 %v1812, %v1812
      %v1871 = vpack.c.bf16 %v1815, %v1815
      %v1872 = vpack.c.bf16 %v1817, %v1817
      %v1873 = vpack.c.bf16 %v1820, %v1820
      %v1874 = vpack.c.bf16 %v1822, %v1822
      %v1875 = vpack.c.bf16 %v1825, %v1825
      %v1876 = vpack.c.bf16 %v1827, %v1827
      %v1885 = vunpack.c.l.b16 %v1829
      %v1886 = vunpack.c.l.b16 %v1830
      %v1887 = vunpack.c.l.b16 %v1831
      %v1888 = vunpack.c.l.b16 %v1832
      %v1889 = vunpack.c.l.b16 %v1833
      %v1890 = vunpack.c.l.b16 %v1834
      %v1891 = vunpack.c.l.b16 %v1835
      %v1892 = vunpack.c.l.b16 %v1836
      %v1893 = vpack.c.b16 %v1886, %v1885
      %v1894 = vpack.c.b16 %v1888, %v1887
      %v1895 = vpack.c.b16 %v1890, %v1889
      %v1896 = vpack.c.b16 %v1892, %v1891
      %v1905 = vunpack.c.l.b16 %v1845
      %v1906 = vunpack.c.l.b16 %v1846
      %v1907 = vunpack.c.l.b16 %v1847
      %v1908 = vunpack.c.l.b16 %v1848
      %v1909 = vunpack.c.l.b16 %v1849
      %v1910 = vunpack.c.l.b16 %v1850
      %v1911 = vunpack.c.l.b16 %v1851
      %v1912 = vunpack.c.l.b16 %v1852
      %v1913 = vpack.c.b16 %v1906, %v1905
      %v1914 = vpack.c.b16 %v1908, %v1907
      %v1915 = vpack.c.b16 %v1910, %v1909
      %v1916 = vpack.c.b16 %v1912, %v1911
      %vm1917 = vcmask 261120
      %v1919 = vsel %vm1917, %v1893, 0
      %v1922 = vsel %vm1917, %v1894, 0
      %v1925 = vsel %vm1917, %v1895, 0
      %v1928 = vsel %vm1917, %v1896, 0
      %v1931 = vsel %vm1917, %v1913, 0
      %v1934 = vsel %vm1917, %v1914, 0
      %v1937 = vsel %vm1917, %v1915, 0
      %v1940 = vsel %vm1917, %v1916, 0
      %1942 = vmatpush.bf16.xpose.msra.mxu0 0
      %1943 = vmatpush.bf16.xpose.msra.mxu0 0
      %1944 = vmatpush.bf16.xpose.msra.mxu0 0
      %1945 = vmatpush.bf16.xpose.msra.mxu0 0
      %1946 = vmatpush.bf16.xpose.msra.mxu0 %v1940
      %1947 = vmatpush.bf16.xpose.msra.mxu0 %v1937
      %1948 = vmatpush.bf16.xpose.msra.mxu0 %v1934
      %1949 = vmatpush.bf16.xpose.msra.mxu0 %v1931
      %1950 = vmatmul.bf16.gmra.mxu0 %v1919
      %v1951 = vpop.f32.mrf.mxu0
      %v1952 = vadd.f32 0.0, %v1951
      %v1953 = vpop.f32.mrf.mxu0
      %v1954 = vadd.f32 0.0, %v1953
      %1955 = vmatmul.bf16.gmra.mxu0 %v1922
      %v1956 = vpop.f32.mrf.mxu0
      %v1957 = vadd.f32 0.0, %v1956
      %v1958 = vpop.f32.mrf.mxu0
      %v1959 = vadd.f32 0.0, %v1958
      %1960 = vmatmul.bf16.gmra.mxu0 %v1925
      %v1961 = vpop.f32.mrf.mxu0
      %v1962 = vadd.f32 0.0, %v1961
      %v1963 = vpop.f32.mrf.mxu0
      %v1964 = vadd.f32 0.0, %v1963
      %1965 = vmatmul.bf16.gmra.mxu0 %v1928
      %v1966 = vpop.f32.mrf.mxu0
      %v1967 = vadd.f32 0.0, %v1966
      %v1968 = vpop.f32.mrf.mxu0
      %v1969 = vadd.f32 0.0, %v1968
      %1970 = vdwg.mxu0
      %v1979 = vunpack.c.l.b16 %v1837
      %v1980 = vunpack.c.l.b16 %v1838
      %v1981 = vunpack.c.l.b16 %v1839
      %v1982 = vunpack.c.l.b16 %v1840
      %v1983 = vunpack.c.l.b16 %v1841
      %v1984 = vunpack.c.l.b16 %v1842
      %v1985 = vunpack.c.l.b16 %v1843
      %v1986 = vunpack.c.l.b16 %v1844
      %v1987 = vpack.c.b16 %v1980, %v1979
      %v1988 = vpack.c.b16 %v1982, %v1981
      %v1989 = vpack.c.b16 %v1984, %v1983
      %v1990 = vpack.c.b16 %v1986, %v1985
      %v1999 = vunpack.c.l.b16 %v1853
      %v2000 = vunpack.c.l.b16 %v1854
      %v2001 = vunpack.c.l.b16 %v1855
      %v2002 = vunpack.c.l.b16 %v1856
      %v2003 = vunpack.c.l.b16 %v1857
      %v2004 = vunpack.c.l.b16 %v1858
      %v2005 = vunpack.c.l.b16 %v1859
      %v2006 = vunpack.c.l.b16 %v1860
      %v2007 = vpack.c.b16 %v2000, %v1999
      %v2008 = vpack.c.b16 %v2002, %v2001
      %v2009 = vpack.c.b16 %v2004, %v2003
      %v2010 = vpack.c.b16 %v2006, %v2005
      %v2012 = vsel %vm1917, %v1987, 0
      %v2015 = vsel %vm1917, %v1988, 0
      %v2018 = vsel %vm1917, %v1989, 0
      %v2021 = vsel %vm1917, %v1990, 0
      %v2024 = vsel %vm1917, %v2007, 0
      %v2027 = vsel %vm1917, %v2008, 0
      %v2030 = vsel %vm1917, %v2009, 0
      %v2033 = vsel %vm1917, %v2010, 0
      %2035 = vmatpush.bf16.xpose.msra.mxu0 0
      %2036 = vmatpush.bf16.xpose.msra.mxu0 0
      %2037 = vmatpush.bf16.xpose.msra.mxu0 0
      %2038 = vmatpush.bf16.xpose.msra.mxu0 0
      %2039 = vmatpush.bf16.xpose.msra.mxu0 %v2033
      %2040 = vmatpush.bf16.xpose.msra.mxu0 %v2030
      %2041 = vmatpush.bf16.xpose.msra.mxu0 %v2027
      %2042 = vmatpush.bf16.xpose.msra.mxu0 %v2024
      %2043 = vmatmul.bf16.gmra.mxu0 %v2012
      %v2044 = vpop.f32.mrf.mxu0
      %v2045 = vadd.f32 0.0, %v2044
      %v2046 = vpop.f32.mrf.mxu0
      %v2047 = vadd.f32 0.0, %v2046
      %2048 = vmatmul.bf16.gmra.mxu0 %v2015
      %v2049 = vpop.f32.mrf.mxu0
      %v2050 = vadd.f32 0.0, %v2049
      %v2051 = vpop.f32.mrf.mxu0
      %v2052 = vadd.f32 0.0, %v2051
      %2053 = vmatmul.bf16.gmra.mxu0 %v2018
      %v2054 = vpop.f32.mrf.mxu0
      %v2055 = vadd.f32 0.0, %v2054
      %v2056 = vpop.f32.mrf.mxu0
      %v2057 = vadd.f32 0.0, %v2056
      %2058 = vmatmul.bf16.gmra.mxu0 %v2021
      %v2059 = vpop.f32.mrf.mxu0
      %v2060 = vadd.f32 0.0, %v2059
      %v2061 = vpop.f32.mrf.mxu0
      %v2062 = vadd.f32 0.0, %v2061
      %2063 = vdwg.mxu0
      %v2064 = vmul.f32 %v1952, 0.17677669
      %v2065 = vmul.f32 %v1954, 0.17677669
      %v2066 = vmul.f32 %v1957, 0.17677669
      %v2067 = vmul.f32 %v1959, 0.17677669
      %v2068 = vmul.f32 %v1962, 0.17677669
      %v2069 = vmul.f32 %v1964, 0.17677669
      %v2070 = vmul.f32 %v1967, 0.17677669
      %v2071 = vmul.f32 %v1969, 0.17677669
      %v2072 = vmul.f32 %v2045, 0.17677669
      %v2073 = vmul.f32 %v2047, 0.17677669
      %v2074 = vmul.f32 %v2050, 0.17677669
      %v2075 = vmul.f32 %v2052, 0.17677669
      %v2076 = vmul.f32 %v2055, 0.17677669
      %v2077 = vmul.f32 %v2057, 0.17677669
      %v2078 = vmul.f32 %v2060, 0.17677669
      %v2079 = vmul.f32 %v2062, 0.17677669
      %vm2080 = vcmask 523264
      %v2081 = vsel %vm2080, %v2064, -inf
      %2082 = vmax.xlane.f32.xlu0 %v2081
      %v2083 = vpop.xlane.xlu0 %2082
      %v2084 = vsel %vm2080, %v2065, -inf
      %2085 = vmax.xlane.f32.xlu0 %v2084
      %v2086 = vpop.xlane.xlu0 %2085
      %v2087 = vsel %vm2080, %v2066, -inf
      %2088 = vmax.xlane.f32.xlu0 %v2087
      %v2089 = vpop.xlane.xlu0 %2088
      %v2090 = vsel %vm2080, %v2067, -inf
      %2091 = vmax.xlane.f32.xlu0 %v2090
      %v2092 = vpop.xlane.xlu0 %2091
      %v2093 = vsel %vm2080, %v2068, -inf
      %2094 = vmax.xlane.f32.xlu0 %v2093
      %v2095 = vpop.xlane.xlu0 %2094
      %v2096 = vsel %vm2080, %v2069, -inf
      %2097 = vmax.xlane.f32.xlu0 %v2096
      %v2098 = vpop.xlane.xlu0 %2097
      %v2099 = vsel %vm2080, %v2070, -inf
      %2100 = vmax.xlane.f32.xlu0 %v2099
      %v2101 = vpop.xlane.xlu0 %2100
      %v2102 = vsel %vm2080, %v2071, -inf
      %2103 = vmax.xlane.f32.xlu0 %v2102
      %v2104 = vpop.xlane.xlu0 %2103
      %v2105 = vsel %vm2080, %v2072, -inf
      %2106 = vmax.xlane.f32.xlu0 %v2105
      %v2107 = vpop.xlane.xlu0 %2106
      %v2108 = vsel %vm2080, %v2073, -inf
      %2109 = vmax.xlane.f32.xlu0 %v2108
      %v2110 = vpop.xlane.xlu0 %2109
      %v2111 = vsel %vm2080, %v2074, -inf
      %2112 = vmax.xlane.f32.xlu0 %v2111
      %v2113 = vpop.xlane.xlu0 %2112
      %v2114 = vsel %vm2080, %v2075, -inf
      %2115 = vmax.xlane.f32.xlu0 %v2114
      %v2116 = vpop.xlane.xlu0 %2115
      %v2117 = vsel %vm2080, %v2076, -inf
      %2118 = vmax.xlane.f32.xlu0 %v2117
      %v2119 = vpop.xlane.xlu0 %2118
      %v2120 = vsel %vm2080, %v2077, -inf
      %2121 = vmax.xlane.f32.xlu0 %v2120
      %v2122 = vpop.xlane.xlu0 %2121
      %v2123 = vsel %vm2080, %v2078, -inf
      %2124 = vmax.xlane.f32.xlu0 %v2123
      %v2125 = vpop.xlane.xlu0 %2124
      %v2126 = vsel %vm2080, %v2079, -inf
      %2127 = vmax.xlane.f32.xlu0 %v2126
      %v2128 = vpop.xlane.xlu0 %2127
      %v2129 = vsub.f32 %v2064, %v2083
      %v2130 = vsub.f32 %v2065, %v2086
      %v2131 = vsub.f32 %v2066, %v2089
      %v2132 = vsub.f32 %v2067, %v2092
      %v2133 = vsub.f32 %v2068, %v2095
      %v2134 = vsub.f32 %v2069, %v2098
      %v2135 = vsub.f32 %v2070, %v2101
      %v2136 = vsub.f32 %v2071, %v2104
      %v2137 = vsub.f32 %v2072, %v2107
      %v2138 = vsub.f32 %v2073, %v2110
      %v2139 = vsub.f32 %v2074, %v2113
      %v2140 = vsub.f32 %v2075, %v2116
      %v2141 = vsub.f32 %v2076, %v2119
      %v2142 = vsub.f32 %v2077, %v2122
      %v2143 = vsub.f32 %v2078, %v2125
      %v2144 = vsub.f32 %v2079, %v2128
      %v2145 = vmul.f32 %v2129, 1.442695
      %v2146 = vpow.pop %v2145
      %v2147 = vmul.f32 %v2130, 1.442695
      %v2148 = vpow.pop %v2147
      %v2149 = vmul.f32 %v2131, 1.442695
      %v2150 = vpow.pop %v2149
      %v2151 = vmul.f32 %v2132, 1.442695
      %v2152 = vpow.pop %v2151
      %v2153 = vmul.f32 %v2133, 1.442695
      %v2154 = vpow.pop %v2153
      %v2155 = vmul.f32 %v2134, 1.442695
      %v2156 = vpow.pop %v2155
      %v2157 = vmul.f32 %v2135, 1.442695
      %v2158 = vpow.pop %v2157
      %v2159 = vmul.f32 %v2136, 1.442695
      %v2160 = vpow.pop %v2159
      %v2161 = vmul.f32 %v2137, 1.442695
      %v2162 = vpow.pop %v2161
      %v2163 = vmul.f32 %v2138, 1.442695
      %v2164 = vpow.pop %v2163
      %v2165 = vmul.f32 %v2139, 1.442695
      %v2166 = vpow.pop %v2165
      %v2167 = vmul.f32 %v2140, 1.442695
      %v2168 = vpow.pop %v2167
      %v2169 = vmul.f32 %v2141, 1.442695
      %v2170 = vpow.pop %v2169
      %v2171 = vmul.f32 %v2142, 1.442695
      %v2172 = vpow.pop %v2171
      %v2173 = vmul.f32 %v2143, 1.442695
      %v2174 = vpow.pop %v2173
      %v2175 = vmul.f32 %v2144, 1.442695
      %v2176 = vpow.pop %v2175
      %v2177 = vsel %vm2080, %v2146, 0.0
      %2178 = vadd.xlane.f32.xlu0 %v2177
      %v2179 = vpop.xlane.xlu0 %2178
      %v2180 = vsel %vm2080, %v2148, 0.0
      %2181 = vadd.xlane.f32.xlu0 %v2180
      %v2182 = vpop.xlane.xlu0 %2181
      %v2183 = vsel %vm2080, %v2150, 0.0
      %2184 = vadd.xlane.f32.xlu0 %v2183
      %v2185 = vpop.xlane.xlu0 %2184
      %v2186 = vsel %vm2080, %v2152, 0.0
      %2187 = vadd.xlane.f32.xlu0 %v2186
      %v2188 = vpop.xlane.xlu0 %2187
      %v2189 = vsel %vm2080, %v2154, 0.0
      %2190 = vadd.xlane.f32.xlu0 %v2189
      %v2191 = vpop.xlane.xlu0 %2190
      %v2192 = vsel %vm2080, %v2156, 0.0
      %2193 = vadd.xlane.f32.xlu0 %v2192
      %v2194 = vpop.xlane.xlu0 %2193
      %v2195 = vsel %vm2080, %v2158, 0.0
      %2196 = vadd.xlane.f32.xlu0 %v2195
      %v2197 = vpop.xlane.xlu0 %2196
      %v2198 = vsel %vm2080, %v2160, 0.0
      %2199 = vadd.xlane.f32.xlu0 %v2198
      %v2200 = vpop.xlane.xlu0 %2199
      %v2201 = vsel %vm2080, %v2162, 0.0
      %2202 = vadd.xlane.f32.xlu0 %v2201
      %v2203 = vpop.xlane.xlu0 %2202
      %v2204 = vsel %vm2080, %v2164, 0.0
      %2205 = vadd.xlane.f32.xlu0 %v2204
      %v2206 = vpop.xlane.xlu0 %2205
      %v2207 = vsel %vm2080, %v2166, 0.0
      %2208 = vadd.xlane.f32.xlu0 %v2207
      %v2209 = vpop.xlane.xlu0 %2208
      %v2210 = vsel %vm2080, %v2168, 0.0
      %2211 = vadd.xlane.f32.xlu0 %v2210
      %v2212 = vpop.xlane.xlu0 %2211
      %v2213 = vsel %vm2080, %v2170, 0.0
      %2214 = vadd.xlane.f32.xlu0 %v2213
      %v2215 = vpop.xlane.xlu0 %2214
      %v2216 = vsel %vm2080, %v2172, 0.0
      %2217 = vadd.xlane.f32.xlu0 %v2216
      %v2218 = vpop.xlane.xlu0 %2217
      %v2219 = vsel %vm2080, %v2174, 0.0
      %2220 = vadd.xlane.f32.xlu0 %v2219
      %v2221 = vpop.xlane.xlu0 %2220
      %v2222 = vsel %vm2080, %v2176, 0.0
      %2223 = vadd.xlane.f32.xlu0 %v2222
      %v2224 = vpop.xlane.xlu0 %2223
      %v2225 = vrcp.pop %v2179
      %v2226 = vrcp.pop %v2182
      %v2227 = vrcp.pop %v2185
      %v2228 = vrcp.pop %v2188
      %v2229 = vrcp.pop %v2191
      %v2230 = vrcp.pop %v2194
      %v2231 = vrcp.pop %v2197
      %v2232 = vrcp.pop %v2200
      %v2233 = vrcp.pop %v2203
      %v2234 = vrcp.pop %v2206
      %v2235 = vrcp.pop %v2209
      %v2236 = vrcp.pop %v2212
      %v2237 = vrcp.pop %v2215
      %v2238 = vrcp.pop %v2218
      %v2239 = vrcp.pop %v2221
      %v2240 = vrcp.pop %v2224
      %v2241 = vmul.f32 %v2146, %v2225
      %v2242 = vmul.f32 %v2148, %v2226
      %v2243 = vmul.f32 %v2150, %v2227
      %v2244 = vmul.f32 %v2152, %v2228
      %v2245 = vmul.f32 %v2154, %v2229
      %v2246 = vmul.f32 %v2156, %v2230
      %v2247 = vmul.f32 %v2158, %v2231
      %v2248 = vmul.f32 %v2160, %v2232
      %v2249 = vmul.f32 %v2162, %v2233
      %v2250 = vmul.f32 %v2164, %v2234
      %v2251 = vmul.f32 %v2166, %v2235
      %v2252 = vmul.f32 %v2168, %v2236
      %v2253 = vmul.f32 %v2170, %v2237
      %v2254 = vmul.f32 %v2172, %v2238
      %v2255 = vmul.f32 %v2174, %v2239
      %v2256 = vmul.f32 %v2176, %v2240
      %v2257 = vpack.c.bf16 %v2241, %v2241
      %v2258 = vpack.c.bf16 %v2242, %v2242
      %v2259 = vpack.c.bf16 %v2243, %v2243
      %v2260 = vpack.c.bf16 %v2244, %v2244
      %v2261 = vpack.c.bf16 %v2245, %v2245
      %v2262 = vpack.c.bf16 %v2246, %v2246
      %v2263 = vpack.c.bf16 %v2247, %v2247
      %v2264 = vpack.c.bf16 %v2248, %v2248
      %v2265 = vpack.c.bf16 %v2249, %v2249
      %v2266 = vpack.c.bf16 %v2250, %v2250
      %v2267 = vpack.c.bf16 %v2251, %v2251
      %v2268 = vpack.c.bf16 %v2252, %v2252
      %v2269 = vpack.c.bf16 %v2253, %v2253
      %v2270 = vpack.c.bf16 %v2254, %v2254
      %v2271 = vpack.c.bf16 %v2255, %v2255
      %v2272 = vpack.c.bf16 %v2256, %v2256
      %v2281 = vunpack.c.l.b16 %v2257
      %v2282 = vunpack.c.l.b16 %v2258
      %v2283 = vunpack.c.l.b16 %v2259
      %v2284 = vunpack.c.l.b16 %v2260
      %v2285 = vunpack.c.l.b16 %v2261
      %v2286 = vunpack.c.l.b16 %v2262
      %v2287 = vunpack.c.l.b16 %v2263
      %v2288 = vunpack.c.l.b16 %v2264
      %v2289 = vpack.c.b16 %v2282, %v2281
      %v2290 = vpack.c.b16 %v2284, %v2283
      %v2291 = vpack.c.b16 %v2286, %v2285
      %v2292 = vpack.c.b16 %v2288, %v2287
      %v2301 = vunpack.c.l.b16 %v1861
      %v2302 = vunpack.c.l.b16 %v1862
      %v2303 = vunpack.c.l.b16 %v1863
      %v2304 = vunpack.c.l.b16 %v1864
      %v2305 = vunpack.c.l.b16 %v1865
      %v2306 = vunpack.c.l.b16 %v1866
      %v2307 = vunpack.c.l.b16 %v1867
      %v2308 = vunpack.c.l.b16 %v1868
      %v2309 = vpack.c.b16 %v2302, %v2301
      %v2310 = vpack.c.b16 %v2304, %v2303
      %v2311 = vpack.c.b16 %v2306, %v2305
      %v2312 = vpack.c.b16 %v2308, %v2307
      %v2318 = vsel %vm2080, %v2289, 0
      %v2321 = vsel %vm2080, %v2290, 0
      %v2324 = vsel %vm2080, %v2291, 0
      %v2327 = vsel %vm2080, %v2292, 0
      %2329 = vmatpush.bf16.msra.mxu0 0
      %2330 = vmatpush.bf16.msra.mxu0 0
      %2331 = vmatpush.bf16.msra.mxu0 0
      %2332 = vmatpush.bf16.msra.mxu0 0
      %2333 = vmatpush.bf16.msra.mxu0 %v2312
      %2334 = vmatpush.bf16.msra.mxu0 %v2311
      %2335 = vmatpush.bf16.msra.mxu0 %v2310
      %2336 = vmatpush.bf16.msra.mxu0 %v2309
      %2337 = vmatmul.bf16.gmra.mxu0 %v2318
      %v2338 = vpop.f32.mrf.mxu0
      %v2339 = vadd.f32 0.0, %v2338
      %v2340 = vpop.f32.mrf.mxu0
      %v2341 = vadd.f32 0.0, %v2340
      %2342 = vmatmul.bf16.gmra.mxu0 %v2321
      %v2343 = vpop.f32.mrf.mxu0
      %v2344 = vadd.f32 0.0, %v2343
      %v2345 = vpop.f32.mrf.mxu0
      %v2346 = vadd.f32 0.0, %v2345
      %2347 = vmatmul.bf16.gmra.mxu0 %v2324
      %v2348 = vpop.f32.mrf.mxu0
      %v2349 = vadd.f32 0.0, %v2348
      %v2350 = vpop.f32.mrf.mxu0
      %v2351 = vadd.f32 0.0, %v2350
      %2352 = vmatmul.bf16.gmra.mxu0 %v2327
      %v2353 = vpop.f32.mrf.mxu0
      %v2354 = vadd.f32 0.0, %v2353
      %v2355 = vpop.f32.mrf.mxu0
      %v2356 = vadd.f32 0.0, %v2355
      %2357 = vdwg.mxu0
      %v2366 = vunpack.c.l.b16 %v2265
      %v2367 = vunpack.c.l.b16 %v2266
      %v2368 = vunpack.c.l.b16 %v2267
      %v2369 = vunpack.c.l.b16 %v2268
      %v2370 = vunpack.c.l.b16 %v2269
      %v2371 = vunpack.c.l.b16 %v2270
      %v2372 = vunpack.c.l.b16 %v2271
      %v2373 = vunpack.c.l.b16 %v2272
      %v2374 = vpack.c.b16 %v2367, %v2366
      %v2375 = vpack.c.b16 %v2369, %v2368
      %v2376 = vpack.c.b16 %v2371, %v2370
      %v2377 = vpack.c.b16 %v2373, %v2372
      %v2386 = vunpack.c.l.b16 %v1869
      %v2387 = vunpack.c.l.b16 %v1870
      %v2388 = vunpack.c.l.b16 %v1871
      %v2389 = vunpack.c.l.b16 %v1872
      %v2390 = vunpack.c.l.b16 %v1873
      %v2391 = vunpack.c.l.b16 %v1874
      %v2392 = vunpack.c.l.b16 %v1875
      %v2393 = vunpack.c.l.b16 %v1876
      %v2394 = vpack.c.b16 %v2387, %v2386
      %v2395 = vpack.c.b16 %v2389, %v2388
      %v2396 = vpack.c.b16 %v2391, %v2390
      %v2397 = vpack.c.b16 %v2393, %v2392
      %v2403 = vsel %vm2080, %v2374, 0
      %v2406 = vsel %vm2080, %v2375, 0
      %v2409 = vsel %vm2080, %v2376, 0
      %v2412 = vsel %vm2080, %v2377, 0
      %2414 = vmatpush.bf16.msra.mxu0 0
      %2415 = vmatpush.bf16.msra.mxu0 0
      %2416 = vmatpush.bf16.msra.mxu0 0
      %2417 = vmatpush.bf16.msra.mxu0 0
      %2418 = vmatpush.bf16.msra.mxu0 %v2397
      %2419 = vmatpush.bf16.msra.mxu0 %v2396
      %2420 = vmatpush.bf16.msra.mxu0 %v2395
      %2421 = vmatpush.bf16.msra.mxu0 %v2394
      %2422 = vmatmul.bf16.gmra.mxu0 %v2403
      %v2423 = vpop.f32.mrf.mxu0
      %v2424 = vadd.f32 0.0, %v2423
      %v2425 = vpop.f32.mrf.mxu0
      %v2426 = vadd.f32 0.0, %v2425
      %2427 = vmatmul.bf16.gmra.mxu0 %v2406
      %v2428 = vpop.f32.mrf.mxu0
      %v2429 = vadd.f32 0.0, %v2428
      %v2430 = vpop.f32.mrf.mxu0
      %v2431 = vadd.f32 0.0, %v2430
      %2432 = vmatmul.bf16.gmra.mxu0 %v2409
      %v2433 = vpop.f32.mrf.mxu0
      %v2434 = vadd.f32 0.0, %v2433
      %v2435 = vpop.f32.mrf.mxu0
      %v2436 = vadd.f32 0.0, %v2435
      %2437 = vmatmul.bf16.gmra.mxu0 %v2412
      %v2438 = vpop.f32.mrf.mxu0
      %v2439 = vadd.f32 0.0, %v2438
      %v2440 = vpop.f32.mrf.mxu0
      %v2441 = vadd.f32 0.0, %v2440
      %2442 = vdwg.mxu0
      %2443 = vrot.lane.b32.xlu0 %v1893, 96
      %v2444 = vpop.permute.xlu0 %2443
      %2445 = vrot.lane.b32.xlu0 %v1894, 96
      %v2446 = vpop.permute.xlu0 %2445
      %2447 = vrot.lane.b32.xlu0 %v1895, 96
      %v2448 = vpop.permute.xlu0 %2447
      %2449 = vrot.lane.b32.xlu0 %v1896, 96
      %v2450 = vpop.permute.xlu0 %2449
      %2451 = vrot.lane.b32.xlu0 %v1913, 96
      %v2452 = vpop.permute.xlu0 %2451
      %2453 = vrot.lane.b32.xlu0 %v1914, 96
      %v2454 = vpop.permute.xlu0 %2453
      %2455 = vrot.lane.b32.xlu0 %v1915, 96
      %v2456 = vpop.permute.xlu0 %2455
      %2457 = vrot.lane.b32.xlu0 %v1916, 96
      %v2458 = vpop.permute.xlu0 %2457
      %v2460 = vsel %vm1917, %v2444, 0
      %v2463 = vsel %vm1917, %v2446, 0
      %v2466 = vsel %vm1917, %v2448, 0
      %v2469 = vsel %vm1917, %v2450, 0
      %v2472 = vsel %vm1917, %v2452, 0
      %v2475 = vsel %vm1917, %v2454, 0
      %v2478 = vsel %vm1917, %v2456, 0
      %v2481 = vsel %vm1917, %v2458, 0
      %2483 = vmatpush.bf16.xpose.msra.mxu0 0
      %2484 = vmatpush.bf16.xpose.msra.mxu0 0
      %2485 = vmatpush.bf16.xpose.msra.mxu0 0
      %2486 = vmatpush.bf16.xpose.msra.mxu0 0
      %2487 = vmatpush.bf16.xpose.msra.mxu0 %v2481
      %2488 = vmatpush.bf16.xpose.msra.mxu0 %v2478
      %2489 = vmatpush.bf16.xpose.msra.mxu0 %v2475
      %2490 = vmatpush.bf16.xpose.msra.mxu0 %v2472
      %2491 = vmatmul.bf16.gmra.mxu0 %v2460
      %v2492 = vpop.f32.mrf.mxu0
      %v2493 = vadd.f32 0.0, %v2492
      %v2494 = vpop.f32.mrf.mxu0
      %v2495 = vadd.f32 0.0, %v2494
      %2496 = vmatmul.bf16.gmra.mxu0 %v2463
      %v2497 = vpop.f32.mrf.mxu0
      %v2498 = vadd.f32 0.0, %v2497
      %v2499 = vpop.f32.mrf.mxu0
      %v2500 = vadd.f32 0.0, %v2499
      %2501 = vmatmul.bf16.gmra.mxu0 %v2466
      %v2502 = vpop.f32.mrf.mxu0
      %v2503 = vadd.f32 0.0, %v2502
      %v2504 = vpop.f32.mrf.mxu0
      %v2505 = vadd.f32 0.0, %v2504
      %2506 = vmatmul.bf16.gmra.mxu0 %v2469
      %v2507 = vpop.f32.mrf.mxu0
      %v2508 = vadd.f32 0.0, %v2507
      %v2509 = vpop.f32.mrf.mxu0
      %v2510 = vadd.f32 0.0, %v2509
      %2511 = vdwg.mxu0
      %2512 = vrot.lane.b32.xlu0 %v1987, 96
      %v2513 = vpop.permute.xlu0 %2512
      %2514 = vrot.lane.b32.xlu0 %v1988, 96
      %v2515 = vpop.permute.xlu0 %2514
      %2516 = vrot.lane.b32.xlu0 %v1989, 96
      %v2517 = vpop.permute.xlu0 %2516
      %2518 = vrot.lane.b32.xlu0 %v1990, 96
      %v2519 = vpop.permute.xlu0 %2518
      %2520 = vrot.lane.b32.xlu0 %v2007, 96
      %v2521 = vpop.permute.xlu0 %2520
      %2522 = vrot.lane.b32.xlu0 %v2008, 96
      %v2523 = vpop.permute.xlu0 %2522
      %2524 = vrot.lane.b32.xlu0 %v2009, 96
      %v2525 = vpop.permute.xlu0 %2524
      %2526 = vrot.lane.b32.xlu0 %v2010, 96
      %v2527 = vpop.permute.xlu0 %2526
      %v2529 = vsel %vm1917, %v2513, 0
      %v2532 = vsel %vm1917, %v2515, 0
      %v2535 = vsel %vm1917, %v2517, 0
      %v2538 = vsel %vm1917, %v2519, 0
      %v2541 = vsel %vm1917, %v2521, 0
      %v2544 = vsel %vm1917, %v2523, 0
      %v2547 = vsel %vm1917, %v2525, 0
      %v2550 = vsel %vm1917, %v2527, 0
      %2552 = vmatpush.bf16.xpose.msra.mxu0 0
      %2553 = vmatpush.bf16.xpose.msra.mxu0 0
      %2554 = vmatpush.bf16.xpose.msra.mxu0 0
      %2555 = vmatpush.bf16.xpose.msra.mxu0 0
      %2556 = vmatpush.bf16.xpose.msra.mxu0 %v2550
      %2557 = vmatpush.bf16.xpose.msra.mxu0 %v2547
      %2558 = vmatpush.bf16.xpose.msra.mxu0 %v2544
      %2559 = vmatpush.bf16.xpose.msra.mxu0 %v2541
      %2560 = vmatmul.bf16.gmra.mxu0 %v2529
      %v2561 = vpop.f32.mrf.mxu0
      %v2562 = vadd.f32 0.0, %v2561
      %v2563 = vpop.f32.mrf.mxu0
      %v2564 = vadd.f32 0.0, %v2563
      %2565 = vmatmul.bf16.gmra.mxu0 %v2532
      %v2566 = vpop.f32.mrf.mxu0
      %v2567 = vadd.f32 0.0, %v2566
      %v2568 = vpop.f32.mrf.mxu0
      %v2569 = vadd.f32 0.0, %v2568
      %2570 = vmatmul.bf16.gmra.mxu0 %v2535
      %v2571 = vpop.f32.mrf.mxu0
      %v2572 = vadd.f32 0.0, %v2571
      %v2573 = vpop.f32.mrf.mxu0
      %v2574 = vadd.f32 0.0, %v2573
      %2575 = vmatmul.bf16.gmra.mxu0 %v2538
      %v2576 = vpop.f32.mrf.mxu0
      %v2577 = vadd.f32 0.0, %v2576
      %v2578 = vpop.f32.mrf.mxu0
      %v2579 = vadd.f32 0.0, %v2578
      %2580 = vdwg.mxu0
      %v2581 = vmul.f32 %v2493, 0.17677669
      %v2582 = vmul.f32 %v2495, 0.17677669
      %v2583 = vmul.f32 %v2498, 0.17677669
      %v2584 = vmul.f32 %v2500, 0.17677669
      %v2585 = vmul.f32 %v2503, 0.17677669
      %v2586 = vmul.f32 %v2505, 0.17677669
      %v2587 = vmul.f32 %v2508, 0.17677669
      %v2588 = vmul.f32 %v2510, 0.17677669
      %v2589 = vmul.f32 %v2562, 0.17677669
      %v2590 = vmul.f32 %v2564, 0.17677669
      %v2591 = vmul.f32 %v2567, 0.17677669
      %v2592 = vmul.f32 %v2569, 0.17677669
      %v2593 = vmul.f32 %v2572, 0.17677669
      %v2594 = vmul.f32 %v2574, 0.17677669
      %v2595 = vmul.f32 %v2577, 0.17677669
      %v2596 = vmul.f32 %v2579, 0.17677669
      %v2597 = vsel %vm2080, %v2581, -inf
      %2598 = vmax.xlane.f32.xlu0 %v2597
      %v2599 = vpop.xlane.xlu0 %2598
      %v2600 = vsel %vm2080, %v2582, -inf
      %2601 = vmax.xlane.f32.xlu0 %v2600
      %v2602 = vpop.xlane.xlu0 %2601
      %v2603 = vsel %vm2080, %v2583, -inf
      %2604 = vmax.xlane.f32.xlu0 %v2603
      %v2605 = vpop.xlane.xlu0 %2604
      %v2606 = vsel %vm2080, %v2584, -inf
      %2607 = vmax.xlane.f32.xlu0 %v2606
      %v2608 = vpop.xlane.xlu0 %2607
      %v2609 = vsel %vm2080, %v2585, -inf
      %2610 = vmax.xlane.f32.xlu0 %v2609
      %v2611 = vpop.xlane.xlu0 %2610
      %v2612 = vsel %vm2080, %v2586, -inf
      %2613 = vmax.xlane.f32.xlu0 %v2612
      %v2614 = vpop.xlane.xlu0 %2613
      %v2615 = vsel %vm2080, %v2587, -inf
      %2616 = vmax.xlane.f32.xlu0 %v2615
      %v2617 = vpop.xlane.xlu0 %2616
      %v2618 = vsel %vm2080, %v2588, -inf
      %2619 = vmax.xlane.f32.xlu0 %v2618
      %v2620 = vpop.xlane.xlu0 %2619
      %v2621 = vsel %vm2080, %v2589, -inf
      %2622 = vmax.xlane.f32.xlu0 %v2621
      %v2623 = vpop.xlane.xlu0 %2622
      %v2624 = vsel %vm2080, %v2590, -inf
      %2625 = vmax.xlane.f32.xlu0 %v2624
      %v2626 = vpop.xlane.xlu0 %2625
      %v2627 = vsel %vm2080, %v2591, -inf
      %2628 = vmax.xlane.f32.xlu0 %v2627
      %v2629 = vpop.xlane.xlu0 %2628
      %v2630 = vsel %vm2080, %v2592, -inf
      %2631 = vmax.xlane.f32.xlu0 %v2630
      %v2632 = vpop.xlane.xlu0 %2631
      %v2633 = vsel %vm2080, %v2593, -inf
      %2634 = vmax.xlane.f32.xlu0 %v2633
      %v2635 = vpop.xlane.xlu0 %2634
      %v2636 = vsel %vm2080, %v2594, -inf
      %2637 = vmax.xlane.f32.xlu0 %v2636
      %v2638 = vpop.xlane.xlu0 %2637
      %v2639 = vsel %vm2080, %v2595, -inf
      %2640 = vmax.xlane.f32.xlu0 %v2639
      %v2641 = vpop.xlane.xlu0 %2640
      %v2642 = vsel %vm2080, %v2596, -inf
      %2643 = vmax.xlane.f32.xlu0 %v2642
      %v2644 = vpop.xlane.xlu0 %2643
      %v2645 = vsub.f32 %v2581, %v2599
      %v2646 = vsub.f32 %v2582, %v2602
      %v2647 = vsub.f32 %v2583, %v2605
      %v2648 = vsub.f32 %v2584, %v2608
      %v2649 = vsub.f32 %v2585, %v2611
      %v2650 = vsub.f32 %v2586, %v2614
      %v2651 = vsub.f32 %v2587, %v2617
      %v2652 = vsub.f32 %v2588, %v2620
      %v2653 = vsub.f32 %v2589, %v2623
      %v2654 = vsub.f32 %v2590, %v2626
      %v2655 = vsub.f32 %v2591, %v2629
      %v2656 = vsub.f32 %v2592, %v2632
      %v2657 = vsub.f32 %v2593, %v2635
      %v2658 = vsub.f32 %v2594, %v2638
      %v2659 = vsub.f32 %v2595, %v2641
      %v2660 = vsub.f32 %v2596, %v2644
      %v2661 = vmul.f32 %v2645, 1.442695
      %v2662 = vpow.pop %v2661
      %v2663 = vmul.f32 %v2646, 1.442695
      %v2664 = vpow.pop %v2663
      %v2665 = vmul.f32 %v2647, 1.442695
      %v2666 = vpow.pop %v2665
      %v2667 = vmul.f32 %v2648, 1.442695
      %v2668 = vpow.pop %v2667
      %v2669 = vmul.f32 %v2649, 1.442695
      %v2670 = vpow.pop %v2669
      %v2671 = vmul.f32 %v2650, 1.442695
      %v2672 = vpow.pop %v2671
      %v2673 = vmul.f32 %v2651, 1.442695
      %v2674 = vpow.pop %v2673
      %v2675 = vmul.f32 %v2652, 1.442695
      %v2676 = vpow.pop %v2675
      %v2677 = vmul.f32 %v2653, 1.442695
      %v2678 = vpow.pop %v2677
      %v2679 = vmul.f32 %v2654, 1.442695
      %v2680 = vpow.pop %v2679
      %v2681 = vmul.f32 %v2655, 1.442695
      %v2682 = vpow.pop %v2681
      %v2683 = vmul.f32 %v2656, 1.442695
      %v2684 = vpow.pop %v2683
      %v2685 = vmul.f32 %v2657, 1.442695
      %v2686 = vpow.pop %v2685
      %v2687 = vmul.f32 %v2658, 1.442695
      %v2688 = vpow.pop %v2687
      %v2689 = vmul.f32 %v2659, 1.442695
      %v2690 = vpow.pop %v2689
      %v2691 = vmul.f32 %v2660, 1.442695
      %v2692 = vpow.pop %v2691
      %v2693 = vsel %vm2080, %v2662, 0.0
      %2694 = vadd.xlane.f32.xlu0 %v2693
      %v2695 = vpop.xlane.xlu0 %2694
      %v2696 = vsel %vm2080, %v2664, 0.0
      %2697 = vadd.xlane.f32.xlu0 %v2696
      %v2698 = vpop.xlane.xlu0 %2697
      %v2699 = vsel %vm2080, %v2666, 0.0
      %2700 = vadd.xlane.f32.xlu0 %v2699
      %v2701 = vpop.xlane.xlu0 %2700
      %v2702 = vsel %vm2080, %v2668, 0.0
      %2703 = vadd.xlane.f32.xlu0 %v2702
      %v2704 = vpop.xlane.xlu0 %2703
      %v2705 = vsel %vm2080, %v2670, 0.0
      %2706 = vadd.xlane.f32.xlu0 %v2705
      %v2707 = vpop.xlane.xlu0 %2706
      %v2708 = vsel %vm2080, %v2672, 0.0
      %2709 = vadd.xlane.f32.xlu0 %v2708
      %v2710 = vpop.xlane.xlu0 %2709
      %v2711 = vsel %vm2080, %v2674, 0.0
      %2712 = vadd.xlane.f32.xlu0 %v2711
      %v2713 = vpop.xlane.xlu0 %2712
      %v2714 = vsel %vm2080, %v2676, 0.0
      %2715 = vadd.xlane.f32.xlu0 %v2714
      %v2716 = vpop.xlane.xlu0 %2715
      %v2717 = vsel %vm2080, %v2678, 0.0
      %2718 = vadd.xlane.f32.xlu0 %v2717
      %v2719 = vpop.xlane.xlu0 %2718
      %v2720 = vsel %vm2080, %v2680, 0.0
      %2721 = vadd.xlane.f32.xlu0 %v2720
      %v2722 = vpop.xlane.xlu0 %2721
      %v2723 = vsel %vm2080, %v2682, 0.0
      %2724 = vadd.xlane.f32.xlu0 %v2723
      %v2725 = vpop.xlane.xlu0 %2724
      %v2726 = vsel %vm2080, %v2684, 0.0
      %2727 = vadd.xlane.f32.xlu0 %v2726
      %v2728 = vpop.xlane.xlu0 %2727
      %v2729 = vsel %vm2080, %v2686, 0.0
      %2730 = vadd.xlane.f32.xlu0 %v2729
      %v2731 = vpop.xlane.xlu0 %2730
      %v2732 = vsel %vm2080, %v2688, 0.0
      %2733 = vadd.xlane.f32.xlu0 %v2732
      %v2734 = vpop.xlane.xlu0 %2733
      %v2735 = vsel %vm2080, %v2690, 0.0
      %2736 = vadd.xlane.f32.xlu0 %v2735
      %v2737 = vpop.xlane.xlu0 %2736
      %v2738 = vsel %vm2080, %v2692, 0.0
      %2739 = vadd.xlane.f32.xlu0 %v2738
      %v2740 = vpop.xlane.xlu0 %2739
      %v2741 = vrcp.pop %v2695
      %v2742 = vrcp.pop %v2698
      %v2743 = vrcp.pop %v2701
      %v2744 = vrcp.pop %v2704
      %v2745 = vrcp.pop %v2707
      %v2746 = vrcp.pop %v2710
      %v2747 = vrcp.pop %v2713
      %v2748 = vrcp.pop %v2716
      %v2749 = vrcp.pop %v2719
      %v2750 = vrcp.pop %v2722
      %v2751 = vrcp.pop %v2725
      %v2752 = vrcp.pop %v2728
      %v2753 = vrcp.pop %v2731
      %v2754 = vrcp.pop %v2734
      %v2755 = vrcp.pop %v2737
      %v2756 = vrcp.pop %v2740
      %v2757 = vmul.f32 %v2662, %v2741
      %v2758 = vmul.f32 %v2664, %v2742
      %v2759 = vmul.f32 %v2666, %v2743
      %v2760 = vmul.f32 %v2668, %v2744
      %v2761 = vmul.f32 %v2670, %v2745
      %v2762 = vmul.f32 %v2672, %v2746
      %v2763 = vmul.f32 %v2674, %v2747
      %v2764 = vmul.f32 %v2676, %v2748
      %v2765 = vmul.f32 %v2678, %v2749
      %v2766 = vmul.f32 %v2680, %v2750
      %v2767 = vmul.f32 %v2682, %v2751
      %v2768 = vmul.f32 %v2684, %v2752
      %v2769 = vmul.f32 %v2686, %v2753
      %v2770 = vmul.f32 %v2688, %v2754
      %v2771 = vmul.f32 %v2690, %v2755
      %v2772 = vmul.f32 %v2692, %v2756
      %v2773 = vpack.c.bf16 %v2757, %v2757
      %v2774 = vpack.c.bf16 %v2758, %v2758
      %v2775 = vpack.c.bf16 %v2759, %v2759
      %v2776 = vpack.c.bf16 %v2760, %v2760
      %v2777 = vpack.c.bf16 %v2761, %v2761
      %v2778 = vpack.c.bf16 %v2762, %v2762
      %v2779 = vpack.c.bf16 %v2763, %v2763
      %v2780 = vpack.c.bf16 %v2764, %v2764
      %v2781 = vpack.c.bf16 %v2765, %v2765
      %v2782 = vpack.c.bf16 %v2766, %v2766
      %v2783 = vpack.c.bf16 %v2767, %v2767
      %v2784 = vpack.c.bf16 %v2768, %v2768
      %v2785 = vpack.c.bf16 %v2769, %v2769
      %v2786 = vpack.c.bf16 %v2770, %v2770
      %v2787 = vpack.c.bf16 %v2771, %v2771
      %v2788 = vpack.c.bf16 %v2772, %v2772
      %v2797 = vunpack.c.l.b16 %v2773
      %v2798 = vunpack.c.l.b16 %v2774
      %v2799 = vunpack.c.l.b16 %v2775
      %v2800 = vunpack.c.l.b16 %v2776
      %v2801 = vunpack.c.l.b16 %v2777
      %v2802 = vunpack.c.l.b16 %v2778
      %v2803 = vunpack.c.l.b16 %v2779
      %v2804 = vunpack.c.l.b16 %v2780
      %v2805 = vpack.c.b16 %v2798, %v2797
      %v2806 = vpack.c.b16 %v2800, %v2799
      %v2807 = vpack.c.b16 %v2802, %v2801
      %v2808 = vpack.c.b16 %v2804, %v2803
      %2809 = vrot.lane.b32.xlu0 %v2309, 96
      %v2810 = vpop.permute.xlu0 %2809
      %2811 = vrot.lane.b32.xlu0 %v2310, 96
      %v2812 = vpop.permute.xlu0 %2811
      %2813 = vrot.lane.b32.xlu0 %v2311, 96
      %v2814 = vpop.permute.xlu0 %2813
      %2815 = vrot.lane.b32.xlu0 %v2312, 96
      %v2816 = vpop.permute.xlu0 %2815
      %v2822 = vsel %vm2080, %v2805, 0
      %v2825 = vsel %vm2080, %v2806, 0
      %v2828 = vsel %vm2080, %v2807, 0
      %v2831 = vsel %vm2080, %v2808, 0
      %2833 = vmatpush.bf16.msra.mxu0 0
      %2834 = vmatpush.bf16.msra.mxu0 0
      %2835 = vmatpush.bf16.msra.mxu0 0
      %2836 = vmatpush.bf16.msra.mxu0 0
      %2837 = vmatpush.bf16.msra.mxu0 %v2816
      %2838 = vmatpush.bf16.msra.mxu0 %v2814
      %2839 = vmatpush.bf16.msra.mxu0 %v2812
      %2840 = vmatpush.bf16.msra.mxu0 %v2810
      %2841 = vmatmul.bf16.gmra.mxu0 %v2822
      %v2842 = vpop.f32.mrf.mxu0
      %v2843 = vadd.f32 0.0, %v2842
      %v2844 = vpop.f32.mrf.mxu0
      %v2845 = vadd.f32 0.0, %v2844
      %2846 = vmatmul.bf16.gmra.mxu0 %v2825
      %v2847 = vpop.f32.mrf.mxu0
      %v2848 = vadd.f32 0.0, %v2847
      %v2849 = vpop.f32.mrf.mxu0
      %v2850 = vadd.f32 0.0, %v2849
      %2851 = vmatmul.bf16.gmra.mxu0 %v2828
      %v2852 = vpop.f32.mrf.mxu0
      %v2853 = vadd.f32 0.0, %v2852
      %v2854 = vpop.f32.mrf.mxu0
      %v2855 = vadd.f32 0.0, %v2854
      %2856 = vmatmul.bf16.gmra.mxu0 %v2831
      %v2857 = vpop.f32.mrf.mxu0
      %v2858 = vadd.f32 0.0, %v2857
      %v2859 = vpop.f32.mrf.mxu0
      %v2860 = vadd.f32 0.0, %v2859
      %2861 = vdwg.mxu0
      %v2870 = vunpack.c.l.b16 %v2781
      %v2871 = vunpack.c.l.b16 %v2782
      %v2872 = vunpack.c.l.b16 %v2783
      %v2873 = vunpack.c.l.b16 %v2784
      %v2874 = vunpack.c.l.b16 %v2785
      %v2875 = vunpack.c.l.b16 %v2786
      %v2876 = vunpack.c.l.b16 %v2787
      %v2877 = vunpack.c.l.b16 %v2788
      %v2878 = vpack.c.b16 %v2871, %v2870
      %v2879 = vpack.c.b16 %v2873, %v2872
      %v2880 = vpack.c.b16 %v2875, %v2874
      %v2881 = vpack.c.b16 %v2877, %v2876
      %2882 = vrot.lane.b32.xlu0 %v2394, 96
      %v2883 = vpop.permute.xlu0 %2882
      %2884 = vrot.lane.b32.xlu0 %v2395, 96
      %v2885 = vpop.permute.xlu0 %2884
      %2886 = vrot.lane.b32.xlu0 %v2396, 96
      %v2887 = vpop.permute.xlu0 %2886
      %2888 = vrot.lane.b32.xlu0 %v2397, 96
      %v2889 = vpop.permute.xlu0 %2888
      %v2895 = vsel %vm2080, %v2878, 0
      %v2898 = vsel %vm2080, %v2879, 0
      %v2901 = vsel %vm2080, %v2880, 0
      %v2904 = vsel %vm2080, %v2881, 0
      %2906 = vmatpush.bf16.msra.mxu0 0
      %2907 = vmatpush.bf16.msra.mxu0 0
      %2908 = vmatpush.bf16.msra.mxu0 0
      %2909 = vmatpush.bf16.msra.mxu0 0
      %2910 = vmatpush.bf16.msra.mxu0 %v2889
      %2911 = vmatpush.bf16.msra.mxu0 %v2887
      %2912 = vmatpush.bf16.msra.mxu0 %v2885
      %2913 = vmatpush.bf16.msra.mxu0 %v2883
      %2914 = vmatmul.bf16.gmra.mxu0 %v2895
      %v2915 = vpop.f32.mrf.mxu0
      %v2916 = vadd.f32 0.0, %v2915
      %v2917 = vpop.f32.mrf.mxu0
      %v2918 = vadd.f32 0.0, %v2917
      %2919 = vmatmul.bf16.gmra.mxu0 %v2898
      %v2920 = vpop.f32.mrf.mxu0
      %v2921 = vadd.f32 0.0, %v2920
      %v2922 = vpop.f32.mrf.mxu0
      %v2923 = vadd.f32 0.0, %v2922
      %2924 = vmatmul.bf16.gmra.mxu0 %v2901
      %v2925 = vpop.f32.mrf.mxu0
      %v2926 = vadd.f32 0.0, %v2925
      %v2927 = vpop.f32.mrf.mxu0
      %v2928 = vadd.f32 0.0, %v2927
      %2929 = vmatmul.bf16.gmra.mxu0 %v2904
      %v2930 = vpop.f32.mrf.mxu0
      %v2931 = vadd.f32 0.0, %v2930
      %v2932 = vpop.f32.mrf.mxu0
      %v2933 = vadd.f32 0.0, %v2932
      %2934 = vdwg.mxu0
      %2935 = vrot.lane.b32.xlu0 %v1893, 64
      %v2936 = vpop.permute.xlu0 %2935
      %2937 = vrot.lane.b32.xlu0 %v1894, 64
      %v2938 = vpop.permute.xlu0 %2937
      %2939 = vrot.lane.b32.xlu0 %v1895, 64
      %v2940 = vpop.permute.xlu0 %2939
      %2941 = vrot.lane.b32.xlu0 %v1896, 64
      %v2942 = vpop.permute.xlu0 %2941
      %2943 = vrot.lane.b32.xlu0 %v1913, 64
      %v2944 = vpop.permute.xlu0 %2943
      %2945 = vrot.lane.b32.xlu0 %v1914, 64
      %v2946 = vpop.permute.xlu0 %2945
      %2947 = vrot.lane.b32.xlu0 %v1915, 64
      %v2948 = vpop.permute.xlu0 %2947
      %2949 = vrot.lane.b32.xlu0 %v1916, 64
      %v2950 = vpop.permute.xlu0 %2949
      %v2952 = vsel %vm1917, %v2936, 0
      %v2955 = vsel %vm1917, %v2938, 0
      %v2958 = vsel %vm1917, %v2940, 0
      %v2961 = vsel %vm1917, %v2942, 0
      %v2964 = vsel %vm1917, %v2944, 0
      %v2967 = vsel %vm1917, %v2946, 0
      %v2970 = vsel %vm1917, %v2948, 0
      %v2973 = vsel %vm1917, %v2950, 0
      %2975 = vmatpush.bf16.xpose.msra.mxu0 0
      %2976 = vmatpush.bf16.xpose.msra.mxu0 0
      %2977 = vmatpush.bf16.xpose.msra.mxu0 0
      %2978 = vmatpush.bf16.xpose.msra.mxu0 0
      %2979 = vmatpush.bf16.xpose.msra.mxu0 %v2973
      %2980 = vmatpush.bf16.xpose.msra.mxu0 %v2970
      %2981 = vmatpush.bf16.xpose.msra.mxu0 %v2967
      %2982 = vmatpush.bf16.xpose.msra.mxu0 %v2964
      %2983 = vmatmul.bf16.gmra.mxu0 %v2952
      %v2984 = vpop.f32.mrf.mxu0
      %v2985 = vadd.f32 0.0, %v2984
      %v2986 = vpop.f32.mrf.mxu0
      %v2987 = vadd.f32 0.0, %v2986
      %2988 = vmatmul.bf16.gmra.mxu0 %v2955
      %v2989 = vpop.f32.mrf.mxu0
      %v2990 = vadd.f32 0.0, %v2989
      %v2991 = vpop.f32.mrf.mxu0
      %v2992 = vadd.f32 0.0, %v2991
      %2993 = vmatmul.bf16.gmra.mxu0 %v2958
      %v2994 = vpop.f32.mrf.mxu0
      %v2995 = vadd.f32 0.0, %v2994
      %v2996 = vpop.f32.mrf.mxu0
      %v2997 = vadd.f32 0.0, %v2996
      %2998 = vmatmul.bf16.gmra.mxu0 %v2961
      %v2999 = vpop.f32.mrf.mxu0
      %v3000 = vadd.f32 0.0, %v2999
      %v3001 = vpop.f32.mrf.mxu0
      %v3002 = vadd.f32 0.0, %v3001
      %3003 = vdwg.mxu0
      %3004 = vrot.lane.b32.xlu0 %v1987, 64
      %v3005 = vpop.permute.xlu0 %3004
      %3006 = vrot.lane.b32.xlu0 %v1988, 64
      %v3007 = vpop.permute.xlu0 %3006
      %3008 = vrot.lane.b32.xlu0 %v1989, 64
      %v3009 = vpop.permute.xlu0 %3008
      %3010 = vrot.lane.b32.xlu0 %v1990, 64
      %v3011 = vpop.permute.xlu0 %3010
      %3012 = vrot.lane.b32.xlu0 %v2007, 64
      %v3013 = vpop.permute.xlu0 %3012
      %3014 = vrot.lane.b32.xlu0 %v2008, 64
      %v3015 = vpop.permute.xlu0 %3014
      %3016 = vrot.lane.b32.xlu0 %v2009, 64
      %v3017 = vpop.permute.xlu0 %3016
      %3018 = vrot.lane.b32.xlu0 %v2010, 64
      %v3019 = vpop.permute.xlu0 %3018
      %v3021 = vsel %vm1917, %v3005, 0
      %v3024 = vsel %vm1917, %v3007, 0
      %v3027 = vsel %vm1917, %v3009, 0
      %v3030 = vsel %vm1917, %v3011, 0
      %v3033 = vsel %vm1917, %v3013, 0
      %v3036 = vsel %vm1917, %v3015, 0
      %v3039 = vsel %vm1917, %v3017, 0
      %v3042 = vsel %vm1917, %v3019, 0
      %3044 = vmatpush.bf16.xpose.msra.mxu0 0
      %3045 = vmatpush.bf16.xpose.msra.mxu0 0
      %3046 = vmatpush.bf16.xpose.msra.mxu0 0
      %3047 = vmatpush.bf16.xpose.msra.mxu0 0
      %3048 = vmatpush.bf16.xpose.msra.mxu0 %v3042
      %3049 = vmatpush.bf16.xpose.msra.mxu0 %v3039
      %3050 = vmatpush.bf16.xpose.msra.mxu0 %v3036
      %3051 = vmatpush.bf16.xpose.msra.mxu0 %v3033
      %3052 = vmatmul.bf16.gmra.mxu0 %v3021
      %v3053 = vpop.f32.mrf.mxu0
      %v3054 = vadd.f32 0.0, %v3053
      %v3055 = vpop.f32.mrf.mxu0
      %v3056 = vadd.f32 0.0, %v3055
      %3057 = vmatmul.bf16.gmra.mxu0 %v3024
      %v3058 = vpop.f32.mrf.mxu0
      %v3059 = vadd.f32 0.0, %v3058
      %v3060 = vpop.f32.mrf.mxu0
      %v3061 = vadd.f32 0.0, %v3060
      %3062 = vmatmul.bf16.gmra.mxu0 %v3027
      %v3063 = vpop.f32.mrf.mxu0
      %v3064 = vadd.f32 0.0, %v3063
      %v3065 = vpop.f32.mrf.mxu0
      %v3066 = vadd.f32 0.0, %v3065
      %3067 = vmatmul.bf16.gmra.mxu0 %v3030
      %v3068 = vpop.f32.mrf.mxu0
      %v3069 = vadd.f32 0.0, %v3068
      %v3070 = vpop.f32.mrf.mxu0
      %v3071 = vadd.f32 0.0, %v3070
      %3072 = vdwg.mxu0
      %v3073 = vmul.f32 %v2985, 0.17677669
      %v3074 = vmul.f32 %v2987, 0.17677669
      %v3075 = vmul.f32 %v2990, 0.17677669
      %v3076 = vmul.f32 %v2992, 0.17677669
      %v3077 = vmul.f32 %v2995, 0.17677669
      %v3078 = vmul.f32 %v2997, 0.17677669
      %v3079 = vmul.f32 %v3000, 0.17677669
      %v3080 = vmul.f32 %v3002, 0.17677669
      %v3081 = vmul.f32 %v3054, 0.17677669
      %v3082 = vmul.f32 %v3056, 0.17677669
      %v3083 = vmul.f32 %v3059, 0.17677669
      %v3084 = vmul.f32 %v3061, 0.17677669
      %v3085 = vmul.f32 %v3064, 0.17677669
      %v3086 = vmul.f32 %v3066, 0.17677669
      %v3087 = vmul.f32 %v3069, 0.17677669
      %v3088 = vmul.f32 %v3071, 0.17677669
      %v3089 = vsel %vm2080, %v3073, -inf
      %3090 = vmax.xlane.f32.xlu0 %v3089
      %v3091 = vpop.xlane.xlu0 %3090
      %v3092 = vsel %vm2080, %v3074, -inf
      %3093 = vmax.xlane.f32.xlu0 %v3092
      %v3094 = vpop.xlane.xlu0 %3093
      %v3095 = vsel %vm2080, %v3075, -inf
      %3096 = vmax.xlane.f32.xlu0 %v3095
      %v3097 = vpop.xlane.xlu0 %3096
      %v3098 = vsel %vm2080, %v3076, -inf
      %3099 = vmax.xlane.f32.xlu0 %v3098
      %v3100 = vpop.xlane.xlu0 %3099
      %v3101 = vsel %vm2080, %v3077, -inf
      %3102 = vmax.xlane.f32.xlu0 %v3101
      %v3103 = vpop.xlane.xlu0 %3102
      %v3104 = vsel %vm2080, %v3078, -inf
      %3105 = vmax.xlane.f32.xlu0 %v3104
      %v3106 = vpop.xlane.xlu0 %3105
      %v3107 = vsel %vm2080, %v3079, -inf
      %3108 = vmax.xlane.f32.xlu0 %v3107
      %v3109 = vpop.xlane.xlu0 %3108
      %v3110 = vsel %vm2080, %v3080, -inf
      %3111 = vmax.xlane.f32.xlu0 %v3110
      %v3112 = vpop.xlane.xlu0 %3111
      %v3113 = vsel %vm2080, %v3081, -inf
      %3114 = vmax.xlane.f32.xlu0 %v3113
      %v3115 = vpop.xlane.xlu0 %3114
      %v3116 = vsel %vm2080, %v3082, -inf
      %3117 = vmax.xlane.f32.xlu0 %v3116
      %v3118 = vpop.xlane.xlu0 %3117
      %v3119 = vsel %vm2080, %v3083, -inf
      %3120 = vmax.xlane.f32.xlu0 %v3119
      %v3121 = vpop.xlane.xlu0 %3120
      %v3122 = vsel %vm2080, %v3084, -inf
      %3123 = vmax.xlane.f32.xlu0 %v3122
      %v3124 = vpop.xlane.xlu0 %3123
      %v3125 = vsel %vm2080, %v3085, -inf
      %3126 = vmax.xlane.f32.xlu0 %v3125
      %v3127 = vpop.xlane.xlu0 %3126
      %v3128 = vsel %vm2080, %v3086, -inf
      %3129 = vmax.xlane.f32.xlu0 %v3128
      %v3130 = vpop.xlane.xlu0 %3129
      %v3131 = vsel %vm2080, %v3087, -inf
      %3132 = vmax.xlane.f32.xlu0 %v3131
      %v3133 = vpop.xlane.xlu0 %3132
      %v3134 = vsel %vm2080, %v3088, -inf
      %3135 = vmax.xlane.f32.xlu0 %v3134
      %v3136 = vpop.xlane.xlu0 %3135
      %v3137 = vsub.f32 %v3073, %v3091
      %v3138 = vsub.f32 %v3074, %v3094
      %v3139 = vsub.f32 %v3075, %v3097
      %v3140 = vsub.f32 %v3076, %v3100
      %v3141 = vsub.f32 %v3077, %v3103
      %v3142 = vsub.f32 %v3078, %v3106
      %v3143 = vsub.f32 %v3079, %v3109
      %v3144 = vsub.f32 %v3080, %v3112
      %v3145 = vsub.f32 %v3081, %v3115
      %v3146 = vsub.f32 %v3082, %v3118
      %v3147 = vsub.f32 %v3083, %v3121
      %v3148 = vsub.f32 %v3084, %v3124
      %v3149 = vsub.f32 %v3085, %v3127
      %v3150 = vsub.f32 %v3086, %v3130
      %v3151 = vsub.f32 %v3087, %v3133
      %v3152 = vsub.f32 %v3088, %v3136
      %v3153 = vmul.f32 %v3137, 1.442695
      %v3154 = vpow.pop %v3153
      %v3155 = vmul.f32 %v3138, 1.442695
      %v3156 = vpow.pop %v3155
      %v3157 = vmul.f32 %v3139, 1.442695
      %v3158 = vpow.pop %v3157
      %v3159 = vmul.f32 %v3140, 1.442695
      %v3160 = vpow.pop %v3159
      %v3161 = vmul.f32 %v3141, 1.442695
      %v3162 = vpow.pop %v3161
      %v3163 = vmul.f32 %v3142, 1.442695
      %v3164 = vpow.pop %v3163
      %v3165 = vmul.f32 %v3143, 1.442695
      %v3166 = vpow.pop %v3165
      %v3167 = vmul.f32 %v3144, 1.442695
      %v3168 = vpow.pop %v3167
      %v3169 = vmul.f32 %v3145, 1.442695
      %v3170 = vpow.pop %v3169
      %v3171 = vmul.f32 %v3146, 1.442695
      %v3172 = vpow.pop %v3171
      %v3173 = vmul.f32 %v3147, 1.442695
      %v3174 = vpow.pop %v3173
      %v3175 = vmul.f32 %v3148, 1.442695
      %v3176 = vpow.pop %v3175
      %v3177 = vmul.f32 %v3149, 1.442695
      %v3178 = vpow.pop %v3177
      %v3179 = vmul.f32 %v3150, 1.442695
      %v3180 = vpow.pop %v3179
      %v3181 = vmul.f32 %v3151, 1.442695
      %v3182 = vpow.pop %v3181
      %v3183 = vmul.f32 %v3152, 1.442695
      %v3184 = vpow.pop %v3183
      %v3185 = vsel %vm2080, %v3154, 0.0
      %3186 = vadd.xlane.f32.xlu0 %v3185
      %v3187 = vpop.xlane.xlu0 %3186
      %v3188 = vsel %vm2080, %v3156, 0.0
      %3189 = vadd.xlane.f32.xlu0 %v3188
      %v3190 = vpop.xlane.xlu0 %3189
      %v3191 = vsel %vm2080, %v3158, 0.0
      %3192 = vadd.xlane.f32.xlu0 %v3191
      %v3193 = vpop.xlane.xlu0 %3192
      %v3194 = vsel %vm2080, %v3160, 0.0
      %3195 = vadd.xlane.f32.xlu0 %v3194
      %v3196 = vpop.xlane.xlu0 %3195
      %v3197 = vsel %vm2080, %v3162, 0.0
      %3198 = vadd.xlane.f32.xlu0 %v3197
      %v3199 = vpop.xlane.xlu0 %3198
      %v3200 = vsel %vm2080, %v3164, 0.0
      %3201 = vadd.xlane.f32.xlu0 %v3200
      %v3202 = vpop.xlane.xlu0 %3201
      %v3203 = vsel %vm2080, %v3166, 0.0
      %3204 = vadd.xlane.f32.xlu0 %v3203
      %v3205 = vpop.xlane.xlu0 %3204
      %v3206 = vsel %vm2080, %v3168, 0.0
      %3207 = vadd.xlane.f32.xlu0 %v3206
      %v3208 = vpop.xlane.xlu0 %3207
      %v3209 = vsel %vm2080, %v3170, 0.0
      %3210 = vadd.xlane.f32.xlu0 %v3209
      %v3211 = vpop.xlane.xlu0 %3210
      %v3212 = vsel %vm2080, %v3172, 0.0
      %3213 = vadd.xlane.f32.xlu0 %v3212
      %v3214 = vpop.xlane.xlu0 %3213
      %v3215 = vsel %vm2080, %v3174, 0.0
      %3216 = vadd.xlane.f32.xlu0 %v3215
      %v3217 = vpop.xlane.xlu0 %3216
      %v3218 = vsel %vm2080, %v3176, 0.0
      %3219 = vadd.xlane.f32.xlu0 %v3218
      %v3220 = vpop.xlane.xlu0 %3219
      %v3221 = vsel %vm2080, %v3178, 0.0
      %3222 = vadd.xlane.f32.xlu0 %v3221
      %v3223 = vpop.xlane.xlu0 %3222
      %v3224 = vsel %vm2080, %v3180, 0.0
      %3225 = vadd.xlane.f32.xlu0 %v3224
      %v3226 = vpop.xlane.xlu0 %3225
      %v3227 = vsel %vm2080, %v3182, 0.0
      %3228 = vadd.xlane.f32.xlu0 %v3227
      %v3229 = vpop.xlane.xlu0 %3228
      %v3230 = vsel %vm2080, %v3184, 0.0
      %3231 = vadd.xlane.f32.xlu0 %v3230
      %v3232 = vpop.xlane.xlu0 %3231
      %v3233 = vrcp.pop %v3187
      %v3234 = vrcp.pop %v3190
      %v3235 = vrcp.pop %v3193
      %v3236 = vrcp.pop %v3196
      %v3237 = vrcp.pop %v3199
      %v3238 = vrcp.pop %v3202
      %v3239 = vrcp.pop %v3205
      %v3240 = vrcp.pop %v3208
      %v3241 = vrcp.pop %v3211
      %v3242 = vrcp.pop %v3214
      %v3243 = vrcp.pop %v3217
      %v3244 = vrcp.pop %v3220
      %v3245 = vrcp.pop %v3223
      %v3246 = vrcp.pop %v3226
      %v3247 = vrcp.pop %v3229
      %v3248 = vrcp.pop %v3232
      %v3249 = vmul.f32 %v3154, %v3233
      %v3250 = vmul.f32 %v3156, %v3234
      %v3251 = vmul.f32 %v3158, %v3235
      %v3252 = vmul.f32 %v3160, %v3236
      %v3253 = vmul.f32 %v3162, %v3237
      %v3254 = vmul.f32 %v3164, %v3238
      %v3255 = vmul.f32 %v3166, %v3239
      %v3256 = vmul.f32 %v3168, %v3240
      %v3257 = vmul.f32 %v3170, %v3241
      %v3258 = vmul.f32 %v3172, %v3242
      %v3259 = vmul.f32 %v3174, %v3243
      %v3260 = vmul.f32 %v3176, %v3244
      %v3261 = vmul.f32 %v3178, %v3245
      %v3262 = vmul.f32 %v3180, %v3246
      %v3263 = vmul.f32 %v3182, %v3247
      %v3264 = vmul.f32 %v3184, %v3248
      %v3265 = vpack.c.bf16 %v3249, %v3249
      %v3266 = vpack.c.bf16 %v3250, %v3250
      %v3267 = vpack.c.bf16 %v3251, %v3251
      %v3268 = vpack.c.bf16 %v3252, %v3252
      %v3269 = vpack.c.bf16 %v3253, %v3253
      %v3270 = vpack.c.bf16 %v3254, %v3254
      %v3271 = vpack.c.bf16 %v3255, %v3255
      %v3272 = vpack.c.bf16 %v3256, %v3256
      %v3273 = vpack.c.bf16 %v3257, %v3257
      %v3274 = vpack.c.bf16 %v3258, %v3258
      %v3275 = vpack.c.bf16 %v3259, %v3259
      %v3276 = vpack.c.bf16 %v3260, %v3260
      %v3277 = vpack.c.bf16 %v3261, %v3261
      %v3278 = vpack.c.bf16 %v3262, %v3262
      %v3279 = vpack.c.bf16 %v3263, %v3263
      %v3280 = vpack.c.bf16 %v3264, %v3264
      %v3289 = vunpack.c.l.b16 %v3265
      %v3290 = vunpack.c.l.b16 %v3266
      %v3291 = vunpack.c.l.b16 %v3267
      %v3292 = vunpack.c.l.b16 %v3268
      %v3293 = vunpack.c.l.b16 %v3269
      %v3294 = vunpack.c.l.b16 %v3270
      %v3295 = vunpack.c.l.b16 %v3271
      %v3296 = vunpack.c.l.b16 %v3272
      %v3297 = vpack.c.b16 %v3290, %v3289
      %v3298 = vpack.c.b16 %v3292, %v3291
      %v3299 = vpack.c.b16 %v3294, %v3293
      %v3300 = vpack.c.b16 %v3296, %v3295
      %3301 = vrot.lane.b32.xlu0 %v2309, 64
      %v3302 = vpop.permute.xlu0 %3301
      %3303 = vrot.lane.b32.xlu0 %v2310, 64
      %v3304 = vpop.permute.xlu0 %3303
      %3305 = vrot.lane.b32.xlu0 %v2311, 64
      %v3306 = vpop.permute.xlu0 %3305
      %3307 = vrot.lane.b32.xlu0 %v2312, 64
      %v3308 = vpop.permute.xlu0 %3307
      %v3314 = vsel %vm2080, %v3297, 0
      %v3317 = vsel %vm2080, %v3298, 0
      %v3320 = vsel %vm2080, %v3299, 0
      %v3323 = vsel %vm2080, %v3300, 0
      %3325 = vmatpush.bf16.msra.mxu0 0
      %3326 = vmatpush.bf16.msra.mxu0 0
      %3327 = vmatpush.bf16.msra.mxu0 0
      %3328 = vmatpush.bf16.msra.mxu0 0
      %3329 = vmatpush.bf16.msra.mxu0 %v3308
      %3330 = vmatpush.bf16.msra.mxu0 %v3306
      %3331 = vmatpush.bf16.msra.mxu0 %v3304
      %3332 = vmatpush.bf16.msra.mxu0 %v3302
      %3333 = vmatmul.bf16.gmra.mxu0 %v3314
      %v3334 = vpop.f32.mrf.mxu0
      %v3335 = vadd.f32 0.0, %v3334
      %v3336 = vpop.f32.mrf.mxu0
      %v3337 = vadd.f32 0.0, %v3336
      %3338 = vmatmul.bf16.gmra.mxu0 %v3317
      %v3339 = vpop.f32.mrf.mxu0
      %v3340 = vadd.f32 0.0, %v3339
      %v3341 = vpop.f32.mrf.mxu0
      %v3342 = vadd.f32 0.0, %v3341
      %3343 = vmatmul.bf16.gmra.mxu0 %v3320
      %v3344 = vpop.f32.mrf.mxu0
      %v3345 = vadd.f32 0.0, %v3344
      %v3346 = vpop.f32.mrf.mxu0
      %v3347 = vadd.f32 0.0, %v3346
      %3348 = vmatmul.bf16.gmra.mxu0 %v3323
      %v3349 = vpop.f32.mrf.mxu0
      %v3350 = vadd.f32 0.0, %v3349
      %v3351 = vpop.f32.mrf.mxu0
      %v3352 = vadd.f32 0.0, %v3351
      %3353 = vdwg.mxu0
      %v3362 = vunpack.c.l.b16 %v3273
      %v3363 = vunpack.c.l.b16 %v3274
      %v3364 = vunpack.c.l.b16 %v3275
      %v3365 = vunpack.c.l.b16 %v3276
      %v3366 = vunpack.c.l.b16 %v3277
      %v3367 = vunpack.c.l.b16 %v3278
      %v3368 = vunpack.c.l.b16 %v3279
      %v3369 = vunpack.c.l.b16 %v3280
      %v3370 = vpack.c.b16 %v3363, %v3362
      %v3371 = vpack.c.b16 %v3365, %v3364
      %v3372 = vpack.c.b16 %v3367, %v3366
      %v3373 = vpack.c.b16 %v3369, %v3368
      %3374 = vrot.lane.b32.xlu0 %v2394, 64
      %v3375 = vpop.permute.xlu0 %3374
      %3376 = vrot.lane.b32.xlu0 %v2395, 64
      %v3377 = vpop.permute.xlu0 %3376
      %3378 = vrot.lane.b32.xlu0 %v2396, 64
      %v3379 = vpop.permute.xlu0 %3378
      %3380 = vrot.lane.b32.xlu0 %v2397, 64
      %v3381 = vpop.permute.xlu0 %3380
      %v3387 = vsel %vm2080, %v3370, 0
      %v3390 = vsel %vm2080, %v3371, 0
      %v3393 = vsel %vm2080, %v3372, 0
      %v3396 = vsel %vm2080, %v3373, 0
      %3398 = vmatpush.bf16.msra.mxu0 0
      %3399 = vmatpush.bf16.msra.mxu0 0
      %3400 = vmatpush.bf16.msra.mxu0 0
      %3401 = vmatpush.bf16.msra.mxu0 0
      %3402 = vmatpush.bf16.msra.mxu0 %v3381
      %3403 = vmatpush.bf16.msra.mxu0 %v3379
      %3404 = vmatpush.bf16.msra.mxu0 %v3377
      %3405 = vmatpush.bf16.msra.mxu0 %v3375
      %3406 = vmatmul.bf16.gmra.mxu0 %v3387
      %v3407 = vpop.f32.mrf.mxu0
      %v3408 = vadd.f32 0.0, %v3407
      %v3409 = vpop.f32.mrf.mxu0
      %v3410 = vadd.f32 0.0, %v3409
      %3411 = vmatmul.bf16.gmra.mxu0 %v3390
      %v3412 = vpop.f32.mrf.mxu0
      %v3413 = vadd.f32 0.0, %v3412
      %v3414 = vpop.f32.mrf.mxu0
      %v3415 = vadd.f32 0.0, %v3414
      %3416 = vmatmul.bf16.gmra.mxu0 %v3393
      %v3417 = vpop.f32.mrf.mxu0
      %v3418 = vadd.f32 0.0, %v3417
      %v3419 = vpop.f32.mrf.mxu0
      %v3420 = vadd.f32 0.0, %v3419
      %3421 = vmatmul.bf16.gmra.mxu0 %v3396
      %v3422 = vpop.f32.mrf.mxu0
      %v3423 = vadd.f32 0.0, %v3422
      %v3424 = vpop.f32.mrf.mxu0
      %v3425 = vadd.f32 0.0, %v3424
      %3426 = vdwg.mxu0
      %3427 = vrot.lane.b32.xlu0 %v1893, 32
      %v3428 = vpop.permute.xlu0 %3427
      %3429 = vrot.lane.b32.xlu0 %v1894, 32
      %v3430 = vpop.permute.xlu0 %3429
      %3431 = vrot.lane.b32.xlu0 %v1895, 32
      %v3432 = vpop.permute.xlu0 %3431
      %3433 = vrot.lane.b32.xlu0 %v1896, 32
      %v3434 = vpop.permute.xlu0 %3433
      %3435 = vrot.lane.b32.xlu0 %v1913, 32
      %v3436 = vpop.permute.xlu0 %3435
      %3437 = vrot.lane.b32.xlu0 %v1914, 32
      %v3438 = vpop.permute.xlu0 %3437
      %3439 = vrot.lane.b32.xlu0 %v1915, 32
      %v3440 = vpop.permute.xlu0 %3439
      %3441 = vrot.lane.b32.xlu0 %v1916, 32
      %v3442 = vpop.permute.xlu0 %3441
      %v3444 = vsel %vm1917, %v3428, 0
      %v3447 = vsel %vm1917, %v3430, 0
      %v3450 = vsel %vm1917, %v3432, 0
      %v3453 = vsel %vm1917, %v3434, 0
      %v3456 = vsel %vm1917, %v3436, 0
      %v3459 = vsel %vm1917, %v3438, 0
      %v3462 = vsel %vm1917, %v3440, 0
      %v3465 = vsel %vm1917, %v3442, 0
      %3467 = vmatpush.bf16.xpose.msra.mxu0 0
      %3468 = vmatpush.bf16.xpose.msra.mxu0 0
      %3469 = vmatpush.bf16.xpose.msra.mxu0 0
      %3470 = vmatpush.bf16.xpose.msra.mxu0 0
      %3471 = vmatpush.bf16.xpose.msra.mxu0 %v3465
      %3472 = vmatpush.bf16.xpose.msra.mxu0 %v3462
      %3473 = vmatpush.bf16.xpose.msra.mxu0 %v3459
      %3474 = vmatpush.bf16.xpose.msra.mxu0 %v3456
      %3475 = vmatmul.bf16.gmra.mxu0 %v3444
      %v3476 = vpop.f32.mrf.mxu0
      %v3477 = vadd.f32 0.0, %v3476
      %v3478 = vpop.f32.mrf.mxu0
      %v3479 = vadd.f32 0.0, %v3478
      %3480 = vmatmul.bf16.gmra.mxu0 %v3447
      %v3481 = vpop.f32.mrf.mxu0
      %v3482 = vadd.f32 0.0, %v3481
      %v3483 = vpop.f32.mrf.mxu0
      %v3484 = vadd.f32 0.0, %v3483
      %3485 = vmatmul.bf16.gmra.mxu0 %v3450
      %v3486 = vpop.f32.mrf.mxu0
      %v3487 = vadd.f32 0.0, %v3486
      %v3488 = vpop.f32.mrf.mxu0
      %v3489 = vadd.f32 0.0, %v3488
      %3490 = vmatmul.bf16.gmra.mxu0 %v3453
      %v3491 = vpop.f32.mrf.mxu0
      %v3492 = vadd.f32 0.0, %v3491
      %v3493 = vpop.f32.mrf.mxu0
      %v3494 = vadd.f32 0.0, %v3493
      %3495 = vdwg.mxu0
      %3496 = vrot.lane.b32.xlu0 %v1987, 32
      %v3497 = vpop.permute.xlu0 %3496
      %3498 = vrot.lane.b32.xlu0 %v1988, 32
      %v3499 = vpop.permute.xlu0 %3498
      %3500 = vrot.lane.b32.xlu0 %v1989, 32
      %v3501 = vpop.permute.xlu0 %3500
      %3502 = vrot.lane.b32.xlu0 %v1990, 32
      %v3503 = vpop.permute.xlu0 %3502
      %3504 = vrot.lane.b32.xlu0 %v2007, 32
      %v3505 = vpop.permute.xlu0 %3504
      %3506 = vrot.lane.b32.xlu0 %v2008, 32
      %v3507 = vpop.permute.xlu0 %3506
      %3508 = vrot.lane.b32.xlu0 %v2009, 32
      %v3509 = vpop.permute.xlu0 %3508
      %3510 = vrot.lane.b32.xlu0 %v2010, 32
      %v3511 = vpop.permute.xlu0 %3510
      %v3513 = vsel %vm1917, %v3497, 0
      %v3516 = vsel %vm1917, %v3499, 0
      %v3519 = vsel %vm1917, %v3501, 0
      %v3522 = vsel %vm1917, %v3503, 0
      %v3525 = vsel %vm1917, %v3505, 0
      %v3528 = vsel %vm1917, %v3507, 0
      %v3531 = vsel %vm1917, %v3509, 0
      %v3534 = vsel %vm1917, %v3511, 0
      %3536 = vmatpush.bf16.xpose.msra.mxu0 0
      %3537 = vmatpush.bf16.xpose.msra.mxu0 0
      %3538 = vmatpush.bf16.xpose.msra.mxu0 0
      %3539 = vmatpush.bf16.xpose.msra.mxu0 0
      %3540 = vmatpush.bf16.xpose.msra.mxu0 %v3534
      %3541 = vmatpush.bf16.xpose.msra.mxu0 %v3531
      %3542 = vmatpush.bf16.xpose.msra.mxu0 %v3528
      %3543 = vmatpush.bf16.xpose.msra.mxu0 %v3525
      %3544 = vmatmul.bf16.gmra.mxu0 %v3513
      %v3545 = vpop.f32.mrf.mxu0
      %v3546 = vadd.f32 0.0, %v3545
      %v3547 = vpop.f32.mrf.mxu0
      %v3548 = vadd.f32 0.0, %v3547
      %3549 = vmatmul.bf16.gmra.mxu0 %v3516
      %v3550 = vpop.f32.mrf.mxu0
      %v3551 = vadd.f32 0.0, %v3550
      %v3552 = vpop.f32.mrf.mxu0
      %v3553 = vadd.f32 0.0, %v3552
      %3554 = vmatmul.bf16.gmra.mxu0 %v3519
      %v3555 = vpop.f32.mrf.mxu0
      %v3556 = vadd.f32 0.0, %v3555
      %v3557 = vpop.f32.mrf.mxu0
      %v3558 = vadd.f32 0.0, %v3557
      %3559 = vmatmul.bf16.gmra.mxu0 %v3522
      %v3560 = vpop.f32.mrf.mxu0
      %v3561 = vadd.f32 0.0, %v3560
      %v3562 = vpop.f32.mrf.mxu0
      %v3563 = vadd.f32 0.0, %v3562
      %3564 = vdwg.mxu0
      %v3565 = vmul.f32 %v3477, 0.17677669
      %v3566 = vmul.f32 %v3479, 0.17677669
      %v3567 = vmul.f32 %v3482, 0.17677669
      %v3568 = vmul.f32 %v3484, 0.17677669
      %v3569 = vmul.f32 %v3487, 0.17677669
      %v3570 = vmul.f32 %v3489, 0.17677669
      %v3571 = vmul.f32 %v3492, 0.17677669
      %v3572 = vmul.f32 %v3494, 0.17677669
      %v3573 = vmul.f32 %v3546, 0.17677669
      %v3574 = vmul.f32 %v3548, 0.17677669
      %v3575 = vmul.f32 %v3551, 0.17677669
      %v3576 = vmul.f32 %v3553, 0.17677669
      %v3577 = vmul.f32 %v3556, 0.17677669
      %v3578 = vmul.f32 %v3558, 0.17677669
      %v3579 = vmul.f32 %v3561, 0.17677669
      %v3580 = vmul.f32 %v3563, 0.17677669
      %v3581 = vsel %vm2080, %v3565, -inf
      %3582 = vmax.xlane.f32.xlu0 %v3581
      %v3583 = vpop.xlane.xlu0 %3582
      %v3584 = vsel %vm2080, %v3566, -inf
      %3585 = vmax.xlane.f32.xlu0 %v3584
      %v3586 = vpop.xlane.xlu0 %3585
      %v3587 = vsel %vm2080, %v3567, -inf
      %3588 = vmax.xlane.f32.xlu0 %v3587
      %v3589 = vpop.xlane.xlu0 %3588
      %v3590 = vsel %vm2080, %v3568, -inf
      %3591 = vmax.xlane.f32.xlu0 %v3590
      %v3592 = vpop.xlane.xlu0 %3591
      %v3593 = vsel %vm2080, %v3569, -inf
      %3594 = vmax.xlane.f32.xlu0 %v3593
      %v3595 = vpop.xlane.xlu0 %3594
      %v3596 = vsel %vm2080, %v3570, -inf
      %3597 = vmax.xlane.f32.xlu0 %v3596
      %v3598 = vpop.xlane.xlu0 %3597
      %v3599 = vsel %vm2080, %v3571, -inf
      %3600 = vmax.xlane.f32.xlu0 %v3599
      %v3601 = vpop.xlane.xlu0 %3600
      %v3602 = vsel %vm2080, %v3572, -inf
      %3603 = vmax.xlane.f32.xlu0 %v3602
      %v3604 = vpop.xlane.xlu0 %3603
      %v3605 = vsel %vm2080, %v3573, -inf
      %3606 = vmax.xlane.f32.xlu0 %v3605
      %v3607 = vpop.xlane.xlu0 %3606
      %v3608 = vsel %vm2080, %v3574, -inf
      %3609 = vmax.xlane.f32.xlu0 %v3608
      %v3610 = vpop.xlane.xlu0 %3609
      %v3611 = vsel %vm2080, %v3575, -inf
      %3612 = vmax.xlane.f32.xlu0 %v3611
      %v3613 = vpop.xlane.xlu0 %3612
      %v3614 = vsel %vm2080, %v3576, -inf
      %3615 = vmax.xlane.f32.xlu0 %v3614
      %v3616 = vpop.xlane.xlu0 %3615
      %v3617 = vsel %vm2080, %v3577, -inf
      %3618 = vmax.xlane.f32.xlu0 %v3617
      %v3619 = vpop.xlane.xlu0 %3618
      %v3620 = vsel %vm2080, %v3578, -inf
      %3621 = vmax.xlane.f32.xlu0 %v3620
      %v3622 = vpop.xlane.xlu0 %3621
      %v3623 = vsel %vm2080, %v3579, -inf
      %3624 = vmax.xlane.f32.xlu0 %v3623
      %v3625 = vpop.xlane.xlu0 %3624
      %v3626 = vsel %vm2080, %v3580, -inf
      %3627 = vmax.xlane.f32.xlu0 %v3626
      %v3628 = vpop.xlane.xlu0 %3627
      %v3629 = vsub.f32 %v3565, %v3583
      %v3630 = vsub.f32 %v3566, %v3586
      %v3631 = vsub.f32 %v3567, %v3589
      %v3632 = vsub.f32 %v3568, %v3592
      %v3633 = vsub.f32 %v3569, %v3595
      %v3634 = vsub.f32 %v3570, %v3598
      %v3635 = vsub.f32 %v3571, %v3601
      %v3636 = vsub.f32 %v3572, %v3604
      %v3637 = vsub.f32 %v3573, %v3607
      %v3638 = vsub.f32 %v3574, %v3610
      %v3639 = vsub.f32 %v3575, %v3613
      %v3640 = vsub.f32 %v3576, %v3616
      %v3641 = vsub.f32 %v3577, %v3619
      %v3642 = vsub.f32 %v3578, %v3622
      %v3643 = vsub.f32 %v3579, %v3625
      %v3644 = vsub.f32 %v3580, %v3628
      %v3645 = vmul.f32 %v3629, 1.442695
      %v3646 = vpow.pop %v3645
      %v3647 = vmul.f32 %v3630, 1.442695
      %v3648 = vpow.pop %v3647
      %v3649 = vmul.f32 %v3631, 1.442695
      %v3650 = vpow.pop %v3649
      %v3651 = vmul.f32 %v3632, 1.442695
      %v3652 = vpow.pop %v3651
      %v3653 = vmul.f32 %v3633, 1.442695
      %v3654 = vpow.pop %v3653
      %v3655 = vmul.f32 %v3634, 1.442695
      %v3656 = vpow.pop %v3655
      %v3657 = vmul.f32 %v3635, 1.442695
      %v3658 = vpow.pop %v3657
      %v3659 = vmul.f32 %v3636, 1.442695
      %v3660 = vpow.pop %v3659
      %v3661 = vmul.f32 %v3637, 1.442695
      %v3662 = vpow.pop %v3661
      %v3663 = vmul.f32 %v3638, 1.442695
      %v3664 = vpow.pop %v3663
      %v3665 = vmul.f32 %v3639, 1.442695
      %v3666 = vpow.pop %v3665
      %v3667 = vmul.f32 %v3640, 1.442695
      %v3668 = vpow.pop %v3667
      %v3669 = vmul.f32 %v3641, 1.442695
      %v3670 = vpow.pop %v3669
      %v3671 = vmul.f32 %v3642, 1.442695
      %v3672 = vpow.pop %v3671
      %v3673 = vmul.f32 %v3643, 1.442695
      %v3674 = vpow.pop %v3673
      %v3675 = vmul.f32 %v3644, 1.442695
      %v3676 = vpow.pop %v3675
      %v3677 = vsel %vm2080, %v3646, 0.0
      %3678 = vadd.xlane.f32.xlu0 %v3677
      %v3679 = vpop.xlane.xlu0 %3678
      %v3680 = vsel %vm2080, %v3648, 0.0
      %3681 = vadd.xlane.f32.xlu0 %v3680
      %v3682 = vpop.xlane.xlu0 %3681
      %v3683 = vsel %vm2080, %v3650, 0.0
      %3684 = vadd.xlane.f32.xlu0 %v3683
      %v3685 = vpop.xlane.xlu0 %3684
      %v3686 = vsel %vm2080, %v3652, 0.0
      %3687 = vadd.xlane.f32.xlu0 %v3686
      %v3688 = vpop.xlane.xlu0 %3687
      %v3689 = vsel %vm2080, %v3654, 0.0
      %3690 = vadd.xlane.f32.xlu0 %v3689
      %v3691 = vpop.xlane.xlu0 %3690
      %v3692 = vsel %vm2080, %v3656, 0.0
      %3693 = vadd.xlane.f32.xlu0 %v3692
      %v3694 = vpop.xlane.xlu0 %3693
      %v3695 = vsel %vm2080, %v3658, 0.0
      %3696 = vadd.xlane.f32.xlu0 %v3695
      %v3697 = vpop.xlane.xlu0 %3696
      %v3698 = vsel %vm2080, %v3660, 0.0
      %3699 = vadd.xlane.f32.xlu0 %v3698
      %v3700 = vpop.xlane.xlu0 %3699
      %v3701 = vsel %vm2080, %v3662, 0.0
      %3702 = vadd.xlane.f32.xlu0 %v3701
      %v3703 = vpop.xlane.xlu0 %3702
      %v3704 = vsel %vm2080, %v3664, 0.0
      %3705 = vadd.xlane.f32.xlu0 %v3704
      %v3706 = vpop.xlane.xlu0 %3705
      %v3707 = vsel %vm2080, %v3666, 0.0
      %3708 = vadd.xlane.f32.xlu0 %v3707
      %v3709 = vpop.xlane.xlu0 %3708
      %v3710 = vsel %vm2080, %v3668, 0.0
      %3711 = vadd.xlane.f32.xlu0 %v3710
      %v3712 = vpop.xlane.xlu0 %3711
      %v3713 = vsel %vm2080, %v3670, 0.0
      %3714 = vadd.xlane.f32.xlu0 %v3713
      %v3715 = vpop.xlane.xlu0 %3714
      %v3716 = vsel %vm2080, %v3672, 0.0
      %3717 = vadd.xlane.f32.xlu0 %v3716
      %v3718 = vpop.xlane.xlu0 %3717
      %v3719 = vsel %vm2080, %v3674, 0.0
      %3720 = vadd.xlane.f32.xlu0 %v3719
      %v3721 = vpop.xlane.xlu0 %3720
      %v3722 = vsel %vm2080, %v3676, 0.0
      %3723 = vadd.xlane.f32.xlu0 %v3722
      %v3724 = vpop.xlane.xlu0 %3723
      %v3725 = vrcp.pop %v3679
      %v3726 = vrcp.pop %v3682
      %v3727 = vrcp.pop %v3685
      %v3728 = vrcp.pop %v3688
      %v3729 = vrcp.pop %v3691
      %v3730 = vrcp.pop %v3694
      %v3731 = vrcp.pop %v3697
      %v3732 = vrcp.pop %v3700
      %v3733 = vrcp.pop %v3703
      %v3734 = vrcp.pop %v3706
      %v3735 = vrcp.pop %v3709
      %v3736 = vrcp.pop %v3712
      %v3737 = vrcp.pop %v3715
      %v3738 = vrcp.pop %v3718
      %v3739 = vrcp.pop %v3721
      %v3740 = vrcp.pop %v3724
      %v3741 = vmul.f32 %v3646, %v3725
      %v3742 = vmul.f32 %v3648, %v3726
      %v3743 = vmul.f32 %v3650, %v3727
      %v3744 = vmul.f32 %v3652, %v3728
      %v3745 = vmul.f32 %v3654, %v3729
      %v3746 = vmul.f32 %v3656, %v3730
      %v3747 = vmul.f32 %v3658, %v3731
      %v3748 = vmul.f32 %v3660, %v3732
      %v3749 = vmul.f32 %v3662, %v3733
      %v3750 = vmul.f32 %v3664, %v3734
      %v3751 = vmul.f32 %v3666, %v3735
      %v3752 = vmul.f32 %v3668, %v3736
      %v3753 = vmul.f32 %v3670, %v3737
      %v3754 = vmul.f32 %v3672, %v3738
      %v3755 = vmul.f32 %v3674, %v3739
      %v3756 = vmul.f32 %v3676, %v3740
      %v3757 = vpack.c.bf16 %v3741, %v3741
      %v3758 = vpack.c.bf16 %v3742, %v3742
      %v3759 = vpack.c.bf16 %v3743, %v3743
      %v3760 = vpack.c.bf16 %v3744, %v3744
      %v3761 = vpack.c.bf16 %v3745, %v3745
      %v3762 = vpack.c.bf16 %v3746, %v3746
      %v3763 = vpack.c.bf16 %v3747, %v3747
      %v3764 = vpack.c.bf16 %v3748, %v3748
      %v3765 = vpack.c.bf16 %v3749, %v3749
      %v3766 = vpack.c.bf16 %v3750, %v3750
      %v3767 = vpack.c.bf16 %v3751, %v3751
      %v3768 = vpack.c.bf16 %v3752, %v3752
      %v3769 = vpack.c.bf16 %v3753, %v3753
      %v3770 = vpack.c.bf16 %v3754, %v3754
      %v3771 = vpack.c.bf16 %v3755, %v3755
      %v3772 = vpack.c.bf16 %v3756, %v3756
      %v3781 = vunpack.c.l.b16 %v3757
      %v3782 = vunpack.c.l.b16 %v3758
      %v3783 = vunpack.c.l.b16 %v3759
      %v3784 = vunpack.c.l.b16 %v3760
      %v3785 = vunpack.c.l.b16 %v3761
      %v3786 = vunpack.c.l.b16 %v3762
      %v3787 = vunpack.c.l.b16 %v3763
      %v3788 = vunpack.c.l.b16 %v3764
      %v3789 = vpack.c.b16 %v3782, %v3781
      %v3790 = vpack.c.b16 %v3784, %v3783
      %v3791 = vpack.c.b16 %v3786, %v3785
      %v3792 = vpack.c.b16 %v3788, %v3787
      %3793 = vrot.lane.b32.xlu0 %v2309, 32
      %v3794 = vpop.permute.xlu0 %3793
      %3795 = vrot.lane.b32.xlu0 %v2310, 32
      %v3796 = vpop.permute.xlu0 %3795
      %3797 = vrot.lane.b32.xlu0 %v2311, 32
      %v3798 = vpop.permute.xlu0 %3797
      %3799 = vrot.lane.b32.xlu0 %v2312, 32
      %v3800 = vpop.permute.xlu0 %3799
      %v3806 = vsel %vm2080, %v3789, 0
      %v3809 = vsel %vm2080, %v3790, 0
      %v3812 = vsel %vm2080, %v3791, 0
      %v3815 = vsel %vm2080, %v3792, 0
      %3817 = vmatpush.bf16.msra.mxu0 0
      %3818 = vmatpush.bf16.msra.mxu0 0
      %3819 = vmatpush.bf16.msra.mxu0 0
      %3820 = vmatpush.bf16.msra.mxu0 0
      %3821 = vmatpush.bf16.msra.mxu0 %v3800
      %3822 = vmatpush.bf16.msra.mxu0 %v3798
      %3823 = vmatpush.bf16.msra.mxu0 %v3796
      %3824 = vmatpush.bf16.msra.mxu0 %v3794
      %3825 = vmatmul.bf16.gmra.mxu0 %v3806
      %v3826 = vpop.f32.mrf.mxu0
      %v3827 = vadd.f32 0.0, %v3826
      %v3828 = vpop.f32.mrf.mxu0
      %v3829 = vadd.f32 0.0, %v3828
      %3830 = vmatmul.bf16.gmra.mxu0 %v3809
      %v3831 = vpop.f32.mrf.mxu0
      %v3832 = vadd.f32 0.0, %v3831
      %v3833 = vpop.f32.mrf.mxu0
      %v3834 = vadd.f32 0.0, %v3833
      %3835 = vmatmul.bf16.gmra.mxu0 %v3812
      %v3836 = vpop.f32.mrf.mxu0
      %v3837 = vadd.f32 0.0, %v3836
      %v3838 = vpop.f32.mrf.mxu0
      %v3839 = vadd.f32 0.0, %v3838
      %3840 = vmatmul.bf16.gmra.mxu0 %v3815
      %v3841 = vpop.f32.mrf.mxu0
      %v3842 = vadd.f32 0.0, %v3841
      %v3843 = vpop.f32.mrf.mxu0
      %v3844 = vadd.f32 0.0, %v3843
      %3845 = vdwg.mxu0
      %v3854 = vunpack.c.l.b16 %v3765
      %v3855 = vunpack.c.l.b16 %v3766
      %v3856 = vunpack.c.l.b16 %v3767
      %v3857 = vunpack.c.l.b16 %v3768
      %v3858 = vunpack.c.l.b16 %v3769
      %v3859 = vunpack.c.l.b16 %v3770
      %v3860 = vunpack.c.l.b16 %v3771
      %v3861 = vunpack.c.l.b16 %v3772
      %v3862 = vpack.c.b16 %v3855, %v3854
      %v3863 = vpack.c.b16 %v3857, %v3856
      %v3864 = vpack.c.b16 %v3859, %v3858
      %v3865 = vpack.c.b16 %v3861, %v3860
      %3866 = vrot.lane.b32.xlu0 %v2394, 32
      %v3867 = vpop.permute.xlu0 %3866
      %3868 = vrot.lane.b32.xlu0 %v2395, 32
      %v3869 = vpop.permute.xlu0 %3868
      %3870 = vrot.lane.b32.xlu0 %v2396, 32
      %v3871 = vpop.permute.xlu0 %3870
      %3872 = vrot.lane.b32.xlu0 %v2397, 32
      %v3873 = vpop.permute.xlu0 %3872
      %v3879 = vsel %vm2080, %v3862, 0
      %v3882 = vsel %vm2080, %v3863, 0
      %v3885 = vsel %vm2080, %v3864, 0
      %v3888 = vsel %vm2080, %v3865, 0
      %3890 = vmatpush.bf16.msra.mxu0 0
      %3891 = vmatpush.bf16.msra.mxu0 0
      %3892 = vmatpush.bf16.msra.mxu0 0
      %3893 = vmatpush.bf16.msra.mxu0 0
      %3894 = vmatpush.bf16.msra.mxu0 %v3873
      %3895 = vmatpush.bf16.msra.mxu0 %v3871
      %3896 = vmatpush.bf16.msra.mxu0 %v3869
      %3897 = vmatpush.bf16.msra.mxu0 %v3867
      %3898 = vmatmul.bf16.gmra.mxu0 %v3879
      %v3899 = vpop.f32.mrf.mxu0
      %v3900 = vadd.f32 0.0, %v3899
      %v3901 = vpop.f32.mrf.mxu0
      %v3902 = vadd.f32 0.0, %v3901
      %3903 = vmatmul.bf16.gmra.mxu0 %v3882
      %v3904 = vpop.f32.mrf.mxu0
      %v3905 = vadd.f32 0.0, %v3904
      %v3906 = vpop.f32.mrf.mxu0
      %v3907 = vadd.f32 0.0, %v3906
      %3908 = vmatmul.bf16.gmra.mxu0 %v3885
      %v3909 = vpop.f32.mrf.mxu0
      %v3910 = vadd.f32 0.0, %v3909
      %v3911 = vpop.f32.mrf.mxu0
      %v3912 = vadd.f32 0.0, %v3911
      %3913 = vmatmul.bf16.gmra.mxu0 %v3888
      %v3914 = vpop.f32.mrf.mxu0
      %v3915 = vadd.f32 0.0, %v3914
      %v3916 = vpop.f32.mrf.mxu0
      %v3917 = vadd.f32 0.0, %v3916
      %3918 = vdwg.mxu0
      %3935 = vrot.lane.b32.xlu0 %v2843, 32
      %v3936 = vpop.permute.xlu0 %3935
      %3937 = vrot.lane.b32.xlu0 %v2845, 32
      %v3938 = vpop.permute.xlu0 %3937
      %3939 = vrot.lane.b32.xlu0 %v2848, 32
      %v3940 = vpop.permute.xlu0 %3939
      %3941 = vrot.lane.b32.xlu0 %v2850, 32
      %v3942 = vpop.permute.xlu0 %3941
      %3943 = vrot.lane.b32.xlu0 %v2853, 32
      %v3944 = vpop.permute.xlu0 %3943
      %3945 = vrot.lane.b32.xlu0 %v2855, 32
      %v3946 = vpop.permute.xlu0 %3945
      %3947 = vrot.lane.b32.xlu0 %v2858, 32
      %v3948 = vpop.permute.xlu0 %3947
      %3949 = vrot.lane.b32.xlu0 %v2860, 32
      %v3950 = vpop.permute.xlu0 %3949
      %3951 = vrot.lane.b32.xlu0 %v2916, 32
      %v3952 = vpop.permute.xlu0 %3951
      %3953 = vrot.lane.b32.xlu0 %v2918, 32
      %v3954 = vpop.permute.xlu0 %3953
      %3955 = vrot.lane.b32.xlu0 %v2921, 32
      %v3956 = vpop.permute.xlu0 %3955
      %3957 = vrot.lane.b32.xlu0 %v2923, 32
      %v3958 = vpop.permute.xlu0 %3957
      %3959 = vrot.lane.b32.xlu0 %v2926, 32
      %v3960 = vpop.permute.xlu0 %3959
      %3961 = vrot.lane.b32.xlu0 %v2928, 32
      %v3962 = vpop.permute.xlu0 %3961
      %3963 = vrot.lane.b32.xlu0 %v2931, 32
      %v3964 = vpop.permute.xlu0 %3963
      %3965 = vrot.lane.b32.xlu0 %v2933, 32
      %v3966 = vpop.permute.xlu0 %3965
      %3999 = vrot.lane.b32.xlu0 %v3335, 64
      %v4000 = vpop.permute.xlu0 %3999
      %4001 = vrot.lane.b32.xlu0 %v3337, 64
      %v4002 = vpop.permute.xlu0 %4001
      %4003 = vrot.lane.b32.xlu0 %v3340, 64
      %v4004 = vpop.permute.xlu0 %4003
      %4005 = vrot.lane.b32.xlu0 %v3342, 64
      %v4006 = vpop.permute.xlu0 %4005
      %4007 = vrot.lane.b32.xlu0 %v3345, 64
      %v4008 = vpop.permute.xlu0 %4007
      %4009 = vrot.lane.b32.xlu0 %v3347, 64
      %v4010 = vpop.permute.xlu0 %4009
      %4011 = vrot.lane.b32.xlu0 %v3350, 64
      %v4012 = vpop.permute.xlu0 %4011
      %4013 = vrot.lane.b32.xlu0 %v3352, 64
      %v4014 = vpop.permute.xlu0 %4013
      %4015 = vrot.lane.b32.xlu0 %v3408, 64
      %v4016 = vpop.permute.xlu0 %4015
      %4017 = vrot.lane.b32.xlu0 %v3410, 64
      %v4018 = vpop.permute.xlu0 %4017
      %4019 = vrot.lane.b32.xlu0 %v3413, 64
      %v4020 = vpop.permute.xlu0 %4019
      %4021 = vrot.lane.b32.xlu0 %v3415, 64
      %v4022 = vpop.permute.xlu0 %4021
      %4023 = vrot.lane.b32.xlu0 %v3418, 64
      %v4024 = vpop.permute.xlu0 %4023
      %4025 = vrot.lane.b32.xlu0 %v3420, 64
      %v4026 = vpop.permute.xlu0 %4025
      %4027 = vrot.lane.b32.xlu0 %v3423, 64
      %v4028 = vpop.permute.xlu0 %4027
      %4029 = vrot.lane.b32.xlu0 %v3425, 64
      %v4030 = vpop.permute.xlu0 %4029
      %4063 = vrot.lane.b32.xlu0 %v3827, 96
      %v4064 = vpop.permute.xlu0 %4063
      %4065 = vrot.lane.b32.xlu0 %v3829, 96
      %v4066 = vpop.permute.xlu0 %4065
      %4067 = vrot.lane.b32.xlu0 %v3832, 96
      %v4068 = vpop.permute.xlu0 %4067
      %4069 = vrot.lane.b32.xlu0 %v3834, 96
      %v4070 = vpop.permute.xlu0 %4069
      %4071 = vrot.lane.b32.xlu0 %v3837, 96
      %v4072 = vpop.permute.xlu0 %4071
      %4073 = vrot.lane.b32.xlu0 %v3839, 96
      %v4074 = vpop.permute.xlu0 %4073
      %4075 = vrot.lane.b32.xlu0 %v3842, 96
      %v4076 = vpop.permute.xlu0 %4075
      %4077 = vrot.lane.b32.xlu0 %v3844, 96
      %v4078 = vpop.permute.xlu0 %4077
      %4079 = vrot.lane.b32.xlu0 %v3900, 96
      %v4080 = vpop.permute.xlu0 %4079
      %4081 = vrot.lane.b32.xlu0 %v3902, 96
      %v4082 = vpop.permute.xlu0 %4081
      %4083 = vrot.lane.b32.xlu0 %v3905, 96
      %v4084 = vpop.permute.xlu0 %4083
      %4085 = vrot.lane.b32.xlu0 %v3907, 96
      %v4086 = vpop.permute.xlu0 %4085
      %4087 = vrot.lane.b32.xlu0 %v3910, 96
      %v4088 = vpop.permute.xlu0 %4087
      %4089 = vrot.lane.b32.xlu0 %v3912, 96
      %v4090 = vpop.permute.xlu0 %4089
      %4091 = vrot.lane.b32.xlu0 %v3915, 96
      %v4092 = vpop.permute.xlu0 %4091
      %4093 = vrot.lane.b32.xlu0 %v3917, 96
      %v4094 = vpop.permute.xlu0 %4093
      %v4111 = vsel %vm1917, %v2339, %v3936
      %v4112 = vsel %vm1917, %v2341, %v3938
      %v4113 = vsel %vm1917, %v2344, %v3940
      %v4114 = vsel %vm1917, %v2346, %v3942
      %v4115 = vsel %vm1917, %v2349, %v3944
      %v4116 = vsel %vm1917, %v2351, %v3946
      %v4117 = vsel %vm1917, %v2354, %v3948
      %v4118 = vsel %vm1917, %v2356, %v3950
      %v4119 = vsel %vm1917, %v2424, %v3952
      %v4120 = vsel %vm1917, %v2426, %v3954
      %v4121 = vsel %vm1917, %v2429, %v3956
      %v4122 = vsel %vm1917, %v2431, %v3958
      %v4123 = vsel %vm1917, %v2434, %v3960
      %v4124 = vsel %vm1917, %v2436, %v3962
      %v4125 = vsel %vm1917, %v2439, %v3964
      %v4126 = vsel %vm1917, %v2441, %v3966
      %v4127 = vsel %vm2080, %v4111, %v4000
      %v4128 = vsel %vm2080, %v4112, %v4002
      %v4129 = vsel %vm2080, %v4113, %v4004
      %v4130 = vsel %vm2080, %v4114, %v4006
      %v4131 = vsel %vm2080, %v4115, %v4008
      %v4132 = vsel %vm2080, %v4116, %v4010
      %v4133 = vsel %vm2080, %v4117, %v4012
      %v4134 = vsel %vm2080, %v4118, %v4014
      %v4135 = vsel %vm2080, %v4119, %v4016
      %v4136 = vsel %vm2080, %v4120, %v4018
      %v4137 = vsel %vm2080, %v4121, %v4020
      %v4138 = vsel %vm2080, %v4122, %v4022
      %v4139 = vsel %vm2080, %v4123, %v4024
      %v4140 = vsel %vm2080, %v4124, %v4026
      %v4141 = vsel %vm2080, %v4125, %v4028
      %v4142 = vsel %vm2080, %v4126, %v4030
      %vm4143 = vcmask 785408
      %v4144 = vsel %vm4143, %v4127, %v4064
      %v4145 = vsel %vm4143, %v4128, %v4066
      %v4146 = vsel %vm4143, %v4129, %v4068
      %v4147 = vsel %vm4143, %v4130, %v4070
      %v4148 = vsel %vm4143, %v4131, %v4072
      %v4149 = vsel %vm4143, %v4132, %v4074
      %v4150 = vsel %vm4143, %v4133, %v4076
      %v4151 = vsel %vm4143, %v4134, %v4078
      %v4152 = vsel %vm4143, %v4135, %v4080
      %v4153 = vsel %vm4143, %v4136, %v4082
      %v4154 = vsel %vm4143, %v4137, %v4084
      %v4155 = vsel %vm4143, %v4138, %v4086
      %v4156 = vsel %vm4143, %v4139, %v4088
      %v4157 = vsel %vm4143, %v4140, %v4090
      %v4158 = vsel %vm4143, %v4141, %v4092
      %v4159 = vsel %vm4143, %v4142, %v4094
      %v4160 = vpack.c.bf16 %v4145, %v4144
      %v4161 = vpack.c.bf16 %v4147, %v4146
      %v4162 = vpack.c.bf16 %v4149, %v4148
      %v4163 = vpack.c.bf16 %v4151, %v4150
      %v4164 = vpack.c.bf16 %v4153, %v4152
      %v4165 = vpack.c.bf16 %v4155, %v4154
      %v4166 = vpack.c.bf16 %v4157, %v4156
      %v4167 = vpack.c.bf16 %v4159, %v4158
      %v4168 = vld [vmem:[%s645] sm:$0xf]
      %v4169 = vld [vmem:[%s645 + $0x4] sm:$0xf]
      %v4170 = vld [vmem:[%s645 + $0x8] sm:$0xf]
      %v4171 = vld [vmem:[%s645 + $0xc] sm:$0xf]
      %v4172 = vld [vmem:[%s645 + $0x10] sm:$0xf]
      %v4173 = vld [vmem:[%s645 + $0x14] sm:$0xf]
      %v4174 = vld [vmem:[%s645 + $0x18] sm:$0xf]
      %v4175 = vld [vmem:[%s645 + $0x1c] sm:$0xf]
      %v4176 = vld [vmem:[%s645 + $0x20] sm:$0xf]
      %v4177 = vld [vmem:[%s645 + $0x24] sm:$0xf]
      %v4178 = vld [vmem:[%s645 + $0x28] sm:$0xf]
      %v4179 = vld [vmem:[%s645 + $0x2c] sm:$0xf]
      %v4180 = vld [vmem:[%s645 + $0x30] sm:$0xf]
      %v4181 = vld [vmem:[%s645 + $0x34] sm:$0xf]
      %v4182 = vld [vmem:[%s645 + $0x38] sm:$0xf]
      %v4183 = vld [vmem:[%s645 + $0x3c] sm:$0xf]
      %v4184 = vld [vmem:[%s648] sm:$0x1]
      %v4186 = vperm.slane %v4184, 0
      %v4204 = vunpack.c.l.b16 %v4168
      %v4205 = vunpack.c.l.b16 %v4169
      %v4206 = vunpack.c.l.b16 %v4170
      %v4207 = vunpack.c.l.b16 %v4171
      %v4208 = vunpack.c.l.b16 %v4172
      %v4209 = vunpack.c.l.b16 %v4173
      %v4210 = vunpack.c.l.b16 %v4174
      %v4211 = vunpack.c.l.b16 %v4175
      %v4212 = vunpack.c.l.b16 %v4176
      %v4213 = vunpack.c.l.b16 %v4177
      %v4214 = vunpack.c.l.b16 %v4178
      %v4215 = vunpack.c.l.b16 %v4179
      %v4216 = vunpack.c.l.b16 %v4180
      %v4217 = vunpack.c.l.b16 %v4181
      %v4218 = vunpack.c.l.b16 %v4182
      %v4219 = vunpack.c.l.b16 %v4183
      %v4220 = vpack.c.b16 %v4205, %v4204
      %v4221 = vpack.c.b16 %v4207, %v4206
      %v4222 = vpack.c.b16 %v4209, %v4208
      %v4223 = vpack.c.b16 %v4211, %v4210
      %v4224 = vpack.c.b16 %v4213, %v4212
      %v4225 = vpack.c.b16 %v4215, %v4214
      %v4226 = vpack.c.b16 %v4217, %v4216
      %v4227 = vpack.c.b16 %v4219, %v4218
      %4236 = vmatpush.bf16.msra.mxu0 %v4227
      %4237 = vmatpush.bf16.msra.mxu0 %v4226
      %4238 = vmatpush.bf16.msra.mxu0 %v4225
      %4239 = vmatpush.bf16.msra.mxu0 %v4224
      %4240 = vmatpush.bf16.msra.mxu0 %v4223
      %4241 = vmatpush.bf16.msra.mxu0 %v4222
      %4242 = vmatpush.bf16.msra.mxu0 %v4221
      %4243 = vmatpush.bf16.msra.mxu0 %v4220
      %4244 = vmatmul.bf16.gmra.mxu0 %v4160
      %v4245 = vpop.f32.mrf.mxu0
      %v4246 = vadd.f32 %v4186, %v4245
      %v4247 = vpop.f32.mrf.mxu0
      %v4248 = vadd.f32 %v4186, %v4247
      %4249 = vmatmul.bf16.gmra.mxu0 %v4161
      %v4250 = vpop.f32.mrf.mxu0
      %v4251 = vadd.f32 %v4186, %v4250
      %v4252 = vpop.f32.mrf.mxu0
      %v4253 = vadd.f32 %v4186, %v4252
      %4254 = vmatmul.bf16.gmra.mxu0 %v4162
      %v4255 = vpop.f32.mrf.mxu0
      %v4256 = vadd.f32 %v4186, %v4255
      %v4257 = vpop.f32.mrf.mxu0
      %v4258 = vadd.f32 %v4186, %v4257
      %4259 = vmatmul.bf16.gmra.mxu0 %v4163
      %v4260 = vpop.f32.mrf.mxu0
      %v4261 = vadd.f32 %v4186, %v4260
      %v4262 = vpop.f32.mrf.mxu0
      %v4263 = vadd.f32 %v4186, %v4262
      %4264 = vmatmul.bf16.gmra.mxu0 %v4164
      %v4265 = vpop.f32.mrf.mxu0
      %v4266 = vadd.f32 %v4186, %v4265
      %v4267 = vpop.f32.mrf.mxu0
      %v4268 = vadd.f32 %v4186, %v4267
      %4269 = vmatmul.bf16.gmra.mxu0 %v4165
      %v4270 = vpop.f32.mrf.mxu0
      %v4271 = vadd.f32 %v4186, %v4270
      %v4272 = vpop.f32.mrf.mxu0
      %v4273 = vadd.f32 %v4186, %v4272
      %4274 = vmatmul.bf16.gmra.mxu0 %v4166
      %v4275 = vpop.f32.mrf.mxu0
      %v4276 = vadd.f32 %v4186, %v4275
      %v4277 = vpop.f32.mrf.mxu0
      %v4278 = vadd.f32 %v4186, %v4277
      %4279 = vmatmul.bf16.gmra.mxu0 %v4167
      %v4280 = vpop.f32.mrf.mxu0
      %v4281 = vadd.f32 %v4186, %v4280
      %v4282 = vpop.f32.mrf.mxu0
      %v4283 = vadd.f32 %v4186, %v4282
      %4284 = vdwg.mxu0
      %v4285 = vperm.slane %v1079, 0
      %v4286 = vperm.slane %v1127, 0
      %v4289 = vmul.f32 %v4285, %v4246
      %v4290 = vmul.f32 %v4285, %v4248
      %v4291 = vmul.f32 %v4285, %v4251
      %v4292 = vmul.f32 %v4285, %v4253
      %v4293 = vmul.f32 %v4285, %v4256
      %v4294 = vmul.f32 %v4285, %v4258
      %v4295 = vmul.f32 %v4285, %v4261
      %v4296 = vmul.f32 %v4285, %v4263
      %v4297 = vmul.f32 %v4286, %v4266
      %v4298 = vmul.f32 %v4286, %v4268
      %v4299 = vmul.f32 %v4286, %v4271
      %v4300 = vmul.f32 %v4286, %v4273
      %v4301 = vmul.f32 %v4286, %v4276
      %v4302 = vmul.f32 %v4286, %v4278
      %v4303 = vmul.f32 %v4286, %v4281
      %v4304 = vmul.f32 %v4286, %v4283
      %v4305 = vadd.f32 %v703, %v4289
      %v4306 = vadd.f32 %v704, %v4290
      %v4307 = vadd.f32 %v705, %v4291
      %v4308 = vadd.f32 %v706, %v4292
      %v4309 = vadd.f32 %v707, %v4293
      %v4310 = vadd.f32 %v708, %v4294
      %v4311 = vadd.f32 %v709, %v4295
      %v4312 = vadd.f32 %v710, %v4296
      %v4313 = vadd.f32 %v711, %v4297
      %v4314 = vadd.f32 %v712, %v4298
      %v4315 = vadd.f32 %v713, %v4299
      %v4316 = vadd.f32 %v714, %v4300
      %v4317 = vadd.f32 %v715, %v4301
      %v4318 = vadd.f32 %v716, %v4302
      %v4319 = vadd.f32 %v717, %v4303
      %v4320 = vadd.f32 %v718, %v4304
      %4321 = vadd.xlane.f32.xlu0 %v4305
      %v4322 = vpop.xlane.xlu0 %4321
      %4323 = vadd.xlane.f32.xlu0 %v4306
      %v4324 = vpop.xlane.xlu0 %4323
      %4325 = vadd.xlane.f32.xlu0 %v4307
      %v4326 = vpop.xlane.xlu0 %4325
      %4327 = vadd.xlane.f32.xlu0 %v4308
      %v4328 = vpop.xlane.xlu0 %4327
      %4329 = vadd.xlane.f32.xlu0 %v4309
      %v4330 = vpop.xlane.xlu0 %4329
      %4331 = vadd.xlane.f32.xlu0 %v4310
      %v4332 = vpop.xlane.xlu0 %4331
      %4333 = vadd.xlane.f32.xlu0 %v4311
      %v4334 = vpop.xlane.xlu0 %4333
      %4335 = vadd.xlane.f32.xlu0 %v4312
      %v4336 = vpop.xlane.xlu0 %4335
      %4337 = vadd.xlane.f32.xlu0 %v4313
      %v4338 = vpop.xlane.xlu0 %4337
      %4339 = vadd.xlane.f32.xlu0 %v4314
      %v4340 = vpop.xlane.xlu0 %4339
      %4341 = vadd.xlane.f32.xlu0 %v4315
      %v4342 = vpop.xlane.xlu0 %4341
      %4343 = vadd.xlane.f32.xlu0 %v4316
      %v4344 = vpop.xlane.xlu0 %4343
      %4345 = vadd.xlane.f32.xlu0 %v4317
      %v4346 = vpop.xlane.xlu0 %4345
      %4347 = vadd.xlane.f32.xlu0 %v4318
      %v4348 = vpop.xlane.xlu0 %4347
      %4349 = vadd.xlane.f32.xlu0 %v4319
      %v4350 = vpop.xlane.xlu0 %4349
      %4351 = vadd.xlane.f32.xlu0 %v4320
      %v4352 = vpop.xlane.xlu0 %4351
      %v4353 = vmul.f32 %v4322, %v1173
      %v4354 = vmul.f32 %v4324, %v1173
      %v4355 = vmul.f32 %v4326, %v1173
      %v4356 = vmul.f32 %v4328, %v1173
      %v4357 = vmul.f32 %v4330, %v1173
      %v4358 = vmul.f32 %v4332, %v1173
      %v4359 = vmul.f32 %v4334, %v1173
      %v4360 = vmul.f32 %v4336, %v1173
      %v4361 = vmul.f32 %v4338, %v1173
      %v4362 = vmul.f32 %v4340, %v1173
      %v4363 = vmul.f32 %v4342, %v1173
      %v4364 = vmul.f32 %v4344, %v1173
      %v4365 = vmul.f32 %v4346, %v1173
      %v4366 = vmul.f32 %v4348, %v1173
      %v4367 = vmul.f32 %v4350, %v1173
      %v4368 = vmul.f32 %v4352, %v1173
      %v4369 = vsub.f32 %v4305, %v4353
      %v4370 = vsub.f32 %v4306, %v4354
      %v4371 = vsub.f32 %v4307, %v4355
      %v4372 = vsub.f32 %v4308, %v4356
      %v4373 = vsub.f32 %v4309, %v4357
      %v4374 = vsub.f32 %v4310, %v4358
      %v4375 = vsub.f32 %v4311, %v4359
      %v4376 = vsub.f32 %v4312, %v4360
      %v4377 = vsub.f32 %v4313, %v4361
      %v4378 = vsub.f32 %v4314, %v4362
      %v4379 = vsub.f32 %v4315, %v4363
      %v4380 = vsub.f32 %v4316, %v4364
      %v4381 = vsub.f32 %v4317, %v4365
      %v4382 = vsub.f32 %v4318, %v4366
      %v4383 = vsub.f32 %v4319, %v4367
      %v4384 = vsub.f32 %v4320, %v4368
      %v4385 = vmul.f32 %v4369, %v4369
      %v4386 = vmul.f32 %v4370, %v4370
      %v4387 = vmul.f32 %v4371, %v4371
      %v4388 = vmul.f32 %v4372, %v4372
      %v4389 = vmul.f32 %v4373, %v4373
      %v4390 = vmul.f32 %v4374, %v4374
      %v4391 = vmul.f32 %v4375, %v4375
      %v4392 = vmul.f32 %v4376, %v4376
      %v4393 = vmul.f32 %v4377, %v4377
      %v4394 = vmul.f32 %v4378, %v4378
      %v4395 = vmul.f32 %v4379, %v4379
      %v4396 = vmul.f32 %v4380, %v4380
      %v4397 = vmul.f32 %v4381, %v4381
      %v4398 = vmul.f32 %v4382, %v4382
      %v4399 = vmul.f32 %v4383, %v4383
      %v4400 = vmul.f32 %v4384, %v4384
      %4401 = vadd.xlane.f32.xlu0 %v4385
      %v4402 = vpop.xlane.xlu0 %4401
      %4403 = vadd.xlane.f32.xlu0 %v4386
      %v4404 = vpop.xlane.xlu0 %4403
      %4405 = vadd.xlane.f32.xlu0 %v4387
      %v4406 = vpop.xlane.xlu0 %4405
      %4407 = vadd.xlane.f32.xlu0 %v4388
      %v4408 = vpop.xlane.xlu0 %4407
      %4409 = vadd.xlane.f32.xlu0 %v4389
      %v4410 = vpop.xlane.xlu0 %4409
      %4411 = vadd.xlane.f32.xlu0 %v4390
      %v4412 = vpop.xlane.xlu0 %4411
      %4413 = vadd.xlane.f32.xlu0 %v4391
      %v4414 = vpop.xlane.xlu0 %4413
      %4415 = vadd.xlane.f32.xlu0 %v4392
      %v4416 = vpop.xlane.xlu0 %4415
      %4417 = vadd.xlane.f32.xlu0 %v4393
      %v4418 = vpop.xlane.xlu0 %4417
      %4419 = vadd.xlane.f32.xlu0 %v4394
      %v4420 = vpop.xlane.xlu0 %4419
      %4421 = vadd.xlane.f32.xlu0 %v4395
      %v4422 = vpop.xlane.xlu0 %4421
      %4423 = vadd.xlane.f32.xlu0 %v4396
      %v4424 = vpop.xlane.xlu0 %4423
      %4425 = vadd.xlane.f32.xlu0 %v4397
      %v4426 = vpop.xlane.xlu0 %4425
      %4427 = vadd.xlane.f32.xlu0 %v4398
      %v4428 = vpop.xlane.xlu0 %4427
      %4429 = vadd.xlane.f32.xlu0 %v4399
      %v4430 = vpop.xlane.xlu0 %4429
      %4431 = vadd.xlane.f32.xlu0 %v4400
      %v4432 = vpop.xlane.xlu0 %4431
      %v4433 = vmul.f32 %v4402, %v1173
      %v4434 = vmul.f32 %v4404, %v1173
      %v4435 = vmul.f32 %v4406, %v1173
      %v4436 = vmul.f32 %v4408, %v1173
      %v4437 = vmul.f32 %v4410, %v1173
      %v4438 = vmul.f32 %v4412, %v1173
      %v4439 = vmul.f32 %v4414, %v1173
      %v4440 = vmul.f32 %v4416, %v1173
      %v4441 = vmul.f32 %v4418, %v1173
      %v4442 = vmul.f32 %v4420, %v1173
      %v4443 = vmul.f32 %v4422, %v1173
      %v4444 = vmul.f32 %v4424, %v1173
      %v4445 = vmul.f32 %v4426, %v1173
      %v4446 = vmul.f32 %v4428, %v1173
      %v4447 = vmul.f32 %v4430, %v1173
      %v4448 = vmul.f32 %v4432, %v1173
      %v4449 = vadd.f32 %v4433, 1e-06
      %v4450 = vadd.f32 %v4434, 1e-06
      %v4451 = vadd.f32 %v4435, 1e-06
      %v4452 = vadd.f32 %v4436, 1e-06
      %v4453 = vadd.f32 %v4437, 1e-06
      %v4454 = vadd.f32 %v4438, 1e-06
      %v4455 = vadd.f32 %v4439, 1e-06
      %v4456 = vadd.f32 %v4440, 1e-06
      %v4457 = vadd.f32 %v4441, 1e-06
      %v4458 = vadd.f32 %v4442, 1e-06
      %v4459 = vadd.f32 %v4443, 1e-06
      %v4460 = vadd.f32 %v4444, 1e-06
      %v4461 = vadd.f32 %v4445, 1e-06
      %v4462 = vadd.f32 %v4446, 1e-06
      %v4463 = vadd.f32 %v4447, 1e-06
      %v4464 = vadd.f32 %v4448, 1e-06
      %v4465 = vrsqrt.pop %v4449
      %v4466 = vmul.f32 %v4465, %v4449
      %v4467 = vmul.f32 %v4466, %v4465
      %v4468 = vmul.f32 0.5, %v4467
      %v4469 = vsub.f32 1.5, %v4468
      %v4470 = vmul.f32 %v4465, %v4469
      %vm4471 = vweird.f32 %v4449
      %vm4472 = vweird.f32 %v4465
      %vm4473 = vmor %vm4471, %vm4472
      %v4474 = vsel %vm4473, %v4465, %v4470
      %v4475 = vrsqrt.pop %v4450
      %v4476 = vmul.f32 %v4475, %v4450
      %v4477 = vmul.f32 %v4476, %v4475
      %v4478 = vmul.f32 0.5, %v4477
      %v4479 = vsub.f32 1.5, %v4478
      %v4480 = vmul.f32 %v4475, %v4479
      %vm4481 = vweird.f32 %v4450
      %vm4482 = vweird.f32 %v4475
      %vm4483 = vmor %vm4481, %vm4482
      %v4484 = vsel %vm4483, %v4475, %v4480
      %v4485 = vrsqrt.pop %v4451
      %v4486 = vmul.f32 %v4485, %v4451
      %v4487 = vmul.f32 %v4486, %v4485
      %v4488 = vmul.f32 0.5, %v4487
      %v4489 = vsub.f32 1.5, %v4488
      %v4490 = vmul.f32 %v4485, %v4489
      %vm4491 = vweird.f32 %v4451
      %vm4492 = vweird.f32 %v4485
      %vm4493 = vmor %vm4491, %vm4492
      %v4494 = vsel %vm4493, %v4485, %v4490
      %v4495 = vrsqrt.pop %v4452
      %v4496 = vmul.f32 %v4495, %v4452
      %v4497 = vmul.f32 %v4496, %v4495
      %v4498 = vmul.f32 0.5, %v4497
      %v4499 = vsub.f32 1.5, %v4498
      %v4500 = vmul.f32 %v4495, %v4499
      %vm4501 = vweird.f32 %v4452
      %vm4502 = vweird.f32 %v4495
      %vm4503 = vmor %vm4501, %vm4502
      %v4504 = vsel %vm4503, %v4495, %v4500
      %v4505 = vrsqrt.pop %v4453
      %v4506 = vmul.f32 %v4505, %v4453
      %v4507 = vmul.f32 %v4506, %v4505
      %v4508 = vmul.f32 0.5, %v4507
      %v4509 = vsub.f32 1.5, %v4508
      %v4510 = vmul.f32 %v4505, %v4509
      %vm4511 = vweird.f32 %v4453
      %vm4512 = vweird.f32 %v4505
      %vm4513 = vmor %vm4511, %vm4512
      %v4514 = vsel %vm4513, %v4505, %v4510
      %v4515 = vrsqrt.pop %v4454
      %v4516 = vmul.f32 %v4515, %v4454
      %v4517 = vmul.f32 %v4516, %v4515
      %v4518 = vmul.f32 0.5, %v4517
      %v4519 = vsub.f32 1.5, %v4518
      %v4520 = vmul.f32 %v4515, %v4519
      %vm4521 = vweird.f32 %v4454
      %vm4522 = vweird.f32 %v4515
      %vm4523 = vmor %vm4521, %vm4522
      %v4524 = vsel %vm4523, %v4515, %v4520
      %v4525 = vrsqrt.pop %v4455
      %v4526 = vmul.f32 %v4525, %v4455
      %v4527 = vmul.f32 %v4526, %v4525
      %v4528 = vmul.f32 0.5, %v4527
      %v4529 = vsub.f32 1.5, %v4528
      %v4530 = vmul.f32 %v4525, %v4529
      %vm4531 = vweird.f32 %v4455
      %vm4532 = vweird.f32 %v4525
      %vm4533 = vmor %vm4531, %vm4532
      %v4534 = vsel %vm4533, %v4525, %v4530
      %v4535 = vrsqrt.pop %v4456
      %v4536 = vmul.f32 %v4535, %v4456
      %v4537 = vmul.f32 %v4536, %v4535
      %v4538 = vmul.f32 0.5, %v4537
      %v4539 = vsub.f32 1.5, %v4538
      %v4540 = vmul.f32 %v4535, %v4539
      %vm4541 = vweird.f32 %v4456
      %vm4542 = vweird.f32 %v4535
      %vm4543 = vmor %vm4541, %vm4542
      %v4544 = vsel %vm4543, %v4535, %v4540
      %v4545 = vrsqrt.pop %v4457
      %v4546 = vmul.f32 %v4545, %v4457
      %v4547 = vmul.f32 %v4546, %v4545
      %v4548 = vmul.f32 0.5, %v4547
      %v4549 = vsub.f32 1.5, %v4548
      %v4550 = vmul.f32 %v4545, %v4549
      %vm4551 = vweird.f32 %v4457
      %vm4552 = vweird.f32 %v4545
      %vm4553 = vmor %vm4551, %vm4552
      %v4554 = vsel %vm4553, %v4545, %v4550
      %v4555 = vrsqrt.pop %v4458
      %v4556 = vmul.f32 %v4555, %v4458
      %v4557 = vmul.f32 %v4556, %v4555
      %v4558 = vmul.f32 0.5, %v4557
      %v4559 = vsub.f32 1.5, %v4558
      %v4560 = vmul.f32 %v4555, %v4559
      %vm4561 = vweird.f32 %v4458
      %vm4562 = vweird.f32 %v4555
      %vm4563 = vmor %vm4561, %vm4562
      %v4564 = vsel %vm4563, %v4555, %v4560
      %v4565 = vrsqrt.pop %v4459
      %v4566 = vmul.f32 %v4565, %v4459
      %v4567 = vmul.f32 %v4566, %v4565
      %v4568 = vmul.f32 0.5, %v4567
      %v4569 = vsub.f32 1.5, %v4568
      %v4570 = vmul.f32 %v4565, %v4569
      %vm4571 = vweird.f32 %v4459
      %vm4572 = vweird.f32 %v4565
      %vm4573 = vmor %vm4571, %vm4572
      %v4574 = vsel %vm4573, %v4565, %v4570
      %v4575 = vrsqrt.pop %v4460
      %v4576 = vmul.f32 %v4575, %v4460
      %v4577 = vmul.f32 %v4576, %v4575
      %v4578 = vmul.f32 0.5, %v4577
      %v4579 = vsub.f32 1.5, %v4578
      %v4580 = vmul.f32 %v4575, %v4579
      %vm4581 = vweird.f32 %v4460
      %vm4582 = vweird.f32 %v4575
      %vm4583 = vmor %vm4581, %vm4582
      %v4584 = vsel %vm4583, %v4575, %v4580
      %v4585 = vrsqrt.pop %v4461
      %v4586 = vmul.f32 %v4585, %v4461
      %v4587 = vmul.f32 %v4586, %v4585
      %v4588 = vmul.f32 0.5, %v4587
      %v4589 = vsub.f32 1.5, %v4588
      %v4590 = vmul.f32 %v4585, %v4589
      %vm4591 = vweird.f32 %v4461
      %vm4592 = vweird.f32 %v4585
      %vm4593 = vmor %vm4591, %vm4592
      %v4594 = vsel %vm4593, %v4585, %v4590
      %v4595 = vrsqrt.pop %v4462
      %v4596 = vmul.f32 %v4595, %v4462
      %v4597 = vmul.f32 %v4596, %v4595
      %v4598 = vmul.f32 0.5, %v4597
      %v4599 = vsub.f32 1.5, %v4598
      %v4600 = vmul.f32 %v4595, %v4599
      %vm4601 = vweird.f32 %v4462
      %vm4602 = vweird.f32 %v4595
      %vm4603 = vmor %vm4601, %vm4602
      %v4604 = vsel %vm4603, %v4595, %v4600
      %v4605 = vrsqrt.pop %v4463
      %v4606 = vmul.f32 %v4605, %v4463
      %v4607 = vmul.f32 %v4606, %v4605
      %v4608 = vmul.f32 0.5, %v4607
      %v4609 = vsub.f32 1.5, %v4608
      %v4610 = vmul.f32 %v4605, %v4609
      %vm4611 = vweird.f32 %v4463
      %vm4612 = vweird.f32 %v4605
      %vm4613 = vmor %vm4611, %vm4612
      %v4614 = vsel %vm4613, %v4605, %v4610
      %v4615 = vrsqrt.pop %v4464
      %v4616 = vmul.f32 %v4615, %v4464
      %v4617 = vmul.f32 %v4616, %v4615
      %v4618 = vmul.f32 0.5, %v4617
      %v4619 = vsub.f32 1.5, %v4618
      %v4620 = vmul.f32 %v4615, %v4619
      %vm4621 = vweird.f32 %v4464
      %vm4622 = vweird.f32 %v4615
      %vm4623 = vmor %vm4621, %vm4622
      %v4624 = vsel %vm4623, %v4615, %v4620
      %v4625 = vmul.f32 %v4369, %v4474
      %v4626 = vmul.f32 %v4370, %v4484
      %v4627 = vmul.f32 %v4371, %v4494
      %v4628 = vmul.f32 %v4372, %v4504
      %v4629 = vmul.f32 %v4373, %v4514
      %v4630 = vmul.f32 %v4374, %v4524
      %v4631 = vmul.f32 %v4375, %v4534
      %v4632 = vmul.f32 %v4376, %v4544
      %v4633 = vmul.f32 %v4377, %v4554
      %v4634 = vmul.f32 %v4378, %v4564
      %v4635 = vmul.f32 %v4379, %v4574
      %v4636 = vmul.f32 %v4380, %v4584
      %v4637 = vmul.f32 %v4381, %v4594
      %v4638 = vmul.f32 %v4382, %v4604
      %v4639 = vmul.f32 %v4383, %v4614
      %v4640 = vmul.f32 %v4384, %v4624
      %v4641 = vadd.f32 %v1105, 1.0
      %v4642 = vadd.f32 %v1131, 1.0
      %v4645 = vperm.slane %v4641, 0
      %v4646 = vperm.slane %v4642, 0
      %v4649 = vmul.f32 %v4625, %v4645
      %v4650 = vmul.f32 %v4626, %v4645
      %v4651 = vmul.f32 %v4627, %v4645
      %v4652 = vmul.f32 %v4628, %v4645
      %v4653 = vmul.f32 %v4629, %v4645
      %v4654 = vmul.f32 %v4630, %v4645
      %v4655 = vmul.f32 %v4631, %v4645
      %v4656 = vmul.f32 %v4632, %v4645
      %v4657 = vmul.f32 %v4633, %v4646
      %v4658 = vmul.f32 %v4634, %v4646
      %v4659 = vmul.f32 %v4635, %v4646
      %v4660 = vmul.f32 %v4636, %v4646
      %v4661 = vmul.f32 %v4637, %v4646
      %v4662 = vmul.f32 %v4638, %v4646
      %v4663 = vmul.f32 %v4639, %v4646
      %v4664 = vmul.f32 %v4640, %v4646
      %v4665 = vperm.slane %v1092, 0
      %v4666 = vperm.slane %v1129, 0
      %v4669 = vadd.f32 %v4649, %v4665
      %v4670 = vadd.f32 %v4650, %v4665
      %v4671 = vadd.f32 %v4651, %v4665
      %v4672 = vadd.f32 %v4652, %v4665
      %v4673 = vadd.f32 %v4653, %v4665
      %v4674 = vadd.f32 %v4654, %v4665
      %v4675 = vadd.f32 %v4655, %v4665
      %v4676 = vadd.f32 %v4656, %v4665
      %v4677 = vadd.f32 %v4657, %v4666
      %v4678 = vadd.f32 %v4658, %v4666
      %v4679 = vadd.f32 %v4659, %v4666
      %v4680 = vadd.f32 %v4660, %v4666
      %v4681 = vadd.f32 %v4661, %v4666
      %v4682 = vadd.f32 %v4662, %v4666
      %v4683 = vadd.f32 %v4663, %v4666
      %v4684 = vadd.f32 %v4664, %v4666
      %v4685 = vpack.c.bf16 %v4670, %v4669
      %v4686 = vpack.c.bf16 %v4672, %v4671
      %v4687 = vpack.c.bf16 %v4674, %v4673
      %v4688 = vpack.c.bf16 %v4676, %v4675
      %v4689 = vpack.c.bf16 %v4678, %v4677
      %v4690 = vpack.c.bf16 %v4680, %v4679
      %v4691 = vpack.c.bf16 %v4682, %v4681
      %v4692 = vpack.c.bf16 %v4684, %v4683
      %v4693 = vld [vmem:[%s653] sm:$0xff]
      %v4694 = vld [vmem:[%s653 + $0x8] sm:$0xff]
      %v4695 = vld [vmem:[%s653 + $0x10] sm:$0xff]
      %v4696 = vld [vmem:[%s653 + $0x18] sm:$0xff]
      %v4697 = vld [vmem:[%s653 + $0x20] sm:$0xff]
      %v4698 = vld [vmem:[%s653 + $0x28] sm:$0xff]
      %v4699 = vld [vmem:[%s653 + $0x30] sm:$0xff]
      %v4700 = vld [vmem:[%s653 + $0x38] sm:$0xff]
      %v4701 = vld [vmem:[%s653 + $0x40] sm:$0xff]
      %v4702 = vld [vmem:[%s653 + $0x48] sm:$0xff]
      %v4703 = vld [vmem:[%s653 + $0x50] sm:$0xff]
      %v4704 = vld [vmem:[%s653 + $0x58] sm:$0xff]
      %v4705 = vld [vmem:[%s653 + $0x60] sm:$0xff]
      %v4706 = vld [vmem:[%s653 + $0x68] sm:$0xff]
      %v4707 = vld [vmem:[%s653 + $0x70] sm:$0xff]
      %v4708 = vld [vmem:[%s653 + $0x78] sm:$0xff]
      %v4709 = vld [vmem:[%s653 + $0x80] sm:$0xff]
      %v4710 = vld [vmem:[%s653 + $0x88] sm:$0xff]
      %v4711 = vld [vmem:[%s653 + $0x90] sm:$0xff]
      %v4712 = vld [vmem:[%s653 + $0x98] sm:$0xff]
      %v4713 = vld [vmem:[%s653 + $0xa0] sm:$0xff]
      %v4714 = vld [vmem:[%s653 + $0xa8] sm:$0xff]
      %v4715 = vld [vmem:[%s653 + $0xb0] sm:$0xff]
      %v4716 = vld [vmem:[%s653 + $0xb8] sm:$0xff]
      %v4717 = vld [vmem:[%s653 + $0xc0] sm:$0xff]
      %v4718 = vld [vmem:[%s653 + $0xc8] sm:$0xff]
      %v4719 = vld [vmem:[%s653 + $0xd0] sm:$0xff]
      %v4720 = vld [vmem:[%s653 + $0xd8] sm:$0xff]
      %v4721 = vld [vmem:[%s653 + $0xe0] sm:$0xff]
      %v4722 = vld [vmem:[%s653 + $0xe8] sm:$0xff]
      %v4723 = vld [vmem:[%s653 + $0xf0] sm:$0xff]
      %v4724 = vld [vmem:[%s653 + $0xf8] sm:$0xff]
      %v4725 = vld [vmem:[%s657] sm:$0xf]
      %v4727 = vperm.slane %v4725, 0
      %v4728 = vperm.slane %v4725, 1
      %v4729 = vperm.slane %v4725, 2
      %v4730 = vperm.slane %v4725, 3
      %v4767 = vunpack.c.l.b16 %v4693
      %v4768 = vunpack.c.h.b16 %v4693
      %v4769 = vunpack.c.l.b16 %v4694
      %v4770 = vunpack.c.h.b16 %v4694
      %v4771 = vunpack.c.l.b16 %v4695
      %v4772 = vunpack.c.h.b16 %v4695
      %v4773 = vunpack.c.l.b16 %v4696
      %v4774 = vunpack.c.h.b16 %v4696
      %v4775 = vunpack.c.l.b16 %v4697
      %v4776 = vunpack.c.h.b16 %v4697
      %v4777 = vunpack.c.l.b16 %v4698
      %v4778 = vunpack.c.h.b16 %v4698
      %v4779 = vunpack.c.l.b16 %v4699
      %v4780 = vunpack.c.h.b16 %v4699
      %v4781 = vunpack.c.l.b16 %v4700
      %v4782 = vunpack.c.h.b16 %v4700
      %v4783 = vunpack.c.l.b16 %v4701
      %v4784 = vunpack.c.h.b16 %v4701
      %v4785 = vunpack.c.l.b16 %v4702
      %v4786 = vunpack.c.h.b16 %v4702
      %v4787 = vunpack.c.l.b16 %v4703
      %v4788 = vunpack.c.h.b16 %v4703
      %v4789 = vunpack.c.l.b16 %v4704
      %v4790 = vunpack.c.h.b16 %v4704
      %v4791 = vunpack.c.l.b16 %v4705
      %v4792 = vunpack.c.h.b16 %v4705
      %v4793 = vunpack.c.l.b16 %v4706
      %v4794 = vunpack.c.h.b16 %v4706
      %v4795 = vunpack.c.l.b16 %v4707
      %v4796 = vunpack.c.h.b16 %v4707
      %v4797 = vunpack.c.l.b16 %v4708
      %v4798 = vunpack.c.h.b16 %v4708
      %v4799 = vunpack.c.l.b16 %v4709
      %v4800 = vunpack.c.h.b16 %v4709
      %v4801 = vunpack.c.l.b16 %v4710
      %v4802 = vunpack.c.h.b16 %v4710
      %v4803 = vunpack.c.l.b16 %v4711
      %v4804 = vunpack.c.h.b16 %v4711
      %v4805 = vunpack.c.l.b16 %v4712
      %v4806 = vunpack.c.h.b16 %v4712
      %v4807 = vunpack.c.l.b16 %v4713
      %v4808 = vunpack.c.h.b16 %v4713
      %v4809 = vunpack.c.l.b16 %v4714
      %v4810 = vunpack.c.h.b16 %v4714
      %v4811 = vunpack.c.l.b16 %v4715
      %v4812 = vunpack.c.h.b16 %v4715
      %v4813 = vunpack.c.l.b16 %v4716
      %v4814 = vunpack.c.h.b16 %v4716
      %v4815 = vunpack.c.l.b16 %v4717
      %v4816 = vunpack.c.h.b16 %v4717
      %v4817 = vunpack.c.l.b16 %v4718
      %v4818 = vunpack.c.h.b16 %v4718
      %v4819 = vunpack.c.l.b16 %v4719
      %v4820 = vunpack.c.h.b16 %v4719
      %v4821 = vunpack.c.l.b16 %v4720
      %v4822 = vunpack.c.h.b16 %v4720
      %v4823 = vunpack.c.l.b16 %v4721
      %v4824 = vunpack.c.h.b16 %v4721
      %v4825 = vunpack.c.l.b16 %v4722
      %v4826 = vunpack.c.h.b16 %v4722
      %v4827 = vunpack.c.l.b16 %v4723
      %v4828 = vunpack.c.h.b16 %v4723
      %v4829 = vunpack.c.l.b16 %v4724
      %v4830 = vunpack.c.h.b16 %v4724
      %v4831 = vpack.c.b16 %v4771, %v4767
      %v4832 = vpack.c.b16 %v4772, %v4768
      %v4833 = vpack.c.b16 %v4773, %v4769
      %v4834 = vpack.c.b16 %v4774, %v4770
      %v4835 = vpack.c.b16 %v4779, %v4775
      %v4836 = vpack.c.b16 %v4780, %v4776
      %v4837 = vpack.c.b16 %v4781, %v4777
      %v4838 = vpack.c.b16 %v4782, %v4778
      %v4839 = vpack.c.b16 %v4787, %v4783
      %v4840 = vpack.c.b16 %v4788, %v4784
      %v4841 = vpack.c.b16 %v4789, %v4785
      %v4842 = vpack.c.b16 %v4790, %v4786
      %v4843 = vpack.c.b16 %v4795, %v4791
      %v4844 = vpack.c.b16 %v4796, %v4792
      %v4845 = vpack.c.b16 %v4797, %v4793
      %v4846 = vpack.c.b16 %v4798, %v4794
      %v4847 = vpack.c.b16 %v4803, %v4799
      %v4848 = vpack.c.b16 %v4804, %v4800
      %v4849 = vpack.c.b16 %v4805, %v4801
      %v4850 = vpack.c.b16 %v4806, %v4802
      %v4851 = vpack.c.b16 %v4811, %v4807
      %v4852 = vpack.c.b16 %v4812, %v4808
      %v4853 = vpack.c.b16 %v4813, %v4809
      %v4854 = vpack.c.b16 %v4814, %v4810
      %v4855 = vpack.c.b16 %v4819, %v4815
      %v4856 = vpack.c.b16 %v4820, %v4816
      %v4857 = vpack.c.b16 %v4821, %v4817
      %v4858 = vpack.c.b16 %v4822, %v4818
      %v4859 = vpack.c.b16 %v4827, %v4823
      %v4860 = vpack.c.b16 %v4828, %v4824
      %v4861 = vpack.c.b16 %v4829, %v4825
      %v4862 = vpack.c.b16 %v4830, %v4826
      %4895 = vmatpush.bf16.msra.mxu0 %v4859
      %4896 = vmatpush.bf16.msra.mxu0 %v4855
      %4897 = vmatpush.bf16.msra.mxu0 %v4851
      %4898 = vmatpush.bf16.msra.mxu0 %v4847
      %4899 = vmatpush.bf16.msra.mxu0 %v4843
      %4900 = vmatpush.bf16.msra.mxu0 %v4839
      %4901 = vmatpush.bf16.msra.mxu0 %v4835
      %4902 = vmatpush.bf16.msra.mxu0 %v4831
      %4903 = vmatmul.bf16.gmra.mxu0 %v4685
      %v4904 = vpop.f32.mrf.mxu0
      %v4905 = vadd.f32 %v4727, %v4904
      %v4906 = vpop.f32.mrf.mxu0
      %v4907 = vadd.f32 %v4727, %v4906
      %4908 = vmatmul.bf16.gmra.mxu0 %v4686
      %v4909 = vpop.f32.mrf.mxu0
      %v4910 = vadd.f32 %v4727, %v4909
      %v4911 = vpop.f32.mrf.mxu0
      %v4912 = vadd.f32 %v4727, %v4911
      %4913 = vmatmul.bf16.gmra.mxu0 %v4687
      %v4914 = vpop.f32.mrf.mxu0
      %v4915 = vadd.f32 %v4727, %v4914
      %v4916 = vpop.f32.mrf.mxu0
      %v4917 = vadd.f32 %v4727, %v4916
      %4918 = vmatmul.bf16.gmra.mxu0 %v4688
      %v4919 = vpop.f32.mrf.mxu0
      %v4920 = vadd.f32 %v4727, %v4919
      %v4921 = vpop.f32.mrf.mxu0
      %v4922 = vadd.f32 %v4727, %v4921
      %4923 = vmatmul.bf16.gmra.mxu0 %v4689
      %v4924 = vpop.f32.mrf.mxu0
      %v4925 = vadd.f32 %v4727, %v4924
      %v4926 = vpop.f32.mrf.mxu0
      %v4927 = vadd.f32 %v4727, %v4926
      %4928 = vmatmul.bf16.gmra.mxu0 %v4690
      %v4929 = vpop.f32.mrf.mxu0
      %v4930 = vadd.f32 %v4727, %v4929
      %v4931 = vpop.f32.mrf.mxu0
      %v4932 = vadd.f32 %v4727, %v4931
      %4933 = vmatmul.bf16.gmra.mxu0 %v4691
      %v4934 = vpop.f32.mrf.mxu0
      %v4935 = vadd.f32 %v4727, %v4934
      %v4936 = vpop.f32.mrf.mxu0
      %v4937 = vadd.f32 %v4727, %v4936
      %4938 = vmatmul.bf16.gmra.mxu0 %v4692
      %v4939 = vpop.f32.mrf.mxu0
      %v4940 = vadd.f32 %v4727, %v4939
      %v4941 = vpop.f32.mrf.mxu0
      %v4942 = vadd.f32 %v4727, %v4941
      %4943 = vdwg.mxu0
      %4944 = vmatpush.bf16.msra.mxu0 %v4860
      %4945 = vmatpush.bf16.msra.mxu0 %v4856
      %4946 = vmatpush.bf16.msra.mxu0 %v4852
      %4947 = vmatpush.bf16.msra.mxu0 %v4848
      %4948 = vmatpush.bf16.msra.mxu0 %v4844
      %4949 = vmatpush.bf16.msra.mxu0 %v4840
      %4950 = vmatpush.bf16.msra.mxu0 %v4836
      %4951 = vmatpush.bf16.msra.mxu0 %v4832
      %4952 = vmatmul.bf16.gmra.mxu0 %v4685
      %v4953 = vpop.f32.mrf.mxu0
      %v4954 = vadd.f32 %v4728, %v4953
      %v4955 = vpop.f32.mrf.mxu0
      %v4956 = vadd.f32 %v4728, %v4955
      %4957 = vmatmul.bf16.gmra.mxu0 %v4686
      %v4958 = vpop.f32.mrf.mxu0
      %v4959 = vadd.f32 %v4728, %v4958
      %v4960 = vpop.f32.mrf.mxu0
      %v4961 = vadd.f32 %v4728, %v4960
      %4962 = vmatmul.bf16.gmra.mxu0 %v4687
      %v4963 = vpop.f32.mrf.mxu0
      %v4964 = vadd.f32 %v4728, %v4963
      %v4965 = vpop.f32.mrf.mxu0
      %v4966 = vadd.f32 %v4728, %v4965
      %4967 = vmatmul.bf16.gmra.mxu0 %v4688
      %v4968 = vpop.f32.mrf.mxu0
      %v4969 = vadd.f32 %v4728, %v4968
      %v4970 = vpop.f32.mrf.mxu0
      %v4971 = vadd.f32 %v4728, %v4970
      %4972 = vmatmul.bf16.gmra.mxu0 %v4689
      %v4973 = vpop.f32.mrf.mxu0
      %v4974 = vadd.f32 %v4728, %v4973
      %v4975 = vpop.f32.mrf.mxu0
      %v4976 = vadd.f32 %v4728, %v4975
      %4977 = vmatmul.bf16.gmra.mxu0 %v4690
      %v4978 = vpop.f32.mrf.mxu0
      %v4979 = vadd.f32 %v4728, %v4978
      %v4980 = vpop.f32.mrf.mxu0
      %v4981 = vadd.f32 %v4728, %v4980
      %4982 = vmatmul.bf16.gmra.mxu0 %v4691
      %v4983 = vpop.f32.mrf.mxu0
      %v4984 = vadd.f32 %v4728, %v4983
      %v4985 = vpop.f32.mrf.mxu0
      %v4986 = vadd.f32 %v4728, %v4985
      %4987 = vmatmul.bf16.gmra.mxu0 %v4692
      %v4988 = vpop.f32.mrf.mxu0
      %v4989 = vadd.f32 %v4728, %v4988
      %v4990 = vpop.f32.mrf.mxu0
      %v4991 = vadd.f32 %v4728, %v4990
      %4992 = vdwg.mxu0
      %4993 = vmatpush.bf16.msra.mxu0 %v4861
      %4994 = vmatpush.bf16.msra.mxu0 %v4857
      %4995 = vmatpush.bf16.msra.mxu0 %v4853
      %4996 = vmatpush.bf16.msra.mxu0 %v4849
      %4997 = vmatpush.bf16.msra.mxu0 %v4845
      %4998 = vmatpush.bf16.msra.mxu0 %v4841
      %4999 = vmatpush.bf16.msra.mxu0 %v4837
      %5000 = vmatpush.bf16.msra.mxu0 %v4833
      %5001 = vmatmul.bf16.gmra.mxu0 %v4685
      %v5002 = vpop.f32.mrf.mxu0
      %v5003 = vadd.f32 %v4729, %v5002
      %v5004 = vpop.f32.mrf.mxu0
      %v5005 = vadd.f32 %v4729, %v5004
      %5006 = vmatmul.bf16.gmra.mxu0 %v4686
      %v5007 = vpop.f32.mrf.mxu0
      %v5008 = vadd.f32 %v4729, %v5007
      %v5009 = vpop.f32.mrf.mxu0
      %v5010 = vadd.f32 %v4729, %v5009
      %5011 = vmatmul.bf16.gmra.mxu0 %v4687
      %v5012 = vpop.f32.mrf.mxu0
      %v5013 = vadd.f32 %v4729, %v5012
      %v5014 = vpop.f32.mrf.mxu0
      %v5015 = vadd.f32 %v4729, %v5014
      %5016 = vmatmul.bf16.gmra.mxu0 %v4688
      %v5017 = vpop.f32.mrf.mxu0
      %v5018 = vadd.f32 %v4729, %v5017
      %v5019 = vpop.f32.mrf.mxu0
      %v5020 = vadd.f32 %v4729, %v5019
      %5021 = vmatmul.bf16.gmra.mxu0 %v4689
      %v5022 = vpop.f32.mrf.mxu0
      %v5023 = vadd.f32 %v4729, %v5022
      %v5024 = vpop.f32.mrf.mxu0
      %v5025 = vadd.f32 %v4729, %v5024
      %5026 = vmatmul.bf16.gmra.mxu0 %v4690
      %v5027 = vpop.f32.mrf.mxu0
      %v5028 = vadd.f32 %v4729, %v5027
      %v5029 = vpop.f32.mrf.mxu0
      %v5030 = vadd.f32 %v4729, %v5029
      %5031 = vmatmul.bf16.gmra.mxu0 %v4691
      %v5032 = vpop.f32.mrf.mxu0
      %v5033 = vadd.f32 %v4729, %v5032
      %v5034 = vpop.f32.mrf.mxu0
      %v5035 = vadd.f32 %v4729, %v5034
      %5036 = vmatmul.bf16.gmra.mxu0 %v4692
      %v5037 = vpop.f32.mrf.mxu0
      %v5038 = vadd.f32 %v4729, %v5037
      %v5039 = vpop.f32.mrf.mxu0
      %v5040 = vadd.f32 %v4729, %v5039
      %5041 = vdwg.mxu0
      %5042 = vmatpush.bf16.msra.mxu0 %v4862
      %5043 = vmatpush.bf16.msra.mxu0 %v4858
      %5044 = vmatpush.bf16.msra.mxu0 %v4854
      %5045 = vmatpush.bf16.msra.mxu0 %v4850
      %5046 = vmatpush.bf16.msra.mxu0 %v4846
      %5047 = vmatpush.bf16.msra.mxu0 %v4842
      %5048 = vmatpush.bf16.msra.mxu0 %v4838
      %5049 = vmatpush.bf16.msra.mxu0 %v4834
      %5050 = vmatmul.bf16.gmra.mxu0 %v4685
      %v5051 = vpop.f32.mrf.mxu0
      %v5052 = vadd.f32 %v4730, %v5051
      %v5053 = vpop.f32.mrf.mxu0
      %v5054 = vadd.f32 %v4730, %v5053
      %5055 = vmatmul.bf16.gmra.mxu0 %v4686
      %v5056 = vpop.f32.mrf.mxu0
      %v5057 = vadd.f32 %v4730, %v5056
      %v5058 = vpop.f32.mrf.mxu0
      %v5059 = vadd.f32 %v4730, %v5058
      %5060 = vmatmul.bf16.gmra.mxu0 %v4687
      %v5061 = vpop.f32.mrf.mxu0
      %v5062 = vadd.f32 %v4730, %v5061
      %v5063 = vpop.f32.mrf.mxu0
      %v5064 = vadd.f32 %v4730, %v5063
      %5065 = vmatmul.bf16.gmra.mxu0 %v4688
      %v5066 = vpop.f32.mrf.mxu0
      %v5067 = vadd.f32 %v4730, %v5066
      %v5068 = vpop.f32.mrf.mxu0
      %v5069 = vadd.f32 %v4730, %v5068
      %5070 = vmatmul.bf16.gmra.mxu0 %v4689
      %v5071 = vpop.f32.mrf.mxu0
      %v5072 = vadd.f32 %v4730, %v5071
      %v5073 = vpop.f32.mrf.mxu0
      %v5074 = vadd.f32 %v4730, %v5073
      %5075 = vmatmul.bf16.gmra.mxu0 %v4690
      %v5076 = vpop.f32.mrf.mxu0
      %v5077 = vadd.f32 %v4730, %v5076
      %v5078 = vpop.f32.mrf.mxu0
      %v5079 = vadd.f32 %v4730, %v5078
      %5080 = vmatmul.bf16.gmra.mxu0 %v4691
      %v5081 = vpop.f32.mrf.mxu0
      %v5082 = vadd.f32 %v4730, %v5081
      %v5083 = vpop.f32.mrf.mxu0
      %v5084 = vadd.f32 %v4730, %v5083
      %5085 = vmatmul.bf16.gmra.mxu0 %v4692
      %v5086 = vpop.f32.mrf.mxu0
      %v5087 = vadd.f32 %v4730, %v5086
      %v5088 = vpop.f32.mrf.mxu0
      %v5089 = vadd.f32 %v4730, %v5088
      %5090 = vdwg.mxu0
      %v5091 = vmul.f32 %v4905, 0.5
      %v5092 = vmul.f32 %v4954, 0.5
      %v5093 = vmul.f32 %v5003, 0.5
      %v5094 = vmul.f32 %v5052, 0.5
      %v5095 = vmul.f32 %v4907, 0.5
      %v5096 = vmul.f32 %v4956, 0.5
      %v5097 = vmul.f32 %v5005, 0.5
      %v5098 = vmul.f32 %v5054, 0.5
      %v5099 = vmul.f32 %v4910, 0.5
      %v5100 = vmul.f32 %v4959, 0.5
      %v5101 = vmul.f32 %v5008, 0.5
      %v5102 = vmul.f32 %v5057, 0.5
      %v5103 = vmul.f32 %v4912, 0.5
      %v5104 = vmul.f32 %v4961, 0.5
      %v5105 = vmul.f32 %v5010, 0.5
      %v5106 = vmul.f32 %v5059, 0.5
      %v5107 = vmul.f32 %v4915, 0.5
      %v5108 = vmul.f32 %v4964, 0.5
      %v5109 = vmul.f32 %v5013, 0.5
      %v5110 = vmul.f32 %v5062, 0.5
      %v5111 = vmul.f32 %v4917, 0.5
      %v5112 = vmul.f32 %v4966, 0.5
      %v5113 = vmul.f32 %v5015, 0.5
      %v5114 = vmul.f32 %v5064, 0.5
      %v5115 = vmul.f32 %v4920, 0.5
      %v5116 = vmul.f32 %v4969, 0.5
      %v5117 = vmul.f32 %v5018, 0.5
      %v5118 = vmul.f32 %v5067, 0.5
      %v5119 = vmul.f32 %v4922, 0.5
      %v5120 = vmul.f32 %v4971, 0.5
      %v5121 = vmul.f32 %v5020, 0.5
      %v5122 = vmul.f32 %v5069, 0.5
      %v5123 = vmul.f32 %v4925, 0.5
      %v5124 = vmul.f32 %v4974, 0.5
      %v5125 = vmul.f32 %v5023, 0.5
      %v5126 = vmul.f32 %v5072, 0.5
      %v5127 = vmul.f32 %v4927, 0.5
      %v5128 = vmul.f32 %v4976, 0.5
      %v5129 = vmul.f32 %v5025, 0.5
      %v5130 = vmul.f32 %v5074, 0.5
      %v5131 = vmul.f32 %v4930, 0.5
      %v5132 = vmul.f32 %v4979, 0.5
      %v5133 = vmul.f32 %v5028, 0.5
      %v5134 = vmul.f32 %v5077, 0.5
      %v5135 = vmul.f32 %v4932, 0.5
      %v5136 = vmul.f32 %v4981, 0.5
      %v5137 = vmul.f32 %v5030, 0.5
      %v5138 = vmul.f32 %v5079, 0.5
      %v5139 = vmul.f32 %v4935, 0.5
      %v5140 = vmul.f32 %v4984, 0.5
      %v5141 = vmul.f32 %v5033, 0.5
      %v5142 = vmul.f32 %v5082, 0.5
      %v5143 = vmul.f32 %v4937, 0.5
      %v5144 = vmul.f32 %v4986, 0.5
      %v5145 = vmul.f32 %v5035, 0.5
      %v5146 = vmul.f32 %v5084, 0.5
      %v5147 = vmul.f32 %v4940, 0.5
      %v5148 = vmul.f32 %v4989, 0.5
      %v5149 = vmul.f32 %v5038, 0.5
      %v5150 = vmul.f32 %v5087, 0.5
      %v5151 = vmul.f32 %v4942, 0.5
      %v5152 = vmul.f32 %v4991, 0.5
      %v5153 = vmul.f32 %v5040, 0.5
      %v5154 = vmul.f32 %v5089, 0.5
      %v5155 = vmul.f32 %v4905, 0.044715
      %v5156 = vmul.f32 %v4954, 0.044715
      %v5157 = vmul.f32 %v5003, 0.044715
      %v5158 = vmul.f32 %v5052, 0.044715
      %v5159 = vmul.f32 %v4907, 0.044715
      %v5160 = vmul.f32 %v4956, 0.044715
      %v5161 = vmul.f32 %v5005, 0.044715
      %v5162 = vmul.f32 %v5054, 0.044715
      %v5163 = vmul.f32 %v4910, 0.044715
      %v5164 = vmul.f32 %v4959, 0.044715
      %v5165 = vmul.f32 %v5008, 0.044715
      %v5166 = vmul.f32 %v5057, 0.044715
      %v5167 = vmul.f32 %v4912, 0.044715
      %v5168 = vmul.f32 %v4961, 0.044715
      %v5169 = vmul.f32 %v5010, 0.044715
      %v5170 = vmul.f32 %v5059, 0.044715
      %v5171 = vmul.f32 %v4915, 0.044715
      %v5172 = vmul.f32 %v4964, 0.044715
      %v5173 = vmul.f32 %v5013, 0.044715
      %v5174 = vmul.f32 %v5062, 0.044715
      %v5175 = vmul.f32 %v4917, 0.044715
      %v5176 = vmul.f32 %v4966, 0.044715
      %v5177 = vmul.f32 %v5015, 0.044715
      %v5178 = vmul.f32 %v5064, 0.044715
      %v5179 = vmul.f32 %v4920, 0.044715
      %v5180 = vmul.f32 %v4969, 0.044715
      %v5181 = vmul.f32 %v5018, 0.044715
      %v5182 = vmul.f32 %v5067, 0.044715
      %v5183 = vmul.f32 %v4922, 0.044715
      %v5184 = vmul.f32 %v4971, 0.044715
      %v5185 = vmul.f32 %v5020, 0.044715
      %v5186 = vmul.f32 %v5069, 0.044715
      %v5187 = vmul.f32 %v4925, 0.044715
      %v5188 = vmul.f32 %v4974, 0.044715
      %v5189 = vmul.f32 %v5023, 0.044715
      %v5190 = vmul.f32 %v5072, 0.044715
      %v5191 = vmul.f32 %v4927, 0.044715
      %v5192 = vmul.f32 %v4976, 0.044715
      %v5193 = vmul.f32 %v5025, 0.044715
      %v5194 = vmul.f32 %v5074, 0.044715
      %v5195 = vmul.f32 %v4930, 0.044715
      %v5196 = vmul.f32 %v4979, 0.044715
      %v5197 = vmul.f32 %v5028, 0.044715
      %v5198 = vmul.f32 %v5077, 0.044715
      %v5199 = vmul.f32 %v4932, 0.044715
      %v5200 = vmul.f32 %v4981, 0.044715
      %v5201 = vmul.f32 %v5030, 0.044715
      %v5202 = vmul.f32 %v5079, 0.044715
      %v5203 = vmul.f32 %v4935, 0.044715
      %v5204 = vmul.f32 %v4984, 0.044715
      %v5205 = vmul.f32 %v5033, 0.044715
      %v5206 = vmul.f32 %v5082, 0.044715
      %v5207 = vmul.f32 %v4937, 0.044715
      %v5208 = vmul.f32 %v4986, 0.044715
      %v5209 = vmul.f32 %v5035, 0.044715
      %v5210 = vmul.f32 %v5084, 0.044715
      %v5211 = vmul.f32 %v4940, 0.044715
      %v5212 = vmul.f32 %v4989, 0.044715
      %v5213 = vmul.f32 %v5038, 0.044715
      %v5214 = vmul.f32 %v5087, 0.044715
      %v5215 = vmul.f32 %v4942, 0.044715
      %v5216 = vmul.f32 %v4991, 0.044715
      %v5217 = vmul.f32 %v5040, 0.044715
      %v5218 = vmul.f32 %v5089, 0.044715
      %v5219 = vmul.f32 %v5155, %v4905
      %v5220 = vmul.f32 %v5156, %v4954
      %v5221 = vmul.f32 %v5157, %v5003
      %v5222 = vmul.f32 %v5158, %v5052
      %v5223 = vmul.f32 %v5159, %v4907
      %v5224 = vmul.f32 %v5160, %v4956
      %v5225 = vmul.f32 %v5161, %v5005
      %v5226 = vmul.f32 %v5162, %v5054
      %v5227 = vmul.f32 %v5163, %v4910
      %v5228 = vmul.f32 %v5164, %v4959
      %v5229 = vmul.f32 %v5165, %v5008
      %v5230 = vmul.f32 %v5166, %v5057
      %v5231 = vmul.f32 %v5167, %v4912
      %v5232 = vmul.f32 %v5168, %v4961
      %v5233 = vmul.f32 %v5169, %v5010
      %v5234 = vmul.f32 %v5170, %v5059
      %v5235 = vmul.f32 %v5171, %v4915
      %v5236 = vmul.f32 %v5172, %v4964
      %v5237 = vmul.f32 %v5173, %v5013
      %v5238 = vmul.f32 %v5174, %v5062
      %v5239 = vmul.f32 %v5175, %v4917
      %v5240 = vmul.f32 %v5176, %v4966
      %v5241 = vmul.f32 %v5177, %v5015
      %v5242 = vmul.f32 %v5178, %v5064
      %v5243 = vmul.f32 %v5179, %v4920
      %v5244 = vmul.f32 %v5180, %v4969
      %v5245 = vmul.f32 %v5181, %v5018
      %v5246 = vmul.f32 %v5182, %v5067
      %v5247 = vmul.f32 %v5183, %v4922
      %v5248 = vmul.f32 %v5184, %v4971
      %v5249 = vmul.f32 %v5185, %v5020
      %v5250 = vmul.f32 %v5186, %v5069
      %v5251 = vmul.f32 %v5187, %v4925
      %v5252 = vmul.f32 %v5188, %v4974
      %v5253 = vmul.f32 %v5189, %v5023
      %v5254 = vmul.f32 %v5190, %v5072
      %v5255 = vmul.f32 %v5191, %v4927
      %v5256 = vmul.f32 %v5192, %v4976
      %v5257 = vmul.f32 %v5193, %v5025
      %v5258 = vmul.f32 %v5194, %v5074
      %v5259 = vmul.f32 %v5195, %v4930
      %v5260 = vmul.f32 %v5196, %v4979
      %v5261 = vmul.f32 %v5197, %v5028
      %v5262 = vmul.f32 %v5198, %v5077
      %v5263 = vmul.f32 %v5199, %v4932
      %v5264 = vmul.f32 %v5200, %v4981
      %v5265 = vmul.f32 %v5201, %v5030
      %v5266 = vmul.f32 %v5202, %v5079
      %v5267 = vmul.f32 %v5203, %v4935
      %v5268 = vmul.f32 %v5204, %v4984
      %v5269 = vmul.f32 %v5205, %v5033
      %v5270 = vmul.f32 %v5206, %v5082
      %v5271 = vmul.f32 %v5207, %v4937
      %v5272 = vmul.f32 %v5208, %v4986
      %v5273 = vmul.f32 %v5209, %v5035
      %v5274 = vmul.f32 %v5210, %v5084
      %v5275 = vmul.f32 %v5211, %v4940
      %v5276 = vmul.f32 %v5212, %v4989
      %v5277 = vmul.f32 %v5213, %v5038
      %v5278 = vmul.f32 %v5214, %v5087
      %v5279 = vmul.f32 %v5215, %v4942
      %v5280 = vmul.f32 %v5216, %v4991
      %v5281 = vmul.f32 %v5217, %v5040
      %v5282 = vmul.f32 %v5218, %v5089
      %v5283 = vmul.f32 %v5219, %v4905
      %v5284 = vmul.f32 %v5220, %v4954
      %v5285 = vmul.f32 %v5221, %v5003
      %v5286 = vmul.f32 %v5222, %v5052
      %v5287 = vmul.f32 %v5223, %v4907
      %v5288 = vmul.f32 %v5224, %v4956
      %v5289 = vmul.f32 %v5225, %v5005
      %v5290 = vmul.f32 %v5226, %v5054
      %v5291 = vmul.f32 %v5227, %v4910
      %v5292 = vmul.f32 %v5228, %v4959
      %v5293 = vmul.f32 %v5229, %v5008
      %v5294 = vmul.f32 %v5230, %v5057
      %v5295 = vmul.f32 %v5231, %v4912
      %v5296 = vmul.f32 %v5232, %v4961
      %v5297 = vmul.f32 %v5233, %v5010
      %v5298 = vmul.f32 %v5234, %v5059
      %v5299 = vmul.f32 %v5235, %v4915
      %v5300 = vmul.f32 %v5236, %v4964
      %v5301 = vmul.f32 %v5237, %v5013
      %v5302 = vmul.f32 %v5238, %v5062
      %v5303 = vmul.f32 %v5239, %v4917
      %v5304 = vmul.f32 %v5240, %v4966
      %v5305 = vmul.f32 %v5241, %v5015
      %v5306 = vmul.f32 %v5242, %v5064
      %v5307 = vmul.f32 %v5243, %v4920
      %v5308 = vmul.f32 %v5244, %v4969
      %v5309 = vmul.f32 %v5245, %v5018
      %v5310 = vmul.f32 %v5246, %v5067
      %v5311 = vmul.f32 %v5247, %v4922
      %v5312 = vmul.f32 %v5248, %v4971
      %v5313 = vmul.f32 %v5249, %v5020
      %v5314 = vmul.f32 %v5250, %v5069
      %v5315 = vmul.f32 %v5251, %v4925
      %v5316 = vmul.f32 %v5252, %v4974
      %v5317 = vmul.f32 %v5253, %v5023
      %v5318 = vmul.f32 %v5254, %v5072
      %v5319 = vmul.f32 %v5255, %v4927
      %v5320 = vmul.f32 %v5256, %v4976
      %v5321 = vmul.f32 %v5257, %v5025
      %v5322 = vmul.f32 %v5258, %v5074
      %v5323 = vmul.f32 %v5259, %v4930
      %v5324 = vmul.f32 %v5260, %v4979
      %v5325 = vmul.f32 %v5261, %v5028
      %v5326 = vmul.f32 %v5262, %v5077
      %v5327 = vmul.f32 %v5263, %v4932
      %v5328 = vmul.f32 %v5264, %v4981
      %v5329 = vmul.f32 %v5265, %v5030
      %v5330 = vmul.f32 %v5266, %v5079
      %v5331 = vmul.f32 %v5267, %v4935
      %v5332 = vmul.f32 %v5268, %v4984
      %v5333 = vmul.f32 %v5269, %v5033
      %v5334 = vmul.f32 %v5270, %v5082
      %v5335 = vmul.f32 %v5271, %v4937
      %v5336 = vmul.f32 %v5272, %v4986
      %v5337 = vmul.f32 %v5273, %v5035
      %v5338 = vmul.f32 %v5274, %v5084
      %v5339 = vmul.f32 %v5275, %v4940
      %v5340 = vmul.f32 %v5276, %v4989
      %v5341 = vmul.f32 %v5277, %v5038
      %v5342 = vmul.f32 %v5278, %v5087
      %v5343 = vmul.f32 %v5279, %v4942
      %v5344 = vmul.f32 %v5280, %v4991
      %v5345 = vmul.f32 %v5281, %v5040
      %v5346 = vmul.f32 %v5282, %v5089
      %v5347 = vadd.f32 %v4905, %v5283
      %v5348 = vadd.f32 %v4954, %v5284
      %v5349 = vadd.f32 %v5003, %v5285
      %v5350 = vadd.f32 %v5052, %v5286
      %v5351 = vadd.f32 %v4907, %v5287
      %v5352 = vadd.f32 %v4956, %v5288
      %v5353 = vadd.f32 %v5005, %v5289
      %v5354 = vadd.f32 %v5054, %v5290
      %v5355 = vadd.f32 %v4910, %v5291
      %v5356 = vadd.f32 %v4959, %v5292
      %v5357 = vadd.f32 %v5008, %v5293
      %v5358 = vadd.f32 %v5057, %v5294
      %v5359 = vadd.f32 %v4912, %v5295
      %v5360 = vadd.f32 %v4961, %v5296
      %v5361 = vadd.f32 %v5010, %v5297
      %v5362 = vadd.f32 %v5059, %v5298
      %v5363 = vadd.f32 %v4915, %v5299
      %v5364 = vadd.f32 %v4964, %v5300
      %v5365 = vadd.f32 %v5013, %v5301
      %v5366 = vadd.f32 %v5062, %v5302
      %v5367 = vadd.f32 %v4917, %v5303
      %v5368 = vadd.f32 %v4966, %v5304
      %v5369 = vadd.f32 %v5015, %v5305
      %v5370 = vadd.f32 %v5064, %v5306
      %v5371 = vadd.f32 %v4920, %v5307
      %v5372 = vadd.f32 %v4969, %v5308
      %v5373 = vadd.f32 %v5018, %v5309
      %v5374 = vadd.f32 %v5067, %v5310
      %v5375 = vadd.f32 %v4922, %v5311
      %v5376 = vadd.f32 %v4971, %v5312
      %v5377 = vadd.f32 %v5020, %v5313
      %v5378 = vadd.f32 %v5069, %v5314
      %v5379 = vadd.f32 %v4925, %v5315
      %v5380 = vadd.f32 %v4974, %v5316
      %v5381 = vadd.f32 %v5023, %v5317
      %v5382 = vadd.f32 %v5072, %v5318
      %v5383 = vadd.f32 %v4927, %v5319
      %v5384 = vadd.f32 %v4976, %v5320
      %v5385 = vadd.f32 %v5025, %v5321
      %v5386 = vadd.f32 %v5074, %v5322
      %v5387 = vadd.f32 %v4930, %v5323
      %v5388 = vadd.f32 %v4979, %v5324
      %v5389 = vadd.f32 %v5028, %v5325
      %v5390 = vadd.f32 %v5077, %v5326
      %v5391 = vadd.f32 %v4932, %v5327
      %v5392 = vadd.f32 %v4981, %v5328
      %v5393 = vadd.f32 %v5030, %v5329
      %v5394 = vadd.f32 %v5079, %v5330
      %v5395 = vadd.f32 %v4935, %v5331
      %v5396 = vadd.f32 %v4984, %v5332
      %v5397 = vadd.f32 %v5033, %v5333
      %v5398 = vadd.f32 %v5082, %v5334
      %v5399 = vadd.f32 %v4937, %v5335
      %v5400 = vadd.f32 %v4986, %v5336
      %v5401 = vadd.f32 %v5035, %v5337
      %v5402 = vadd.f32 %v5084, %v5338
      %v5403 = vadd.f32 %v4940, %v5339
      %v5404 = vadd.f32 %v4989, %v5340
      %v5405 = vadd.f32 %v5038, %v5341
      %v5406 = vadd.f32 %v5087, %v5342
      %v5407 = vadd.f32 %v4942, %v5343
      %v5408 = vadd.f32 %v4991, %v5344
      %v5409 = vadd.f32 %v5040, %v5345
      %v5410 = vadd.f32 %v5089, %v5346
      %v5411 = vmul.f32 %v5347, 0.7978846
      %v5412 = vmul.f32 %v5348, 0.7978846
      %v5413 = vmul.f32 %v5349, 0.7978846
      %v5414 = vmul.f32 %v5350, 0.7978846
      %v5415 = vmul.f32 %v5351, 0.7978846
      %v5416 = vmul.f32 %v5352, 0.7978846
      %v5417 = vmul.f32 %v5353, 0.7978846
      %v5418 = vmul.f32 %v5354, 0.7978846
      %v5419 = vmul.f32 %v5355, 0.7978846
      %v5420 = vmul.f32 %v5356, 0.7978846
      %v5421 = vmul.f32 %v5357, 0.7978846
      %v5422 = vmul.f32 %v5358, 0.7978846
      %v5423 = vmul.f32 %v5359, 0.7978846
      %v5424 = vmul.f32 %v5360, 0.7978846
      %v5425 = vmul.f32 %v5361, 0.7978846
      %v5426 = vmul.f32 %v5362, 0.7978846
      %v5427 = vmul.f32 %v5363, 0.7978846
      %v5428 = vmul.f32 %v5364, 0.7978846
      %v5429 = vmul.f32 %v5365, 0.7978846
      %v5430 = vmul.f32 %v5366, 0.7978846
      %v5431 = vmul.f32 %v5367, 0.7978846
      %v5432 = vmul.f32 %v5368, 0.7978846
      %v5433 = vmul.f32 %v5369, 0.7978846
      %v5434 = vmul.f32 %v5370, 0.7978846
      %v5435 = vmul.f32 %v5371, 0.7978846
      %v5436 = vmul.f32 %v5372, 0.7978846
      %v5437 = vmul.f32 %v5373, 0.7978846
      %v5438 = vmul.f32 %v5374, 0.7978846
      %v5439 = vmul.f32 %v5375, 0.7978846
      %v5440 = vmul.f32 %v5376, 0.7978846
      %v5441 = vmul.f32 %v5377, 0.7978846
      %v5442 = vmul.f32 %v5378, 0.7978846
      %v5443 = vmul.f32 %v5379, 0.7978846
      %v5444 = vmul.f32 %v5380, 0.7978846
      %v5445 = vmul.f32 %v5381, 0.7978846
      %v5446 = vmul.f32 %v5382, 0.7978846
      %v5447 = vmul.f32 %v5383, 0.7978846
      %v5448 = vmul.f32 %v5384, 0.7978846
      %v5449 = vmul.f32 %v5385, 0.7978846
      %v5450 = vmul.f32 %v5386, 0.7978846
      %v5451 = vmul.f32 %v5387, 0.7978846
      %v5452 = vmul.f32 %v5388, 0.7978846
      %v5453 = vmul.f32 %v5389, 0.7978846
      %v5454 = vmul.f32 %v5390, 0.7978846
      %v5455 = vmul.f32 %v5391, 0.7978846
      %v5456 = vmul.f32 %v5392, 0.7978846
      %v5457 = vmul.f32 %v5393, 0.7978846
      %v5458 = vmul.f32 %v5394, 0.7978846
      %v5459 = vmul.f32 %v5395, 0.7978846
      %v5460 = vmul.f32 %v5396, 0.7978846
      %v5461 = vmul.f32 %v5397, 0.7978846
      %v5462 = vmul.f32 %v5398, 0.7978846
      %v5463 = vmul.f32 %v5399, 0.7978846
      %v5464 = vmul.f32 %v5400, 0.7978846
      %v5465 = vmul.f32 %v5401, 0.7978846
      %v5466 = vmul.f32 %v5402, 0.7978846
      %v5467 = vmul.f32 %v5403, 0.7978846
      %v5468 = vmul.f32 %v5404, 0.7978846
      %v5469 = vmul.f32 %v5405, 0.7978846
      %v5470 = vmul.f32 %v5406, 0.7978846
      %v5471 = vmul.f32 %v5407, 0.7978846
      %v5472 = vmul.f32 %v5408, 0.7978846
      %v5473 = vmul.f32 %v5409, 0.7978846
      %v5474 = vmul.f32 %v5410, 0.7978846
      %v5475 = vtanh.pop %v5411
      %v5476 = vtanh.pop %v5412
      %v5477 = vtanh.pop %v5413
      %v5478 = vtanh.pop %v5414
      %v5479 = vtanh.pop %v5415
      %v5480 = vtanh.pop %v5416
      %v5481 = vtanh.pop %v5417
      %v5482 = vtanh.pop %v5418
      %v5483 = vtanh.pop %v5419
      %v5484 = vtanh.pop %v5420
      %v5485 = vtanh.pop %v5421
      %v5486 = vtanh.pop %v5422
      %v5487 = vtanh.pop %v5423
      %v5488 = vtanh.pop %v5424
      %v5489 = vtanh.pop %v5425
      %v5490 = vtanh.pop %v5426
      %v5491 = vtanh.pop %v5427
      %v5492 = vtanh.pop %v5428
      %v5493 = vtanh.pop %v5429
      %v5494 = vtanh.pop %v5430
      %v5495 = vtanh.pop %v5431
      %v5496 = vtanh.pop %v5432
      %v5497 = vtanh.pop %v5433
      %v5498 = vtanh.pop %v5434
      %v5499 = vtanh.pop %v5435
      %v5500 = vtanh.pop %v5436
      %v5501 = vtanh.pop %v5437
      %v5502 = vtanh.pop %v5438
      %v5503 = vtanh.pop %v5439
      %v5504 = vtanh.pop %v5440
      %v5505 = vtanh.pop %v5441
      %v5506 = vtanh.pop %v5442
      %v5507 = vtanh.pop %v5443
      %v5508 = vtanh.pop %v5444
      %v5509 = vtanh.pop %v5445
      %v5510 = vtanh.pop %v5446
      %v5511 = vtanh.pop %v5447
      %v5512 = vtanh.pop %v5448
      %v5513 = vtanh.pop %v5449
      %v5514 = vtanh.pop %v5450
      %v5515 = vtanh.pop %v5451
      %v5516 = vtanh.pop %v5452
      %v5517 = vtanh.pop %v5453
      %v5518 = vtanh.pop %v5454
      %v5519 = vtanh.pop %v5455
      %v5520 = vtanh.pop %v5456
      %v5521 = vtanh.pop %v5457
      %v5522 = vtanh.pop %v5458
      %v5523 = vtanh.pop %v5459
      %v5524 = vtanh.pop %v5460
      %v5525 = vtanh.pop %v5461
      %v5526 = vtanh.pop %v5462
      %v5527 = vtanh.pop %v5463
      %v5528 = vtanh.pop %v5464
      %v5529 = vtanh.pop %v5465
      %v5530 = vtanh.pop %v5466
      %v5531 = vtanh.pop %v5467
      %v5532 = vtanh.pop %v5468
      %v5533 = vtanh.pop %v5469
      %v5534 = vtanh.pop %v5470
      %v5535 = vtanh.pop %v5471
      %v5536 = vtanh.pop %v5472
      %v5537 = vtanh.pop %v5473
      %v5538 = vtanh.pop %v5474
      %v5539 = vadd.f32 %v5475, 1.0
      %v5540 = vadd.f32 %v5476, 1.0
      %v5541 = vadd.f32 %v5477, 1.0
      %v5542 = vadd.f32 %v5478, 1.0
      %v5543 = vadd.f32 %v5479, 1.0
      %v5544 = vadd.f32 %v5480, 1.0
      %v5545 = vadd.f32 %v5481, 1.0
      %v5546 = vadd.f32 %v5482, 1.0
      %v5547 = vadd.f32 %v5483, 1.0
      %v5548 = vadd.f32 %v5484, 1.0
      %v5549 = vadd.f32 %v5485, 1.0
      %v5550 = vadd.f32 %v5486, 1.0
      %v5551 = vadd.f32 %v5487, 1.0
      %v5552 = vadd.f32 %v5488, 1.0
      %v5553 = vadd.f32 %v5489, 1.0
      %v5554 = vadd.f32 %v5490, 1.0
      %v5555 = vadd.f32 %v5491, 1.0
      %v5556 = vadd.f32 %v5492, 1.0
      %v5557 = vadd.f32 %v5493, 1.0
      %v5558 = vadd.f32 %v5494, 1.0
      %v5559 = vadd.f32 %v5495, 1.0
      %v5560 = vadd.f32 %v5496, 1.0
      %v5561 = vadd.f32 %v5497, 1.0
      %v5562 = vadd.f32 %v5498, 1.0
      %v5563 = vadd.f32 %v5499, 1.0
      %v5564 = vadd.f32 %v5500, 1.0
      %v5565 = vadd.f32 %v5501, 1.0
      %v5566 = vadd.f32 %v5502, 1.0
      %v5567 = vadd.f32 %v5503, 1.0
      %v5568 = vadd.f32 %v5504, 1.0
      %v5569 = vadd.f32 %v5505, 1.0
      %v5570 = vadd.f32 %v5506, 1.0
      %v5571 = vadd.f32 %v5507, 1.0
      %v5572 = vadd.f32 %v5508, 1.0
      %v5573 = vadd.f32 %v5509, 1.0
      %v5574 = vadd.f32 %v5510, 1.0
      %v5575 = vadd.f32 %v5511, 1.0
      %v5576 = vadd.f32 %v5512, 1.0
      %v5577 = vadd.f32 %v5513, 1.0
      %v5578 = vadd.f32 %v5514, 1.0
      %v5579 = vadd.f32 %v5515, 1.0
      %v5580 = vadd.f32 %v5516, 1.0
      %v5581 = vadd.f32 %v5517, 1.0
      %v5582 = vadd.f32 %v5518, 1.0
      %v5583 = vadd.f32 %v5519, 1.0
      %v5584 = vadd.f32 %v5520, 1.0
      %v5585 = vadd.f32 %v5521, 1.0
      %v5586 = vadd.f32 %v5522, 1.0
      %v5587 = vadd.f32 %v5523, 1.0
      %v5588 = vadd.f32 %v5524, 1.0
      %v5589 = vadd.f32 %v5525, 1.0
      %v5590 = vadd.f32 %v5526, 1.0
      %v5591 = vadd.f32 %v5527, 1.0
      %v5592 = vadd.f32 %v5528, 1.0
      %v5593 = vadd.f32 %v5529, 1.0
      %v5594 = vadd.f32 %v5530, 1.0
      %v5595 = vadd.f32 %v5531, 1.0
      %v5596 = vadd.f32 %v5532, 1.0
      %v5597 = vadd.f32 %v5533, 1.0
      %v5598 = vadd.f32 %v5534, 1.0
      %v5599 = vadd.f32 %v5535, 1.0
      %v5600 = vadd.f32 %v5536, 1.0
      %v5601 = vadd.f32 %v5537, 1.0
      %v5602 = vadd.f32 %v5538, 1.0
      %v5603 = vmul.f32 %v5091, %v5539
      %v5604 = vmul.f32 %v5092, %v5540
      %v5605 = vmul.f32 %v5093, %v5541
      %v5606 = vmul.f32 %v5094, %v5542
      %v5607 = vmul.f32 %v5095, %v5543
      %v5608 = vmul.f32 %v5096, %v5544
      %v5609 = vmul.f32 %v5097, %v5545
      %v5610 = vmul.f32 %v5098, %v5546
      %v5611 = vmul.f32 %v5099, %v5547
      %v5612 = vmul.f32 %v5100, %v5548
      %v5613 = vmul.f32 %v5101, %v5549
      %v5614 = vmul.f32 %v5102, %v5550
      %v5615 = vmul.f32 %v5103, %v5551
      %v5616 = vmul.f32 %v5104, %v5552
      %v5617 = vmul.f32 %v5105, %v5553
      %v5618 = vmul.f32 %v5106, %v5554
      %v5619 = vmul.f32 %v5107, %v5555
      %v5620 = vmul.f32 %v5108, %v5556
      %v5621 = vmul.f32 %v5109, %v5557
      %v5622 = vmul.f32 %v5110, %v5558
      %v5623 = vmul.f32 %v5111, %v5559
      %v5624 = vmul.f32 %v5112, %v5560
      %v5625 = vmul.f32 %v5113, %v5561
      %v5626 = vmul.f32 %v5114, %v5562
      %v5627 = vmul.f32 %v5115, %v5563
      %v5628 = vmul.f32 %v5116, %v5564
      %v5629 = vmul.f32 %v5117, %v5565
      %v5630 = vmul.f32 %v5118, %v5566
      %v5631 = vmul.f32 %v5119, %v5567
      %v5632 = vmul.f32 %v5120, %v5568
      %v5633 = vmul.f32 %v5121, %v5569
      %v5634 = vmul.f32 %v5122, %v5570
      %v5635 = vmul.f32 %v5123, %v5571
      %v5636 = vmul.f32 %v5124, %v5572
      %v5637 = vmul.f32 %v5125, %v5573
      %v5638 = vmul.f32 %v5126, %v5574
      %v5639 = vmul.f32 %v5127, %v5575
      %v5640 = vmul.f32 %v5128, %v5576
      %v5641 = vmul.f32 %v5129, %v5577
      %v5642 = vmul.f32 %v5130, %v5578
      %v5643 = vmul.f32 %v5131, %v5579
      %v5644 = vmul.f32 %v5132, %v5580
      %v5645 = vmul.f32 %v5133, %v5581
      %v5646 = vmul.f32 %v5134, %v5582
      %v5647 = vmul.f32 %v5135, %v5583
      %v5648 = vmul.f32 %v5136, %v5584
      %v5649 = vmul.f32 %v5137, %v5585
      %v5650 = vmul.f32 %v5138, %v5586
      %v5651 = vmul.f32 %v5139, %v5587
      %v5652 = vmul.f32 %v5140, %v5588
      %v5653 = vmul.f32 %v5141, %v5589
      %v5654 = vmul.f32 %v5142, %v5590
      %v5655 = vmul.f32 %v5143, %v5591
      %v5656 = vmul.f32 %v5144, %v5592
      %v5657 = vmul.f32 %v5145, %v5593
      %v5658 = vmul.f32 %v5146, %v5594
      %v5659 = vmul.f32 %v5147, %v5595
      %v5660 = vmul.f32 %v5148, %v5596
      %v5661 = vmul.f32 %v5149, %v5597
      %v5662 = vmul.f32 %v5150, %v5598
      %v5663 = vmul.f32 %v5151, %v5599
      %v5664 = vmul.f32 %v5152, %v5600
      %v5665 = vmul.f32 %v5153, %v5601
      %v5666 = vmul.f32 %v5154, %v5602
      %v5667 = vpack.c.bf16 %v5607, %v5603
      %v5668 = vpack.c.bf16 %v5608, %v5604
      %v5669 = vpack.c.bf16 %v5609, %v5605
      %v5670 = vpack.c.bf16 %v5610, %v5606
      %v5671 = vpack.c.bf16 %v5615, %v5611
      %v5672 = vpack.c.bf16 %v5616, %v5612
      %v5673 = vpack.c.bf16 %v5617, %v5613
      %v5674 = vpack.c.bf16 %v5618, %v5614
      %v5675 = vpack.c.bf16 %v5623, %v5619
      %v5676 = vpack.c.bf16 %v5624, %v5620
      %v5677 = vpack.c.bf16 %v5625, %v5621
      %v5678 = vpack.c.bf16 %v5626, %v5622
      %v5679 = vpack.c.bf16 %v5631, %v5627
      %v5680 = vpack.c.bf16 %v5632, %v5628
      %v5681 = vpack.c.bf16 %v5633, %v5629
      %v5682 = vpack.c.bf16 %v5634, %v5630
      %v5683 = vpack.c.bf16 %v5639, %v5635
      %v5684 = vpack.c.bf16 %v5640, %v5636
      %v5685 = vpack.c.bf16 %v5641, %v5637
      %v5686 = vpack.c.bf16 %v5642, %v5638
      %v5687 = vpack.c.bf16 %v5647, %v5643
      %v5688 = vpack.c.bf16 %v5648, %v5644
      %v5689 = vpack.c.bf16 %v5649, %v5645
      %v5690 = vpack.c.bf16 %v5650, %v5646
      %v5691 = vpack.c.bf16 %v5655, %v5651
      %v5692 = vpack.c.bf16 %v5656, %v5652
      %v5693 = vpack.c.bf16 %v5657, %v5653
      %v5694 = vpack.c.bf16 %v5658, %v5654
      %v5695 = vpack.c.bf16 %v5663, %v5659
      %v5696 = vpack.c.bf16 %v5664, %v5660
      %v5697 = vpack.c.bf16 %v5665, %v5661
      %v5698 = vpack.c.bf16 %v5666, %v5662
      %v5699 = vld [vmem:[%s662] sm:$0xf]
      %v5700 = vld [vmem:[%s662 + $0x4] sm:$0xf]
      %v5701 = vld [vmem:[%s662 + $0x8] sm:$0xf]
      %v5702 = vld [vmem:[%s662 + $0xc] sm:$0xf]
      %v5703 = vld [vmem:[%s662 + $0x10] sm:$0xf]
      %v5704 = vld [vmem:[%s662 + $0x14] sm:$0xf]
      %v5705 = vld [vmem:[%s662 + $0x18] sm:$0xf]
      %v5706 = vld [vmem:[%s662 + $0x1c] sm:$0xf]
      %v5707 = vld [vmem:[%s662 + $0x20] sm:$0xf]
      %v5708 = vld [vmem:[%s662 + $0x24] sm:$0xf]
      %v5709 = vld [vmem:[%s662 + $0x28] sm:$0xf]
      %v5710 = vld [vmem:[%s662 + $0x2c] sm:$0xf]
      %v5711 = vld [vmem:[%s662 + $0x30] sm:$0xf]
      %v5712 = vld [vmem:[%s662 + $0x34] sm:$0xf]
      %v5713 = vld [vmem:[%s662 + $0x38] sm:$0xf]
      %v5714 = vld [vmem:[%s662 + $0x3c] sm:$0xf]
      %v5715 = vld [vmem:[%s662 + $0x40] sm:$0xf]
      %v5716 = vld [vmem:[%s662 + $0x44] sm:$0xf]
      %v5717 = vld [vmem:[%s662 + $0x48] sm:$0xf]
      %v5718 = vld [vmem:[%s662 + $0x4c] sm:$0xf]
      %v5719 = vld [vmem:[%s662 + $0x50] sm:$0xf]
      %v5720 = vld [vmem:[%s662 + $0x54] sm:$0xf]
      %v5721 = vld [vmem:[%s662 + $0x58] sm:$0xf]
      %v5722 = vld [vmem:[%s662 + $0x5c] sm:$0xf]
      %v5723 = vld [vmem:[%s662 + $0x60] sm:$0xf]
      %v5724 = vld [vmem:[%s662 + $0x64] sm:$0xf]
      %v5725 = vld [vmem:[%s662 + $0x68] sm:$0xf]
      %v5726 = vld [vmem:[%s662 + $0x6c] sm:$0xf]
      %v5727 = vld [vmem:[%s662 + $0x70] sm:$0xf]
      %v5728 = vld [vmem:[%s662 + $0x74] sm:$0xf]
      %v5729 = vld [vmem:[%s662 + $0x78] sm:$0xf]
      %v5730 = vld [vmem:[%s662 + $0x7c] sm:$0xf]
      %v5731 = vld [vmem:[%s662 + $0x80] sm:$0xf]
      %v5732 = vld [vmem:[%s662 + $0x84] sm:$0xf]
      %v5733 = vld [vmem:[%s662 + $0x88] sm:$0xf]
      %v5734 = vld [vmem:[%s662 + $0x8c] sm:$0xf]
      %v5735 = vld [vmem:[%s662 + $0x90] sm:$0xf]
      %v5736 = vld [vmem:[%s662 + $0x94] sm:$0xf]
      %v5737 = vld [vmem:[%s662 + $0x98] sm:$0xf]
      %v5738 = vld [vmem:[%s662 + $0x9c] sm:$0xf]
      %v5739 = vld [vmem:[%s662 + $0xa0] sm:$0xf]
      %v5740 = vld [vmem:[%s662 + $0xa4] sm:$0xf]
      %v5741 = vld [vmem:[%s662 + $0xa8] sm:$0xf]
      %v5742 = vld [vmem:[%s662 + $0xac] sm:$0xf]
      %v5743 = vld [vmem:[%s662 + $0xb0] sm:$0xf]
      %v5744 = vld [vmem:[%s662 + $0xb4] sm:$0xf]
      %v5745 = vld [vmem:[%s662 + $0xb8] sm:$0xf]
      %v5746 = vld [vmem:[%s662 + $0xbc] sm:$0xf]
      %v5747 = vld [vmem:[%s662 + $0xc0] sm:$0xf]
      %v5748 = vld [vmem:[%s662 + $0xc4] sm:$0xf]
      %v5749 = vld [vmem:[%s662 + $0xc8] sm:$0xf]
      %v5750 = vld [vmem:[%s662 + $0xcc] sm:$0xf]
      %v5751 = vld [vmem:[%s662 + $0xd0] sm:$0xf]
      %v5752 = vld [vmem:[%s662 + $0xd4] sm:$0xf]
      %v5753 = vld [vmem:[%s662 + $0xd8] sm:$0xf]
      %v5754 = vld [vmem:[%s662 + $0xdc] sm:$0xf]
      %v5755 = vld [vmem:[%s662 + $0xe0] sm:$0xf]
      %v5756 = vld [vmem:[%s662 + $0xe4] sm:$0xf]
      %v5757 = vld [vmem:[%s662 + $0xe8] sm:$0xf]
      %v5758 = vld [vmem:[%s662 + $0xec] sm:$0xf]
      %v5759 = vld [vmem:[%s662 + $0xf0] sm:$0xf]
      %v5760 = vld [vmem:[%s662 + $0xf4] sm:$0xf]
      %v5761 = vld [vmem:[%s662 + $0xf8] sm:$0xf]
      %v5762 = vld [vmem:[%s662 + $0xfc] sm:$0xf]
      %v5763 = vld [vmem:[%s665] sm:$0x1]
      %v5765 = vperm.slane %v5763, 0
      %v5831 = vunpack.c.l.b16 %v5699
      %v5832 = vunpack.c.l.b16 %v5700
      %v5833 = vunpack.c.l.b16 %v5701
      %v5834 = vunpack.c.l.b16 %v5702
      %v5835 = vunpack.c.l.b16 %v5703
      %v5836 = vunpack.c.l.b16 %v5704
      %v5837 = vunpack.c.l.b16 %v5705
      %v5838 = vunpack.c.l.b16 %v5706
      %v5839 = vunpack.c.l.b16 %v5707
      %v5840 = vunpack.c.l.b16 %v5708
      %v5841 = vunpack.c.l.b16 %v5709
      %v5842 = vunpack.c.l.b16 %v5710
      %v5843 = vunpack.c.l.b16 %v5711
      %v5844 = vunpack.c.l.b16 %v5712
      %v5845 = vunpack.c.l.b16 %v5713
      %v5846 = vunpack.c.l.b16 %v5714
      %v5847 = vunpack.c.l.b16 %v5715
      %v5848 = vunpack.c.l.b16 %v5716
      %v5849 = vunpack.c.l.b16 %v5717
      %v5850 = vunpack.c.l.b16 %v5718
      %v5851 = vunpack.c.l.b16 %v5719
      %v5852 = vunpack.c.l.b16 %v5720
      %v5853 = vunpack.c.l.b16 %v5721
      %v5854 = vunpack.c.l.b16 %v5722
      %v5855 = vunpack.c.l.b16 %v5723
      %v5856 = vunpack.c.l.b16 %v5724
      %v5857 = vunpack.c.l.b16 %v5725
      %v5858 = vunpack.c.l.b16 %v5726
      %v5859 = vunpack.c.l.b16 %v5727
      %v5860 = vunpack.c.l.b16 %v5728
      %v5861 = vunpack.c.l.b16 %v5729
      %v5862 = vunpack.c.l.b16 %v5730
      %v5863 = vunpack.c.l.b16 %v5731
      %v5864 = vunpack.c.l.b16 %v5732
      %v5865 = vunpack.c.l.b16 %v5733
      %v5866 = vunpack.c.l.b16 %v5734
      %v5867 = vunpack.c.l.b16 %v5735
      %v5868 = vunpack.c.l.b16 %v5736
      %v5869 = vunpack.c.l.b16 %v5737
      %v5870 = vunpack.c.l.b16 %v5738
      %v5871 = vunpack.c.l.b16 %v5739
      %v5872 = vunpack.c.l.b16 %v5740
      %v5873 = vunpack.c.l.b16 %v5741
      %v5874 = vunpack.c.l.b16 %v5742
      %v5875 = vunpack.c.l.b16 %v5743
      %v5876 = vunpack.c.l.b16 %v5744
      %v5877 = vunpack.c.l.b16 %v5745
      %v5878 = vunpack.c.l.b16 %v5746
      %v5879 = vunpack.c.l.b16 %v5747
      %v5880 = vunpack.c.l.b16 %v5748
      %v5881 = vunpack.c.l.b16 %v5749
      %v5882 = vunpack.c.l.b16 %v5750
      %v5883 = vunpack.c.l.b16 %v5751
      %v5884 = vunpack.c.l.b16 %v5752
      %v5885 = vunpack.c.l.b16 %v5753
      %v5886 = vunpack.c.l.b16 %v5754
      %v5887 = vunpack.c.l.b16 %v5755
      %v5888 = vunpack.c.l.b16 %v5756
      %v5889 = vunpack.c.l.b16 %v5757
      %v5890 = vunpack.c.l.b16 %v5758
      %v5891 = vunpack.c.l.b16 %v5759
      %v5892 = vunpack.c.l.b16 %v5760
      %v5893 = vunpack.c.l.b16 %v5761
      %v5894 = vunpack.c.l.b16 %v5762
      %v5895 = vpack.c.b16 %v5832, %v5831
      %v5896 = vpack.c.b16 %v5834, %v5833
      %v5897 = vpack.c.b16 %v5836, %v5835
      %v5898 = vpack.c.b16 %v5838, %v5837
      %v5899 = vpack.c.b16 %v5840, %v5839
      %v5900 = vpack.c.b16 %v5842, %v5841
      %v5901 = vpack.c.b16 %v5844, %v5843
      %v5902 = vpack.c.b16 %v5846, %v5845
      %v5903 = vpack.c.b16 %v5848, %v5847
      %v5904 = vpack.c.b16 %v5850, %v5849
      %v5905 = vpack.c.b16 %v5852, %v5851
      %v5906 = vpack.c.b16 %v5854, %v5853
      %v5907 = vpack.c.b16 %v5856, %v5855
      %v5908 = vpack.c.b16 %v5858, %v5857
      %v5909 = vpack.c.b16 %v5860, %v5859
      %v5910 = vpack.c.b16 %v5862, %v5861
      %v5911 = vpack.c.b16 %v5864, %v5863
      %v5912 = vpack.c.b16 %v5866, %v5865
      %v5913 = vpack.c.b16 %v5868, %v5867
      %v5914 = vpack.c.b16 %v5870, %v5869
      %v5915 = vpack.c.b16 %v5872, %v5871
      %v5916 = vpack.c.b16 %v5874, %v5873
      %v5917 = vpack.c.b16 %v5876, %v5875
      %v5918 = vpack.c.b16 %v5878, %v5877
      %v5919 = vpack.c.b16 %v5880, %v5879
      %v5920 = vpack.c.b16 %v5882, %v5881
      %v5921 = vpack.c.b16 %v5884, %v5883
      %v5922 = vpack.c.b16 %v5886, %v5885
      %v5923 = vpack.c.b16 %v5888, %v5887
      %v5924 = vpack.c.b16 %v5890, %v5889
      %v5925 = vpack.c.b16 %v5892, %v5891
      %v5926 = vpack.c.b16 %v5894, %v5893
      %5959 = vmatpush.bf16.msra.mxu0 %v5902
      %5960 = vmatpush.bf16.msra.mxu0 %v5901
      %5961 = vmatpush.bf16.msra.mxu0 %v5900
      %5962 = vmatpush.bf16.msra.mxu0 %v5899
      %5963 = vmatpush.bf16.msra.mxu0 %v5898
      %5964 = vmatpush.bf16.msra.mxu0 %v5897
      %5965 = vmatpush.bf16.msra.mxu0 %v5896
      %5966 = vmatpush.bf16.msra.mxu0 %v5895
      %5967 = vmatmul.bf16.gmra.mxu0 %v5667
      %v5968 = vpop.f32.mrf.mxu0
      %v5969 = vadd.f32 %v5765, %v5968
      %v5970 = vpop.f32.mrf.mxu0
      %v5971 = vadd.f32 %v5765, %v5970
      %5972 = vmatmul.bf16.gmra.mxu0 %v5671
      %v5973 = vpop.f32.mrf.mxu0
      %v5974 = vadd.f32 %v5765, %v5973
      %v5975 = vpop.f32.mrf.mxu0
      %v5976 = vadd.f32 %v5765, %v5975
      %5977 = vmatmul.bf16.gmra.mxu0 %v5675
      %v5978 = vpop.f32.mrf.mxu0
      %v5979 = vadd.f32 %v5765, %v5978
      %v5980 = vpop.f32.mrf.mxu0
      %v5981 = vadd.f32 %v5765, %v5980
      %5982 = vmatmul.bf16.gmra.mxu0 %v5679
      %v5983 = vpop.f32.mrf.mxu0
      %v5984 = vadd.f32 %v5765, %v5983
      %v5985 = vpop.f32.mrf.mxu0
      %v5986 = vadd.f32 %v5765, %v5985
      %5987 = vmatmul.bf16.gmra.mxu0 %v5683
      %v5988 = vpop.f32.mrf.mxu0
      %v5989 = vadd.f32 %v5765, %v5988
      %v5990 = vpop.f32.mrf.mxu0
      %v5991 = vadd.f32 %v5765, %v5990
      %5992 = vmatmul.bf16.gmra.mxu0 %v5687
      %v5993 = vpop.f32.mrf.mxu0
      %v5994 = vadd.f32 %v5765, %v5993
      %v5995 = vpop.f32.mrf.mxu0
      %v5996 = vadd.f32 %v5765, %v5995
      %5997 = vmatmul.bf16.gmra.mxu0 %v5691
      %v5998 = vpop.f32.mrf.mxu0
      %v5999 = vadd.f32 %v5765, %v5998
      %v6000 = vpop.f32.mrf.mxu0
      %v6001 = vadd.f32 %v5765, %v6000
      %6002 = vmatmul.bf16.gmra.mxu0 %v5695
      %v6003 = vpop.f32.mrf.mxu0
      %v6004 = vadd.f32 %v5765, %v6003
      %v6005 = vpop.f32.mrf.mxu0
      %v6006 = vadd.f32 %v5765, %v6005
      %6007 = vdwg.mxu0
      %6008 = vmatpush.bf16.msra.mxu0 %v5910
      %6009 = vmatpush.bf16.msra.mxu0 %v5909
      %6010 = vmatpush.bf16.msra.mxu0 %v5908
      %6011 = vmatpush.bf16.msra.mxu0 %v5907
      %6012 = vmatpush.bf16.msra.mxu0 %v5906
      %6013 = vmatpush.bf16.msra.mxu0 %v5905
      %6014 = vmatpush.bf16.msra.mxu0 %v5904
      %6015 = vmatpush.bf16.msra.mxu0 %v5903
      %6016 = vmatmul.bf16.gmra.mxu0 %v5668
      %v6017 = vpop.f32.mrf.mxu0
      %v6018 = vadd.f32 %v5969, %v6017
      %v6019 = vpop.f32.mrf.mxu0
      %v6020 = vadd.f32 %v5971, %v6019
      %6021 = vmatmul.bf16.gmra.mxu0 %v5672
      %v6022 = vpop.f32.mrf.mxu0
      %v6023 = vadd.f32 %v5974, %v6022
      %v6024 = vpop.f32.mrf.mxu0
      %v6025 = vadd.f32 %v5976, %v6024
      %6026 = vmatmul.bf16.gmra.mxu0 %v5676
      %v6027 = vpop.f32.mrf.mxu0
      %v6028 = vadd.f32 %v5979, %v6027
      %v6029 = vpop.f32.mrf.mxu0
      %v6030 = vadd.f32 %v5981, %v6029
      %6031 = vmatmul.bf16.gmra.mxu0 %v5680
      %v6032 = vpop.f32.mrf.mxu0
      %v6033 = vadd.f32 %v5984, %v6032
      %v6034 = vpop.f32.mrf.mxu0
      %v6035 = vadd.f32 %v5986, %v6034
      %6036 = vmatmul.bf16.gmra.mxu0 %v5684
      %v6037 = vpop.f32.mrf.mxu0
      %v6038 = vadd.f32 %v5989, %v6037
      %v6039 = vpop.f32.mrf.mxu0
      %v6040 = vadd.f32 %v5991, %v6039
      %6041 = vmatmul.bf16.gmra.mxu0 %v5688
      %v6042 = vpop.f32.mrf.mxu0
      %v6043 = vadd.f32 %v5994, %v6042
      %v6044 = vpop.f32.mrf.mxu0
      %v6045 = vadd.f32 %v5996, %v6044
      %6046 = vmatmul.bf16.gmra.mxu0 %v5692
      %v6047 = vpop.f32.mrf.mxu0
      %v6048 = vadd.f32 %v5999, %v6047
      %v6049 = vpop.f32.mrf.mxu0
      %v6050 = vadd.f32 %v6001, %v6049
      %6051 = vmatmul.bf16.gmra.mxu0 %v5696
      %v6052 = vpop.f32.mrf.mxu0
      %v6053 = vadd.f32 %v6004, %v6052
      %v6054 = vpop.f32.mrf.mxu0
      %v6055 = vadd.f32 %v6006, %v6054
      %6056 = vdwg.mxu0
      %6057 = vmatpush.bf16.msra.mxu0 %v5918
      %6058 = vmatpush.bf16.msra.mxu0 %v5917
      %6059 = vmatpush.bf16.msra.mxu0 %v5916
      %6060 = vmatpush.bf16.msra.mxu0 %v5915
      %6061 = vmatpush.bf16.msra.mxu0 %v5914
      %6062 = vmatpush.bf16.msra.mxu0 %v5913
      %6063 = vmatpush.bf16.msra.mxu0 %v5912
      %6064 = vmatpush.bf16.msra.mxu0 %v5911
      %6065 = vmatmul.bf16.gmra.mxu0 %v5669
      %v6066 = vpop.f32.mrf.mxu0
      %v6067 = vadd.f32 %v6018, %v6066
      %v6068 = vpop.f32.mrf.mxu0
      %v6069 = vadd.f32 %v6020, %v6068
      %6070 = vmatmul.bf16.gmra.mxu0 %v5673
      %v6071 = vpop.f32.mrf.mxu0
      %v6072 = vadd.f32 %v6023, %v6071
      %v6073 = vpop.f32.mrf.mxu0
      %v6074 = vadd.f32 %v6025, %v6073
      %6075 = vmatmul.bf16.gmra.mxu0 %v5677
      %v6076 = vpop.f32.mrf.mxu0
      %v6077 = vadd.f32 %v6028, %v6076
      %v6078 = vpop.f32.mrf.mxu0
      %v6079 = vadd.f32 %v6030, %v6078
      %6080 = vmatmul.bf16.gmra.mxu0 %v5681
      %v6081 = vpop.f32.mrf.mxu0
      %v6082 = vadd.f32 %v6033, %v6081
      %v6083 = vpop.f32.mrf.mxu0
      %v6084 = vadd.f32 %v6035, %v6083
      %6085 = vmatmul.bf16.gmra.mxu0 %v5685
      %v6086 = vpop.f32.mrf.mxu0
      %v6087 = vadd.f32 %v6038, %v6086
      %v6088 = vpop.f32.mrf.mxu0
      %v6089 = vadd.f32 %v6040, %v6088
      %6090 = vmatmul.bf16.gmra.mxu0 %v5689
      %v6091 = vpop.f32.mrf.mxu0
      %v6092 = vadd.f32 %v6043, %v6091
      %v6093 = vpop.f32.mrf.mxu0
      %v6094 = vadd.f32 %v6045, %v6093
      %6095 = vmatmul.bf16.gmra.mxu0 %v5693
      %v6096 = vpop.f32.mrf.mxu0
      %v6097 = vadd.f32 %v6048, %v6096
      %v6098 = vpop.f32.mrf.mxu0
      %v6099 = vadd.f32 %v6050, %v6098
      %6100 = vmatmul.bf16.gmra.mxu0 %v5697
      %v6101 = vpop.f32.mrf.mxu0
      %v6102 = vadd.f32 %v6053, %v6101
      %v6103 = vpop.f32.mrf.mxu0
      %v6104 = vadd.f32 %v6055, %v6103
      %6105 = vdwg.mxu0
      %6106 = vmatpush.bf16.msra.mxu0 %v5926
      %6107 = vmatpush.bf16.msra.mxu0 %v5925
      %6108 = vmatpush.bf16.msra.mxu0 %v5924
      %6109 = vmatpush.bf16.msra.mxu0 %v5923
      %6110 = vmatpush.bf16.msra.mxu0 %v5922
      %6111 = vmatpush.bf16.msra.mxu0 %v5921
      %6112 = vmatpush.bf16.msra.mxu0 %v5920
      %6113 = vmatpush.bf16.msra.mxu0 %v5919
      %6114 = vmatmul.bf16.gmra.mxu0 %v5670
      %v6115 = vpop.f32.mrf.mxu0
      %v6116 = vadd.f32 %v6067, %v6115
      %v6117 = vpop.f32.mrf.mxu0
      %v6118 = vadd.f32 %v6069, %v6117
      %6119 = vmatmul.bf16.gmra.mxu0 %v5674
      %v6120 = vpop.f32.mrf.mxu0
      %v6121 = vadd.f32 %v6072, %v6120
      %v6122 = vpop.f32.mrf.mxu0
      %v6123 = vadd.f32 %v6074, %v6122
      %6124 = vmatmul.bf16.gmra.mxu0 %v5678
      %v6125 = vpop.f32.mrf.mxu0
      %v6126 = vadd.f32 %v6077, %v6125
      %v6127 = vpop.f32.mrf.mxu0
      %v6128 = vadd.f32 %v6079, %v6127
      %6129 = vmatmul.bf16.gmra.mxu0 %v5682
      %v6130 = vpop.f32.mrf.mxu0
      %v6131 = vadd.f32 %v6082, %v6130
      %v6132 = vpop.f32.mrf.mxu0
      %v6133 = vadd.f32 %v6084, %v6132
      %6134 = vmatmul.bf16.gmra.mxu0 %v5686
      %v6135 = vpop.f32.mrf.mxu0
      %v6136 = vadd.f32 %v6087, %v6135
      %v6137 = vpop.f32.mrf.mxu0
      %v6138 = vadd.f32 %v6089, %v6137
      %6139 = vmatmul.bf16.gmra.mxu0 %v5690
      %v6140 = vpop.f32.mrf.mxu0
      %v6141 = vadd.f32 %v6092, %v6140
      %v6142 = vpop.f32.mrf.mxu0
      %v6143 = vadd.f32 %v6094, %v6142
      %6144 = vmatmul.bf16.gmra.mxu0 %v5694
      %v6145 = vpop.f32.mrf.mxu0
      %v6146 = vadd.f32 %v6097, %v6145
      %v6147 = vpop.f32.mrf.mxu0
      %v6148 = vadd.f32 %v6099, %v6147
      %6149 = vmatmul.bf16.gmra.mxu0 %v5698
      %v6150 = vpop.f32.mrf.mxu0
      %v6151 = vadd.f32 %v6102, %v6150
      %v6152 = vpop.f32.mrf.mxu0
      %v6153 = vadd.f32 %v6104, %v6152
      %6154 = vdwg.mxu0
      %v6155 = vperm.slane %v1118, 0
      %v6156 = vperm.slane %v1134, 0
      %v6159 = vmul.f32 %v6155, %v6116
      %v6160 = vmul.f32 %v6155, %v6118
      %v6161 = vmul.f32 %v6155, %v6121
      %v6162 = vmul.f32 %v6155, %v6123
      %v6163 = vmul.f32 %v6155, %v6126
      %v6164 = vmul.f32 %v6155, %v6128
      %v6165 = vmul.f32 %v6155, %v6131
      %v6166 = vmul.f32 %v6155, %v6133
      %v6167 = vmul.f32 %v6156, %v6136
      %v6168 = vmul.f32 %v6156, %v6138
      %v6169 = vmul.f32 %v6156, %v6141
      %v6170 = vmul.f32 %v6156, %v6143
      %v6171 = vmul.f32 %v6156, %v6146
      %v6172 = vmul.f32 %v6156, %v6148
      %v6173 = vmul.f32 %v6156, %v6151
      %v6174 = vmul.f32 %v6156, %v6153
      %v6175 = vadd.f32 %v4305, %v6159
      %v6176 = vadd.f32 %v4306, %v6160
      %v6177 = vadd.f32 %v4307, %v6161
      %v6178 = vadd.f32 %v4308, %v6162
      %v6179 = vadd.f32 %v4309, %v6163
      %v6180 = vadd.f32 %v4310, %v6164
      %v6181 = vadd.f32 %v4311, %v6165
      %v6182 = vadd.f32 %v4312, %v6166
      %v6183 = vadd.f32 %v4313, %v6167
      %v6184 = vadd.f32 %v4314, %v6168
      %v6185 = vadd.f32 %v4315, %v6169
      %v6186 = vadd.f32 %v4316, %v6170
      %v6187 = vadd.f32 %v4317, %v6171
      %v6188 = vadd.f32 %v4318, %v6172
      %v6189 = vadd.f32 %v4319, %v6173
      %v6190 = vadd.f32 %v4320, %v6174
      %6191 = vst [vmem:[#allocation2] sm:$0xff] %v6175
      %6192 = vst [vmem:[#allocation2 + $0x8] sm:$0xff] %v6176
      %6193 = vst [vmem:[#allocation2 + $0x10] sm:$0xff] %v6177
      %6194 = vst [vmem:[#allocation2 + $0x18] sm:$0xff] %v6178
      %6195 = vst [vmem:[#allocation2 + $0x20] sm:$0xff] %v6179
      %6196 = vst [vmem:[#allocation2 + $0x28] sm:$0xff] %v6180
      %6197 = vst [vmem:[#allocation2 + $0x30] sm:$0xff] %v6181
      %6198 = vst [vmem:[#allocation2 + $0x38] sm:$0xff] %v6182
      %6199 = vst [vmem:[#allocation2 + $0x40] sm:$0xff] %v6183
      %6200 = vst [vmem:[#allocation2 + $0x48] sm:$0xff] %v6184
      %6201 = vst [vmem:[#allocation2 + $0x50] sm:$0xff] %v6185
      %6202 = vst [vmem:[#allocation2 + $0x58] sm:$0xff] %v6186
      %6203 = vst [vmem:[#allocation2 + $0x60] sm:$0xff] %v6187
      %6204 = vst [vmem:[#allocation2 + $0x68] sm:$0xff] %v6188
      %6205 = vst [vmem:[#allocation2 + $0x70] sm:$0xff] %v6189
      %6206 = vst [vmem:[#allocation2 + $0x78] sm:$0xff] %v6190
      %p6207 = scmp.eq.s32.totalorder %s27, 1
      // Predicated region
      $region89: #{_lambda_.5} parent=83 // pred_check
        %p6208 = pneg %p6207
      $region90: #{_lambda_.5} parent=83 // pred_check_branch
        %6210 = sbr.rel (%p6208) target = $region92
      $region91: #{_lambda_.5} parent=83 // pred_region
        %v6211 = vld [vmem:[%s12] sm:$0xff]
        %v6212 = vld [vmem:[%s12 + $0x8] sm:$0xff]
        %v6213 = vld [vmem:[%s12 + $0x10] sm:$0xff]
        %v6214 = vld [vmem:[%s12 + $0x18] sm:$0xff]
        %v6215 = vld [vmem:[%s12 + $0x20] sm:$0xff]
        %v6216 = vld [vmem:[%s12 + $0x28] sm:$0xff]
        %v6217 = vld [vmem:[%s12 + $0x30] sm:$0xff]
        %v6218 = vld [vmem:[%s12 + $0x38] sm:$0xff]
        %v6219 = vld [vmem:[%s12 + $0x40] sm:$0xff]
        %v6220 = vld [vmem:[%s12 + $0x48] sm:$0xff]
        %v6221 = vld [vmem:[%s12 + $0x50] sm:$0xff]
        %v6222 = vld [vmem:[%s12 + $0x58] sm:$0xff]
        %v6223 = vld [vmem:[%s12 + $0x60] sm:$0xff]
        %v6224 = vld [vmem:[%s12 + $0x68] sm:$0xff]
        %v6225 = vld [vmem:[%s12 + $0x70] sm:$0xff]
        %v6226 = vld [vmem:[%s12 + $0x78] sm:$0xff]
        %v6227 = vld [vmem:[%s13] sm:$0x3]
        %v6229 = vperm.slane %v6227, 0
        %v6230 = vperm.slane %v6227, 1
        %v6249 = vunpack.c.l.b16 %v6211
        %v6250 = vunpack.c.h.b16 %v6211
        %v6251 = vunpack.c.l.b16 %v6212
        %v6252 = vunpack.c.h.b16 %v6212
        %v6253 = vunpack.c.l.b16 %v6213
        %v6254 = vunpack.c.h.b16 %v6213
        %v6255 = vunpack.c.l.b16 %v6214
        %v6256 = vunpack.c.h.b16 %v6214
        %v6257 = vunpack.c.l.b16 %v6215
        %v6258 = vunpack.c.h.b16 %v6215
        %v6259 = vunpack.c.l.b16 %v6216
        %v6260 = vunpack.c.h.b16 %v6216
        %v6261 = vunpack.c.l.b16 %v6217
        %v6262 = vunpack.c.h.b16 %v6217
        %v6263 = vunpack.c.l.b16 %v6218
        %v6264 = vunpack.c.h.b16 %v6218
        %v6265 = vunpack.c.l.b16 %v6219
        %v6266 = vunpack.c.h.b16 %v6219
        %v6267 = vunpack.c.l.b16 %v6220
        %v6268 = vunpack.c.h.b16 %v6220
        %v6269 = vunpack.c.l.b16 %v6221
        %v6270 = vunpack.c.h.b16 %v6221
        %v6271 = vunpack.c.l.b16 %v6222
        %v6272 = vunpack.c.h.b16 %v6222
        %v6273 = vunpack.c.l.b16 %v6223
        %v6274 = vunpack.c.h.b16 %v6223
        %v6275 = vunpack.c.l.b16 %v6224
        %v6276 = vunpack.c.h.b16 %v6224
        %v6277 = vunpack.c.l.b16 %v6225
        %v6278 = vunpack.c.h.b16 %v6225
        %v6279 = vunpack.c.l.b16 %v6226
        %v6280 = vunpack.c.h.b16 %v6226
        %v6281 = vpack.c.b16 %v6251, %v6249
        %v6282 = vpack.c.b16 %v6252, %v6250
        %v6283 = vpack.c.b16 %v6255, %v6253
        %v6284 = vpack.c.b16 %v6256, %v6254
        %v6285 = vpack.c.b16 %v6259, %v6257
        %v6286 = vpack.c.b16 %v6260, %v6258
        %v6287 = vpack.c.b16 %v6263, %v6261
        %v6288 = vpack.c.b16 %v6264, %v6262
        %v6289 = vpack.c.b16 %v6267, %v6265
        %v6290 = vpack.c.b16 %v6268, %v6266
        %v6291 = vpack.c.b16 %v6271, %v6269
        %v6292 = vpack.c.b16 %v6272, %v6270
        %v6293 = vpack.c.b16 %v6275, %v6273
        %v6294 = vpack.c.b16 %v6276, %v6274
        %v6295 = vpack.c.b16 %v6279, %v6277
        %v6296 = vpack.c.b16 %v6280, %v6278
        %6313 = vmatpush.bf16.msra.mxu0 %v6295
        %6314 = vmatpush.bf16.msra.mxu0 %v6293
        %6315 = vmatpush.bf16.msra.mxu0 %v6291
        %6316 = vmatpush.bf16.msra.mxu0 %v6289
        %6317 = vmatpush.bf16.msra.mxu0 %v6287
        %6318 = vmatpush.bf16.msra.mxu0 %v6285
        %6319 = vmatpush.bf16.msra.mxu0 %v6283
        %6320 = vmatpush.bf16.msra.mxu0 %v6281
        %6321 = vmatmul.bf16.gmra.mxu0 %v740
        %v6322 = vpop.f32.mrf.mxu0
        %v6323 = vadd.f32 %v6229, %v6322
        %v6324 = vpop.f32.mrf.mxu0
        %6325 = vdwg.mxu0
        %6326 = vmatpush.bf16.msra.mxu0 %v6296
        %6327 = vmatpush.bf16.msra.mxu0 %v6294
        %6328 = vmatpush.bf16.msra.mxu0 %v6292
        %6329 = vmatpush.bf16.msra.mxu0 %v6290
        %6330 = vmatpush.bf16.msra.mxu0 %v6288
        %6331 = vmatpush.bf16.msra.mxu0 %v6286
        %6332 = vmatpush.bf16.msra.mxu0 %v6284
        %6333 = vmatpush.bf16.msra.mxu0 %v6282
        %6334 = vmatmul.bf16.gmra.mxu0 %v740
        %v6335 = vpop.f32.mrf.mxu0
        %v6336 = vadd.f32 %v6230, %v6335
        %v6337 = vpop.f32.mrf.mxu0
        %6338 = vdwg.mxu0
        %v6340 = vrot.slane %v6323, 1
        %v6342 = vrot.slane %v6336, 1
        %6344 = vadd.xlane.f32.xlu0 %v6175
        %v6345 = vpop.xlane.xlu0 %6344
        %6346 = vadd.xlane.f32.xlu0 %v6176
        %v6347 = vpop.xlane.xlu0 %6346
        %6348 = vadd.xlane.f32.xlu0 %v6177
        %v6349 = vpop.xlane.xlu0 %6348
        %6350 = vadd.xlane.f32.xlu0 %v6178
        %v6351 = vpop.xlane.xlu0 %6350
        %6352 = vadd.xlane.f32.xlu0 %v6179
        %v6353 = vpop.xlane.xlu0 %6352
        %6354 = vadd.xlane.f32.xlu0 %v6180
        %v6355 = vpop.xlane.xlu0 %6354
        %6356 = vadd.xlane.f32.xlu0 %v6181
        %v6357 = vpop.xlane.xlu0 %6356
        %6358 = vadd.xlane.f32.xlu0 %v6182
        %v6359 = vpop.xlane.xlu0 %6358
        %6360 = vadd.xlane.f32.xlu0 %v6183
        %v6361 = vpop.xlane.xlu0 %6360
        %6362 = vadd.xlane.f32.xlu0 %v6184
        %v6363 = vpop.xlane.xlu0 %6362
        %6364 = vadd.xlane.f32.xlu0 %v6185
        %v6365 = vpop.xlane.xlu0 %6364
        %6366 = vadd.xlane.f32.xlu0 %v6186
        %v6367 = vpop.xlane.xlu0 %6366
        %6368 = vadd.xlane.f32.xlu0 %v6187
        %v6369 = vpop.xlane.xlu0 %6368
        %6370 = vadd.xlane.f32.xlu0 %v6188
        %v6371 = vpop.xlane.xlu0 %6370
        %6372 = vadd.xlane.f32.xlu0 %v6189
        %v6373 = vpop.xlane.xlu0 %6372
        %6374 = vadd.xlane.f32.xlu0 %v6190
        %v6375 = vpop.xlane.xlu0 %6374
        %v6376 = vmul.f32 %v6345, %v1173
        %v6377 = vmul.f32 %v6347, %v1173
        %v6378 = vmul.f32 %v6349, %v1173
        %v6379 = vmul.f32 %v6351, %v1173
        %v6380 = vmul.f32 %v6353, %v1173
        %v6381 = vmul.f32 %v6355, %v1173
        %v6382 = vmul.f32 %v6357, %v1173
        %v6383 = vmul.f32 %v6359, %v1173
        %v6384 = vmul.f32 %v6361, %v1173
        %v6385 = vmul.f32 %v6363, %v1173
        %v6386 = vmul.f32 %v6365, %v1173
        %v6387 = vmul.f32 %v6367, %v1173
        %v6388 = vmul.f32 %v6369, %v1173
        %v6389 = vmul.f32 %v6371, %v1173
        %v6390 = vmul.f32 %v6373, %v1173
        %v6391 = vmul.f32 %v6375, %v1173
        %v6392 = vsub.f32 %v6175, %v6376
        %v6393 = vsub.f32 %v6176, %v6377
        %v6394 = vsub.f32 %v6177, %v6378
        %v6395 = vsub.f32 %v6178, %v6379
        %v6396 = vsub.f32 %v6179, %v6380
        %v6397 = vsub.f32 %v6180, %v6381
        %v6398 = vsub.f32 %v6181, %v6382
        %v6399 = vsub.f32 %v6182, %v6383
        %v6400 = vsub.f32 %v6183, %v6384
        %v6401 = vsub.f32 %v6184, %v6385
        %v6402 = vsub.f32 %v6185, %v6386
        %v6403 = vsub.f32 %v6186, %v6387
        %v6404 = vsub.f32 %v6187, %v6388
        %v6405 = vsub.f32 %v6188, %v6389
        %v6406 = vsub.f32 %v6189, %v6390
        %v6407 = vsub.f32 %v6190, %v6391
        %v6408 = vmul.f32 %v6392, %v6392
        %v6409 = vmul.f32 %v6393, %v6393
        %v6410 = vmul.f32 %v6394, %v6394
        %v6411 = vmul.f32 %v6395, %v6395
        %v6412 = vmul.f32 %v6396, %v6396
        %v6413 = vmul.f32 %v6397, %v6397
        %v6414 = vmul.f32 %v6398, %v6398
        %v6415 = vmul.f32 %v6399, %v6399
        %v6416 = vmul.f32 %v6400, %v6400
        %v6417 = vmul.f32 %v6401, %v6401
        %v6418 = vmul.f32 %v6402, %v6402
        %v6419 = vmul.f32 %v6403, %v6403
        %v6420 = vmul.f32 %v6404, %v6404
        %v6421 = vmul.f32 %v6405, %v6405
        %v6422 = vmul.f32 %v6406, %v6406
        %v6423 = vmul.f32 %v6407, %v6407
        %6424 = vadd.xlane.f32.xlu0 %v6408
        %v6425 = vpop.xlane.xlu0 %6424
        %6426 = vadd.xlane.f32.xlu0 %v6409
        %v6427 = vpop.xlane.xlu0 %6426
        %6428 = vadd.xlane.f32.xlu0 %v6410
        %v6429 = vpop.xlane.xlu0 %6428
        %6430 = vadd.xlane.f32.xlu0 %v6411
        %v6431 = vpop.xlane.xlu0 %6430
        %6432 = vadd.xlane.f32.xlu0 %v6412
        %v6433 = vpop.xlane.xlu0 %6432
        %6434 = vadd.xlane.f32.xlu0 %v6413
        %v6435 = vpop.xlane.xlu0 %6434
        %6436 = vadd.xlane.f32.xlu0 %v6414
        %v6437 = vpop.xlane.xlu0 %6436
        %6438 = vadd.xlane.f32.xlu0 %v6415
        %v6439 = vpop.xlane.xlu0 %6438
        %6440 = vadd.xlane.f32.xlu0 %v6416
        %v6441 = vpop.xlane.xlu0 %6440
        %6442 = vadd.xlane.f32.xlu0 %v6417
        %v6443 = vpop.xlane.xlu0 %6442
        %6444 = vadd.xlane.f32.xlu0 %v6418
        %v6445 = vpop.xlane.xlu0 %6444
        %6446 = vadd.xlane.f32.xlu0 %v6419
        %v6447 = vpop.xlane.xlu0 %6446
        %6448 = vadd.xlane.f32.xlu0 %v6420
        %v6449 = vpop.xlane.xlu0 %6448
        %6450 = vadd.xlane.f32.xlu0 %v6421
        %v6451 = vpop.xlane.xlu0 %6450
        %6452 = vadd.xlane.f32.xlu0 %v6422
        %v6453 = vpop.xlane.xlu0 %6452
        %6454 = vadd.xlane.f32.xlu0 %v6423
        %v6455 = vpop.xlane.xlu0 %6454
        %v6456 = vmul.f32 %v6425, %v1173
        %v6457 = vmul.f32 %v6427, %v1173
        %v6458 = vmul.f32 %v6429, %v1173
        %v6459 = vmul.f32 %v6431, %v1173
        %v6460 = vmul.f32 %v6433, %v1173
        %v6461 = vmul.f32 %v6435, %v1173
        %v6462 = vmul.f32 %v6437, %v1173
        %v6463 = vmul.f32 %v6439, %v1173
        %v6464 = vmul.f32 %v6441, %v1173
        %v6465 = vmul.f32 %v6443, %v1173
        %v6466 = vmul.f32 %v6445, %v1173
        %v6467 = vmul.f32 %v6447, %v1173
        %v6468 = vmul.f32 %v6449, %v1173
        %v6469 = vmul.f32 %v6451, %v1173
        %v6470 = vmul.f32 %v6453, %v1173
        %v6471 = vmul.f32 %v6455, %v1173
        %v6472 = vadd.f32 %v6456, 1e-06
        %v6473 = vadd.f32 %v6457, 1e-06
        %v6474 = vadd.f32 %v6458, 1e-06
        %v6475 = vadd.f32 %v6459, 1e-06
        %v6476 = vadd.f32 %v6460, 1e-06
        %v6477 = vadd.f32 %v6461, 1e-06
        %v6478 = vadd.f32 %v6462, 1e-06
        %v6479 = vadd.f32 %v6463, 1e-06
        %v6480 = vadd.f32 %v6464, 1e-06
        %v6481 = vadd.f32 %v6465, 1e-06
        %v6482 = vadd.f32 %v6466, 1e-06
        %v6483 = vadd.f32 %v6467, 1e-06
        %v6484 = vadd.f32 %v6468, 1e-06
        %v6485 = vadd.f32 %v6469, 1e-06
        %v6486 = vadd.f32 %v6470, 1e-06
        %v6487 = vadd.f32 %v6471, 1e-06
        %v6488 = vrsqrt.pop %v6472
        %v6489 = vmul.f32 %v6488, %v6472
        %v6490 = vmul.f32 %v6489, %v6488
        %v6491 = vmul.f32 0.5, %v6490
        %v6492 = vsub.f32 1.5, %v6491
        %v6493 = vmul.f32 %v6488, %v6492
        %vm6494 = vweird.f32 %v6472
        %vm6495 = vweird.f32 %v6488
        %vm6496 = vmor %vm6494, %vm6495
        %v6497 = vsel %vm6496, %v6488, %v6493
        %v6498 = vrsqrt.pop %v6473
        %v6499 = vmul.f32 %v6498, %v6473
        %v6500 = vmul.f32 %v6499, %v6498
        %v6501 = vmul.f32 0.5, %v6500
        %v6502 = vsub.f32 1.5, %v6501
        %v6503 = vmul.f32 %v6498, %v6502
        %vm6504 = vweird.f32 %v6473
        %vm6505 = vweird.f32 %v6498
        %vm6506 = vmor %vm6504, %vm6505
        %v6507 = vsel %vm6506, %v6498, %v6503
        %v6508 = vrsqrt.pop %v6474
        %v6509 = vmul.f32 %v6508, %v6474
        %v6510 = vmul.f32 %v6509, %v6508
        %v6511 = vmul.f32 0.5, %v6510
        %v6512 = vsub.f32 1.5, %v6511
        %v6513 = vmul.f32 %v6508, %v6512
        %vm6514 = vweird.f32 %v6474
        %vm6515 = vweird.f32 %v6508
        %vm6516 = vmor %vm6514, %vm6515
        %v6517 = vsel %vm6516, %v6508, %v6513
        %v6518 = vrsqrt.pop %v6475
        %v6519 = vmul.f32 %v6518, %v6475
        %v6520 = vmul.f32 %v6519, %v6518
        %v6521 = vmul.f32 0.5, %v6520
        %v6522 = vsub.f32 1.5, %v6521
        %v6523 = vmul.f32 %v6518, %v6522
        %vm6524 = vweird.f32 %v6475
        %vm6525 = vweird.f32 %v6518
        %vm6526 = vmor %vm6524, %vm6525
        %v6527 = vsel %vm6526, %v6518, %v6523
        %v6528 = vrsqrt.pop %v6476
        %v6529 = vmul.f32 %v6528, %v6476
        %v6530 = vmul.f32 %v6529, %v6528
        %v6531 = vmul.f32 0.5, %v6530
        %v6532 = vsub.f32 1.5, %v6531
        %v6533 = vmul.f32 %v6528, %v6532
        %vm6534 = vweird.f32 %v6476
        %vm6535 = vweird.f32 %v6528
        %vm6536 = vmor %vm6534, %vm6535
        %v6537 = vsel %vm6536, %v6528, %v6533
        %v6538 = vrsqrt.pop %v6477
        %v6539 = vmul.f32 %v6538, %v6477
        %v6540 = vmul.f32 %v6539, %v6538
        %v6541 = vmul.f32 0.5, %v6540
        %v6542 = vsub.f32 1.5, %v6541
        %v6543 = vmul.f32 %v6538, %v6542
        %vm6544 = vweird.f32 %v6477
        %vm6545 = vweird.f32 %v6538
        %vm6546 = vmor %vm6544, %vm6545
        %v6547 = vsel %vm6546, %v6538, %v6543
        %v6548 = vrsqrt.pop %v6478
        %v6549 = vmul.f32 %v6548, %v6478
        %v6550 = vmul.f32 %v6549, %v6548
        %v6551 = vmul.f32 0.5, %v6550
        %v6552 = vsub.f32 1.5, %v6551
        %v6553 = vmul.f32 %v6548, %v6552
        %vm6554 = vweird.f32 %v6478
        %vm6555 = vweird.f32 %v6548
        %vm6556 = vmor %vm6554, %vm6555
        %v6557 = vsel %vm6556, %v6548, %v6553
        %v6558 = vrsqrt.pop %v6479
        %v6559 = vmul.f32 %v6558, %v6479
        %v6560 = vmul.f32 %v6559, %v6558
        %v6561 = vmul.f32 0.5, %v6560
        %v6562 = vsub.f32 1.5, %v6561
        %v6563 = vmul.f32 %v6558, %v6562
        %vm6564 = vweird.f32 %v6479
        %vm6565 = vweird.f32 %v6558
        %vm6566 = vmor %vm6564, %vm6565
        %v6567 = vsel %vm6566, %v6558, %v6563
        %v6568 = vrsqrt.pop %v6480
        %v6569 = vmul.f32 %v6568, %v6480
        %v6570 = vmul.f32 %v6569, %v6568
        %v6571 = vmul.f32 0.5, %v6570
        %v6572 = vsub.f32 1.5, %v6571
        %v6573 = vmul.f32 %v6568, %v6572
        %vm6574 = vweird.f32 %v6480
        %vm6575 = vweird.f32 %v6568
        %vm6576 = vmor %vm6574, %vm6575
        %v6577 = vsel %vm6576, %v6568, %v6573
        %v6578 = vrsqrt.pop %v6481
        %v6579 = vmul.f32 %v6578, %v6481
        %v6580 = vmul.f32 %v6579, %v6578
        %v6581 = vmul.f32 0.5, %v6580
        %v6582 = vsub.f32 1.5, %v6581
        %v6583 = vmul.f32 %v6578, %v6582
        %vm6584 = vweird.f32 %v6481
        %vm6585 = vweird.f32 %v6578
        %vm6586 = vmor %vm6584, %vm6585
        %v6587 = vsel %vm6586, %v6578, %v6583
        %v6588 = vrsqrt.pop %v6482
        %v6589 = vmul.f32 %v6588, %v6482
        %v6590 = vmul.f32 %v6589, %v6588
        %v6591 = vmul.f32 0.5, %v6590
        %v6592 = vsub.f32 1.5, %v6591
        %v6593 = vmul.f32 %v6588, %v6592
        %vm6594 = vweird.f32 %v6482
        %vm6595 = vweird.f32 %v6588
        %vm6596 = vmor %vm6594, %vm6595
        %v6597 = vsel %vm6596, %v6588, %v6593
        %v6598 = vrsqrt.pop %v6483
        %v6599 = vmul.f32 %v6598, %v6483
        %v6600 = vmul.f32 %v6599, %v6598
        %v6601 = vmul.f32 0.5, %v6600
        %v6602 = vsub.f32 1.5, %v6601
        %v6603 = vmul.f32 %v6598, %v6602
        %vm6604 = vweird.f32 %v6483
        %vm6605 = vweird.f32 %v6598
        %vm6606 = vmor %vm6604, %vm6605
        %v6607 = vsel %vm6606, %v6598, %v6603
        %v6608 = vrsqrt.pop %v6484
        %v6609 = vmul.f32 %v6608, %v6484
        %v6610 = vmul.f32 %v6609, %v6608
        %v6611 = vmul.f32 0.5, %v6610
        %v6612 = vsub.f32 1.5, %v6611
        %v6613 = vmul.f32 %v6608, %v6612
        %vm6614 = vweird.f32 %v6484
        %vm6615 = vweird.f32 %v6608
        %vm6616 = vmor %vm6614, %vm6615
        %v6617 = vsel %vm6616, %v6608, %v6613
        %v6618 = vrsqrt.pop %v6485
        %v6619 = vmul.f32 %v6618, %v6485
        %v6620 = vmul.f32 %v6619, %v6618
        %v6621 = vmul.f32 0.5, %v6620
        %v6622 = vsub.f32 1.5, %v6621
        %v6623 = vmul.f32 %v6618, %v6622
        %vm6624 = vweird.f32 %v6485
        %vm6625 = vweird.f32 %v6618
        %vm6626 = vmor %vm6624, %vm6625
        %v6627 = vsel %vm6626, %v6618, %v6623
        %v6628 = vrsqrt.pop %v6486
        %v6629 = vmul.f32 %v6628, %v6486
        %v6630 = vmul.f32 %v6629, %v6628
        %v6631 = vmul.f32 0.5, %v6630
        %v6632 = vsub.f32 1.5, %v6631
        %v6633 = vmul.f32 %v6628, %v6632
        %vm6634 = vweird.f32 %v6486
        %vm6635 = vweird.f32 %v6628
        %vm6636 = vmor %vm6634, %vm6635
        %v6637 = vsel %vm6636, %v6628, %v6633
        %v6638 = vrsqrt.pop %v6487
        %v6639 = vmul.f32 %v6638, %v6487
        %v6640 = vmul.f32 %v6639, %v6638
        %v6641 = vmul.f32 0.5, %v6640
        %v6642 = vsub.f32 1.5, %v6641
        %v6643 = vmul.f32 %v6638, %v6642
        %vm6644 = vweird.f32 %v6487
        %vm6645 = vweird.f32 %v6638
        %vm6646 = vmor %vm6644, %vm6645
        %v6647 = vsel %vm6646, %v6638, %v6643
        %v6648 = vmul.f32 %v6392, %v6497
        %v6649 = vmul.f32 %v6393, %v6507
        %v6650 = vmul.f32 %v6394, %v6517
        %v6651 = vmul.f32 %v6395, %v6527
        %v6652 = vmul.f32 %v6396, %v6537
        %v6653 = vmul.f32 %v6397, %v6547
        %v6654 = vmul.f32 %v6398, %v6557
        %v6655 = vmul.f32 %v6399, %v6567
        %v6656 = vmul.f32 %v6400, %v6577
        %v6657 = vmul.f32 %v6401, %v6587
        %v6658 = vmul.f32 %v6402, %v6597
        %v6659 = vmul.f32 %v6403, %v6607
        %v6660 = vmul.f32 %v6404, %v6617
        %v6661 = vmul.f32 %v6405, %v6627
        %v6662 = vmul.f32 %v6406, %v6637
        %v6663 = vmul.f32 %v6407, %v6647
        %v6664 = vadd.f32 %v6336, 1.0
        %v6665 = vadd.f32 %v6342, 1.0
        %v6668 = vperm.slane %v6664, 0
        %v6669 = vperm.slane %v6665, 0
        %v6672 = vmul.f32 %v6648, %v6668
        %v6673 = vmul.f32 %v6649, %v6668
        %v6674 = vmul.f32 %v6650, %v6668
        %v6675 = vmul.f32 %v6651, %v6668
        %v6676 = vmul.f32 %v6652, %v6668
        %v6677 = vmul.f32 %v6653, %v6668
        %v6678 = vmul.f32 %v6654, %v6668
        %v6679 = vmul.f32 %v6655, %v6668
        %v6680 = vmul.f32 %v6656, %v6669
        %v6681 = vmul.f32 %v6657, %v6669
        %v6682 = vmul.f32 %v6658, %v6669
        %v6683 = vmul.f32 %v6659, %v6669
        %v6684 = vmul.f32 %v6660, %v6669
        %v6685 = vmul.f32 %v6661, %v6669
        %v6686 = vmul.f32 %v6662, %v6669
        %v6687 = vmul.f32 %v6663, %v6669
        %v6688 = vperm.slane %v6323, 0
        %v6689 = vperm.slane %v6340, 0
        %v6692 = vadd.f32 %v6672, %v6688
        %v6693 = vadd.f32 %v6673, %v6688
        %v6694 = vadd.f32 %v6674, %v6688
        %v6695 = vadd.f32 %v6675, %v6688
        %v6696 = vadd.f32 %v6676, %v6688
        %v6697 = vadd.f32 %v6677, %v6688
        %v6698 = vadd.f32 %v6678, %v6688
        %v6699 = vadd.f32 %v6679, %v6688
        %v6700 = vadd.f32 %v6680, %v6689
        %v6701 = vadd.f32 %v6681, %v6689
        %v6702 = vadd.f32 %v6682, %v6689
        %v6703 = vadd.f32 %v6683, %v6689
        %v6704 = vadd.f32 %v6684, %v6689
        %v6705 = vadd.f32 %v6685, %v6689
        %v6706 = vadd.f32 %v6686, %v6689
        %v6707 = vadd.f32 %v6687, %v6689
        %v6708 = vpack.c.bf16 %v6693, %v6692
        %v6709 = vpack.c.bf16 %v6695, %v6694
        %v6710 = vpack.c.bf16 %v6697, %v6696
        %v6711 = vpack.c.bf16 %v6699, %v6698
        %v6712 = vpack.c.bf16 %v6701, %v6700
        %v6713 = vpack.c.bf16 %v6703, %v6702
        %v6714 = vpack.c.bf16 %v6705, %v6704
        %v6715 = vpack.c.bf16 %v6707, %v6706
        %v6716 = vld [vmem:[%s14] sm:$0xf]
        %v6717 = vld [vmem:[%s14 + $0x4] sm:$0xf]
        %v6718 = vld [vmem:[%s14 + $0x8] sm:$0xf]
        %v6719 = vld [vmem:[%s14 + $0xc] sm:$0xf]
        %v6720 = vld [vmem:[%s14 + $0x10] sm:$0xf]
        %v6721 = vld [vmem:[%s14 + $0x14] sm:$0xf]
        %v6722 = vld [vmem:[%s14 + $0x18] sm:$0xf]
        %v6723 = vld [vmem:[%s14 + $0x1c] sm:$0xf]
        %v6724 = vld [vmem:[%s14 + $0x20] sm:$0xf]
        %v6725 = vld [vmem:[%s14 + $0x24] sm:$0xf]
        %v6726 = vld [vmem:[%s14 + $0x28] sm:$0xf]
        %v6727 = vld [vmem:[%s14 + $0x2c] sm:$0xf]
        %v6728 = vld [vmem:[%s14 + $0x30] sm:$0xf]
        %v6729 = vld [vmem:[%s14 + $0x34] sm:$0xf]
        %v6730 = vld [vmem:[%s14 + $0x38] sm:$0xf]
        %v6731 = vld [vmem:[%s14 + $0x3c] sm:$0xf]
        %v6732 = vld [vmem:[%s15] sm:$0x1]
        %v6734 = vperm.slane %v6732, 0
        %v6752 = vunpack.c.l.b16 %v6716
        %v6753 = vunpack.c.l.b16 %v6717
        %v6754 = vunpack.c.l.b16 %v6718
        %v6755 = vunpack.c.l.b16 %v6719
        %v6756 = vunpack.c.l.b16 %v6720
        %v6757 = vunpack.c.l.b16 %v6721
        %v6758 = vunpack.c.l.b16 %v6722
        %v6759 = vunpack.c.l.b16 %v6723
        %v6760 = vunpack.c.l.b16 %v6724
        %v6761 = vunpack.c.l.b16 %v6725
        %v6762 = vunpack.c.l.b16 %v6726
        %v6763 = vunpack.c.l.b16 %v6727
        %v6764 = vunpack.c.l.b16 %v6728
        %v6765 = vunpack.c.l.b16 %v6729
        %v6766 = vunpack.c.l.b16 %v6730
        %v6767 = vunpack.c.l.b16 %v6731
        %v6768 = vpack.c.b16 %v6753, %v6752
        %v6769 = vpack.c.b16 %v6755, %v6754
        %v6770 = vpack.c.b16 %v6757, %v6756
        %v6771 = vpack.c.b16 %v6759, %v6758
        %v6772 = vpack.c.b16 %v6761, %v6760
        %v6773 = vpack.c.b16 %v6763, %v6762
        %v6774 = vpack.c.b16 %v6765, %v6764
        %v6775 = vpack.c.b16 %v6767, %v6766
        %6784 = vmatpush.bf16.msra.mxu0 %v6775
        %6785 = vmatpush.bf16.msra.mxu0 %v6774
        %6786 = vmatpush.bf16.msra.mxu0 %v6773
        %6787 = vmatpush.bf16.msra.mxu0 %v6772
        %6788 = vmatpush.bf16.msra.mxu0 %v6771
        %6789 = vmatpush.bf16.msra.mxu0 %v6770
        %6790 = vmatpush.bf16.msra.mxu0 %v6769
        %6791 = vmatpush.bf16.msra.mxu0 %v6768
        %6792 = vmatmul.bf16.gmra.mxu0 %v6708
        %v6793 = vpop.f32.mrf.mxu0
        %v6794 = vadd.f32 %v6734, %v6793
        %v6795 = vpop.f32.mrf.mxu0
        %v6796 = vadd.f32 %v6734, %v6795
        %6797 = vmatmul.bf16.gmra.mxu0 %v6709
        %v6798 = vpop.f32.mrf.mxu0
        %v6799 = vadd.f32 %v6734, %v6798
        %v6800 = vpop.f32.mrf.mxu0
        %v6801 = vadd.f32 %v6734, %v6800
        %6802 = vmatmul.bf16.gmra.mxu0 %v6710
        %v6803 = vpop.f32.mrf.mxu0
        %v6804 = vadd.f32 %v6734, %v6803
        %v6805 = vpop.f32.mrf.mxu0
        %v6806 = vadd.f32 %v6734, %v6805
        %6807 = vmatmul.bf16.gmra.mxu0 %v6711
        %v6808 = vpop.f32.mrf.mxu0
        %v6809 = vadd.f32 %v6734, %v6808
        %v6810 = vpop.f32.mrf.mxu0
        %v6811 = vadd.f32 %v6734, %v6810
        %6812 = vmatmul.bf16.gmra.mxu0 %v6712
        %v6813 = vpop.f32.mrf.mxu0
        %v6814 = vadd.f32 %v6734, %v6813
        %v6815 = vpop.f32.mrf.mxu0
        %v6816 = vadd.f32 %v6734, %v6815
        %6817 = vmatmul.bf16.gmra.mxu0 %v6713
        %v6818 = vpop.f32.mrf.mxu0
        %v6819 = vadd.f32 %v6734, %v6818
        %v6820 = vpop.f32.mrf.mxu0
        %v6821 = vadd.f32 %v6734, %v6820
        %6822 = vmatmul.bf16.gmra.mxu0 %v6714
        %v6823 = vpop.f32.mrf.mxu0
        %v6824 = vadd.f32 %v6734, %v6823
        %v6825 = vpop.f32.mrf.mxu0
        %v6826 = vadd.f32 %v6734, %v6825
        %6827 = vmatmul.bf16.gmra.mxu0 %v6715
        %v6828 = vpop.f32.mrf.mxu0
        %v6829 = vadd.f32 %v6734, %v6828
        %v6830 = vpop.f32.mrf.mxu0
        %v6831 = vadd.f32 %v6734, %v6830
        %6832 = vdwg.mxu0
        %6833 = vst [vmem:[%s16] sm:$0xff] %v6794
        %6834 = vst [vmem:[%s16 + $0x8] sm:$0xff] %v6796
        %6835 = vst [vmem:[%s16 + $0x10] sm:$0xff] %v6799
        %6836 = vst [vmem:[%s16 + $0x18] sm:$0xff] %v6801
        %6837 = vst [vmem:[%s16 + $0x20] sm:$0xff] %v6804
        %6838 = vst [vmem:[%s16 + $0x28] sm:$0xff] %v6806
        %6839 = vst [vmem:[%s16 + $0x30] sm:$0xff] %v6809
        %6840 = vst [vmem:[%s16 + $0x38] sm:$0xff] %v6811
        %6841 = vst [vmem:[%s16 + $0x40] sm:$0xff] %v6814
        %6842 = vst [vmem:[%s16 + $0x48] sm:$0xff] %v6816
        %6843 = vst [vmem:[%s16 + $0x50] sm:$0xff] %v6819
        %6844 = vst [vmem:[%s16 + $0x58] sm:$0xff] %v6821
        %6845 = vst [vmem:[%s16 + $0x60] sm:$0xff] %v6824
        %6846 = vst [vmem:[%s16 + $0x68] sm:$0xff] %v6826
        %6847 = vst [vmem:[%s16 + $0x70] sm:$0xff] %v6829
        %6848 = vst [vmem:[%s16 + $0x78] sm:$0xff] %v6831
      $region92: #{_lambda_.5} parent=83 // pred_fallthru
        _
      // Predicated region
      $region93: #{_lambda_.5} parent=83 // pred_check
        %p6849 = pneg %p426
      $region94: #{_lambda_.5} parent=83 // pred_check_branch
        %6851 = sbr.rel (%p6849) target = $region96
      $region95: #{_lambda_.5} parent=83 // pred_region
        _
      $region96: #{_lambda_.5} parent=83 // pred_fallthru
        _
      // Predicated region
      $region97: #{_lambda_.5} parent=83 // pred_check
        %p6852 = pneg %p426
      $region98: #{_lambda_.5} parent=83 // pred_check_branch
        %6854 = sbr.rel (%p6852) target = $region100
      $region99: #{_lambda_.5} parent=83 // pred_region
        _
      $region100: #{_lambda_.5} parent=83 // pred_fallthru
        _
    $region84: #{_lambda_.5} parent=5 // pred_fallthru
      _
    %p6855 = scmp.le.s32.totalorder 2, %s22
    // Predicated region
    $region101: #{_lambda_.5} parent=5 // pred_check
      %p6856 = pneg %p6855
    $region102: #{_lambda_.5} parent=5 // pred_check_branch
      %6858 = sbr.rel (%p6856) target = $region104
    $region103: #{_lambda_.5} parent=5 // pred_region
      %s6859 = ssub.s32 %s22, 2
    $region104: #{_lambda_.5} parent=5 // pred_fallthru
      _
  $region6: #{_lambda_.5} parent=0 // loop_footer
    %s26 = sadd.s32 1, %s22
  $region7: #{_lambda_.5} parent=0 // loop_footer_branch
    %21 = sbr.rel target = $region3
  $region8: #{_lambda_.5} parent=0 // loop_exit
    _

</llo_original>
